<compile_context>
chip_gen: v6e
topology: v6e:2x2x1
jax: 0.10.0
libtpu: 0.0.40
codegen_flags: <defaults>
</compile_context>

<pallas_src>
import functools

import jax
import jax.numpy as jnp
from jax import lax
from jax.experimental import pallas as pl
from jax.experimental.pallas import tpu as pltpu

KSZ = 3      # 3x3 convolutions
HALO = 2     # fused conv3x3 -> conv3x3 has radius 2 along H


def _fused_dehaze_kernel(x_hbm, w1_ref, b1_ref, w2_ref, b2_ref, o_ref,
                         strip_ref, copy_sem,
                         *, cin, cmid, cout, th, img_h, img_w):
    """One (batch, H-strip) step of fused Conv3x3 -> ReLU -> Conv3x3 (NCHW)."""
    b = pl.program_id(0)
    s = pl.program_id(1)
    rows = th + 2 * HALO
    wp = o_ref.shape[3]

    # ---- manual halo DMA: padded-input rows [s*th, s*th + th + 4) ----------
    cp = pltpu.make_async_copy(
        x_hbm.at[pl.ds(b, 1), :, pl.ds(s * th, rows), :],
        strip_ref, copy_sem)
    cp.start()

    # ---- hoisted border masks (computed while the DMA is in flight) --------
    col = lax.broadcasted_iota(jnp.int32, (rows, wp), 1)
    m_left = col >= 1                      # dx = -1: col 0 has no left neighbor
    m_right = col < (img_w - 1)            # dx = +1: col W-1 has no right neighbor
    row = lax.broadcasted_iota(jnp.int32, (rows, wp), 0)
    grow = row + s * th - HALO             # global image row of each strip row
    m_hrow = jnp.logical_and(grow >= 0, grow < img_h)   # conv2 zero-pad in H

    cp.wait()

    def lane_variants(p):
        # (dx=-1, dx=0, dx=+1) windows: win[:, x] = p[:, x+dx], 0 outside image.
        pm1 = jnp.where(m_left, pltpu.roll(p, shift=1, axis=1), 0.0)
        pp1 = jnp.where(m_right, pltpu.roll(p, shift=wp - 1, axis=1), 0.0)
        return (pm1, p, pp1)

    def row_shift(p, dy):
        # win[r, :] = p[r+dy, :]; wrap garbage lands only in unused halo rows.
        if dy == 0:
            return p
        return pltpu.roll(p, shift=(-dy) % rows, axis=0)

    zero = jnp.zeros((rows, wp), jnp.float32)

    # ---- conv1 (cin -> cmid): shifted VPU FMAs, weights as SMEM scalars ----
    acc1 = [zero] * cmid
    for ci in range(cin):
        var = lane_variants(strip_ref[0, ci].astype(jnp.float32))
        for kx in range(KSZ):
            vx = var[kx]
            for ky in range(KSZ):
                win = row_shift(vx, ky - 1)
                base = ((ky * KSZ + kx) * cin + ci) * cmid
                for co in range(cmid):
                    acc1[co] = acc1[co] + w1_ref[base + co] * win

    # Intermediate h never touches HBM; zero it outside the image rows so
    # conv2's SAME zero-padding in H is honoured at strip boundaries.
    h = [jnp.where(m_hrow, jnp.maximum(acc1[co] + b1_ref[co], 0.0), 0.0)
         for co in range(cmid)]

    # ---- conv2 (cmid -> cout) + bias ----------------------------------------
    acc2 = [zero] * cout
    for ci in range(cmid):
        var = lane_variants(h[ci])
        for kx in range(KSZ):
            vx = var[kx]
            for ky in range(KSZ):
                win = row_shift(vx, ky - 1)
                base = ((ky * KSZ + kx) * cmid + ci) * cout
                for co in range(cout):
                    acc2[co] = acc2[co] + w2_ref[base + co] * win

    for co in range(cout):
        o_ref[0, co, :, :] = (acc2[co][HALO:HALO + th, :]
                              + b2_ref[co]).astype(o_ref.dtype)


def fused_two_conv(x_nchw, w1, b1, w2, b2, *, strip_rows=None):
    """x: (B, Cin, H, W);  w1: (3,3,Cin,Cmid) HWIO;  w2: (3,3,Cmid,Cout)."""
    B, Cin, H, W = x_nchw.shape
    Cmid = w1.shape[-1]
    Cout = w2.shape[-1]

    # H-strip rows: multiple of 8 (aligned output blocks), up to 64 for large
    # images; per-strip working set stays well under the v5e/v6e/v7x VMEM
    # limits even at 1080p/4K widths.
    if strip_rows is None:
        strip_rows = 8 * max(1, min(8, pl.cdiv(H, 16)))
    th = strip_rows
    ns = pl.cdiv(H, th)
    wp = 128 * pl.cdiv(W, 128)             # lane-dense W (unmasked stores)
    hp = ns * th + 2 * HALO                 # 2-row zero halo top/bottom

    xp = jnp.pad(x_nchw, ((0, 0), (0, 0),
                          (HALO, hp - H - HALO), (0, wp - W)))

    kernel = functools.partial(_fused_dehaze_kernel, cin=Cin, cmid=Cmid,
                               cout=Cout, th=th, img_h=H, img_w=W)
    smem = pl.BlockSpec(memory_space=pltpu.MemorySpace.SMEM)

    out = pl.pallas_call(
        kernel,
        out_shape=jax.ShapeDtypeStruct((B, Cout, ns * th, wp), x_nchw.dtype),
        grid_spec=pltpu.PrefetchScalarGridSpec(
            num_scalar_prefetch=0,
            grid=(B, ns),
            in_specs=[
                pl.BlockSpec(memory_space=pl.ANY),   # padded input stays in HBM
                smem,   # w1, flattened [ky, kx, ci, co]
                smem,   # b1
                smem,   # w2, flattened [ky, kx, ci, co]
                smem,   # b2
            ],
            out_specs=pl.BlockSpec((1, Cout, th, wp), lambda b, s: (b, 0, s, 0)),
            scratch_shapes=[
                pltpu.VMEM((1, Cin, th + 2 * HALO, wp), x_nchw.dtype),
                pltpu.SemaphoreType.DMA(()),
            ],
        ),
        compiler_params=pltpu.CompilerParams(
            dimension_semantics=("parallel", "parallel")),
    )(xp,
      w1.astype(jnp.float32).reshape(-1),
      b1.astype(jnp.float32),
      w2.astype(jnp.float32).reshape(-1),
      b2.astype(jnp.float32))

    return out[:, :, :H, :W]


# ---------------------------------------------------------------------------
# Synthetic sub-model (stands in for module.make_model(args)) and Model.forward
# ---------------------------------------------------------------------------
def make_model_params(key, cin=3, cmid=8, cout=3, dtype=jnp.float32):
    k1, k2, k3, k4 = jax.random.split(key, 4)
    w1 = jax.random.normal(k1, (KSZ, KSZ, cin, cmid), dtype) \
        * (2.0 / (KSZ * KSZ * cin)) ** 0.5
    b1 = 0.1 * jax.random.normal(k2, (cmid,), dtype)
    w2 = jax.random.normal(k3, (KSZ, KSZ, cmid, cout), dtype) \
        * (2.0 / (KSZ * KSZ * cmid)) ** 0.5
    b2 = 0.1 * jax.random.normal(k4, (cout,), dtype)
    return {"w1": w1, "b1": b1, "w2": w2, "b2": b2}


def model_forward(params, x_nchw):
    """Equivalent of Model.forward(x): delegates to the built sub-model."""
    return fused_two_conv(x_nchw, params["w1"], params["b1"],
                          params["w2"], params["b2"])


if __name__ == "__main__":
    key = jax.random.PRNGKey(0)
    kp, kx = jax.random.split(key)

    B, C, Hh, Ww = 2, 3, 16, 16
    params = make_model_params(kp, cin=C, cmid=8, cout=3)
    x = jax.random.normal(kx, (B, C, Hh, Ww), jnp.float32)

    fwd = jax.jit(model_forward)
    out = fwd(params, x)          # H=16 -> TH=8 -> 2 H-strips (halo path tested)
    jax.block_until_ready(out)

    # Pure-JAX reference (lax.conv) sanity check.
    def ref_forward(p, xin):
        dn = ("NCHW", "HWIO", "NCHW")
        h = jax.lax.conv_general_dilated(
            xin, p["w1"], (1, 1), "SAME", dimension_numbers=dn,
            precision=jax.lax.Precision.HIGHEST)
        h = jnp.maximum(h + p["b1"][None, :, None, None], 0.0)
        y = jax.lax.conv_general_dilated(
            h, p["w2"], (1, 1), "SAME", dimension_numbers=dn,
            precision=jax.lax.Precision.HIGHEST)
        return y + p["b2"][None, :, None, None]

    ref = ref_forward(params, x)
    assert out.shape == (B, 3, Hh, Ww)
    err = float(jnp.max(jnp.abs(out - ref)))
    assert err < 2e-4, err

    print("KERNEL_OK")
</pallas_src>

<mosaic_0001>
module attributes {stable_mosaic.version = 11 : i64} {
  func.func @_fused_dehaze_kernel(%arg0: i32, %arg1: i32, %arg2: memref<2x3x20x128xf32, #tpu.memory_space<any>>, %arg3: memref<216xf32, #tpu.memory_space<smem>>, %arg4: memref<8xf32, #tpu.memory_space<smem>>, %arg5: memref<216xf32, #tpu.memory_space<smem>>, %arg6: memref<3xf32, #tpu.memory_space<smem>>, %arg7: memref<1x3x8x128xf32, #tpu.memory_space<vmem>>, %arg8: memref<1x3x12x128xf32, #tpu.memory_space<vmem>>, %arg9: memref<!tpu.dma_semaphore, #tpu.memory_space<semaphore_mem>>) attributes {dimension_semantics = [#tpu.dimension_semantics<parallel>, #tpu.dimension_semantics<parallel>], iteration_bounds = array<i64: 2, 2>, scalar_prefetch = 0 : i64, scratch_operands = 2 : i64, tpu.core_type = #tpu.core_type<tc>, window_params = [{}, {transform_indices = @transform_1, window_bounds = array<i64: 216>}, {transform_indices = @transform_2, window_bounds = array<i64: 8>}, {transform_indices = @transform_3, window_bounds = array<i64: 216>}, {transform_indices = @transform_4, window_bounds = array<i64: 3>}, {transform_indices = @transform_5, window_bounds = array<i64: 1, 3, 8, 128>}]} {
    %c8_i32 = arith.constant 8 : i32
    %0 = arith.muli %arg1, %c8_i32 : i32
    %c0_i32 = arith.constant 0 : i32
    %c0_i32_0 = arith.constant 0 : i32
    %1 = tpu.memref_slice %arg2[%arg0, %c0_i32, %0, %c0_i32_0] : memref<2x3x20x128xf32, #tpu.memory_space<any>> -> memref<1x3x12x128xf32, #tpu.memory_space<any>>
    tpu.enqueue_dma source(%1 : memref<1x3x12x128xf32, #tpu.memory_space<any>>) target(%arg8 : memref<1x3x12x128xf32, #tpu.memory_space<vmem>>) target_semaphore(%arg9 : memref<!tpu.dma_semaphore, #tpu.memory_space<semaphore_mem>>)
    %2 = tpu.iota {dimensions = array<i32: 1>} : vector<12x128xi32>
    %c1_i32 = arith.constant 1 : i32
    %3 = vector.broadcast %c1_i32 : i32 to vector<12x128xi32>
    %4 = arith.cmpi sge, %2, %3 : vector<12x128xi32>
    %c15_i32 = arith.constant 15 : i32
    %5 = vector.broadcast %c15_i32 : i32 to vector<12x128xi32>
    %6 = arith.cmpi slt, %2, %5 : vector<12x128xi32>
    %7 = tpu.iota {dimensions = array<i32: 0>} : vector<12x128xi32>
    %c8_i32_1 = arith.constant 8 : i32
    %8 = arith.muli %arg1, %c8_i32_1 : i32
    %9 = vector.broadcast %8 : i32 to vector<12x128xi32>
    %10 = arith.addi %7, %9 : vector<12x128xi32>
    %c2_i32 = arith.constant 2 : i32
    %11 = vector.broadcast %c2_i32 : i32 to vector<12x128xi32>
    %12 = arith.subi %10, %11 : vector<12x128xi32>
    %c0_i32_2 = arith.constant 0 : i32
    %13 = vector.broadcast %c0_i32_2 : i32 to vector<12x128xi32>
    %14 = arith.cmpi sge, %12, %13 : vector<12x128xi32>
    %c16_i32 = arith.constant 16 : i32
    %15 = vector.broadcast %c16_i32 : i32 to vector<12x128xi32>
    %16 = arith.cmpi slt, %12, %15 : vector<12x128xi32>
    %17 = arith.andi %14, %16 : vector<12x128xi1>
    %c0_i32_3 = arith.constant 0 : i32
    %c0_i32_4 = arith.constant 0 : i32
    %18 = tpu.memref_slice %arg2[%arg0, %c0_i32_3, %0, %c0_i32_4] : memref<2x3x20x128xf32, #tpu.memory_space<any>> -> memref<1x3x12x128xf32, #tpu.memory_space<any>>
    tpu.wait_dma2 semaphore(%arg9 : memref<!tpu.dma_semaphore, #tpu.memory_space<semaphore_mem>>) src(%18 : memref<1x3x12x128xf32, #tpu.memory_space<any>>) dst(%arg8 : memref<1x3x12x128xf32, #tpu.memory_space<vmem>>)
    %cst = arith.constant 0.000000e+00 : f32
    %19 = vector.broadcast %cst : f32 to vector<12x128xf32>
    %c0 = arith.constant 0 : index
    %c0_5 = arith.constant 0 : index
    %c0_6 = arith.constant 0 : index
    %c0_7 = arith.constant 0 : index
    %20 = vector.load %arg8[%c0, %c0_5, %c0_6, %c0_7] : memref<1x3x12x128xf32, #tpu.memory_space<vmem>>, vector<1x1x12x128xf32>
    %21 = vector.shape_cast %20 : vector<1x1x12x128xf32> to vector<12x128xf32>
    %c1_i32_8 = arith.constant 1 : i32
    %22 = tpu.dynamic_rotate %21 by %c1_i32_8 dim 1 : vector<12x128xf32>, i32 -> vector<12x128xf32>
    %cst_9 = arith.constant 0.000000e+00 : f32
    %23 = vector.broadcast %cst_9 : f32 to vector<12x128xf32>
    %24 = arith.select %4, %22, %23 : vector<12x128xi1>, vector<12x128xf32>
    %c127_i32 = arith.constant 127 : i32
    %25 = tpu.dynamic_rotate %21 by %c127_i32 dim 1 : vector<12x128xf32>, i32 -> vector<12x128xf32>
    %cst_10 = arith.constant 0.000000e+00 : f32
    %26 = vector.broadcast %cst_10 : f32 to vector<12x128xf32>
    %27 = arith.select %6, %25, %26 : vector<12x128xi1>, vector<12x128xf32>
    %c1_i32_11 = arith.constant 1 : i32
    %28 = tpu.dynamic_rotate %24 by %c1_i32_11 dim 0 : vector<12x128xf32>, i32 -> vector<12x128xf32>
    %c0_12 = arith.constant 0 : index
    %29 = memref.load %arg3[%c0_12] : memref<216xf32, #tpu.memory_space<smem>>
    %30 = vector.broadcast %29 : f32 to vector<12x128xf32>
    %31 = arith.mulf %30, %28 : vector<12x128xf32>
    %32 = arith.addf %19, %31 : vector<12x128xf32>
    %c1 = arith.constant 1 : index
    %33 = memref.load %arg3[%c1] : memref<216xf32, #tpu.memory_space<smem>>
    %34 = vector.broadcast %33 : f32 to vector<12x128xf32>
    %35 = arith.mulf %34, %28 : vector<12x128xf32>
    %36 = arith.addf %19, %35 : vector<12x128xf32>
    %c2 = arith.constant 2 : index
    %37 = memref.load %arg3[%c2] : memref<216xf32, #tpu.memory_space<smem>>
    %38 = vector.broadcast %37 : f32 to vector<12x128xf32>
    %39 = arith.mulf %38, %28 : vector<12x128xf32>
    %40 = arith.addf %19, %39 : vector<12x128xf32>
    %c3 = arith.constant 3 : index
    %41 = memref.load %arg3[%c3] : memref<216xf32, #tpu.memory_space<smem>>
    %42 = vector.broadcast %41 : f32 to vector<12x128xf32>
    %43 = arith.mulf %42, %28 : vector<12x128xf32>
    %44 = arith.addf %19, %43 : vector<12x128xf32>
    %c4 = arith.constant 4 : index
    %45 = memref.load %arg3[%c4] : memref<216xf32, #tpu.memory_space<smem>>
    %46 = vector.broadcast %45 : f32 to vector<12x128xf32>
    %47 = arith.mulf %46, %28 : vector<12x128xf32>
    %48 = arith.addf %19, %47 : vector<12x128xf32>
    %c5 = arith.constant 5 : index
    %49 = memref.load %arg3[%c5] : memref<216xf32, #tpu.memory_space<smem>>
    %50 = vector.broadcast %49 : f32 to vector<12x128xf32>
    %51 = arith.mulf %50, %28 : vector<12x128xf32>
    %52 = arith.addf %19, %51 : vector<12x128xf32>
    %c6 = arith.constant 6 : index
    %53 = memref.load %arg3[%c6] : memref<216xf32, #tpu.memory_space<smem>>
    %54 = vector.broadcast %53 : f32 to vector<12x128xf32>
    %55 = arith.mulf %54, %28 : vector<12x128xf32>
    %56 = arith.addf %19, %55 : vector<12x128xf32>
    %c7 = arith.constant 7 : index
    %57 = memref.load %arg3[%c7] : memref<216xf32, #tpu.memory_space<smem>>
    %58 = vector.broadcast %57 : f32 to vector<12x128xf32>
    %59 = arith.mulf %58, %28 : vector<12x128xf32>
    %60 = arith.addf %19, %59 : vector<12x128xf32>
    %c72 = arith.constant 72 : index
    %61 = memref.load %arg3[%c72] : memref<216xf32, #tpu.memory_space<smem>>
    %62 = vector.broadcast %61 : f32 to vector<12x128xf32>
    %63 = arith.mulf %62, %24 : vector<12x128xf32>
    %64 = arith.addf %32, %63 : vector<12x128xf32>
    %c73 = arith.constant 73 : index
    %65 = memref.load %arg3[%c73] : memref<216xf32, #tpu.memory_space<smem>>
    %66 = vector.broadcast %65 : f32 to vector<12x128xf32>
    %67 = arith.mulf %66, %24 : vector<12x128xf32>
    %68 = arith.addf %36, %67 : vector<12x128xf32>
    %c74 = arith.constant 74 : index
    %69 = memref.load %arg3[%c74] : memref<216xf32, #tpu.memory_space<smem>>
    %70 = vector.broadcast %69 : f32 to vector<12x128xf32>
    %71 = arith.mulf %70, %24 : vector<12x128xf32>
    %72 = arith.addf %40, %71 : vector<12x128xf32>
    %c75 = arith.constant 75 : index
    %73 = memref.load %arg3[%c75] : memref<216xf32, #tpu.memory_space<smem>>
    %74 = vector.broadcast %73 : f32 to vector<12x128xf32>
    %75 = arith.mulf %74, %24 : vector<12x128xf32>
    %76 = arith.addf %44, %75 : vector<12x128xf32>
    %c76 = arith.constant 76 : index
    %77 = memref.load %arg3[%c76] : memref<216xf32, #tpu.memory_space<smem>>
    %78 = vector.broadcast %77 : f32 to vector<12x128xf32>
    %79 = arith.mulf %78, %24 : vector<12x128xf32>
    %80 = arith.addf %48, %79 : vector<12x128xf32>
    %c77 = arith.constant 77 : index
    %81 = memref.load %arg3[%c77] : memref<216xf32, #tpu.memory_space<smem>>
    %82 = vector.broadcast %81 : f32 to vector<12x128xf32>
    %83 = arith.mulf %82, %24 : vector<12x128xf32>
    %84 = arith.addf %52, %83 : vector<12x128xf32>
    %c78 = arith.constant 78 : index
    %85 = memref.load %arg3[%c78] : memref<216xf32, #tpu.memory_space<smem>>
    %86 = vector.broadcast %85 : f32 to vector<12x128xf32>
    %87 = arith.mulf %86, %24 : vector<12x128xf32>
    %88 = arith.addf %56, %87 : vector<12x128xf32>
    %c79 = arith.constant 79 : index
    %89 = memref.load %arg3[%c79] : memref<216xf32, #tpu.memory_space<smem>>
    %90 = vector.broadcast %89 : f32 to vector<12x128xf32>
    %91 = arith.mulf %90, %24 : vector<12x128xf32>
    %92 = arith.addf %60, %91 : vector<12x128xf32>
    %c11_i32 = arith.constant 11 : i32
    %93 = tpu.dynamic_rotate %24 by %c11_i32 dim 0 : vector<12x128xf32>, i32 -> vector<12x128xf32>
    %c144 = arith.constant 144 : index
    %94 = memref.load %arg3[%c144] : memref<216xf32, #tpu.memory_space<smem>>
    %95 = vector.broadcast %94 : f32 to vector<12x128xf32>
    %96 = arith.mulf %95, %93 : vector<12x128xf32>
    %97 = arith.addf %64, %96 : vector<12x128xf32>
    %c145 = arith.constant 145 : index
    %98 = memref.load %arg3[%c145] : memref<216xf32, #tpu.memory_space<smem>>
    %99 = vector.broadcast %98 : f32 to vector<12x128xf32>
    %100 = arith.mulf %99, %93 : vector<12x128xf32>
    %101 = arith.addf %68, %100 : vector<12x128xf32>
    %c146 = arith.constant 146 : index
    %102 = memref.load %arg3[%c146] : memref<216xf32, #tpu.memory_space<smem>>
    %103 = vector.broadcast %102 : f32 to vector<12x128xf32>
    %104 = arith.mulf %103, %93 : vector<12x128xf32>
    %105 = arith.addf %72, %104 : vector<12x128xf32>
    %c147 = arith.constant 147 : index
    %106 = memref.load %arg3[%c147] : memref<216xf32, #tpu.memory_space<smem>>
    %107 = vector.broadcast %106 : f32 to vector<12x128xf32>
    %108 = arith.mulf %107, %93 : vector<12x128xf32>
    %109 = arith.addf %76, %108 : vector<12x128xf32>
    %c148 = arith.constant 148 : index
    %110 = memref.load %arg3[%c148] : memref<216xf32, #tpu.memory_space<smem>>
    %111 = vector.broadcast %110 : f32 to vector<12x128xf32>
    %112 = arith.mulf %111, %93 : vector<12x128xf32>
    %113 = arith.addf %80, %112 : vector<12x128xf32>
    %c149 = arith.constant 149 : index
    %114 = memref.load %arg3[%c149] : memref<216xf32, #tpu.memory_space<smem>>
    %115 = vector.broadcast %114 : f32 to vector<12x128xf32>
    %116 = arith.mulf %115, %93 : vector<12x128xf32>
    %117 = arith.addf %84, %116 : vector<12x128xf32>
    %c150 = arith.constant 150 : index
    %118 = memref.load %arg3[%c150] : memref<216xf32, #tpu.memory_space<smem>>
    %119 = vector.broadcast %118 : f32 to vector<12x128xf32>
    %120 = arith.mulf %119, %93 : vector<12x128xf32>
    %121 = arith.addf %88, %120 : vector<12x128xf32>
    %c151 = arith.constant 151 : index
    %122 = memref.load %arg3[%c151] : memref<216xf32, #tpu.memory_space<smem>>
    %123 = vector.broadcast %122 : f32 to vector<12x128xf32>
    %124 = arith.mulf %123, %93 : vector<12x128xf32>
    %125 = arith.addf %92, %124 : vector<12x128xf32>
    %c1_i32_13 = arith.constant 1 : i32
    %126 = tpu.dynamic_rotate %21 by %c1_i32_13 dim 0 : vector<12x128xf32>, i32 -> vector<12x128xf32>
    %c24 = arith.constant 24 : index
    %127 = memref.load %arg3[%c24] : memref<216xf32, #tpu.memory_space<smem>>
    %128 = vector.broadcast %127 : f32 to vector<12x128xf32>
    %129 = arith.mulf %128, %126 : vector<12x128xf32>
    %130 = arith.addf %97, %129 : vector<12x128xf32>
    %c25 = arith.constant 25 : index
    %131 = memref.load %arg3[%c25] : memref<216xf32, #tpu.memory_space<smem>>
    %132 = vector.broadcast %131 : f32 to vector<12x128xf32>
    %133 = arith.mulf %132, %126 : vector<12x128xf32>
    %134 = arith.addf %101, %133 : vector<12x128xf32>
    %c26 = arith.constant 26 : index
    %135 = memref.load %arg3[%c26] : memref<216xf32, #tpu.memory_space<smem>>
    %136 = vector.broadcast %135 : f32 to vector<12x128xf32>
    %137 = arith.mulf %136, %126 : vector<12x128xf32>
    %138 = arith.addf %105, %137 : vector<12x128xf32>
    %c27 = arith.constant 27 : index
    %139 = memref.load %arg3[%c27] : memref<216xf32, #tpu.memory_space<smem>>
    %140 = vector.broadcast %139 : f32 to vector<12x128xf32>
    %141 = arith.mulf %140, %126 : vector<12x128xf32>
    %142 = arith.addf %109, %141 : vector<12x128xf32>
    %c28 = arith.constant 28 : index
    %143 = memref.load %arg3[%c28] : memref<216xf32, #tpu.memory_space<smem>>
    %144 = vector.broadcast %143 : f32 to vector<12x128xf32>
    %145 = arith.mulf %144, %126 : vector<12x128xf32>
    %146 = arith.addf %113, %145 : vector<12x128xf32>
    %c29 = arith.constant 29 : index
    %147 = memref.load %arg3[%c29] : memref<216xf32, #tpu.memory_space<smem>>
    %148 = vector.broadcast %147 : f32 to vector<12x128xf32>
    %149 = arith.mulf %148, %126 : vector<12x128xf32>
    %150 = arith.addf %117, %149 : vector<12x128xf32>
    %c30 = arith.constant 30 : index
    %151 = memref.load %arg3[%c30] : memref<216xf32, #tpu.memory_space<smem>>
    %152 = vector.broadcast %151 : f32 to vector<12x128xf32>
    %153 = arith.mulf %152, %126 : vector<12x128xf32>
    %154 = arith.addf %121, %153 : vector<12x128xf32>
    %c31 = arith.constant 31 : index
    %155 = memref.load %arg3[%c31] : memref<216xf32, #tpu.memory_space<smem>>
    %156 = vector.broadcast %155 : f32 to vector<12x128xf32>
    %157 = arith.mulf %156, %126 : vector<12x128xf32>
    %158 = arith.addf %125, %157 : vector<12x128xf32>
    %c96 = arith.constant 96 : index
    %159 = memref.load %arg3[%c96] : memref<216xf32, #tpu.memory_space<smem>>
    %160 = vector.broadcast %159 : f32 to vector<12x128xf32>
    %161 = arith.mulf %160, %21 : vector<12x128xf32>
    %162 = arith.addf %130, %161 : vector<12x128xf32>
    %c97 = arith.constant 97 : index
    %163 = memref.load %arg3[%c97] : memref<216xf32, #tpu.memory_space<smem>>
    %164 = vector.broadcast %163 : f32 to vector<12x128xf32>
    %165 = arith.mulf %164, %21 : vector<12x128xf32>
    %166 = arith.addf %134, %165 : vector<12x128xf32>
    %c98 = arith.constant 98 : index
    %167 = memref.load %arg3[%c98] : memref<216xf32, #tpu.memory_space<smem>>
    %168 = vector.broadcast %167 : f32 to vector<12x128xf32>
    %169 = arith.mulf %168, %21 : vector<12x128xf32>
    %170 = arith.addf %138, %169 : vector<12x128xf32>
    %c99 = arith.constant 99 : index
    %171 = memref.load %arg3[%c99] : memref<216xf32, #tpu.memory_space<smem>>
    %172 = vector.broadcast %171 : f32 to vector<12x128xf32>
    %173 = arith.mulf %172, %21 : vector<12x128xf32>
    %174 = arith.addf %142, %173 : vector<12x128xf32>
    %c100 = arith.constant 100 : index
    %175 = memref.load %arg3[%c100] : memref<216xf32, #tpu.memory_space<smem>>
    %176 = vector.broadcast %175 : f32 to vector<12x128xf32>
    %177 = arith.mulf %176, %21 : vector<12x128xf32>
    %178 = arith.addf %146, %177 : vector<12x128xf32>
    %c101 = arith.constant 101 : index
    %179 = memref.load %arg3[%c101] : memref<216xf32, #tpu.memory_space<smem>>
    %180 = vector.broadcast %179 : f32 to vector<12x128xf32>
    %181 = arith.mulf %180, %21 : vector<12x128xf32>
    %182 = arith.addf %150, %181 : vector<12x128xf32>
    %c102 = arith.constant 102 : index
    %183 = memref.load %arg3[%c102] : memref<216xf32, #tpu.memory_space<smem>>
    %184 = vector.broadcast %183 : f32 to vector<12x128xf32>
    %185 = arith.mulf %184, %21 : vector<12x128xf32>
    %186 = arith.addf %154, %185 : vector<12x128xf32>
    %c103 = arith.constant 103 : index
    %187 = memref.load %arg3[%c103] : memref<216xf32, #tpu.memory_space<smem>>
    %188 = vector.broadcast %187 : f32 to vector<12x128xf32>
    %189 = arith.mulf %188, %21 : vector<12x128xf32>
    %190 = arith.addf %158, %189 : vector<12x128xf32>
    %c11_i32_14 = arith.constant 11 : i32
    %191 = tpu.dynamic_rotate %21 by %c11_i32_14 dim 0 : vector<12x128xf32>, i32 -> vector<12x128xf32>
    %c168 = arith.constant 168 : index
    %192 = memref.load %arg3[%c168] : memref<216xf32, #tpu.memory_space<smem>>
    %193 = vector.broadcast %192 : f32 to vector<12x128xf32>
    %194 = arith.mulf %193, %191 : vector<12x128xf32>
    %195 = arith.addf %162, %194 : vector<12x128xf32>
    %c169 = arith.constant 169 : index
    %196 = memref.load %arg3[%c169] : memref<216xf32, #tpu.memory_space<smem>>
    %197 = vector.broadcast %196 : f32 to vector<12x128xf32>
    %198 = arith.mulf %197, %191 : vector<12x128xf32>
    %199 = arith.addf %166, %198 : vector<12x128xf32>
    %c170 = arith.constant 170 : index
    %200 = memref.load %arg3[%c170] : memref<216xf32, #tpu.memory_space<smem>>
    %201 = vector.broadcast %200 : f32 to vector<12x128xf32>
    %202 = arith.mulf %201, %191 : vector<12x128xf32>
    %203 = arith.addf %170, %202 : vector<12x128xf32>
    %c171 = arith.constant 171 : index
    %204 = memref.load %arg3[%c171] : memref<216xf32, #tpu.memory_space<smem>>
    %205 = vector.broadcast %204 : f32 to vector<12x128xf32>
    %206 = arith.mulf %205, %191 : vector<12x128xf32>
    %207 = arith.addf %174, %206 : vector<12x128xf32>
    %c172 = arith.constant 172 : index
    %208 = memref.load %arg3[%c172] : memref<216xf32, #tpu.memory_space<smem>>
    %209 = vector.broadcast %208 : f32 to vector<12x128xf32>
    %210 = arith.mulf %209, %191 : vector<12x128xf32>
    %211 = arith.addf %178, %210 : vector<12x128xf32>
    %c173 = arith.constant 173 : index
    %212 = memref.load %arg3[%c173] : memref<216xf32, #tpu.memory_space<smem>>
    %213 = vector.broadcast %212 : f32 to vector<12x128xf32>
    %214 = arith.mulf %213, %191 : vector<12x128xf32>
    %215 = arith.addf %182, %214 : vector<12x128xf32>
    %c174 = arith.constant 174 : index
    %216 = memref.load %arg3[%c174] : memref<216xf32, #tpu.memory_space<smem>>
    %217 = vector.broadcast %216 : f32 to vector<12x128xf32>
    %218 = arith.mulf %217, %191 : vector<12x128xf32>
    %219 = arith.addf %186, %218 : vector<12x128xf32>
    %c175 = arith.constant 175 : index
    %220 = memref.load %arg3[%c175] : memref<216xf32, #tpu.memory_space<smem>>
    %221 = vector.broadcast %220 : f32 to vector<12x128xf32>
    %222 = arith.mulf %221, %191 : vector<12x128xf32>
    %223 = arith.addf %190, %222 : vector<12x128xf32>
    %c1_i32_15 = arith.constant 1 : i32
    %224 = tpu.dynamic_rotate %27 by %c1_i32_15 dim 0 : vector<12x128xf32>, i32 -> vector<12x128xf32>
    %c48 = arith.constant 48 : index
    %225 = memref.load %arg3[%c48] : memref<216xf32, #tpu.memory_space<smem>>
    %226 = vector.broadcast %225 : f32 to vector<12x128xf32>
    %227 = arith.mulf %226, %224 : vector<12x128xf32>
    %228 = arith.addf %195, %227 : vector<12x128xf32>
    %c49 = arith.constant 49 : index
    %229 = memref.load %arg3[%c49] : memref<216xf32, #tpu.memory_space<smem>>
    %230 = vector.broadcast %229 : f32 to vector<12x128xf32>
    %231 = arith.mulf %230, %224 : vector<12x128xf32>
    %232 = arith.addf %199, %231 : vector<12x128xf32>
    %c50 = arith.constant 50 : index
    %233 = memref.load %arg3[%c50] : memref<216xf32, #tpu.memory_space<smem>>
    %234 = vector.broadcast %233 : f32 to vector<12x128xf32>
    %235 = arith.mulf %234, %224 : vector<12x128xf32>
    %236 = arith.addf %203, %235 : vector<12x128xf32>
    %c51 = arith.constant 51 : index
    %237 = memref.load %arg3[%c51] : memref<216xf32, #tpu.memory_space<smem>>
    %238 = vector.broadcast %237 : f32 to vector<12x128xf32>
    %239 = arith.mulf %238, %224 : vector<12x128xf32>
    %240 = arith.addf %207, %239 : vector<12x128xf32>
    %c52 = arith.constant 52 : index
    %241 = memref.load %arg3[%c52] : memref<216xf32, #tpu.memory_space<smem>>
    %242 = vector.broadcast %241 : f32 to vector<12x128xf32>
    %243 = arith.mulf %242, %224 : vector<12x128xf32>
    %244 = arith.addf %211, %243 : vector<12x128xf32>
    %c53 = arith.constant 53 : index
    %245 = memref.load %arg3[%c53] : memref<216xf32, #tpu.memory_space<smem>>
    %246 = vector.broadcast %245 : f32 to vector<12x128xf32>
    %247 = arith.mulf %246, %224 : vector<12x128xf32>
    %248 = arith.addf %215, %247 : vector<12x128xf32>
    %c54 = arith.constant 54 : index
    %249 = memref.load %arg3[%c54] : memref<216xf32, #tpu.memory_space<smem>>
    %250 = vector.broadcast %249 : f32 to vector<12x128xf32>
    %251 = arith.mulf %250, %224 : vector<12x128xf32>
    %252 = arith.addf %219, %251 : vector<12x128xf32>
    %c55 = arith.constant 55 : index
    %253 = memref.load %arg3[%c55] : memref<216xf32, #tpu.memory_space<smem>>
    %254 = vector.broadcast %253 : f32 to vector<12x128xf32>
    %255 = arith.mulf %254, %224 : vector<12x128xf32>
    %256 = arith.addf %223, %255 : vector<12x128xf32>
    %c120 = arith.constant 120 : index
    %257 = memref.load %arg3[%c120] : memref<216xf32, #tpu.memory_space<smem>>
    %258 = vector.broadcast %257 : f32 to vector<12x128xf32>
    %259 = arith.mulf %258, %27 : vector<12x128xf32>
    %260 = arith.addf %228, %259 : vector<12x128xf32>
    %c121 = arith.constant 121 : index
    %261 = memref.load %arg3[%c121] : memref<216xf32, #tpu.memory_space<smem>>
    %262 = vector.broadcast %261 : f32 to vector<12x128xf32>
    %263 = arith.mulf %262, %27 : vector<12x128xf32>
    %264 = arith.addf %232, %263 : vector<12x128xf32>
    %c122 = arith.constant 122 : index
    %265 = memref.load %arg3[%c122] : memref<216xf32, #tpu.memory_space<smem>>
    %266 = vector.broadcast %265 : f32 to vector<12x128xf32>
    %267 = arith.mulf %266, %27 : vector<12x128xf32>
    %268 = arith.addf %236, %267 : vector<12x128xf32>
    %c123 = arith.constant 123 : index
    %269 = memref.load %arg3[%c123] : memref<216xf32, #tpu.memory_space<smem>>
    %270 = vector.broadcast %269 : f32 to vector<12x128xf32>
    %271 = arith.mulf %270, %27 : vector<12x128xf32>
    %272 = arith.addf %240, %271 : vector<12x128xf32>
    %c124 = arith.constant 124 : index
    %273 = memref.load %arg3[%c124] : memref<216xf32, #tpu.memory_space<smem>>
    %274 = vector.broadcast %273 : f32 to vector<12x128xf32>
    %275 = arith.mulf %274, %27 : vector<12x128xf32>
    %276 = arith.addf %244, %275 : vector<12x128xf32>
    %c125 = arith.constant 125 : index
    %277 = memref.load %arg3[%c125] : memref<216xf32, #tpu.memory_space<smem>>
    %278 = vector.broadcast %277 : f32 to vector<12x128xf32>
    %279 = arith.mulf %278, %27 : vector<12x128xf32>
    %280 = arith.addf %248, %279 : vector<12x128xf32>
    %c126 = arith.constant 126 : index
    %281 = memref.load %arg3[%c126] : memref<216xf32, #tpu.memory_space<smem>>
    %282 = vector.broadcast %281 : f32 to vector<12x128xf32>
    %283 = arith.mulf %282, %27 : vector<12x128xf32>
    %284 = arith.addf %252, %283 : vector<12x128xf32>
    %c127 = arith.constant 127 : index
    %285 = memref.load %arg3[%c127] : memref<216xf32, #tpu.memory_space<smem>>
    %286 = vector.broadcast %285 : f32 to vector<12x128xf32>
    %287 = arith.mulf %286, %27 : vector<12x128xf32>
    %288 = arith.addf %256, %287 : vector<12x128xf32>
    %c11_i32_16 = arith.constant 11 : i32
    %289 = tpu.dynamic_rotate %27 by %c11_i32_16 dim 0 : vector<12x128xf32>, i32 -> vector<12x128xf32>
    %c192 = arith.constant 192 : index
    %290 = memref.load %arg3[%c192] : memref<216xf32, #tpu.memory_space<smem>>
    %291 = vector.broadcast %290 : f32 to vector<12x128xf32>
    %292 = arith.mulf %291, %289 : vector<12x128xf32>
    %293 = arith.addf %260, %292 : vector<12x128xf32>
    %c193 = arith.constant 193 : index
    %294 = memref.load %arg3[%c193] : memref<216xf32, #tpu.memory_space<smem>>
    %295 = vector.broadcast %294 : f32 to vector<12x128xf32>
    %296 = arith.mulf %295, %289 : vector<12x128xf32>
    %297 = arith.addf %264, %296 : vector<12x128xf32>
    %c194 = arith.constant 194 : index
    %298 = memref.load %arg3[%c194] : memref<216xf32, #tpu.memory_space<smem>>
    %299 = vector.broadcast %298 : f32 to vector<12x128xf32>
    %300 = arith.mulf %299, %289 : vector<12x128xf32>
    %301 = arith.addf %268, %300 : vector<12x128xf32>
    %c195 = arith.constant 195 : index
    %302 = memref.load %arg3[%c195] : memref<216xf32, #tpu.memory_space<smem>>
    %303 = vector.broadcast %302 : f32 to vector<12x128xf32>
    %304 = arith.mulf %303, %289 : vector<12x128xf32>
    %305 = arith.addf %272, %304 : vector<12x128xf32>
    %c196 = arith.constant 196 : index
    %306 = memref.load %arg3[%c196] : memref<216xf32, #tpu.memory_space<smem>>
    %307 = vector.broadcast %306 : f32 to vector<12x128xf32>
    %308 = arith.mulf %307, %289 : vector<12x128xf32>
    %309 = arith.addf %276, %308 : vector<12x128xf32>
    %c197 = arith.constant 197 : index
    %310 = memref.load %arg3[%c197] : memref<216xf32, #tpu.memory_space<smem>>
    %311 = vector.broadcast %310 : f32 to vector<12x128xf32>
    %312 = arith.mulf %311, %289 : vector<12x128xf32>
    %313 = arith.addf %280, %312 : vector<12x128xf32>
    %c198 = arith.constant 198 : index
    %314 = memref.load %arg3[%c198] : memref<216xf32, #tpu.memory_space<smem>>
    %315 = vector.broadcast %314 : f32 to vector<12x128xf32>
    %316 = arith.mulf %315, %289 : vector<12x128xf32>
    %317 = arith.addf %284, %316 : vector<12x128xf32>
    %c199 = arith.constant 199 : index
    %318 = memref.load %arg3[%c199] : memref<216xf32, #tpu.memory_space<smem>>
    %319 = vector.broadcast %318 : f32 to vector<12x128xf32>
    %320 = arith.mulf %319, %289 : vector<12x128xf32>
    %321 = arith.addf %288, %320 : vector<12x128xf32>
    %c0_17 = arith.constant 0 : index
    %c1_18 = arith.constant 1 : index
    %c0_19 = arith.constant 0 : index
    %c0_20 = arith.constant 0 : index
    %322 = vector.load %arg8[%c0_17, %c1_18, %c0_19, %c0_20] : memref<1x3x12x128xf32, #tpu.memory_space<vmem>>, vector<1x1x12x128xf32>
    %323 = vector.shape_cast %322 : vector<1x1x12x128xf32> to vector<12x128xf32>
    %c1_i32_21 = arith.constant 1 : i32
    %324 = tpu.dynamic_rotate %323 by %c1_i32_21 dim 1 : vector<12x128xf32>, i32 -> vector<12x128xf32>
    %cst_22 = arith.constant 0.000000e+00 : f32
    %325 = vector.broadcast %cst_22 : f32 to vector<12x128xf32>
    %326 = arith.select %4, %324, %325 : vector<12x128xi1>, vector<12x128xf32>
    %c127_i32_23 = arith.constant 127 : i32
    %327 = tpu.dynamic_rotate %323 by %c127_i32_23 dim 1 : vector<12x128xf32>, i32 -> vector<12x128xf32>
    %cst_24 = arith.constant 0.000000e+00 : f32
    %328 = vector.broadcast %cst_24 : f32 to vector<12x128xf32>
    %329 = arith.select %6, %327, %328 : vector<12x128xi1>, vector<12x128xf32>
    %c1_i32_25 = arith.constant 1 : i32
    %330 = tpu.dynamic_rotate %326 by %c1_i32_25 dim 0 : vector<12x128xf32>, i32 -> vector<12x128xf32>
    %c8 = arith.constant 8 : index
    %331 = memref.load %arg3[%c8] : memref<216xf32, #tpu.memory_space<smem>>
    %332 = vector.broadcast %331 : f32 to vector<12x128xf32>
    %333 = arith.mulf %332, %330 : vector<12x128xf32>
    %334 = arith.addf %293, %333 : vector<12x128xf32>
    %c9 = arith.constant 9 : index
    %335 = memref.load %arg3[%c9] : memref<216xf32, #tpu.memory_space<smem>>
    %336 = vector.broadcast %335 : f32 to vector<12x128xf32>
    %337 = arith.mulf %336, %330 : vector<12x128xf32>
    %338 = arith.addf %297, %337 : vector<12x128xf32>
    %c10 = arith.constant 10 : index
    %339 = memref.load %arg3[%c10] : memref<216xf32, #tpu.memory_space<smem>>
    %340 = vector.broadcast %339 : f32 to vector<12x128xf32>
    %341 = arith.mulf %340, %330 : vector<12x128xf32>
    %342 = arith.addf %301, %341 : vector<12x128xf32>
    %c11 = arith.constant 11 : index
    %343 = memref.load %arg3[%c11] : memref<216xf32, #tpu.memory_space<smem>>
    %344 = vector.broadcast %343 : f32 to vector<12x128xf32>
    %345 = arith.mulf %344, %330 : vector<12x128xf32>
    %346 = arith.addf %305, %345 : vector<12x128xf32>
    %c12 = arith.constant 12 : index
    %347 = memref.load %arg3[%c12] : memref<216xf32, #tpu.memory_space<smem>>
    %348 = vector.broadcast %347 : f32 to vector<12x128xf32>
    %349 = arith.mulf %348, %330 : vector<12x128xf32>
    %350 = arith.addf %309, %349 : vector<12x128xf32>
    %c13 = arith.constant 13 : index
    %351 = memref.load %arg3[%c13] : memref<216xf32, #tpu.memory_space<smem>>
    %352 = vector.broadcast %351 : f32 to vector<12x128xf32>
    %353 = arith.mulf %352, %330 : vector<12x128xf32>
    %354 = arith.addf %313, %353 : vector<12x128xf32>
    %c14 = arith.constant 14 : index
    %355 = memref.load %arg3[%c14] : memref<216xf32, #tpu.memory_space<smem>>
    %356 = vector.broadcast %355 : f32 to vector<12x128xf32>
    %357 = arith.mulf %356, %330 : vector<12x128xf32>
    %358 = arith.addf %317, %357 : vector<12x128xf32>
    %c15 = arith.constant 15 : index
    %359 = memref.load %arg3[%c15] : memref<216xf32, #tpu.memory_space<smem>>
    %360 = vector.broadcast %359 : f32 to vector<12x128xf32>
    %361 = arith.mulf %360, %330 : vector<12x128xf32>
    %362 = arith.addf %321, %361 : vector<12x128xf32>
    %c80 = arith.constant 80 : index
    %363 = memref.load %arg3[%c80] : memref<216xf32, #tpu.memory_space<smem>>
    %364 = vector.broadcast %363 : f32 to vector<12x128xf32>
    %365 = arith.mulf %364, %326 : vector<12x128xf32>
    %366 = arith.addf %334, %365 : vector<12x128xf32>
    %c81 = arith.constant 81 : index
    %367 = memref.load %arg3[%c81] : memref<216xf32, #tpu.memory_space<smem>>
    %368 = vector.broadcast %367 : f32 to vector<12x128xf32>
    %369 = arith.mulf %368, %326 : vector<12x128xf32>
    %370 = arith.addf %338, %369 : vector<12x128xf32>
    %c82 = arith.constant 82 : index
    %371 = memref.load %arg3[%c82] : memref<216xf32, #tpu.memory_space<smem>>
    %372 = vector.broadcast %371 : f32 to vector<12x128xf32>
    %373 = arith.mulf %372, %326 : vector<12x128xf32>
    %374 = arith.addf %342, %373 : vector<12x128xf32>
    %c83 = arith.constant 83 : index
    %375 = memref.load %arg3[%c83] : memref<216xf32, #tpu.memory_space<smem>>
    %376 = vector.broadcast %375 : f32 to vector<12x128xf32>
    %377 = arith.mulf %376, %326 : vector<12x128xf32>
    %378 = arith.addf %346, %377 : vector<12x128xf32>
    %c84 = arith.constant 84 : index
    %379 = memref.load %arg3[%c84] : memref<216xf32, #tpu.memory_space<smem>>
    %380 = vector.broadcast %379 : f32 to vector<12x128xf32>
    %381 = arith.mulf %380, %326 : vector<12x128xf32>
    %382 = arith.addf %350, %381 : vector<12x128xf32>
    %c85 = arith.constant 85 : index
    %383 = memref.load %arg3[%c85] : memref<216xf32, #tpu.memory_space<smem>>
    %384 = vector.broadcast %383 : f32 to vector<12x128xf32>
    %385 = arith.mulf %384, %326 : vector<12x128xf32>
    %386 = arith.addf %354, %385 : vector<12x128xf32>
    %c86 = arith.constant 86 : index
    %387 = memref.load %arg3[%c86] : memref<216xf32, #tpu.memory_space<smem>>
    %388 = vector.broadcast %387 : f32 to vector<12x128xf32>
    %389 = arith.mulf %388, %326 : vector<12x128xf32>
    %390 = arith.addf %358, %389 : vector<12x128xf32>
    %c87 = arith.constant 87 : index
    %391 = memref.load %arg3[%c87] : memref<216xf32, #tpu.memory_space<smem>>
    %392 = vector.broadcast %391 : f32 to vector<12x128xf32>
    %393 = arith.mulf %392, %326 : vector<12x128xf32>
    %394 = arith.addf %362, %393 : vector<12x128xf32>
    %c11_i32_26 = arith.constant 11 : i32
    %395 = tpu.dynamic_rotate %326 by %c11_i32_26 dim 0 : vector<12x128xf32>, i32 -> vector<12x128xf32>
    %c152 = arith.constant 152 : index
    %396 = memref.load %arg3[%c152] : memref<216xf32, #tpu.memory_space<smem>>
    %397 = vector.broadcast %396 : f32 to vector<12x128xf32>
    %398 = arith.mulf %397, %395 : vector<12x128xf32>
    %399 = arith.addf %366, %398 : vector<12x128xf32>
    %c153 = arith.constant 153 : index
    %400 = memref.load %arg3[%c153] : memref<216xf32, #tpu.memory_space<smem>>
    %401 = vector.broadcast %400 : f32 to vector<12x128xf32>
    %402 = arith.mulf %401, %395 : vector<12x128xf32>
    %403 = arith.addf %370, %402 : vector<12x128xf32>
    %c154 = arith.constant 154 : index
    %404 = memref.load %arg3[%c154] : memref<216xf32, #tpu.memory_space<smem>>
    %405 = vector.broadcast %404 : f32 to vector<12x128xf32>
    %406 = arith.mulf %405, %395 : vector<12x128xf32>
    %407 = arith.addf %374, %406 : vector<12x128xf32>
    %c155 = arith.constant 155 : index
    %408 = memref.load %arg3[%c155] : memref<216xf32, #tpu.memory_space<smem>>
    %409 = vector.broadcast %408 : f32 to vector<12x128xf32>
    %410 = arith.mulf %409, %395 : vector<12x128xf32>
    %411 = arith.addf %378, %410 : vector<12x128xf32>
    %c156 = arith.constant 156 : index
    %412 = memref.load %arg3[%c156] : memref<216xf32, #tpu.memory_space<smem>>
    %413 = vector.broadcast %412 : f32 to vector<12x128xf32>
    %414 = arith.mulf %413, %395 : vector<12x128xf32>
    %415 = arith.addf %382, %414 : vector<12x128xf32>
    %c157 = arith.constant 157 : index
    %416 = memref.load %arg3[%c157] : memref<216xf32, #tpu.memory_space<smem>>
    %417 = vector.broadcast %416 : f32 to vector<12x128xf32>
    %418 = arith.mulf %417, %395 : vector<12x128xf32>
    %419 = arith.addf %386, %418 : vector<12x128xf32>
    %c158 = arith.constant 158 : index
    %420 = memref.load %arg3[%c158] : memref<216xf32, #tpu.memory_space<smem>>
    %421 = vector.broadcast %420 : f32 to vector<12x128xf32>
    %422 = arith.mulf %421, %395 : vector<12x128xf32>
    %423 = arith.addf %390, %422 : vector<12x128xf32>
    %c159 = arith.constant 159 : index
    %424 = memref.load %arg3[%c159] : memref<216xf32, #tpu.memory_space<smem>>
    %425 = vector.broadcast %424 : f32 to vector<12x128xf32>
    %426 = arith.mulf %425, %395 : vector<12x128xf32>
    %427 = arith.addf %394, %426 : vector<12x128xf32>
    %c1_i32_27 = arith.constant 1 : i32
    %428 = tpu.dynamic_rotate %323 by %c1_i32_27 dim 0 : vector<12x128xf32>, i32 -> vector<12x128xf32>
    %c32 = arith.constant 32 : index
    %429 = memref.load %arg3[%c32] : memref<216xf32, #tpu.memory_space<smem>>
    %430 = vector.broadcast %429 : f32 to vector<12x128xf32>
    %431 = arith.mulf %430, %428 : vector<12x128xf32>
    %432 = arith.addf %399, %431 : vector<12x128xf32>
    %c33 = arith.constant 33 : index
    %433 = memref.load %arg3[%c33] : memref<216xf32, #tpu.memory_space<smem>>
    %434 = vector.broadcast %433 : f32 to vector<12x128xf32>
    %435 = arith.mulf %434, %428 : vector<12x128xf32>
    %436 = arith.addf %403, %435 : vector<12x128xf32>
    %c34 = arith.constant 34 : index
    %437 = memref.load %arg3[%c34] : memref<216xf32, #tpu.memory_space<smem>>
    %438 = vector.broadcast %437 : f32 to vector<12x128xf32>
    %439 = arith.mulf %438, %428 : vector<12x128xf32>
    %440 = arith.addf %407, %439 : vector<12x128xf32>
    %c35 = arith.constant 35 : index
    %441 = memref.load %arg3[%c35] : memref<216xf32, #tpu.memory_space<smem>>
    %442 = vector.broadcast %441 : f32 to vector<12x128xf32>
    %443 = arith.mulf %442, %428 : vector<12x128xf32>
    %444 = arith.addf %411, %443 : vector<12x128xf32>
    %c36 = arith.constant 36 : index
    %445 = memref.load %arg3[%c36] : memref<216xf32, #tpu.memory_space<smem>>
    %446 = vector.broadcast %445 : f32 to vector<12x128xf32>
    %447 = arith.mulf %446, %428 : vector<12x128xf32>
    %448 = arith.addf %415, %447 : vector<12x128xf32>
    %c37 = arith.constant 37 : index
    %449 = memref.load %arg3[%c37] : memref<216xf32, #tpu.memory_space<smem>>
    %450 = vector.broadcast %449 : f32 to vector<12x128xf32>
    %451 = arith.mulf %450, %428 : vector<12x128xf32>
    %452 = arith.addf %419, %451 : vector<12x128xf32>
    %c38 = arith.constant 38 : index
    %453 = memref.load %arg3[%c38] : memref<216xf32, #tpu.memory_space<smem>>
    %454 = vector.broadcast %453 : f32 to vector<12x128xf32>
    %455 = arith.mulf %454, %428 : vector<12x128xf32>
    %456 = arith.addf %423, %455 : vector<12x128xf32>
    %c39 = arith.constant 39 : index
    %457 = memref.load %arg3[%c39] : memref<216xf32, #tpu.memory_space<smem>>
    %458 = vector.broadcast %457 : f32 to vector<12x128xf32>
    %459 = arith.mulf %458, %428 : vector<12x128xf32>
    %460 = arith.addf %427, %459 : vector<12x128xf32>
    %c104 = arith.constant 104 : index
    %461 = memref.load %arg3[%c104] : memref<216xf32, #tpu.memory_space<smem>>
    %462 = vector.broadcast %461 : f32 to vector<12x128xf32>
    %463 = arith.mulf %462, %323 : vector<12x128xf32>
    %464 = arith.addf %432, %463 : vector<12x128xf32>
    %c105 = arith.constant 105 : index
    %465 = memref.load %arg3[%c105] : memref<216xf32, #tpu.memory_space<smem>>
    %466 = vector.broadcast %465 : f32 to vector<12x128xf32>
    %467 = arith.mulf %466, %323 : vector<12x128xf32>
    %468 = arith.addf %436, %467 : vector<12x128xf32>
    %c106 = arith.constant 106 : index
    %469 = memref.load %arg3[%c106] : memref<216xf32, #tpu.memory_space<smem>>
    %470 = vector.broadcast %469 : f32 to vector<12x128xf32>
    %471 = arith.mulf %470, %323 : vector<12x128xf32>
    %472 = arith.addf %440, %471 : vector<12x128xf32>
    %c107 = arith.constant 107 : index
    %473 = memref.load %arg3[%c107] : memref<216xf32, #tpu.memory_space<smem>>
    %474 = vector.broadcast %473 : f32 to vector<12x128xf32>
    %475 = arith.mulf %474, %323 : vector<12x128xf32>
    %476 = arith.addf %444, %475 : vector<12x128xf32>
    %c108 = arith.constant 108 : index
    %477 = memref.load %arg3[%c108] : memref<216xf32, #tpu.memory_space<smem>>
    %478 = vector.broadcast %477 : f32 to vector<12x128xf32>
    %479 = arith.mulf %478, %323 : vector<12x128xf32>
    %480 = arith.addf %448, %479 : vector<12x128xf32>
    %c109 = arith.constant 109 : index
    %481 = memref.load %arg3[%c109] : memref<216xf32, #tpu.memory_space<smem>>
    %482 = vector.broadcast %481 : f32 to vector<12x128xf32>
    %483 = arith.mulf %482, %323 : vector<12x128xf32>
    %484 = arith.addf %452, %483 : vector<12x128xf32>
    %c110 = arith.constant 110 : index
    %485 = memref.load %arg3[%c110] : memref<216xf32, #tpu.memory_space<smem>>
    %486 = vector.broadcast %485 : f32 to vector<12x128xf32>
    %487 = arith.mulf %486, %323 : vector<12x128xf32>
    %488 = arith.addf %456, %487 : vector<12x128xf32>
    %c111 = arith.constant 111 : index
    %489 = memref.load %arg3[%c111] : memref<216xf32, #tpu.memory_space<smem>>
    %490 = vector.broadcast %489 : f32 to vector<12x128xf32>
    %491 = arith.mulf %490, %323 : vector<12x128xf32>
    %492 = arith.addf %460, %491 : vector<12x128xf32>
    %c11_i32_28 = arith.constant 11 : i32
    %493 = tpu.dynamic_rotate %323 by %c11_i32_28 dim 0 : vector<12x128xf32>, i32 -> vector<12x128xf32>
    %c176 = arith.constant 176 : index
    %494 = memref.load %arg3[%c176] : memref<216xf32, #tpu.memory_space<smem>>
    %495 = vector.broadcast %494 : f32 to vector<12x128xf32>
    %496 = arith.mulf %495, %493 : vector<12x128xf32>
    %497 = arith.addf %464, %496 : vector<12x128xf32>
    %c177 = arith.constant 177 : index
    %498 = memref.load %arg3[%c177] : memref<216xf32, #tpu.memory_space<smem>>
    %499 = vector.broadcast %498 : f32 to vector<12x128xf32>
    %500 = arith.mulf %499, %493 : vector<12x128xf32>
    %501 = arith.addf %468, %500 : vector<12x128xf32>
    %c178 = arith.constant 178 : index
    %502 = memref.load %arg3[%c178] : memref<216xf32, #tpu.memory_space<smem>>
    %503 = vector.broadcast %502 : f32 to vector<12x128xf32>
    %504 = arith.mulf %503, %493 : vector<12x128xf32>
    %505 = arith.addf %472, %504 : vector<12x128xf32>
    %c179 = arith.constant 179 : index
    %506 = memref.load %arg3[%c179] : memref<216xf32, #tpu.memory_space<smem>>
    %507 = vector.broadcast %506 : f32 to vector<12x128xf32>
    %508 = arith.mulf %507, %493 : vector<12x128xf32>
    %509 = arith.addf %476, %508 : vector<12x128xf32>
    %c180 = arith.constant 180 : index
    %510 = memref.load %arg3[%c180] : memref<216xf32, #tpu.memory_space<smem>>
    %511 = vector.broadcast %510 : f32 to vector<12x128xf32>
    %512 = arith.mulf %511, %493 : vector<12x128xf32>
    %513 = arith.addf %480, %512 : vector<12x128xf32>
    %c181 = arith.constant 181 : index
    %514 = memref.load %arg3[%c181] : memref<216xf32, #tpu.memory_space<smem>>
    %515 = vector.broadcast %514 : f32 to vector<12x128xf32>
    %516 = arith.mulf %515, %493 : vector<12x128xf32>
    %517 = arith.addf %484, %516 : vector<12x128xf32>
    %c182 = arith.constant 182 : index
    %518 = memref.load %arg3[%c182] : memref<216xf32, #tpu.memory_space<smem>>
    %519 = vector.broadcast %518 : f32 to vector<12x128xf32>
    %520 = arith.mulf %519, %493 : vector<12x128xf32>
    %521 = arith.addf %488, %520 : vector<12x128xf32>
    %c183 = arith.constant 183 : index
    %522 = memref.load %arg3[%c183] : memref<216xf32, #tpu.memory_space<smem>>
    %523 = vector.broadcast %522 : f32 to vector<12x128xf32>
    %524 = arith.mulf %523, %493 : vector<12x128xf32>
    %525 = arith.addf %492, %524 : vector<12x128xf32>
    %c1_i32_29 = arith.constant 1 : i32
    %526 = tpu.dynamic_rotate %329 by %c1_i32_29 dim 0 : vector<12x128xf32>, i32 -> vector<12x128xf32>
    %c56 = arith.constant 56 : index
    %527 = memref.load %arg3[%c56] : memref<216xf32, #tpu.memory_space<smem>>
    %528 = vector.broadcast %527 : f32 to vector<12x128xf32>
    %529 = arith.mulf %528, %526 : vector<12x128xf32>
    %530 = arith.addf %497, %529 : vector<12x128xf32>
    %c57 = arith.constant 57 : index
    %531 = memref.load %arg3[%c57] : memref<216xf32, #tpu.memory_space<smem>>
    %532 = vector.broadcast %531 : f32 to vector<12x128xf32>
    %533 = arith.mulf %532, %526 : vector<12x128xf32>
    %534 = arith.addf %501, %533 : vector<12x128xf32>
    %c58 = arith.constant 58 : index
    %535 = memref.load %arg3[%c58] : memref<216xf32, #tpu.memory_space<smem>>
    %536 = vector.broadcast %535 : f32 to vector<12x128xf32>
    %537 = arith.mulf %536, %526 : vector<12x128xf32>
    %538 = arith.addf %505, %537 : vector<12x128xf32>
    %c59 = arith.constant 59 : index
    %539 = memref.load %arg3[%c59] : memref<216xf32, #tpu.memory_space<smem>>
    %540 = vector.broadcast %539 : f32 to vector<12x128xf32>
    %541 = arith.mulf %540, %526 : vector<12x128xf32>
    %542 = arith.addf %509, %541 : vector<12x128xf32>
    %c60 = arith.constant 60 : index
    %543 = memref.load %arg3[%c60] : memref<216xf32, #tpu.memory_space<smem>>
    %544 = vector.broadcast %543 : f32 to vector<12x128xf32>
    %545 = arith.mulf %544, %526 : vector<12x128xf32>
    %546 = arith.addf %513, %545 : vector<12x128xf32>
    %c61 = arith.constant 61 : index
    %547 = memref.load %arg3[%c61] : memref<216xf32, #tpu.memory_space<smem>>
    %548 = vector.broadcast %547 : f32 to vector<12x128xf32>
    %549 = arith.mulf %548, %526 : vector<12x128xf32>
    %550 = arith.addf %517, %549 : vector<12x128xf32>
    %c62 = arith.constant 62 : index
    %551 = memref.load %arg3[%c62] : memref<216xf32, #tpu.memory_space<smem>>
    %552 = vector.broadcast %551 : f32 to vector<12x128xf32>
    %553 = arith.mulf %552, %526 : vector<12x128xf32>
    %554 = arith.addf %521, %553 : vector<12x128xf32>
    %c63 = arith.constant 63 : index
    %555 = memref.load %arg3[%c63] : memref<216xf32, #tpu.memory_space<smem>>
    %556 = vector.broadcast %555 : f32 to vector<12x128xf32>
    %557 = arith.mulf %556, %526 : vector<12x128xf32>
    %558 = arith.addf %525, %557 : vector<12x128xf32>
    %c128 = arith.constant 128 : index
    %559 = memref.load %arg3[%c128] : memref<216xf32, #tpu.memory_space<smem>>
    %560 = vector.broadcast %559 : f32 to vector<12x128xf32>
    %561 = arith.mulf %560, %329 : vector<12x128xf32>
    %562 = arith.addf %530, %561 : vector<12x128xf32>
    %c129 = arith.constant 129 : index
    %563 = memref.load %arg3[%c129] : memref<216xf32, #tpu.memory_space<smem>>
    %564 = vector.broadcast %563 : f32 to vector<12x128xf32>
    %565 = arith.mulf %564, %329 : vector<12x128xf32>
    %566 = arith.addf %534, %565 : vector<12x128xf32>
    %c130 = arith.constant 130 : index
    %567 = memref.load %arg3[%c130] : memref<216xf32, #tpu.memory_space<smem>>
    %568 = vector.broadcast %567 : f32 to vector<12x128xf32>
    %569 = arith.mulf %568, %329 : vector<12x128xf32>
    %570 = arith.addf %538, %569 : vector<12x128xf32>
    %c131 = arith.constant 131 : index
    %571 = memref.load %arg3[%c131] : memref<216xf32, #tpu.memory_space<smem>>
    %572 = vector.broadcast %571 : f32 to vector<12x128xf32>
    %573 = arith.mulf %572, %329 : vector<12x128xf32>
    %574 = arith.addf %542, %573 : vector<12x128xf32>
    %c132 = arith.constant 132 : index
    %575 = memref.load %arg3[%c132] : memref<216xf32, #tpu.memory_space<smem>>
    %576 = vector.broadcast %575 : f32 to vector<12x128xf32>
    %577 = arith.mulf %576, %329 : vector<12x128xf32>
    %578 = arith.addf %546, %577 : vector<12x128xf32>
    %c133 = arith.constant 133 : index
    %579 = memref.load %arg3[%c133] : memref<216xf32, #tpu.memory_space<smem>>
    %580 = vector.broadcast %579 : f32 to vector<12x128xf32>
    %581 = arith.mulf %580, %329 : vector<12x128xf32>
    %582 = arith.addf %550, %581 : vector<12x128xf32>
    %c134 = arith.constant 134 : index
    %583 = memref.load %arg3[%c134] : memref<216xf32, #tpu.memory_space<smem>>
    %584 = vector.broadcast %583 : f32 to vector<12x128xf32>
    %585 = arith.mulf %584, %329 : vector<12x128xf32>
    %586 = arith.addf %554, %585 : vector<12x128xf32>
    %c135 = arith.constant 135 : index
    %587 = memref.load %arg3[%c135] : memref<216xf32, #tpu.memory_space<smem>>
    %588 = vector.broadcast %587 : f32 to vector<12x128xf32>
    %589 = arith.mulf %588, %329 : vector<12x128xf32>
    %590 = arith.addf %558, %589 : vector<12x128xf32>
    %c11_i32_30 = arith.constant 11 : i32
    %591 = tpu.dynamic_rotate %329 by %c11_i32_30 dim 0 : vector<12x128xf32>, i32 -> vector<12x128xf32>
    %c200 = arith.constant 200 : index
    %592 = memref.load %arg3[%c200] : memref<216xf32, #tpu.memory_space<smem>>
    %593 = vector.broadcast %592 : f32 to vector<12x128xf32>
    %594 = arith.mulf %593, %591 : vector<12x128xf32>
    %595 = arith.addf %562, %594 : vector<12x128xf32>
    %c201 = arith.constant 201 : index
    %596 = memref.load %arg3[%c201] : memref<216xf32, #tpu.memory_space<smem>>
    %597 = vector.broadcast %596 : f32 to vector<12x128xf32>
    %598 = arith.mulf %597, %591 : vector<12x128xf32>
    %599 = arith.addf %566, %598 : vector<12x128xf32>
    %c202 = arith.constant 202 : index
    %600 = memref.load %arg3[%c202] : memref<216xf32, #tpu.memory_space<smem>>
    %601 = vector.broadcast %600 : f32 to vector<12x128xf32>
    %602 = arith.mulf %601, %591 : vector<12x128xf32>
    %603 = arith.addf %570, %602 : vector<12x128xf32>
    %c203 = arith.constant 203 : index
    %604 = memref.load %arg3[%c203] : memref<216xf32, #tpu.memory_space<smem>>
    %605 = vector.broadcast %604 : f32 to vector<12x128xf32>
    %606 = arith.mulf %605, %591 : vector<12x128xf32>
    %607 = arith.addf %574, %606 : vector<12x128xf32>
    %c204 = arith.constant 204 : index
    %608 = memref.load %arg3[%c204] : memref<216xf32, #tpu.memory_space<smem>>
    %609 = vector.broadcast %608 : f32 to vector<12x128xf32>
    %610 = arith.mulf %609, %591 : vector<12x128xf32>
    %611 = arith.addf %578, %610 : vector<12x128xf32>
    %c205 = arith.constant 205 : index
    %612 = memref.load %arg3[%c205] : memref<216xf32, #tpu.memory_space<smem>>
    %613 = vector.broadcast %612 : f32 to vector<12x128xf32>
    %614 = arith.mulf %613, %591 : vector<12x128xf32>
    %615 = arith.addf %582, %614 : vector<12x128xf32>
    %c206 = arith.constant 206 : index
    %616 = memref.load %arg3[%c206] : memref<216xf32, #tpu.memory_space<smem>>
    %617 = vector.broadcast %616 : f32 to vector<12x128xf32>
    %618 = arith.mulf %617, %591 : vector<12x128xf32>
    %619 = arith.addf %586, %618 : vector<12x128xf32>
    %c207 = arith.constant 207 : index
    %620 = memref.load %arg3[%c207] : memref<216xf32, #tpu.memory_space<smem>>
    %621 = vector.broadcast %620 : f32 to vector<12x128xf32>
    %622 = arith.mulf %621, %591 : vector<12x128xf32>
    %623 = arith.addf %590, %622 : vector<12x128xf32>
    %c0_31 = arith.constant 0 : index
    %c2_32 = arith.constant 2 : index
    %c0_33 = arith.constant 0 : index
    %c0_34 = arith.constant 0 : index
    %624 = vector.load %arg8[%c0_31, %c2_32, %c0_33, %c0_34] : memref<1x3x12x128xf32, #tpu.memory_space<vmem>>, vector<1x1x12x128xf32>
    %625 = vector.shape_cast %624 : vector<1x1x12x128xf32> to vector<12x128xf32>
    %c1_i32_35 = arith.constant 1 : i32
    %626 = tpu.dynamic_rotate %625 by %c1_i32_35 dim 1 : vector<12x128xf32>, i32 -> vector<12x128xf32>
    %cst_36 = arith.constant 0.000000e+00 : f32
    %627 = vector.broadcast %cst_36 : f32 to vector<12x128xf32>
    %628 = arith.select %4, %626, %627 : vector<12x128xi1>, vector<12x128xf32>
    %c127_i32_37 = arith.constant 127 : i32
    %629 = tpu.dynamic_rotate %625 by %c127_i32_37 dim 1 : vector<12x128xf32>, i32 -> vector<12x128xf32>
    %cst_38 = arith.constant 0.000000e+00 : f32
    %630 = vector.broadcast %cst_38 : f32 to vector<12x128xf32>
    %631 = arith.select %6, %629, %630 : vector<12x128xi1>, vector<12x128xf32>
    %c1_i32_39 = arith.constant 1 : i32
    %632 = tpu.dynamic_rotate %628 by %c1_i32_39 dim 0 : vector<12x128xf32>, i32 -> vector<12x128xf32>
    %c16 = arith.constant 16 : index
    %633 = memref.load %arg3[%c16] : memref<216xf32, #tpu.memory_space<smem>>
    %634 = vector.broadcast %633 : f32 to vector<12x128xf32>
    %635 = arith.mulf %634, %632 : vector<12x128xf32>
    %636 = arith.addf %595, %635 : vector<12x128xf32>
    %c17 = arith.constant 17 : index
    %637 = memref.load %arg3[%c17] : memref<216xf32, #tpu.memory_space<smem>>
    %638 = vector.broadcast %637 : f32 to vector<12x128xf32>
    %639 = arith.mulf %638, %632 : vector<12x128xf32>
    %640 = arith.addf %599, %639 : vector<12x128xf32>
    %c18 = arith.constant 18 : index
    %641 = memref.load %arg3[%c18] : memref<216xf32, #tpu.memory_space<smem>>
    %642 = vector.broadcast %641 : f32 to vector<12x128xf32>
    %643 = arith.mulf %642, %632 : vector<12x128xf32>
    %644 = arith.addf %603, %643 : vector<12x128xf32>
    %c19 = arith.constant 19 : index
    %645 = memref.load %arg3[%c19] : memref<216xf32, #tpu.memory_space<smem>>
    %646 = vector.broadcast %645 : f32 to vector<12x128xf32>
    %647 = arith.mulf %646, %632 : vector<12x128xf32>
    %648 = arith.addf %607, %647 : vector<12x128xf32>
    %c20 = arith.constant 20 : index
    %649 = memref.load %arg3[%c20] : memref<216xf32, #tpu.memory_space<smem>>
    %650 = vector.broadcast %649 : f32 to vector<12x128xf32>
    %651 = arith.mulf %650, %632 : vector<12x128xf32>
    %652 = arith.addf %611, %651 : vector<12x128xf32>
    %c21 = arith.constant 21 : index
    %653 = memref.load %arg3[%c21] : memref<216xf32, #tpu.memory_space<smem>>
    %654 = vector.broadcast %653 : f32 to vector<12x128xf32>
    %655 = arith.mulf %654, %632 : vector<12x128xf32>
    %656 = arith.addf %615, %655 : vector<12x128xf32>
    %c22 = arith.constant 22 : index
    %657 = memref.load %arg3[%c22] : memref<216xf32, #tpu.memory_space<smem>>
    %658 = vector.broadcast %657 : f32 to vector<12x128xf32>
    %659 = arith.mulf %658, %632 : vector<12x128xf32>
    %660 = arith.addf %619, %659 : vector<12x128xf32>
    %c23 = arith.constant 23 : index
    %661 = memref.load %arg3[%c23] : memref<216xf32, #tpu.memory_space<smem>>
    %662 = vector.broadcast %661 : f32 to vector<12x128xf32>
    %663 = arith.mulf %662, %632 : vector<12x128xf32>
    %664 = arith.addf %623, %663 : vector<12x128xf32>
    %c88 = arith.constant 88 : index
    %665 = memref.load %arg3[%c88] : memref<216xf32, #tpu.memory_space<smem>>
    %666 = vector.broadcast %665 : f32 to vector<12x128xf32>
    %667 = arith.mulf %666, %628 : vector<12x128xf32>
    %668 = arith.addf %636, %667 : vector<12x128xf32>
    %c89 = arith.constant 89 : index
    %669 = memref.load %arg3[%c89] : memref<216xf32, #tpu.memory_space<smem>>
    %670 = vector.broadcast %669 : f32 to vector<12x128xf32>
    %671 = arith.mulf %670, %628 : vector<12x128xf32>
    %672 = arith.addf %640, %671 : vector<12x128xf32>
    %c90 = arith.constant 90 : index
    %673 = memref.load %arg3[%c90] : memref<216xf32, #tpu.memory_space<smem>>
    %674 = vector.broadcast %673 : f32 to vector<12x128xf32>
    %675 = arith.mulf %674, %628 : vector<12x128xf32>
    %676 = arith.addf %644, %675 : vector<12x128xf32>
    %c91 = arith.constant 91 : index
    %677 = memref.load %arg3[%c91] : memref<216xf32, #tpu.memory_space<smem>>
    %678 = vector.broadcast %677 : f32 to vector<12x128xf32>
    %679 = arith.mulf %678, %628 : vector<12x128xf32>
    %680 = arith.addf %648, %679 : vector<12x128xf32>
    %c92 = arith.constant 92 : index
    %681 = memref.load %arg3[%c92] : memref<216xf32, #tpu.memory_space<smem>>
    %682 = vector.broadcast %681 : f32 to vector<12x128xf32>
    %683 = arith.mulf %682, %628 : vector<12x128xf32>
    %684 = arith.addf %652, %683 : vector<12x128xf32>
    %c93 = arith.constant 93 : index
    %685 = memref.load %arg3[%c93] : memref<216xf32, #tpu.memory_space<smem>>
    %686 = vector.broadcast %685 : f32 to vector<12x128xf32>
    %687 = arith.mulf %686, %628 : vector<12x128xf32>
    %688 = arith.addf %656, %687 : vector<12x128xf32>
    %c94 = arith.constant 94 : index
    %689 = memref.load %arg3[%c94] : memref<216xf32, #tpu.memory_space<smem>>
    %690 = vector.broadcast %689 : f32 to vector<12x128xf32>
    %691 = arith.mulf %690, %628 : vector<12x128xf32>
    %692 = arith.addf %660, %691 : vector<12x128xf32>
    %c95 = arith.constant 95 : index
    %693 = memref.load %arg3[%c95] : memref<216xf32, #tpu.memory_space<smem>>
    %694 = vector.broadcast %693 : f32 to vector<12x128xf32>
    %695 = arith.mulf %694, %628 : vector<12x128xf32>
    %696 = arith.addf %664, %695 : vector<12x128xf32>
    %c11_i32_40 = arith.constant 11 : i32
    %697 = tpu.dynamic_rotate %628 by %c11_i32_40 dim 0 : vector<12x128xf32>, i32 -> vector<12x128xf32>
    %c160 = arith.constant 160 : index
    %698 = memref.load %arg3[%c160] : memref<216xf32, #tpu.memory_space<smem>>
    %699 = vector.broadcast %698 : f32 to vector<12x128xf32>
    %700 = arith.mulf %699, %697 : vector<12x128xf32>
    %701 = arith.addf %668, %700 : vector<12x128xf32>
    %c161 = arith.constant 161 : index
    %702 = memref.load %arg3[%c161] : memref<216xf32, #tpu.memory_space<smem>>
    %703 = vector.broadcast %702 : f32 to vector<12x128xf32>
    %704 = arith.mulf %703, %697 : vector<12x128xf32>
    %705 = arith.addf %672, %704 : vector<12x128xf32>
    %c162 = arith.constant 162 : index
    %706 = memref.load %arg3[%c162] : memref<216xf32, #tpu.memory_space<smem>>
    %707 = vector.broadcast %706 : f32 to vector<12x128xf32>
    %708 = arith.mulf %707, %697 : vector<12x128xf32>
    %709 = arith.addf %676, %708 : vector<12x128xf32>
    %c163 = arith.constant 163 : index
    %710 = memref.load %arg3[%c163] : memref<216xf32, #tpu.memory_space<smem>>
    %711 = vector.broadcast %710 : f32 to vector<12x128xf32>
    %712 = arith.mulf %711, %697 : vector<12x128xf32>
    %713 = arith.addf %680, %712 : vector<12x128xf32>
    %c164 = arith.constant 164 : index
    %714 = memref.load %arg3[%c164] : memref<216xf32, #tpu.memory_space<smem>>
    %715 = vector.broadcast %714 : f32 to vector<12x128xf32>
    %716 = arith.mulf %715, %697 : vector<12x128xf32>
    %717 = arith.addf %684, %716 : vector<12x128xf32>
    %c165 = arith.constant 165 : index
    %718 = memref.load %arg3[%c165] : memref<216xf32, #tpu.memory_space<smem>>
    %719 = vector.broadcast %718 : f32 to vector<12x128xf32>
    %720 = arith.mulf %719, %697 : vector<12x128xf32>
    %721 = arith.addf %688, %720 : vector<12x128xf32>
    %c166 = arith.constant 166 : index
    %722 = memref.load %arg3[%c166] : memref<216xf32, #tpu.memory_space<smem>>
    %723 = vector.broadcast %722 : f32 to vector<12x128xf32>
    %724 = arith.mulf %723, %697 : vector<12x128xf32>
    %725 = arith.addf %692, %724 : vector<12x128xf32>
    %c167 = arith.constant 167 : index
    %726 = memref.load %arg3[%c167] : memref<216xf32, #tpu.memory_space<smem>>
    %727 = vector.broadcast %726 : f32 to vector<12x128xf32>
    %728 = arith.mulf %727, %697 : vector<12x128xf32>
    %729 = arith.addf %696, %728 : vector<12x128xf32>
    %c1_i32_41 = arith.constant 1 : i32
    %730 = tpu.dynamic_rotate %625 by %c1_i32_41 dim 0 : vector<12x128xf32>, i32 -> vector<12x128xf32>
    %c40 = arith.constant 40 : index
    %731 = memref.load %arg3[%c40] : memref<216xf32, #tpu.memory_space<smem>>
    %732 = vector.broadcast %731 : f32 to vector<12x128xf32>
    %733 = arith.mulf %732, %730 : vector<12x128xf32>
    %734 = arith.addf %701, %733 : vector<12x128xf32>
    %c41 = arith.constant 41 : index
    %735 = memref.load %arg3[%c41] : memref<216xf32, #tpu.memory_space<smem>>
    %736 = vector.broadcast %735 : f32 to vector<12x128xf32>
    %737 = arith.mulf %736, %730 : vector<12x128xf32>
    %738 = arith.addf %705, %737 : vector<12x128xf32>
    %c42 = arith.constant 42 : index
    %739 = memref.load %arg3[%c42] : memref<216xf32, #tpu.memory_space<smem>>
    %740 = vector.broadcast %739 : f32 to vector<12x128xf32>
    %741 = arith.mulf %740, %730 : vector<12x128xf32>
    %742 = arith.addf %709, %741 : vector<12x128xf32>
    %c43 = arith.constant 43 : index
    %743 = memref.load %arg3[%c43] : memref<216xf32, #tpu.memory_space<smem>>
    %744 = vector.broadcast %743 : f32 to vector<12x128xf32>
    %745 = arith.mulf %744, %730 : vector<12x128xf32>
    %746 = arith.addf %713, %745 : vector<12x128xf32>
    %c44 = arith.constant 44 : index
    %747 = memref.load %arg3[%c44] : memref<216xf32, #tpu.memory_space<smem>>
    %748 = vector.broadcast %747 : f32 to vector<12x128xf32>
    %749 = arith.mulf %748, %730 : vector<12x128xf32>
    %750 = arith.addf %717, %749 : vector<12x128xf32>
    %c45 = arith.constant 45 : index
    %751 = memref.load %arg3[%c45] : memref<216xf32, #tpu.memory_space<smem>>
    %752 = vector.broadcast %751 : f32 to vector<12x128xf32>
    %753 = arith.mulf %752, %730 : vector<12x128xf32>
    %754 = arith.addf %721, %753 : vector<12x128xf32>
    %c46 = arith.constant 46 : index
    %755 = memref.load %arg3[%c46] : memref<216xf32, #tpu.memory_space<smem>>
    %756 = vector.broadcast %755 : f32 to vector<12x128xf32>
    %757 = arith.mulf %756, %730 : vector<12x128xf32>
    %758 = arith.addf %725, %757 : vector<12x128xf32>
    %c47 = arith.constant 47 : index
    %759 = memref.load %arg3[%c47] : memref<216xf32, #tpu.memory_space<smem>>
    %760 = vector.broadcast %759 : f32 to vector<12x128xf32>
    %761 = arith.mulf %760, %730 : vector<12x128xf32>
    %762 = arith.addf %729, %761 : vector<12x128xf32>
    %c112 = arith.constant 112 : index
    %763 = memref.load %arg3[%c112] : memref<216xf32, #tpu.memory_space<smem>>
    %764 = vector.broadcast %763 : f32 to vector<12x128xf32>
    %765 = arith.mulf %764, %625 : vector<12x128xf32>
    %766 = arith.addf %734, %765 : vector<12x128xf32>
    %c113 = arith.constant 113 : index
    %767 = memref.load %arg3[%c113] : memref<216xf32, #tpu.memory_space<smem>>
    %768 = vector.broadcast %767 : f32 to vector<12x128xf32>
    %769 = arith.mulf %768, %625 : vector<12x128xf32>
    %770 = arith.addf %738, %769 : vector<12x128xf32>
    %c114 = arith.constant 114 : index
    %771 = memref.load %arg3[%c114] : memref<216xf32, #tpu.memory_space<smem>>
    %772 = vector.broadcast %771 : f32 to vector<12x128xf32>
    %773 = arith.mulf %772, %625 : vector<12x128xf32>
    %774 = arith.addf %742, %773 : vector<12x128xf32>
    %c115 = arith.constant 115 : index
    %775 = memref.load %arg3[%c115] : memref<216xf32, #tpu.memory_space<smem>>
    %776 = vector.broadcast %775 : f32 to vector<12x128xf32>
    %777 = arith.mulf %776, %625 : vector<12x128xf32>
    %778 = arith.addf %746, %777 : vector<12x128xf32>
    %c116 = arith.constant 116 : index
    %779 = memref.load %arg3[%c116] : memref<216xf32, #tpu.memory_space<smem>>
    %780 = vector.broadcast %779 : f32 to vector<12x128xf32>
    %781 = arith.mulf %780, %625 : vector<12x128xf32>
    %782 = arith.addf %750, %781 : vector<12x128xf32>
    %c117 = arith.constant 117 : index
    %783 = memref.load %arg3[%c117] : memref<216xf32, #tpu.memory_space<smem>>
    %784 = vector.broadcast %783 : f32 to vector<12x128xf32>
    %785 = arith.mulf %784, %625 : vector<12x128xf32>
    %786 = arith.addf %754, %785 : vector<12x128xf32>
    %c118 = arith.constant 118 : index
    %787 = memref.load %arg3[%c118] : memref<216xf32, #tpu.memory_space<smem>>
    %788 = vector.broadcast %787 : f32 to vector<12x128xf32>
    %789 = arith.mulf %788, %625 : vector<12x128xf32>
    %790 = arith.addf %758, %789 : vector<12x128xf32>
    %c119 = arith.constant 119 : index
    %791 = memref.load %arg3[%c119] : memref<216xf32, #tpu.memory_space<smem>>
    %792 = vector.broadcast %791 : f32 to vector<12x128xf32>
    %793 = arith.mulf %792, %625 : vector<12x128xf32>
    %794 = arith.addf %762, %793 : vector<12x128xf32>
    %c11_i32_42 = arith.constant 11 : i32
    %795 = tpu.dynamic_rotate %625 by %c11_i32_42 dim 0 : vector<12x128xf32>, i32 -> vector<12x128xf32>
    %c184 = arith.constant 184 : index
    %796 = memref.load %arg3[%c184] : memref<216xf32, #tpu.memory_space<smem>>
    %797 = vector.broadcast %796 : f32 to vector<12x128xf32>
    %798 = arith.mulf %797, %795 : vector<12x128xf32>
    %799 = arith.addf %766, %798 : vector<12x128xf32>
    %c185 = arith.constant 185 : index
    %800 = memref.load %arg3[%c185] : memref<216xf32, #tpu.memory_space<smem>>
    %801 = vector.broadcast %800 : f32 to vector<12x128xf32>
    %802 = arith.mulf %801, %795 : vector<12x128xf32>
    %803 = arith.addf %770, %802 : vector<12x128xf32>
    %c186 = arith.constant 186 : index
    %804 = memref.load %arg3[%c186] : memref<216xf32, #tpu.memory_space<smem>>
    %805 = vector.broadcast %804 : f32 to vector<12x128xf32>
    %806 = arith.mulf %805, %795 : vector<12x128xf32>
    %807 = arith.addf %774, %806 : vector<12x128xf32>
    %c187 = arith.constant 187 : index
    %808 = memref.load %arg3[%c187] : memref<216xf32, #tpu.memory_space<smem>>
    %809 = vector.broadcast %808 : f32 to vector<12x128xf32>
    %810 = arith.mulf %809, %795 : vector<12x128xf32>
    %811 = arith.addf %778, %810 : vector<12x128xf32>
    %c188 = arith.constant 188 : index
    %812 = memref.load %arg3[%c188] : memref<216xf32, #tpu.memory_space<smem>>
    %813 = vector.broadcast %812 : f32 to vector<12x128xf32>
    %814 = arith.mulf %813, %795 : vector<12x128xf32>
    %815 = arith.addf %782, %814 : vector<12x128xf32>
    %c189 = arith.constant 189 : index
    %816 = memref.load %arg3[%c189] : memref<216xf32, #tpu.memory_space<smem>>
    %817 = vector.broadcast %816 : f32 to vector<12x128xf32>
    %818 = arith.mulf %817, %795 : vector<12x128xf32>
    %819 = arith.addf %786, %818 : vector<12x128xf32>
    %c190 = arith.constant 190 : index
    %820 = memref.load %arg3[%c190] : memref<216xf32, #tpu.memory_space<smem>>
    %821 = vector.broadcast %820 : f32 to vector<12x128xf32>
    %822 = arith.mulf %821, %795 : vector<12x128xf32>
    %823 = arith.addf %790, %822 : vector<12x128xf32>
    %c191 = arith.constant 191 : index
    %824 = memref.load %arg3[%c191] : memref<216xf32, #tpu.memory_space<smem>>
    %825 = vector.broadcast %824 : f32 to vector<12x128xf32>
    %826 = arith.mulf %825, %795 : vector<12x128xf32>
    %827 = arith.addf %794, %826 : vector<12x128xf32>
    %c1_i32_43 = arith.constant 1 : i32
    %828 = tpu.dynamic_rotate %631 by %c1_i32_43 dim 0 : vector<12x128xf32>, i32 -> vector<12x128xf32>
    %c64 = arith.constant 64 : index
    %829 = memref.load %arg3[%c64] : memref<216xf32, #tpu.memory_space<smem>>
    %830 = vector.broadcast %829 : f32 to vector<12x128xf32>
    %831 = arith.mulf %830, %828 : vector<12x128xf32>
    %832 = arith.addf %799, %831 : vector<12x128xf32>
    %c65 = arith.constant 65 : index
    %833 = memref.load %arg3[%c65] : memref<216xf32, #tpu.memory_space<smem>>
    %834 = vector.broadcast %833 : f32 to vector<12x128xf32>
    %835 = arith.mulf %834, %828 : vector<12x128xf32>
    %836 = arith.addf %803, %835 : vector<12x128xf32>
    %c66 = arith.constant 66 : index
    %837 = memref.load %arg3[%c66] : memref<216xf32, #tpu.memory_space<smem>>
    %838 = vector.broadcast %837 : f32 to vector<12x128xf32>
    %839 = arith.mulf %838, %828 : vector<12x128xf32>
    %840 = arith.addf %807, %839 : vector<12x128xf32>
    %c67 = arith.constant 67 : index
    %841 = memref.load %arg3[%c67] : memref<216xf32, #tpu.memory_space<smem>>
    %842 = vector.broadcast %841 : f32 to vector<12x128xf32>
    %843 = arith.mulf %842, %828 : vector<12x128xf32>
    %844 = arith.addf %811, %843 : vector<12x128xf32>
    %c68 = arith.constant 68 : index
    %845 = memref.load %arg3[%c68] : memref<216xf32, #tpu.memory_space<smem>>
    %846 = vector.broadcast %845 : f32 to vector<12x128xf32>
    %847 = arith.mulf %846, %828 : vector<12x128xf32>
    %848 = arith.addf %815, %847 : vector<12x128xf32>
    %c69 = arith.constant 69 : index
    %849 = memref.load %arg3[%c69] : memref<216xf32, #tpu.memory_space<smem>>
    %850 = vector.broadcast %849 : f32 to vector<12x128xf32>
    %851 = arith.mulf %850, %828 : vector<12x128xf32>
    %852 = arith.addf %819, %851 : vector<12x128xf32>
    %c70 = arith.constant 70 : index
    %853 = memref.load %arg3[%c70] : memref<216xf32, #tpu.memory_space<smem>>
    %854 = vector.broadcast %853 : f32 to vector<12x128xf32>
    %855 = arith.mulf %854, %828 : vector<12x128xf32>
    %856 = arith.addf %823, %855 : vector<12x128xf32>
    %c71 = arith.constant 71 : index
    %857 = memref.load %arg3[%c71] : memref<216xf32, #tpu.memory_space<smem>>
    %858 = vector.broadcast %857 : f32 to vector<12x128xf32>
    %859 = arith.mulf %858, %828 : vector<12x128xf32>
    %860 = arith.addf %827, %859 : vector<12x128xf32>
    %c136 = arith.constant 136 : index
    %861 = memref.load %arg3[%c136] : memref<216xf32, #tpu.memory_space<smem>>
    %862 = vector.broadcast %861 : f32 to vector<12x128xf32>
    %863 = arith.mulf %862, %631 : vector<12x128xf32>
    %864 = arith.addf %832, %863 : vector<12x128xf32>
    %c137 = arith.constant 137 : index
    %865 = memref.load %arg3[%c137] : memref<216xf32, #tpu.memory_space<smem>>
    %866 = vector.broadcast %865 : f32 to vector<12x128xf32>
    %867 = arith.mulf %866, %631 : vector<12x128xf32>
    %868 = arith.addf %836, %867 : vector<12x128xf32>
    %c138 = arith.constant 138 : index
    %869 = memref.load %arg3[%c138] : memref<216xf32, #tpu.memory_space<smem>>
    %870 = vector.broadcast %869 : f32 to vector<12x128xf32>
    %871 = arith.mulf %870, %631 : vector<12x128xf32>
    %872 = arith.addf %840, %871 : vector<12x128xf32>
    %c139 = arith.constant 139 : index
    %873 = memref.load %arg3[%c139] : memref<216xf32, #tpu.memory_space<smem>>
    %874 = vector.broadcast %873 : f32 to vector<12x128xf32>
    %875 = arith.mulf %874, %631 : vector<12x128xf32>
    %876 = arith.addf %844, %875 : vector<12x128xf32>
    %c140 = arith.constant 140 : index
    %877 = memref.load %arg3[%c140] : memref<216xf32, #tpu.memory_space<smem>>
    %878 = vector.broadcast %877 : f32 to vector<12x128xf32>
    %879 = arith.mulf %878, %631 : vector<12x128xf32>
    %880 = arith.addf %848, %879 : vector<12x128xf32>
    %c141 = arith.constant 141 : index
    %881 = memref.load %arg3[%c141] : memref<216xf32, #tpu.memory_space<smem>>
    %882 = vector.broadcast %881 : f32 to vector<12x128xf32>
    %883 = arith.mulf %882, %631 : vector<12x128xf32>
    %884 = arith.addf %852, %883 : vector<12x128xf32>
    %c142 = arith.constant 142 : index
    %885 = memref.load %arg3[%c142] : memref<216xf32, #tpu.memory_space<smem>>
    %886 = vector.broadcast %885 : f32 to vector<12x128xf32>
    %887 = arith.mulf %886, %631 : vector<12x128xf32>
    %888 = arith.addf %856, %887 : vector<12x128xf32>
    %c143 = arith.constant 143 : index
    %889 = memref.load %arg3[%c143] : memref<216xf32, #tpu.memory_space<smem>>
    %890 = vector.broadcast %889 : f32 to vector<12x128xf32>
    %891 = arith.mulf %890, %631 : vector<12x128xf32>
    %892 = arith.addf %860, %891 : vector<12x128xf32>
    %c11_i32_44 = arith.constant 11 : i32
    %893 = tpu.dynamic_rotate %631 by %c11_i32_44 dim 0 : vector<12x128xf32>, i32 -> vector<12x128xf32>
    %c208 = arith.constant 208 : index
    %894 = memref.load %arg3[%c208] : memref<216xf32, #tpu.memory_space<smem>>
    %895 = vector.broadcast %894 : f32 to vector<12x128xf32>
    %896 = arith.mulf %895, %893 : vector<12x128xf32>
    %897 = arith.addf %864, %896 : vector<12x128xf32>
    %c209 = arith.constant 209 : index
    %898 = memref.load %arg3[%c209] : memref<216xf32, #tpu.memory_space<smem>>
    %899 = vector.broadcast %898 : f32 to vector<12x128xf32>
    %900 = arith.mulf %899, %893 : vector<12x128xf32>
    %901 = arith.addf %868, %900 : vector<12x128xf32>
    %c210 = arith.constant 210 : index
    %902 = memref.load %arg3[%c210] : memref<216xf32, #tpu.memory_space<smem>>
    %903 = vector.broadcast %902 : f32 to vector<12x128xf32>
    %904 = arith.mulf %903, %893 : vector<12x128xf32>
    %905 = arith.addf %872, %904 : vector<12x128xf32>
    %c211 = arith.constant 211 : index
    %906 = memref.load %arg3[%c211] : memref<216xf32, #tpu.memory_space<smem>>
    %907 = vector.broadcast %906 : f32 to vector<12x128xf32>
    %908 = arith.mulf %907, %893 : vector<12x128xf32>
    %909 = arith.addf %876, %908 : vector<12x128xf32>
    %c212 = arith.constant 212 : index
    %910 = memref.load %arg3[%c212] : memref<216xf32, #tpu.memory_space<smem>>
    %911 = vector.broadcast %910 : f32 to vector<12x128xf32>
    %912 = arith.mulf %911, %893 : vector<12x128xf32>
    %913 = arith.addf %880, %912 : vector<12x128xf32>
    %c213 = arith.constant 213 : index
    %914 = memref.load %arg3[%c213] : memref<216xf32, #tpu.memory_space<smem>>
    %915 = vector.broadcast %914 : f32 to vector<12x128xf32>
    %916 = arith.mulf %915, %893 : vector<12x128xf32>
    %917 = arith.addf %884, %916 : vector<12x128xf32>
    %c214 = arith.constant 214 : index
    %918 = memref.load %arg3[%c214] : memref<216xf32, #tpu.memory_space<smem>>
    %919 = vector.broadcast %918 : f32 to vector<12x128xf32>
    %920 = arith.mulf %919, %893 : vector<12x128xf32>
    %921 = arith.addf %888, %920 : vector<12x128xf32>
    %c215 = arith.constant 215 : index
    %922 = memref.load %arg3[%c215] : memref<216xf32, #tpu.memory_space<smem>>
    %923 = vector.broadcast %922 : f32 to vector<12x128xf32>
    %924 = arith.mulf %923, %893 : vector<12x128xf32>
    %925 = arith.addf %892, %924 : vector<12x128xf32>
    %c0_45 = arith.constant 0 : index
    %926 = memref.load %arg4[%c0_45] : memref<8xf32, #tpu.memory_space<smem>>
    %927 = vector.broadcast %926 : f32 to vector<12x128xf32>
    %928 = arith.addf %897, %927 : vector<12x128xf32>
    %cst_46 = arith.constant 0.000000e+00 : f32
    %929 = vector.broadcast %cst_46 : f32 to vector<12x128xf32>
    %930 = arith.maximumf %928, %929 : vector<12x128xf32>
    %cst_47 = arith.constant 0.000000e+00 : f32
    %931 = vector.broadcast %cst_47 : f32 to vector<12x128xf32>
    %932 = arith.select %17, %930, %931 : vector<12x128xi1>, vector<12x128xf32>
    %c1_48 = arith.constant 1 : index
    %933 = memref.load %arg4[%c1_48] : memref<8xf32, #tpu.memory_space<smem>>
    %934 = vector.broadcast %933 : f32 to vector<12x128xf32>
    %935 = arith.addf %901, %934 : vector<12x128xf32>
    %cst_49 = arith.constant 0.000000e+00 : f32
    %936 = vector.broadcast %cst_49 : f32 to vector<12x128xf32>
    %937 = arith.maximumf %935, %936 : vector<12x128xf32>
    %cst_50 = arith.constant 0.000000e+00 : f32
    %938 = vector.broadcast %cst_50 : f32 to vector<12x128xf32>
    %939 = arith.select %17, %937, %938 : vector<12x128xi1>, vector<12x128xf32>
    %c2_51 = arith.constant 2 : index
    %940 = memref.load %arg4[%c2_51] : memref<8xf32, #tpu.memory_space<smem>>
    %941 = vector.broadcast %940 : f32 to vector<12x128xf32>
    %942 = arith.addf %905, %941 : vector<12x128xf32>
    %cst_52 = arith.constant 0.000000e+00 : f32
    %943 = vector.broadcast %cst_52 : f32 to vector<12x128xf32>
    %944 = arith.maximumf %942, %943 : vector<12x128xf32>
    %cst_53 = arith.constant 0.000000e+00 : f32
    %945 = vector.broadcast %cst_53 : f32 to vector<12x128xf32>
    %946 = arith.select %17, %944, %945 : vector<12x128xi1>, vector<12x128xf32>
    %c3_54 = arith.constant 3 : index
    %947 = memref.load %arg4[%c3_54] : memref<8xf32, #tpu.memory_space<smem>>
    %948 = vector.broadcast %947 : f32 to vector<12x128xf32>
    %949 = arith.addf %909, %948 : vector<12x128xf32>
    %cst_55 = arith.constant 0.000000e+00 : f32
    %950 = vector.broadcast %cst_55 : f32 to vector<12x128xf32>
    %951 = arith.maximumf %949, %950 : vector<12x128xf32>
    %cst_56 = arith.constant 0.000000e+00 : f32
    %952 = vector.broadcast %cst_56 : f32 to vector<12x128xf32>
    %953 = arith.select %17, %951, %952 : vector<12x128xi1>, vector<12x128xf32>
    %c4_57 = arith.constant 4 : index
    %954 = memref.load %arg4[%c4_57] : memref<8xf32, #tpu.memory_space<smem>>
    %955 = vector.broadcast %954 : f32 to vector<12x128xf32>
    %956 = arith.addf %913, %955 : vector<12x128xf32>
    %cst_58 = arith.constant 0.000000e+00 : f32
    %957 = vector.broadcast %cst_58 : f32 to vector<12x128xf32>
    %958 = arith.maximumf %956, %957 : vector<12x128xf32>
    %cst_59 = arith.constant 0.000000e+00 : f32
    %959 = vector.broadcast %cst_59 : f32 to vector<12x128xf32>
    %960 = arith.select %17, %958, %959 : vector<12x128xi1>, vector<12x128xf32>
    %c5_60 = arith.constant 5 : index
    %961 = memref.load %arg4[%c5_60] : memref<8xf32, #tpu.memory_space<smem>>
    %962 = vector.broadcast %961 : f32 to vector<12x128xf32>
    %963 = arith.addf %917, %962 : vector<12x128xf32>
    %cst_61 = arith.constant 0.000000e+00 : f32
    %964 = vector.broadcast %cst_61 : f32 to vector<12x128xf32>
    %965 = arith.maximumf %963, %964 : vector<12x128xf32>
    %cst_62 = arith.constant 0.000000e+00 : f32
    %966 = vector.broadcast %cst_62 : f32 to vector<12x128xf32>
    %967 = arith.select %17, %965, %966 : vector<12x128xi1>, vector<12x128xf32>
    %c6_63 = arith.constant 6 : index
    %968 = memref.load %arg4[%c6_63] : memref<8xf32, #tpu.memory_space<smem>>
    %969 = vector.broadcast %968 : f32 to vector<12x128xf32>
    %970 = arith.addf %921, %969 : vector<12x128xf32>
    %cst_64 = arith.constant 0.000000e+00 : f32
    %971 = vector.broadcast %cst_64 : f32 to vector<12x128xf32>
    %972 = arith.maximumf %970, %971 : vector<12x128xf32>
    %cst_65 = arith.constant 0.000000e+00 : f32
    %973 = vector.broadcast %cst_65 : f32 to vector<12x128xf32>
    %974 = arith.select %17, %972, %973 : vector<12x128xi1>, vector<12x128xf32>
    %c7_66 = arith.constant 7 : index
    %975 = memref.load %arg4[%c7_66] : memref<8xf32, #tpu.memory_space<smem>>
    %976 = vector.broadcast %975 : f32 to vector<12x128xf32>
    %977 = arith.addf %925, %976 : vector<12x128xf32>
    %cst_67 = arith.constant 0.000000e+00 : f32
    %978 = vector.broadcast %cst_67 : f32 to vector<12x128xf32>
    %979 = arith.maximumf %977, %978 : vector<12x128xf32>
    %cst_68 = arith.constant 0.000000e+00 : f32
    %980 = vector.broadcast %cst_68 : f32 to vector<12x128xf32>
    %981 = arith.select %17, %979, %980 : vector<12x128xi1>, vector<12x128xf32>
    %c1_i32_69 = arith.constant 1 : i32
    %982 = tpu.dynamic_rotate %932 by %c1_i32_69 dim 1 : vector<12x128xf32>, i32 -> vector<12x128xf32>
    %cst_70 = arith.constant 0.000000e+00 : f32
    %983 = vector.broadcast %cst_70 : f32 to vector<12x128xf32>
    %984 = arith.select %4, %982, %983 : vector<12x128xi1>, vector<12x128xf32>
    %c127_i32_71 = arith.constant 127 : i32
    %985 = tpu.dynamic_rotate %932 by %c127_i32_71 dim 1 : vector<12x128xf32>, i32 -> vector<12x128xf32>
    %cst_72 = arith.constant 0.000000e+00 : f32
    %986 = vector.broadcast %cst_72 : f32 to vector<12x128xf32>
    %987 = arith.select %6, %985, %986 : vector<12x128xi1>, vector<12x128xf32>
    %c1_i32_73 = arith.constant 1 : i32
    %988 = tpu.dynamic_rotate %984 by %c1_i32_73 dim 0 : vector<12x128xf32>, i32 -> vector<12x128xf32>
    %c0_74 = arith.constant 0 : index
    %989 = memref.load %arg5[%c0_74] : memref<216xf32, #tpu.memory_space<smem>>
    %990 = vector.broadcast %989 : f32 to vector<12x128xf32>
    %991 = arith.mulf %990, %988 : vector<12x128xf32>
    %992 = arith.addf %19, %991 : vector<12x128xf32>
    %c1_75 = arith.constant 1 : index
    %993 = memref.load %arg5[%c1_75] : memref<216xf32, #tpu.memory_space<smem>>
    %994 = vector.broadcast %993 : f32 to vector<12x128xf32>
    %995 = arith.mulf %994, %988 : vector<12x128xf32>
    %996 = arith.addf %19, %995 : vector<12x128xf32>
    %c2_76 = arith.constant 2 : index
    %997 = memref.load %arg5[%c2_76] : memref<216xf32, #tpu.memory_space<smem>>
    %998 = vector.broadcast %997 : f32 to vector<12x128xf32>
    %999 = arith.mulf %998, %988 : vector<12x128xf32>
    %1000 = arith.addf %19, %999 : vector<12x128xf32>
    %c72_77 = arith.constant 72 : index
    %1001 = memref.load %arg5[%c72_77] : memref<216xf32, #tpu.memory_space<smem>>
    %1002 = vector.broadcast %1001 : f32 to vector<12x128xf32>
    %1003 = arith.mulf %1002, %984 : vector<12x128xf32>
    %1004 = arith.addf %992, %1003 : vector<12x128xf32>
    %c73_78 = arith.constant 73 : index
    %1005 = memref.load %arg5[%c73_78] : memref<216xf32, #tpu.memory_space<smem>>
    %1006 = vector.broadcast %1005 : f32 to vector<12x128xf32>
    %1007 = arith.mulf %1006, %984 : vector<12x128xf32>
    %1008 = arith.addf %996, %1007 : vector<12x128xf32>
    %c74_79 = arith.constant 74 : index
    %1009 = memref.load %arg5[%c74_79] : memref<216xf32, #tpu.memory_space<smem>>
    %1010 = vector.broadcast %1009 : f32 to vector<12x128xf32>
    %1011 = arith.mulf %1010, %984 : vector<12x128xf32>
    %1012 = arith.addf %1000, %1011 : vector<12x128xf32>
    %c11_i32_80 = arith.constant 11 : i32
    %1013 = tpu.dynamic_rotate %984 by %c11_i32_80 dim 0 : vector<12x128xf32>, i32 -> vector<12x128xf32>
    %c144_81 = arith.constant 144 : index
    %1014 = memref.load %arg5[%c144_81] : memref<216xf32, #tpu.memory_space<smem>>
    %1015 = vector.broadcast %1014 : f32 to vector<12x128xf32>
    %1016 = arith.mulf %1015, %1013 : vector<12x128xf32>
    %1017 = arith.addf %1004, %1016 : vector<12x128xf32>
    %c145_82 = arith.constant 145 : index
    %1018 = memref.load %arg5[%c145_82] : memref<216xf32, #tpu.memory_space<smem>>
    %1019 = vector.broadcast %1018 : f32 to vector<12x128xf32>
    %1020 = arith.mulf %1019, %1013 : vector<12x128xf32>
    %1021 = arith.addf %1008, %1020 : vector<12x128xf32>
    %c146_83 = arith.constant 146 : index
    %1022 = memref.load %arg5[%c146_83] : memref<216xf32, #tpu.memory_space<smem>>
    %1023 = vector.broadcast %1022 : f32 to vector<12x128xf32>
    %1024 = arith.mulf %1023, %1013 : vector<12x128xf32>
    %1025 = arith.addf %1012, %1024 : vector<12x128xf32>
    %c1_i32_84 = arith.constant 1 : i32
    %1026 = tpu.dynamic_rotate %932 by %c1_i32_84 dim 0 : vector<12x128xf32>, i32 -> vector<12x128xf32>
    %c24_85 = arith.constant 24 : index
    %1027 = memref.load %arg5[%c24_85] : memref<216xf32, #tpu.memory_space<smem>>
    %1028 = vector.broadcast %1027 : f32 to vector<12x128xf32>
    %1029 = arith.mulf %1028, %1026 : vector<12x128xf32>
    %1030 = arith.addf %1017, %1029 : vector<12x128xf32>
    %c25_86 = arith.constant 25 : index
    %1031 = memref.load %arg5[%c25_86] : memref<216xf32, #tpu.memory_space<smem>>
    %1032 = vector.broadcast %1031 : f32 to vector<12x128xf32>
    %1033 = arith.mulf %1032, %1026 : vector<12x128xf32>
    %1034 = arith.addf %1021, %1033 : vector<12x128xf32>
    %c26_87 = arith.constant 26 : index
    %1035 = memref.load %arg5[%c26_87] : memref<216xf32, #tpu.memory_space<smem>>
    %1036 = vector.broadcast %1035 : f32 to vector<12x128xf32>
    %1037 = arith.mulf %1036, %1026 : vector<12x128xf32>
    %1038 = arith.addf %1025, %1037 : vector<12x128xf32>
    %c96_88 = arith.constant 96 : index
    %1039 = memref.load %arg5[%c96_88] : memref<216xf32, #tpu.memory_space<smem>>
    %1040 = vector.broadcast %1039 : f32 to vector<12x128xf32>
    %1041 = arith.mulf %1040, %932 : vector<12x128xf32>
    %1042 = arith.addf %1030, %1041 : vector<12x128xf32>
    %c97_89 = arith.constant 97 : index
    %1043 = memref.load %arg5[%c97_89] : memref<216xf32, #tpu.memory_space<smem>>
    %1044 = vector.broadcast %1043 : f32 to vector<12x128xf32>
    %1045 = arith.mulf %1044, %932 : vector<12x128xf32>
    %1046 = arith.addf %1034, %1045 : vector<12x128xf32>
    %c98_90 = arith.constant 98 : index
    %1047 = memref.load %arg5[%c98_90] : memref<216xf32, #tpu.memory_space<smem>>
    %1048 = vector.broadcast %1047 : f32 to vector<12x128xf32>
    %1049 = arith.mulf %1048, %932 : vector<12x128xf32>
    %1050 = arith.addf %1038, %1049 : vector<12x128xf32>
    %c11_i32_91 = arith.constant 11 : i32
    %1051 = tpu.dynamic_rotate %932 by %c11_i32_91 dim 0 : vector<12x128xf32>, i32 -> vector<12x128xf32>
    %c168_92 = arith.constant 168 : index
    %1052 = memref.load %arg5[%c168_92] : memref<216xf32, #tpu.memory_space<smem>>
    %1053 = vector.broadcast %1052 : f32 to vector<12x128xf32>
    %1054 = arith.mulf %1053, %1051 : vector<12x128xf32>
    %1055 = arith.addf %1042, %1054 : vector<12x128xf32>
    %c169_93 = arith.constant 169 : index
    %1056 = memref.load %arg5[%c169_93] : memref<216xf32, #tpu.memory_space<smem>>
    %1057 = vector.broadcast %1056 : f32 to vector<12x128xf32>
    %1058 = arith.mulf %1057, %1051 : vector<12x128xf32>
    %1059 = arith.addf %1046, %1058 : vector<12x128xf32>
    %c170_94 = arith.constant 170 : index
    %1060 = memref.load %arg5[%c170_94] : memref<216xf32, #tpu.memory_space<smem>>
    %1061 = vector.broadcast %1060 : f32 to vector<12x128xf32>
    %1062 = arith.mulf %1061, %1051 : vector<12x128xf32>
    %1063 = arith.addf %1050, %1062 : vector<12x128xf32>
    %c1_i32_95 = arith.constant 1 : i32
    %1064 = tpu.dynamic_rotate %987 by %c1_i32_95 dim 0 : vector<12x128xf32>, i32 -> vector<12x128xf32>
    %c48_96 = arith.constant 48 : index
    %1065 = memref.load %arg5[%c48_96] : memref<216xf32, #tpu.memory_space<smem>>
    %1066 = vector.broadcast %1065 : f32 to vector<12x128xf32>
    %1067 = arith.mulf %1066, %1064 : vector<12x128xf32>
    %1068 = arith.addf %1055, %1067 : vector<12x128xf32>
    %c49_97 = arith.constant 49 : index
    %1069 = memref.load %arg5[%c49_97] : memref<216xf32, #tpu.memory_space<smem>>
    %1070 = vector.broadcast %1069 : f32 to vector<12x128xf32>
    %1071 = arith.mulf %1070, %1064 : vector<12x128xf32>
    %1072 = arith.addf %1059, %1071 : vector<12x128xf32>
    %c50_98 = arith.constant 50 : index
    %1073 = memref.load %arg5[%c50_98] : memref<216xf32, #tpu.memory_space<smem>>
    %1074 = vector.broadcast %1073 : f32 to vector<12x128xf32>
    %1075 = arith.mulf %1074, %1064 : vector<12x128xf32>
    %1076 = arith.addf %1063, %1075 : vector<12x128xf32>
    %c120_99 = arith.constant 120 : index
    %1077 = memref.load %arg5[%c120_99] : memref<216xf32, #tpu.memory_space<smem>>
    %1078 = vector.broadcast %1077 : f32 to vector<12x128xf32>
    %1079 = arith.mulf %1078, %987 : vector<12x128xf32>
    %1080 = arith.addf %1068, %1079 : vector<12x128xf32>
    %c121_100 = arith.constant 121 : index
    %1081 = memref.load %arg5[%c121_100] : memref<216xf32, #tpu.memory_space<smem>>
    %1082 = vector.broadcast %1081 : f32 to vector<12x128xf32>
    %1083 = arith.mulf %1082, %987 : vector<12x128xf32>
    %1084 = arith.addf %1072, %1083 : vector<12x128xf32>
    %c122_101 = arith.constant 122 : index
    %1085 = memref.load %arg5[%c122_101] : memref<216xf32, #tpu.memory_space<smem>>
    %1086 = vector.broadcast %1085 : f32 to vector<12x128xf32>
    %1087 = arith.mulf %1086, %987 : vector<12x128xf32>
    %1088 = arith.addf %1076, %1087 : vector<12x128xf32>
    %c11_i32_102 = arith.constant 11 : i32
    %1089 = tpu.dynamic_rotate %987 by %c11_i32_102 dim 0 : vector<12x128xf32>, i32 -> vector<12x128xf32>
    %c192_103 = arith.constant 192 : index
    %1090 = memref.load %arg5[%c192_103] : memref<216xf32, #tpu.memory_space<smem>>
    %1091 = vector.broadcast %1090 : f32 to vector<12x128xf32>
    %1092 = arith.mulf %1091, %1089 : vector<12x128xf32>
    %1093 = arith.addf %1080, %1092 : vector<12x128xf32>
    %c193_104 = arith.constant 193 : index
    %1094 = memref.load %arg5[%c193_104] : memref<216xf32, #tpu.memory_space<smem>>
    %1095 = vector.broadcast %1094 : f32 to vector<12x128xf32>
    %1096 = arith.mulf %1095, %1089 : vector<12x128xf32>
    %1097 = arith.addf %1084, %1096 : vector<12x128xf32>
    %c194_105 = arith.constant 194 : index
    %1098 = memref.load %arg5[%c194_105] : memref<216xf32, #tpu.memory_space<smem>>
    %1099 = vector.broadcast %1098 : f32 to vector<12x128xf32>
    %1100 = arith.mulf %1099, %1089 : vector<12x128xf32>
    %1101 = arith.addf %1088, %1100 : vector<12x128xf32>
    %c1_i32_106 = arith.constant 1 : i32
    %1102 = tpu.dynamic_rotate %939 by %c1_i32_106 dim 1 : vector<12x128xf32>, i32 -> vector<12x128xf32>
    %cst_107 = arith.constant 0.000000e+00 : f32
    %1103 = vector.broadcast %cst_107 : f32 to vector<12x128xf32>
    %1104 = arith.select %4, %1102, %1103 : vector<12x128xi1>, vector<12x128xf32>
    %c127_i32_108 = arith.constant 127 : i32
    %1105 = tpu.dynamic_rotate %939 by %c127_i32_108 dim 1 : vector<12x128xf32>, i32 -> vector<12x128xf32>
    %cst_109 = arith.constant 0.000000e+00 : f32
    %1106 = vector.broadcast %cst_109 : f32 to vector<12x128xf32>
    %1107 = arith.select %6, %1105, %1106 : vector<12x128xi1>, vector<12x128xf32>
    %c1_i32_110 = arith.constant 1 : i32
    %1108 = tpu.dynamic_rotate %1104 by %c1_i32_110 dim 0 : vector<12x128xf32>, i32 -> vector<12x128xf32>
    %c3_111 = arith.constant 3 : index
    %1109 = memref.load %arg5[%c3_111] : memref<216xf32, #tpu.memory_space<smem>>
    %1110 = vector.broadcast %1109 : f32 to vector<12x128xf32>
    %1111 = arith.mulf %1110, %1108 : vector<12x128xf32>
    %1112 = arith.addf %1093, %1111 : vector<12x128xf32>
    %c4_112 = arith.constant 4 : index
    %1113 = memref.load %arg5[%c4_112] : memref<216xf32, #tpu.memory_space<smem>>
    %1114 = vector.broadcast %1113 : f32 to vector<12x128xf32>
    %1115 = arith.mulf %1114, %1108 : vector<12x128xf32>
    %1116 = arith.addf %1097, %1115 : vector<12x128xf32>
    %c5_113 = arith.constant 5 : index
    %1117 = memref.load %arg5[%c5_113] : memref<216xf32, #tpu.memory_space<smem>>
    %1118 = vector.broadcast %1117 : f32 to vector<12x128xf32>
    %1119 = arith.mulf %1118, %1108 : vector<12x128xf32>
    %1120 = arith.addf %1101, %1119 : vector<12x128xf32>
    %c75_114 = arith.constant 75 : index
    %1121 = memref.load %arg5[%c75_114] : memref<216xf32, #tpu.memory_space<smem>>
    %1122 = vector.broadcast %1121 : f32 to vector<12x128xf32>
    %1123 = arith.mulf %1122, %1104 : vector<12x128xf32>
    %1124 = arith.addf %1112, %1123 : vector<12x128xf32>
    %c76_115 = arith.constant 76 : index
    %1125 = memref.load %arg5[%c76_115] : memref<216xf32, #tpu.memory_space<smem>>
    %1126 = vector.broadcast %1125 : f32 to vector<12x128xf32>
    %1127 = arith.mulf %1126, %1104 : vector<12x128xf32>
    %1128 = arith.addf %1116, %1127 : vector<12x128xf32>
    %c77_116 = arith.constant 77 : index
    %1129 = memref.load %arg5[%c77_116] : memref<216xf32, #tpu.memory_space<smem>>
    %1130 = vector.broadcast %1129 : f32 to vector<12x128xf32>
    %1131 = arith.mulf %1130, %1104 : vector<12x128xf32>
    %1132 = arith.addf %1120, %1131 : vector<12x128xf32>
    %c11_i32_117 = arith.constant 11 : i32
    %1133 = tpu.dynamic_rotate %1104 by %c11_i32_117 dim 0 : vector<12x128xf32>, i32 -> vector<12x128xf32>
    %c147_118 = arith.constant 147 : index
    %1134 = memref.load %arg5[%c147_118] : memref<216xf32, #tpu.memory_space<smem>>
    %1135 = vector.broadcast %1134 : f32 to vector<12x128xf32>
    %1136 = arith.mulf %1135, %1133 : vector<12x128xf32>
    %1137 = arith.addf %1124, %1136 : vector<12x128xf32>
    %c148_119 = arith.constant 148 : index
    %1138 = memref.load %arg5[%c148_119] : memref<216xf32, #tpu.memory_space<smem>>
    %1139 = vector.broadcast %1138 : f32 to vector<12x128xf32>
    %1140 = arith.mulf %1139, %1133 : vector<12x128xf32>
    %1141 = arith.addf %1128, %1140 : vector<12x128xf32>
    %c149_120 = arith.constant 149 : index
    %1142 = memref.load %arg5[%c149_120] : memref<216xf32, #tpu.memory_space<smem>>
    %1143 = vector.broadcast %1142 : f32 to vector<12x128xf32>
    %1144 = arith.mulf %1143, %1133 : vector<12x128xf32>
    %1145 = arith.addf %1132, %1144 : vector<12x128xf32>
    %c1_i32_121 = arith.constant 1 : i32
    %1146 = tpu.dynamic_rotate %939 by %c1_i32_121 dim 0 : vector<12x128xf32>, i32 -> vector<12x128xf32>
    %c27_122 = arith.constant 27 : index
    %1147 = memref.load %arg5[%c27_122] : memref<216xf32, #tpu.memory_space<smem>>
    %1148 = vector.broadcast %1147 : f32 to vector<12x128xf32>
    %1149 = arith.mulf %1148, %1146 : vector<12x128xf32>
    %1150 = arith.addf %1137, %1149 : vector<12x128xf32>
    %c28_123 = arith.constant 28 : index
    %1151 = memref.load %arg5[%c28_123] : memref<216xf32, #tpu.memory_space<smem>>
    %1152 = vector.broadcast %1151 : f32 to vector<12x128xf32>
    %1153 = arith.mulf %1152, %1146 : vector<12x128xf32>
    %1154 = arith.addf %1141, %1153 : vector<12x128xf32>
    %c29_124 = arith.constant 29 : index
    %1155 = memref.load %arg5[%c29_124] : memref<216xf32, #tpu.memory_space<smem>>
    %1156 = vector.broadcast %1155 : f32 to vector<12x128xf32>
    %1157 = arith.mulf %1156, %1146 : vector<12x128xf32>
    %1158 = arith.addf %1145, %1157 : vector<12x128xf32>
    %c99_125 = arith.constant 99 : index
    %1159 = memref.load %arg5[%c99_125] : memref<216xf32, #tpu.memory_space<smem>>
    %1160 = vector.broadcast %1159 : f32 to vector<12x128xf32>
    %1161 = arith.mulf %1160, %939 : vector<12x128xf32>
    %1162 = arith.addf %1150, %1161 : vector<12x128xf32>
    %c100_126 = arith.constant 100 : index
    %1163 = memref.load %arg5[%c100_126] : memref<216xf32, #tpu.memory_space<smem>>
    %1164 = vector.broadcast %1163 : f32 to vector<12x128xf32>
    %1165 = arith.mulf %1164, %939 : vector<12x128xf32>
    %1166 = arith.addf %1154, %1165 : vector<12x128xf32>
    %c101_127 = arith.constant 101 : index
    %1167 = memref.load %arg5[%c101_127] : memref<216xf32, #tpu.memory_space<smem>>
    %1168 = vector.broadcast %1167 : f32 to vector<12x128xf32>
    %1169 = arith.mulf %1168, %939 : vector<12x128xf32>
    %1170 = arith.addf %1158, %1169 : vector<12x128xf32>
    %c11_i32_128 = arith.constant 11 : i32
    %1171 = tpu.dynamic_rotate %939 by %c11_i32_128 dim 0 : vector<12x128xf32>, i32 -> vector<12x128xf32>
    %c171_129 = arith.constant 171 : index
    %1172 = memref.load %arg5[%c171_129] : memref<216xf32, #tpu.memory_space<smem>>
    %1173 = vector.broadcast %1172 : f32 to vector<12x128xf32>
    %1174 = arith.mulf %1173, %1171 : vector<12x128xf32>
    %1175 = arith.addf %1162, %1174 : vector<12x128xf32>
    %c172_130 = arith.constant 172 : index
    %1176 = memref.load %arg5[%c172_130] : memref<216xf32, #tpu.memory_space<smem>>
    %1177 = vector.broadcast %1176 : f32 to vector<12x128xf32>
    %1178 = arith.mulf %1177, %1171 : vector<12x128xf32>
    %1179 = arith.addf %1166, %1178 : vector<12x128xf32>
    %c173_131 = arith.constant 173 : index
    %1180 = memref.load %arg5[%c173_131] : memref<216xf32, #tpu.memory_space<smem>>
    %1181 = vector.broadcast %1180 : f32 to vector<12x128xf32>
    %1182 = arith.mulf %1181, %1171 : vector<12x128xf32>
    %1183 = arith.addf %1170, %1182 : vector<12x128xf32>
    %c1_i32_132 = arith.constant 1 : i32
    %1184 = tpu.dynamic_rotate %1107 by %c1_i32_132 dim 0 : vector<12x128xf32>, i32 -> vector<12x128xf32>
    %c51_133 = arith.constant 51 : index
    %1185 = memref.load %arg5[%c51_133] : memref<216xf32, #tpu.memory_space<smem>>
    %1186 = vector.broadcast %1185 : f32 to vector<12x128xf32>
    %1187 = arith.mulf %1186, %1184 : vector<12x128xf32>
    %1188 = arith.addf %1175, %1187 : vector<12x128xf32>
    %c52_134 = arith.constant 52 : index
    %1189 = memref.load %arg5[%c52_134] : memref<216xf32, #tpu.memory_space<smem>>
    %1190 = vector.broadcast %1189 : f32 to vector<12x128xf32>
    %1191 = arith.mulf %1190, %1184 : vector<12x128xf32>
    %1192 = arith.addf %1179, %1191 : vector<12x128xf32>
    %c53_135 = arith.constant 53 : index
    %1193 = memref.load %arg5[%c53_135] : memref<216xf32, #tpu.memory_space<smem>>
    %1194 = vector.broadcast %1193 : f32 to vector<12x128xf32>
    %1195 = arith.mulf %1194, %1184 : vector<12x128xf32>
    %1196 = arith.addf %1183, %1195 : vector<12x128xf32>
    %c123_136 = arith.constant 123 : index
    %1197 = memref.load %arg5[%c123_136] : memref<216xf32, #tpu.memory_space<smem>>
    %1198 = vector.broadcast %1197 : f32 to vector<12x128xf32>
    %1199 = arith.mulf %1198, %1107 : vector<12x128xf32>
    %1200 = arith.addf %1188, %1199 : vector<12x128xf32>
    %c124_137 = arith.constant 124 : index
    %1201 = memref.load %arg5[%c124_137] : memref<216xf32, #tpu.memory_space<smem>>
    %1202 = vector.broadcast %1201 : f32 to vector<12x128xf32>
    %1203 = arith.mulf %1202, %1107 : vector<12x128xf32>
    %1204 = arith.addf %1192, %1203 : vector<12x128xf32>
    %c125_138 = arith.constant 125 : index
    %1205 = memref.load %arg5[%c125_138] : memref<216xf32, #tpu.memory_space<smem>>
    %1206 = vector.broadcast %1205 : f32 to vector<12x128xf32>
    %1207 = arith.mulf %1206, %1107 : vector<12x128xf32>
    %1208 = arith.addf %1196, %1207 : vector<12x128xf32>
    %c11_i32_139 = arith.constant 11 : i32
    %1209 = tpu.dynamic_rotate %1107 by %c11_i32_139 dim 0 : vector<12x128xf32>, i32 -> vector<12x128xf32>
    %c195_140 = arith.constant 195 : index
    %1210 = memref.load %arg5[%c195_140] : memref<216xf32, #tpu.memory_space<smem>>
    %1211 = vector.broadcast %1210 : f32 to vector<12x128xf32>
    %1212 = arith.mulf %1211, %1209 : vector<12x128xf32>
    %1213 = arith.addf %1200, %1212 : vector<12x128xf32>
    %c196_141 = arith.constant 196 : index
    %1214 = memref.load %arg5[%c196_141] : memref<216xf32, #tpu.memory_space<smem>>
    %1215 = vector.broadcast %1214 : f32 to vector<12x128xf32>
    %1216 = arith.mulf %1215, %1209 : vector<12x128xf32>
    %1217 = arith.addf %1204, %1216 : vector<12x128xf32>
    %c197_142 = arith.constant 197 : index
    %1218 = memref.load %arg5[%c197_142] : memref<216xf32, #tpu.memory_space<smem>>
    %1219 = vector.broadcast %1218 : f32 to vector<12x128xf32>
    %1220 = arith.mulf %1219, %1209 : vector<12x128xf32>
    %1221 = arith.addf %1208, %1220 : vector<12x128xf32>
    %c1_i32_143 = arith.constant 1 : i32
    %1222 = tpu.dynamic_rotate %946 by %c1_i32_143 dim 1 : vector<12x128xf32>, i32 -> vector<12x128xf32>
    %cst_144 = arith.constant 0.000000e+00 : f32
    %1223 = vector.broadcast %cst_144 : f32 to vector<12x128xf32>
    %1224 = arith.select %4, %1222, %1223 : vector<12x128xi1>, vector<12x128xf32>
    %c127_i32_145 = arith.constant 127 : i32
    %1225 = tpu.dynamic_rotate %946 by %c127_i32_145 dim 1 : vector<12x128xf32>, i32 -> vector<12x128xf32>
    %cst_146 = arith.constant 0.000000e+00 : f32
    %1226 = vector.broadcast %cst_146 : f32 to vector<12x128xf32>
    %1227 = arith.select %6, %1225, %1226 : vector<12x128xi1>, vector<12x128xf32>
    %c1_i32_147 = arith.constant 1 : i32
    %1228 = tpu.dynamic_rotate %1224 by %c1_i32_147 dim 0 : vector<12x128xf32>, i32 -> vector<12x128xf32>
    %c6_148 = arith.constant 6 : index
    %1229 = memref.load %arg5[%c6_148] : memref<216xf32, #tpu.memory_space<smem>>
    %1230 = vector.broadcast %1229 : f32 to vector<12x128xf32>
    %1231 = arith.mulf %1230, %1228 : vector<12x128xf32>
    %1232 = arith.addf %1213, %1231 : vector<12x128xf32>
    %c7_149 = arith.constant 7 : index
    %1233 = memref.load %arg5[%c7_149] : memref<216xf32, #tpu.memory_space<smem>>
    %1234 = vector.broadcast %1233 : f32 to vector<12x128xf32>
    %1235 = arith.mulf %1234, %1228 : vector<12x128xf32>
    %1236 = arith.addf %1217, %1235 : vector<12x128xf32>
    %c8_150 = arith.constant 8 : index
    %1237 = memref.load %arg5[%c8_150] : memref<216xf32, #tpu.memory_space<smem>>
    %1238 = vector.broadcast %1237 : f32 to vector<12x128xf32>
    %1239 = arith.mulf %1238, %1228 : vector<12x128xf32>
    %1240 = arith.addf %1221, %1239 : vector<12x128xf32>
    %c78_151 = arith.constant 78 : index
    %1241 = memref.load %arg5[%c78_151] : memref<216xf32, #tpu.memory_space<smem>>
    %1242 = vector.broadcast %1241 : f32 to vector<12x128xf32>
    %1243 = arith.mulf %1242, %1224 : vector<12x128xf32>
    %1244 = arith.addf %1232, %1243 : vector<12x128xf32>
    %c79_152 = arith.constant 79 : index
    %1245 = memref.load %arg5[%c79_152] : memref<216xf32, #tpu.memory_space<smem>>
    %1246 = vector.broadcast %1245 : f32 to vector<12x128xf32>
    %1247 = arith.mulf %1246, %1224 : vector<12x128xf32>
    %1248 = arith.addf %1236, %1247 : vector<12x128xf32>
    %c80_153 = arith.constant 80 : index
    %1249 = memref.load %arg5[%c80_153] : memref<216xf32, #tpu.memory_space<smem>>
    %1250 = vector.broadcast %1249 : f32 to vector<12x128xf32>
    %1251 = arith.mulf %1250, %1224 : vector<12x128xf32>
    %1252 = arith.addf %1240, %1251 : vector<12x128xf32>
    %c11_i32_154 = arith.constant 11 : i32
    %1253 = tpu.dynamic_rotate %1224 by %c11_i32_154 dim 0 : vector<12x128xf32>, i32 -> vector<12x128xf32>
    %c150_155 = arith.constant 150 : index
    %1254 = memref.load %arg5[%c150_155] : memref<216xf32, #tpu.memory_space<smem>>
    %1255 = vector.broadcast %1254 : f32 to vector<12x128xf32>
    %1256 = arith.mulf %1255, %1253 : vector<12x128xf32>
    %1257 = arith.addf %1244, %1256 : vector<12x128xf32>
    %c151_156 = arith.constant 151 : index
    %1258 = memref.load %arg5[%c151_156] : memref<216xf32, #tpu.memory_space<smem>>
    %1259 = vector.broadcast %1258 : f32 to vector<12x128xf32>
    %1260 = arith.mulf %1259, %1253 : vector<12x128xf32>
    %1261 = arith.addf %1248, %1260 : vector<12x128xf32>
    %c152_157 = arith.constant 152 : index
    %1262 = memref.load %arg5[%c152_157] : memref<216xf32, #tpu.memory_space<smem>>
    %1263 = vector.broadcast %1262 : f32 to vector<12x128xf32>
    %1264 = arith.mulf %1263, %1253 : vector<12x128xf32>
    %1265 = arith.addf %1252, %1264 : vector<12x128xf32>
    %c1_i32_158 = arith.constant 1 : i32
    %1266 = tpu.dynamic_rotate %946 by %c1_i32_158 dim 0 : vector<12x128xf32>, i32 -> vector<12x128xf32>
    %c30_159 = arith.constant 30 : index
    %1267 = memref.load %arg5[%c30_159] : memref<216xf32, #tpu.memory_space<smem>>
    %1268 = vector.broadcast %1267 : f32 to vector<12x128xf32>
    %1269 = arith.mulf %1268, %1266 : vector<12x128xf32>
    %1270 = arith.addf %1257, %1269 : vector<12x128xf32>
    %c31_160 = arith.constant 31 : index
    %1271 = memref.load %arg5[%c31_160] : memref<216xf32, #tpu.memory_space<smem>>
    %1272 = vector.broadcast %1271 : f32 to vector<12x128xf32>
    %1273 = arith.mulf %1272, %1266 : vector<12x128xf32>
    %1274 = arith.addf %1261, %1273 : vector<12x128xf32>
    %c32_161 = arith.constant 32 : index
    %1275 = memref.load %arg5[%c32_161] : memref<216xf32, #tpu.memory_space<smem>>
    %1276 = vector.broadcast %1275 : f32 to vector<12x128xf32>
    %1277 = arith.mulf %1276, %1266 : vector<12x128xf32>
    %1278 = arith.addf %1265, %1277 : vector<12x128xf32>
    %c102_162 = arith.constant 102 : index
    %1279 = memref.load %arg5[%c102_162] : memref<216xf32, #tpu.memory_space<smem>>
    %1280 = vector.broadcast %1279 : f32 to vector<12x128xf32>
    %1281 = arith.mulf %1280, %946 : vector<12x128xf32>
    %1282 = arith.addf %1270, %1281 : vector<12x128xf32>
    %c103_163 = arith.constant 103 : index
    %1283 = memref.load %arg5[%c103_163] : memref<216xf32, #tpu.memory_space<smem>>
    %1284 = vector.broadcast %1283 : f32 to vector<12x128xf32>
    %1285 = arith.mulf %1284, %946 : vector<12x128xf32>
    %1286 = arith.addf %1274, %1285 : vector<12x128xf32>
    %c104_164 = arith.constant 104 : index
    %1287 = memref.load %arg5[%c104_164] : memref<216xf32, #tpu.memory_space<smem>>
    %1288 = vector.broadcast %1287 : f32 to vector<12x128xf32>
    %1289 = arith.mulf %1288, %946 : vector<12x128xf32>
    %1290 = arith.addf %1278, %1289 : vector<12x128xf32>
    %c11_i32_165 = arith.constant 11 : i32
    %1291 = tpu.dynamic_rotate %946 by %c11_i32_165 dim 0 : vector<12x128xf32>, i32 -> vector<12x128xf32>
    %c174_166 = arith.constant 174 : index
    %1292 = memref.load %arg5[%c174_166] : memref<216xf32, #tpu.memory_space<smem>>
    %1293 = vector.broadcast %1292 : f32 to vector<12x128xf32>
    %1294 = arith.mulf %1293, %1291 : vector<12x128xf32>
    %1295 = arith.addf %1282, %1294 : vector<12x128xf32>
    %c175_167 = arith.constant 175 : index
    %1296 = memref.load %arg5[%c175_167] : memref<216xf32, #tpu.memory_space<smem>>
    %1297 = vector.broadcast %1296 : f32 to vector<12x128xf32>
    %1298 = arith.mulf %1297, %1291 : vector<12x128xf32>
    %1299 = arith.addf %1286, %1298 : vector<12x128xf32>
    %c176_168 = arith.constant 176 : index
    %1300 = memref.load %arg5[%c176_168] : memref<216xf32, #tpu.memory_space<smem>>
    %1301 = vector.broadcast %1300 : f32 to vector<12x128xf32>
    %1302 = arith.mulf %1301, %1291 : vector<12x128xf32>
    %1303 = arith.addf %1290, %1302 : vector<12x128xf32>
    %c1_i32_169 = arith.constant 1 : i32
    %1304 = tpu.dynamic_rotate %1227 by %c1_i32_169 dim 0 : vector<12x128xf32>, i32 -> vector<12x128xf32>
    %c54_170 = arith.constant 54 : index
    %1305 = memref.load %arg5[%c54_170] : memref<216xf32, #tpu.memory_space<smem>>
    %1306 = vector.broadcast %1305 : f32 to vector<12x128xf32>
    %1307 = arith.mulf %1306, %1304 : vector<12x128xf32>
    %1308 = arith.addf %1295, %1307 : vector<12x128xf32>
    %c55_171 = arith.constant 55 : index
    %1309 = memref.load %arg5[%c55_171] : memref<216xf32, #tpu.memory_space<smem>>
    %1310 = vector.broadcast %1309 : f32 to vector<12x128xf32>
    %1311 = arith.mulf %1310, %1304 : vector<12x128xf32>
    %1312 = arith.addf %1299, %1311 : vector<12x128xf32>
    %c56_172 = arith.constant 56 : index
    %1313 = memref.load %arg5[%c56_172] : memref<216xf32, #tpu.memory_space<smem>>
    %1314 = vector.broadcast %1313 : f32 to vector<12x128xf32>
    %1315 = arith.mulf %1314, %1304 : vector<12x128xf32>
    %1316 = arith.addf %1303, %1315 : vector<12x128xf32>
    %c126_173 = arith.constant 126 : index
    %1317 = memref.load %arg5[%c126_173] : memref<216xf32, #tpu.memory_space<smem>>
    %1318 = vector.broadcast %1317 : f32 to vector<12x128xf32>
    %1319 = arith.mulf %1318, %1227 : vector<12x128xf32>
    %1320 = arith.addf %1308, %1319 : vector<12x128xf32>
    %c127_174 = arith.constant 127 : index
    %1321 = memref.load %arg5[%c127_174] : memref<216xf32, #tpu.memory_space<smem>>
    %1322 = vector.broadcast %1321 : f32 to vector<12x128xf32>
    %1323 = arith.mulf %1322, %1227 : vector<12x128xf32>
    %1324 = arith.addf %1312, %1323 : vector<12x128xf32>
    %c128_175 = arith.constant 128 : index
    %1325 = memref.load %arg5[%c128_175] : memref<216xf32, #tpu.memory_space<smem>>
    %1326 = vector.broadcast %1325 : f32 to vector<12x128xf32>
    %1327 = arith.mulf %1326, %1227 : vector<12x128xf32>
    %1328 = arith.addf %1316, %1327 : vector<12x128xf32>
    %c11_i32_176 = arith.constant 11 : i32
    %1329 = tpu.dynamic_rotate %1227 by %c11_i32_176 dim 0 : vector<12x128xf32>, i32 -> vector<12x128xf32>
    %c198_177 = arith.constant 198 : index
    %1330 = memref.load %arg5[%c198_177] : memref<216xf32, #tpu.memory_space<smem>>
    %1331 = vector.broadcast %1330 : f32 to vector<12x128xf32>
    %1332 = arith.mulf %1331, %1329 : vector<12x128xf32>
    %1333 = arith.addf %1320, %1332 : vector<12x128xf32>
    %c199_178 = arith.constant 199 : index
    %1334 = memref.load %arg5[%c199_178] : memref<216xf32, #tpu.memory_space<smem>>
    %1335 = vector.broadcast %1334 : f32 to vector<12x128xf32>
    %1336 = arith.mulf %1335, %1329 : vector<12x128xf32>
    %1337 = arith.addf %1324, %1336 : vector<12x128xf32>
    %c200_179 = arith.constant 200 : index
    %1338 = memref.load %arg5[%c200_179] : memref<216xf32, #tpu.memory_space<smem>>
    %1339 = vector.broadcast %1338 : f32 to vector<12x128xf32>
    %1340 = arith.mulf %1339, %1329 : vector<12x128xf32>
    %1341 = arith.addf %1328, %1340 : vector<12x128xf32>
    %c1_i32_180 = arith.constant 1 : i32
    %1342 = tpu.dynamic_rotate %953 by %c1_i32_180 dim 1 : vector<12x128xf32>, i32 -> vector<12x128xf32>
    %cst_181 = arith.constant 0.000000e+00 : f32
    %1343 = vector.broadcast %cst_181 : f32 to vector<12x128xf32>
    %1344 = arith.select %4, %1342, %1343 : vector<12x128xi1>, vector<12x128xf32>
    %c127_i32_182 = arith.constant 127 : i32
    %1345 = tpu.dynamic_rotate %953 by %c127_i32_182 dim 1 : vector<12x128xf32>, i32 -> vector<12x128xf32>
    %cst_183 = arith.constant 0.000000e+00 : f32
    %1346 = vector.broadcast %cst_183 : f32 to vector<12x128xf32>
    %1347 = arith.select %6, %1345, %1346 : vector<12x128xi1>, vector<12x128xf32>
    %c1_i32_184 = arith.constant 1 : i32
    %1348 = tpu.dynamic_rotate %1344 by %c1_i32_184 dim 0 : vector<12x128xf32>, i32 -> vector<12x128xf32>
    %c9_185 = arith.constant 9 : index
    %1349 = memref.load %arg5[%c9_185] : memref<216xf32, #tpu.memory_space<smem>>
    %1350 = vector.broadcast %1349 : f32 to vector<12x128xf32>
    %1351 = arith.mulf %1350, %1348 : vector<12x128xf32>
    %1352 = arith.addf %1333, %1351 : vector<12x128xf32>
    %c10_186 = arith.constant 10 : index
    %1353 = memref.load %arg5[%c10_186] : memref<216xf32, #tpu.memory_space<smem>>
    %1354 = vector.broadcast %1353 : f32 to vector<12x128xf32>
    %1355 = arith.mulf %1354, %1348 : vector<12x128xf32>
    %1356 = arith.addf %1337, %1355 : vector<12x128xf32>
    %c11_187 = arith.constant 11 : index
    %1357 = memref.load %arg5[%c11_187] : memref<216xf32, #tpu.memory_space<smem>>
    %1358 = vector.broadcast %1357 : f32 to vector<12x128xf32>
    %1359 = arith.mulf %1358, %1348 : vector<12x128xf32>
    %1360 = arith.addf %1341, %1359 : vector<12x128xf32>
    %c81_188 = arith.constant 81 : index
    %1361 = memref.load %arg5[%c81_188] : memref<216xf32, #tpu.memory_space<smem>>
    %1362 = vector.broadcast %1361 : f32 to vector<12x128xf32>
    %1363 = arith.mulf %1362, %1344 : vector<12x128xf32>
    %1364 = arith.addf %1352, %1363 : vector<12x128xf32>
    %c82_189 = arith.constant 82 : index
    %1365 = memref.load %arg5[%c82_189] : memref<216xf32, #tpu.memory_space<smem>>
    %1366 = vector.broadcast %1365 : f32 to vector<12x128xf32>
    %1367 = arith.mulf %1366, %1344 : vector<12x128xf32>
    %1368 = arith.addf %1356, %1367 : vector<12x128xf32>
    %c83_190 = arith.constant 83 : index
    %1369 = memref.load %arg5[%c83_190] : memref<216xf32, #tpu.memory_space<smem>>
    %1370 = vector.broadcast %1369 : f32 to vector<12x128xf32>
    %1371 = arith.mulf %1370, %1344 : vector<12x128xf32>
    %1372 = arith.addf %1360, %1371 : vector<12x128xf32>
    %c11_i32_191 = arith.constant 11 : i32
    %1373 = tpu.dynamic_rotate %1344 by %c11_i32_191 dim 0 : vector<12x128xf32>, i32 -> vector<12x128xf32>
    %c153_192 = arith.constant 153 : index
    %1374 = memref.load %arg5[%c153_192] : memref<216xf32, #tpu.memory_space<smem>>
    %1375 = vector.broadcast %1374 : f32 to vector<12x128xf32>
    %1376 = arith.mulf %1375, %1373 : vector<12x128xf32>
    %1377 = arith.addf %1364, %1376 : vector<12x128xf32>
    %c154_193 = arith.constant 154 : index
    %1378 = memref.load %arg5[%c154_193] : memref<216xf32, #tpu.memory_space<smem>>
    %1379 = vector.broadcast %1378 : f32 to vector<12x128xf32>
    %1380 = arith.mulf %1379, %1373 : vector<12x128xf32>
    %1381 = arith.addf %1368, %1380 : vector<12x128xf32>
    %c155_194 = arith.constant 155 : index
    %1382 = memref.load %arg5[%c155_194] : memref<216xf32, #tpu.memory_space<smem>>
    %1383 = vector.broadcast %1382 : f32 to vector<12x128xf32>
    %1384 = arith.mulf %1383, %1373 : vector<12x128xf32>
    %1385 = arith.addf %1372, %1384 : vector<12x128xf32>
    %c1_i32_195 = arith.constant 1 : i32
    %1386 = tpu.dynamic_rotate %953 by %c1_i32_195 dim 0 : vector<12x128xf32>, i32 -> vector<12x128xf32>
    %c33_196 = arith.constant 33 : index
    %1387 = memref.load %arg5[%c33_196] : memref<216xf32, #tpu.memory_space<smem>>
    %1388 = vector.broadcast %1387 : f32 to vector<12x128xf32>
    %1389 = arith.mulf %1388, %1386 : vector<12x128xf32>
    %1390 = arith.addf %1377, %1389 : vector<12x128xf32>
    %c34_197 = arith.constant 34 : index
    %1391 = memref.load %arg5[%c34_197] : memref<216xf32, #tpu.memory_space<smem>>
    %1392 = vector.broadcast %1391 : f32 to vector<12x128xf32>
    %1393 = arith.mulf %1392, %1386 : vector<12x128xf32>
    %1394 = arith.addf %1381, %1393 : vector<12x128xf32>
    %c35_198 = arith.constant 35 : index
    %1395 = memref.load %arg5[%c35_198] : memref<216xf32, #tpu.memory_space<smem>>
    %1396 = vector.broadcast %1395 : f32 to vector<12x128xf32>
    %1397 = arith.mulf %1396, %1386 : vector<12x128xf32>
    %1398 = arith.addf %1385, %1397 : vector<12x128xf32>
    %c105_199 = arith.constant 105 : index
    %1399 = memref.load %arg5[%c105_199] : memref<216xf32, #tpu.memory_space<smem>>
    %1400 = vector.broadcast %1399 : f32 to vector<12x128xf32>
    %1401 = arith.mulf %1400, %953 : vector<12x128xf32>
    %1402 = arith.addf %1390, %1401 : vector<12x128xf32>
    %c106_200 = arith.constant 106 : index
    %1403 = memref.load %arg5[%c106_200] : memref<216xf32, #tpu.memory_space<smem>>
    %1404 = vector.broadcast %1403 : f32 to vector<12x128xf32>
    %1405 = arith.mulf %1404, %953 : vector<12x128xf32>
    %1406 = arith.addf %1394, %1405 : vector<12x128xf32>
    %c107_201 = arith.constant 107 : index
    %1407 = memref.load %arg5[%c107_201] : memref<216xf32, #tpu.memory_space<smem>>
    %1408 = vector.broadcast %1407 : f32 to vector<12x128xf32>
    %1409 = arith.mulf %1408, %953 : vector<12x128xf32>
    %1410 = arith.addf %1398, %1409 : vector<12x128xf32>
    %c11_i32_202 = arith.constant 11 : i32
    %1411 = tpu.dynamic_rotate %953 by %c11_i32_202 dim 0 : vector<12x128xf32>, i32 -> vector<12x128xf32>
    %c177_203 = arith.constant 177 : index
    %1412 = memref.load %arg5[%c177_203] : memref<216xf32, #tpu.memory_space<smem>>
    %1413 = vector.broadcast %1412 : f32 to vector<12x128xf32>
    %1414 = arith.mulf %1413, %1411 : vector<12x128xf32>
    %1415 = arith.addf %1402, %1414 : vector<12x128xf32>
    %c178_204 = arith.constant 178 : index
    %1416 = memref.load %arg5[%c178_204] : memref<216xf32, #tpu.memory_space<smem>>
    %1417 = vector.broadcast %1416 : f32 to vector<12x128xf32>
    %1418 = arith.mulf %1417, %1411 : vector<12x128xf32>
    %1419 = arith.addf %1406, %1418 : vector<12x128xf32>
    %c179_205 = arith.constant 179 : index
    %1420 = memref.load %arg5[%c179_205] : memref<216xf32, #tpu.memory_space<smem>>
    %1421 = vector.broadcast %1420 : f32 to vector<12x128xf32>
    %1422 = arith.mulf %1421, %1411 : vector<12x128xf32>
    %1423 = arith.addf %1410, %1422 : vector<12x128xf32>
    %c1_i32_206 = arith.constant 1 : i32
    %1424 = tpu.dynamic_rotate %1347 by %c1_i32_206 dim 0 : vector<12x128xf32>, i32 -> vector<12x128xf32>
    %c57_207 = arith.constant 57 : index
    %1425 = memref.load %arg5[%c57_207] : memref<216xf32, #tpu.memory_space<smem>>
    %1426 = vector.broadcast %1425 : f32 to vector<12x128xf32>
    %1427 = arith.mulf %1426, %1424 : vector<12x128xf32>
    %1428 = arith.addf %1415, %1427 : vector<12x128xf32>
    %c58_208 = arith.constant 58 : index
    %1429 = memref.load %arg5[%c58_208] : memref<216xf32, #tpu.memory_space<smem>>
    %1430 = vector.broadcast %1429 : f32 to vector<12x128xf32>
    %1431 = arith.mulf %1430, %1424 : vector<12x128xf32>
    %1432 = arith.addf %1419, %1431 : vector<12x128xf32>
    %c59_209 = arith.constant 59 : index
    %1433 = memref.load %arg5[%c59_209] : memref<216xf32, #tpu.memory_space<smem>>
    %1434 = vector.broadcast %1433 : f32 to vector<12x128xf32>
    %1435 = arith.mulf %1434, %1424 : vector<12x128xf32>
    %1436 = arith.addf %1423, %1435 : vector<12x128xf32>
    %c129_210 = arith.constant 129 : index
    %1437 = memref.load %arg5[%c129_210] : memref<216xf32, #tpu.memory_space<smem>>
    %1438 = vector.broadcast %1437 : f32 to vector<12x128xf32>
    %1439 = arith.mulf %1438, %1347 : vector<12x128xf32>
    %1440 = arith.addf %1428, %1439 : vector<12x128xf32>
    %c130_211 = arith.constant 130 : index
    %1441 = memref.load %arg5[%c130_211] : memref<216xf32, #tpu.memory_space<smem>>
    %1442 = vector.broadcast %1441 : f32 to vector<12x128xf32>
    %1443 = arith.mulf %1442, %1347 : vector<12x128xf32>
    %1444 = arith.addf %1432, %1443 : vector<12x128xf32>
    %c131_212 = arith.constant 131 : index
    %1445 = memref.load %arg5[%c131_212] : memref<216xf32, #tpu.memory_space<smem>>
    %1446 = vector.broadcast %1445 : f32 to vector<12x128xf32>
    %1447 = arith.mulf %1446, %1347 : vector<12x128xf32>
    %1448 = arith.addf %1436, %1447 : vector<12x128xf32>
    %c11_i32_213 = arith.constant 11 : i32
    %1449 = tpu.dynamic_rotate %1347 by %c11_i32_213 dim 0 : vector<12x128xf32>, i32 -> vector<12x128xf32>
    %c201_214 = arith.constant 201 : index
    %1450 = memref.load %arg5[%c201_214] : memref<216xf32, #tpu.memory_space<smem>>
    %1451 = vector.broadcast %1450 : f32 to vector<12x128xf32>
    %1452 = arith.mulf %1451, %1449 : vector<12x128xf32>
    %1453 = arith.addf %1440, %1452 : vector<12x128xf32>
    %c202_215 = arith.constant 202 : index
    %1454 = memref.load %arg5[%c202_215] : memref<216xf32, #tpu.memory_space<smem>>
    %1455 = vector.broadcast %1454 : f32 to vector<12x128xf32>
    %1456 = arith.mulf %1455, %1449 : vector<12x128xf32>
    %1457 = arith.addf %1444, %1456 : vector<12x128xf32>
    %c203_216 = arith.constant 203 : index
    %1458 = memref.load %arg5[%c203_216] : memref<216xf32, #tpu.memory_space<smem>>
    %1459 = vector.broadcast %1458 : f32 to vector<12x128xf32>
    %1460 = arith.mulf %1459, %1449 : vector<12x128xf32>
    %1461 = arith.addf %1448, %1460 : vector<12x128xf32>
    %c1_i32_217 = arith.constant 1 : i32
    %1462 = tpu.dynamic_rotate %960 by %c1_i32_217 dim 1 : vector<12x128xf32>, i32 -> vector<12x128xf32>
    %cst_218 = arith.constant 0.000000e+00 : f32
    %1463 = vector.broadcast %cst_218 : f32 to vector<12x128xf32>
    %1464 = arith.select %4, %1462, %1463 : vector<12x128xi1>, vector<12x128xf32>
    %c127_i32_219 = arith.constant 127 : i32
    %1465 = tpu.dynamic_rotate %960 by %c127_i32_219 dim 1 : vector<12x128xf32>, i32 -> vector<12x128xf32>
    %cst_220 = arith.constant 0.000000e+00 : f32
    %1466 = vector.broadcast %cst_220 : f32 to vector<12x128xf32>
    %1467 = arith.select %6, %1465, %1466 : vector<12x128xi1>, vector<12x128xf32>
    %c1_i32_221 = arith.constant 1 : i32
    %1468 = tpu.dynamic_rotate %1464 by %c1_i32_221 dim 0 : vector<12x128xf32>, i32 -> vector<12x128xf32>
    %c12_222 = arith.constant 12 : index
    %1469 = memref.load %arg5[%c12_222] : memref<216xf32, #tpu.memory_space<smem>>
    %1470 = vector.broadcast %1469 : f32 to vector<12x128xf32>
    %1471 = arith.mulf %1470, %1468 : vector<12x128xf32>
    %1472 = arith.addf %1453, %1471 : vector<12x128xf32>
    %c13_223 = arith.constant 13 : index
    %1473 = memref.load %arg5[%c13_223] : memref<216xf32, #tpu.memory_space<smem>>
    %1474 = vector.broadcast %1473 : f32 to vector<12x128xf32>
    %1475 = arith.mulf %1474, %1468 : vector<12x128xf32>
    %1476 = arith.addf %1457, %1475 : vector<12x128xf32>
    %c14_224 = arith.constant 14 : index
    %1477 = memref.load %arg5[%c14_224] : memref<216xf32, #tpu.memory_space<smem>>
    %1478 = vector.broadcast %1477 : f32 to vector<12x128xf32>
    %1479 = arith.mulf %1478, %1468 : vector<12x128xf32>
    %1480 = arith.addf %1461, %1479 : vector<12x128xf32>
    %c84_225 = arith.constant 84 : index
    %1481 = memref.load %arg5[%c84_225] : memref<216xf32, #tpu.memory_space<smem>>
    %1482 = vector.broadcast %1481 : f32 to vector<12x128xf32>
    %1483 = arith.mulf %1482, %1464 : vector<12x128xf32>
    %1484 = arith.addf %1472, %1483 : vector<12x128xf32>
    %c85_226 = arith.constant 85 : index
    %1485 = memref.load %arg5[%c85_226] : memref<216xf32, #tpu.memory_space<smem>>
    %1486 = vector.broadcast %1485 : f32 to vector<12x128xf32>
    %1487 = arith.mulf %1486, %1464 : vector<12x128xf32>
    %1488 = arith.addf %1476, %1487 : vector<12x128xf32>
    %c86_227 = arith.constant 86 : index
    %1489 = memref.load %arg5[%c86_227] : memref<216xf32, #tpu.memory_space<smem>>
    %1490 = vector.broadcast %1489 : f32 to vector<12x128xf32>
    %1491 = arith.mulf %1490, %1464 : vector<12x128xf32>
    %1492 = arith.addf %1480, %1491 : vector<12x128xf32>
    %c11_i32_228 = arith.constant 11 : i32
    %1493 = tpu.dynamic_rotate %1464 by %c11_i32_228 dim 0 : vector<12x128xf32>, i32 -> vector<12x128xf32>
    %c156_229 = arith.constant 156 : index
    %1494 = memref.load %arg5[%c156_229] : memref<216xf32, #tpu.memory_space<smem>>
    %1495 = vector.broadcast %1494 : f32 to vector<12x128xf32>
    %1496 = arith.mulf %1495, %1493 : vector<12x128xf32>
    %1497 = arith.addf %1484, %1496 : vector<12x128xf32>
    %c157_230 = arith.constant 157 : index
    %1498 = memref.load %arg5[%c157_230] : memref<216xf32, #tpu.memory_space<smem>>
    %1499 = vector.broadcast %1498 : f32 to vector<12x128xf32>
    %1500 = arith.mulf %1499, %1493 : vector<12x128xf32>
    %1501 = arith.addf %1488, %1500 : vector<12x128xf32>
    %c158_231 = arith.constant 158 : index
    %1502 = memref.load %arg5[%c158_231] : memref<216xf32, #tpu.memory_space<smem>>
    %1503 = vector.broadcast %1502 : f32 to vector<12x128xf32>
    %1504 = arith.mulf %1503, %1493 : vector<12x128xf32>
    %1505 = arith.addf %1492, %1504 : vector<12x128xf32>
    %c1_i32_232 = arith.constant 1 : i32
    %1506 = tpu.dynamic_rotate %960 by %c1_i32_232 dim 0 : vector<12x128xf32>, i32 -> vector<12x128xf32>
    %c36_233 = arith.constant 36 : index
    %1507 = memref.load %arg5[%c36_233] : memref<216xf32, #tpu.memory_space<smem>>
    %1508 = vector.broadcast %1507 : f32 to vector<12x128xf32>
    %1509 = arith.mulf %1508, %1506 : vector<12x128xf32>
    %1510 = arith.addf %1497, %1509 : vector<12x128xf32>
    %c37_234 = arith.constant 37 : index
    %1511 = memref.load %arg5[%c37_234] : memref<216xf32, #tpu.memory_space<smem>>
    %1512 = vector.broadcast %1511 : f32 to vector<12x128xf32>
    %1513 = arith.mulf %1512, %1506 : vector<12x128xf32>
    %1514 = arith.addf %1501, %1513 : vector<12x128xf32>
    %c38_235 = arith.constant 38 : index
    %1515 = memref.load %arg5[%c38_235] : memref<216xf32, #tpu.memory_space<smem>>
    %1516 = vector.broadcast %1515 : f32 to vector<12x128xf32>
    %1517 = arith.mulf %1516, %1506 : vector<12x128xf32>
    %1518 = arith.addf %1505, %1517 : vector<12x128xf32>
    %c108_236 = arith.constant 108 : index
    %1519 = memref.load %arg5[%c108_236] : memref<216xf32, #tpu.memory_space<smem>>
    %1520 = vector.broadcast %1519 : f32 to vector<12x128xf32>
    %1521 = arith.mulf %1520, %960 : vector<12x128xf32>
    %1522 = arith.addf %1510, %1521 : vector<12x128xf32>
    %c109_237 = arith.constant 109 : index
    %1523 = memref.load %arg5[%c109_237] : memref<216xf32, #tpu.memory_space<smem>>
    %1524 = vector.broadcast %1523 : f32 to vector<12x128xf32>
    %1525 = arith.mulf %1524, %960 : vector<12x128xf32>
    %1526 = arith.addf %1514, %1525 : vector<12x128xf32>
    %c110_238 = arith.constant 110 : index
    %1527 = memref.load %arg5[%c110_238] : memref<216xf32, #tpu.memory_space<smem>>
    %1528 = vector.broadcast %1527 : f32 to vector<12x128xf32>
    %1529 = arith.mulf %1528, %960 : vector<12x128xf32>
    %1530 = arith.addf %1518, %1529 : vector<12x128xf32>
    %c11_i32_239 = arith.constant 11 : i32
    %1531 = tpu.dynamic_rotate %960 by %c11_i32_239 dim 0 : vector<12x128xf32>, i32 -> vector<12x128xf32>
    %c180_240 = arith.constant 180 : index
    %1532 = memref.load %arg5[%c180_240] : memref<216xf32, #tpu.memory_space<smem>>
    %1533 = vector.broadcast %1532 : f32 to vector<12x128xf32>
    %1534 = arith.mulf %1533, %1531 : vector<12x128xf32>
    %1535 = arith.addf %1522, %1534 : vector<12x128xf32>
    %c181_241 = arith.constant 181 : index
    %1536 = memref.load %arg5[%c181_241] : memref<216xf32, #tpu.memory_space<smem>>
    %1537 = vector.broadcast %1536 : f32 to vector<12x128xf32>
    %1538 = arith.mulf %1537, %1531 : vector<12x128xf32>
    %1539 = arith.addf %1526, %1538 : vector<12x128xf32>
    %c182_242 = arith.constant 182 : index
    %1540 = memref.load %arg5[%c182_242] : memref<216xf32, #tpu.memory_space<smem>>
    %1541 = vector.broadcast %1540 : f32 to vector<12x128xf32>
    %1542 = arith.mulf %1541, %1531 : vector<12x128xf32>
    %1543 = arith.addf %1530, %1542 : vector<12x128xf32>
    %c1_i32_243 = arith.constant 1 : i32
    %1544 = tpu.dynamic_rotate %1467 by %c1_i32_243 dim 0 : vector<12x128xf32>, i32 -> vector<12x128xf32>
    %c60_244 = arith.constant 60 : index
    %1545 = memref.load %arg5[%c60_244] : memref<216xf32, #tpu.memory_space<smem>>
    %1546 = vector.broadcast %1545 : f32 to vector<12x128xf32>
    %1547 = arith.mulf %1546, %1544 : vector<12x128xf32>
    %1548 = arith.addf %1535, %1547 : vector<12x128xf32>
    %c61_245 = arith.constant 61 : index
    %1549 = memref.load %arg5[%c61_245] : memref<216xf32, #tpu.memory_space<smem>>
    %1550 = vector.broadcast %1549 : f32 to vector<12x128xf32>
    %1551 = arith.mulf %1550, %1544 : vector<12x128xf32>
    %1552 = arith.addf %1539, %1551 : vector<12x128xf32>
    %c62_246 = arith.constant 62 : index
    %1553 = memref.load %arg5[%c62_246] : memref<216xf32, #tpu.memory_space<smem>>
    %1554 = vector.broadcast %1553 : f32 to vector<12x128xf32>
    %1555 = arith.mulf %1554, %1544 : vector<12x128xf32>
    %1556 = arith.addf %1543, %1555 : vector<12x128xf32>
    %c132_247 = arith.constant 132 : index
    %1557 = memref.load %arg5[%c132_247] : memref<216xf32, #tpu.memory_space<smem>>
    %1558 = vector.broadcast %1557 : f32 to vector<12x128xf32>
    %1559 = arith.mulf %1558, %1467 : vector<12x128xf32>
    %1560 = arith.addf %1548, %1559 : vector<12x128xf32>
    %c133_248 = arith.constant 133 : index
    %1561 = memref.load %arg5[%c133_248] : memref<216xf32, #tpu.memory_space<smem>>
    %1562 = vector.broadcast %1561 : f32 to vector<12x128xf32>
    %1563 = arith.mulf %1562, %1467 : vector<12x128xf32>
    %1564 = arith.addf %1552, %1563 : vector<12x128xf32>
    %c134_249 = arith.constant 134 : index
    %1565 = memref.load %arg5[%c134_249] : memref<216xf32, #tpu.memory_space<smem>>
    %1566 = vector.broadcast %1565 : f32 to vector<12x128xf32>
    %1567 = arith.mulf %1566, %1467 : vector<12x128xf32>
    %1568 = arith.addf %1556, %1567 : vector<12x128xf32>
    %c11_i32_250 = arith.constant 11 : i32
    %1569 = tpu.dynamic_rotate %1467 by %c11_i32_250 dim 0 : vector<12x128xf32>, i32 -> vector<12x128xf32>
    %c204_251 = arith.constant 204 : index
    %1570 = memref.load %arg5[%c204_251] : memref<216xf32, #tpu.memory_space<smem>>
    %1571 = vector.broadcast %1570 : f32 to vector<12x128xf32>
    %1572 = arith.mulf %1571, %1569 : vector<12x128xf32>
    %1573 = arith.addf %1560, %1572 : vector<12x128xf32>
    %c205_252 = arith.constant 205 : index
    %1574 = memref.load %arg5[%c205_252] : memref<216xf32, #tpu.memory_space<smem>>
    %1575 = vector.broadcast %1574 : f32 to vector<12x128xf32>
    %1576 = arith.mulf %1575, %1569 : vector<12x128xf32>
    %1577 = arith.addf %1564, %1576 : vector<12x128xf32>
    %c206_253 = arith.constant 206 : index
    %1578 = memref.load %arg5[%c206_253] : memref<216xf32, #tpu.memory_space<smem>>
    %1579 = vector.broadcast %1578 : f32 to vector<12x128xf32>
    %1580 = arith.mulf %1579, %1569 : vector<12x128xf32>
    %1581 = arith.addf %1568, %1580 : vector<12x128xf32>
    %c1_i32_254 = arith.constant 1 : i32
    %1582 = tpu.dynamic_rotate %967 by %c1_i32_254 dim 1 : vector<12x128xf32>, i32 -> vector<12x128xf32>
    %cst_255 = arith.constant 0.000000e+00 : f32
    %1583 = vector.broadcast %cst_255 : f32 to vector<12x128xf32>
    %1584 = arith.select %4, %1582, %1583 : vector<12x128xi1>, vector<12x128xf32>
    %c127_i32_256 = arith.constant 127 : i32
    %1585 = tpu.dynamic_rotate %967 by %c127_i32_256 dim 1 : vector<12x128xf32>, i32 -> vector<12x128xf32>
    %cst_257 = arith.constant 0.000000e+00 : f32
    %1586 = vector.broadcast %cst_257 : f32 to vector<12x128xf32>
    %1587 = arith.select %6, %1585, %1586 : vector<12x128xi1>, vector<12x128xf32>
    %c1_i32_258 = arith.constant 1 : i32
    %1588 = tpu.dynamic_rotate %1584 by %c1_i32_258 dim 0 : vector<12x128xf32>, i32 -> vector<12x128xf32>
    %c15_259 = arith.constant 15 : index
    %1589 = memref.load %arg5[%c15_259] : memref<216xf32, #tpu.memory_space<smem>>
    %1590 = vector.broadcast %1589 : f32 to vector<12x128xf32>
    %1591 = arith.mulf %1590, %1588 : vector<12x128xf32>
    %1592 = arith.addf %1573, %1591 : vector<12x128xf32>
    %c16_260 = arith.constant 16 : index
    %1593 = memref.load %arg5[%c16_260] : memref<216xf32, #tpu.memory_space<smem>>
    %1594 = vector.broadcast %1593 : f32 to vector<12x128xf32>
    %1595 = arith.mulf %1594, %1588 : vector<12x128xf32>
    %1596 = arith.addf %1577, %1595 : vector<12x128xf32>
    %c17_261 = arith.constant 17 : index
    %1597 = memref.load %arg5[%c17_261] : memref<216xf32, #tpu.memory_space<smem>>
    %1598 = vector.broadcast %1597 : f32 to vector<12x128xf32>
    %1599 = arith.mulf %1598, %1588 : vector<12x128xf32>
    %1600 = arith.addf %1581, %1599 : vector<12x128xf32>
    %c87_262 = arith.constant 87 : index
    %1601 = memref.load %arg5[%c87_262] : memref<216xf32, #tpu.memory_space<smem>>
    %1602 = vector.broadcast %1601 : f32 to vector<12x128xf32>
    %1603 = arith.mulf %1602, %1584 : vector<12x128xf32>
    %1604 = arith.addf %1592, %1603 : vector<12x128xf32>
    %c88_263 = arith.constant 88 : index
    %1605 = memref.load %arg5[%c88_263] : memref<216xf32, #tpu.memory_space<smem>>
    %1606 = vector.broadcast %1605 : f32 to vector<12x128xf32>
    %1607 = arith.mulf %1606, %1584 : vector<12x128xf32>
    %1608 = arith.addf %1596, %1607 : vector<12x128xf32>
    %c89_264 = arith.constant 89 : index
    %1609 = memref.load %arg5[%c89_264] : memref<216xf32, #tpu.memory_space<smem>>
    %1610 = vector.broadcast %1609 : f32 to vector<12x128xf32>
    %1611 = arith.mulf %1610, %1584 : vector<12x128xf32>
    %1612 = arith.addf %1600, %1611 : vector<12x128xf32>
    %c11_i32_265 = arith.constant 11 : i32
    %1613 = tpu.dynamic_rotate %1584 by %c11_i32_265 dim 0 : vector<12x128xf32>, i32 -> vector<12x128xf32>
    %c159_266 = arith.constant 159 : index
    %1614 = memref.load %arg5[%c159_266] : memref<216xf32, #tpu.memory_space<smem>>
    %1615 = vector.broadcast %1614 : f32 to vector<12x128xf32>
    %1616 = arith.mulf %1615, %1613 : vector<12x128xf32>
    %1617 = arith.addf %1604, %1616 : vector<12x128xf32>
    %c160_267 = arith.constant 160 : index
    %1618 = memref.load %arg5[%c160_267] : memref<216xf32, #tpu.memory_space<smem>>
    %1619 = vector.broadcast %1618 : f32 to vector<12x128xf32>
    %1620 = arith.mulf %1619, %1613 : vector<12x128xf32>
    %1621 = arith.addf %1608, %1620 : vector<12x128xf32>
    %c161_268 = arith.constant 161 : index
    %1622 = memref.load %arg5[%c161_268] : memref<216xf32, #tpu.memory_space<smem>>
    %1623 = vector.broadcast %1622 : f32 to vector<12x128xf32>
    %1624 = arith.mulf %1623, %1613 : vector<12x128xf32>
    %1625 = arith.addf %1612, %1624 : vector<12x128xf32>
    %c1_i32_269 = arith.constant 1 : i32
    %1626 = tpu.dynamic_rotate %967 by %c1_i32_269 dim 0 : vector<12x128xf32>, i32 -> vector<12x128xf32>
    %c39_270 = arith.constant 39 : index
    %1627 = memref.load %arg5[%c39_270] : memref<216xf32, #tpu.memory_space<smem>>
    %1628 = vector.broadcast %1627 : f32 to vector<12x128xf32>
    %1629 = arith.mulf %1628, %1626 : vector<12x128xf32>
    %1630 = arith.addf %1617, %1629 : vector<12x128xf32>
    %c40_271 = arith.constant 40 : index
    %1631 = memref.load %arg5[%c40_271] : memref<216xf32, #tpu.memory_space<smem>>
    %1632 = vector.broadcast %1631 : f32 to vector<12x128xf32>
    %1633 = arith.mulf %1632, %1626 : vector<12x128xf32>
    %1634 = arith.addf %1621, %1633 : vector<12x128xf32>
    %c41_272 = arith.constant 41 : index
    %1635 = memref.load %arg5[%c41_272] : memref<216xf32, #tpu.memory_space<smem>>
    %1636 = vector.broadcast %1635 : f32 to vector<12x128xf32>
    %1637 = arith.mulf %1636, %1626 : vector<12x128xf32>
    %1638 = arith.addf %1625, %1637 : vector<12x128xf32>
    %c111_273 = arith.constant 111 : index
    %1639 = memref.load %arg5[%c111_273] : memref<216xf32, #tpu.memory_space<smem>>
    %1640 = vector.broadcast %1639 : f32 to vector<12x128xf32>
    %1641 = arith.mulf %1640, %967 : vector<12x128xf32>
    %1642 = arith.addf %1630, %1641 : vector<12x128xf32>
    %c112_274 = arith.constant 112 : index
    %1643 = memref.load %arg5[%c112_274] : memref<216xf32, #tpu.memory_space<smem>>
    %1644 = vector.broadcast %1643 : f32 to vector<12x128xf32>
    %1645 = arith.mulf %1644, %967 : vector<12x128xf32>
    %1646 = arith.addf %1634, %1645 : vector<12x128xf32>
    %c113_275 = arith.constant 113 : index
    %1647 = memref.load %arg5[%c113_275] : memref<216xf32, #tpu.memory_space<smem>>
    %1648 = vector.broadcast %1647 : f32 to vector<12x128xf32>
    %1649 = arith.mulf %1648, %967 : vector<12x128xf32>
    %1650 = arith.addf %1638, %1649 : vector<12x128xf32>
    %c11_i32_276 = arith.constant 11 : i32
    %1651 = tpu.dynamic_rotate %967 by %c11_i32_276 dim 0 : vector<12x128xf32>, i32 -> vector<12x128xf32>
    %c183_277 = arith.constant 183 : index
    %1652 = memref.load %arg5[%c183_277] : memref<216xf32, #tpu.memory_space<smem>>
    %1653 = vector.broadcast %1652 : f32 to vector<12x128xf32>
    %1654 = arith.mulf %1653, %1651 : vector<12x128xf32>
    %1655 = arith.addf %1642, %1654 : vector<12x128xf32>
    %c184_278 = arith.constant 184 : index
    %1656 = memref.load %arg5[%c184_278] : memref<216xf32, #tpu.memory_space<smem>>
    %1657 = vector.broadcast %1656 : f32 to vector<12x128xf32>
    %1658 = arith.mulf %1657, %1651 : vector<12x128xf32>
    %1659 = arith.addf %1646, %1658 : vector<12x128xf32>
    %c185_279 = arith.constant 185 : index
    %1660 = memref.load %arg5[%c185_279] : memref<216xf32, #tpu.memory_space<smem>>
    %1661 = vector.broadcast %1660 : f32 to vector<12x128xf32>
    %1662 = arith.mulf %1661, %1651 : vector<12x128xf32>
    %1663 = arith.addf %1650, %1662 : vector<12x128xf32>
    %c1_i32_280 = arith.constant 1 : i32
    %1664 = tpu.dynamic_rotate %1587 by %c1_i32_280 dim 0 : vector<12x128xf32>, i32 -> vector<12x128xf32>
    %c63_281 = arith.constant 63 : index
    %1665 = memref.load %arg5[%c63_281] : memref<216xf32, #tpu.memory_space<smem>>
    %1666 = vector.broadcast %1665 : f32 to vector<12x128xf32>
    %1667 = arith.mulf %1666, %1664 : vector<12x128xf32>
    %1668 = arith.addf %1655, %1667 : vector<12x128xf32>
    %c64_282 = arith.constant 64 : index
    %1669 = memref.load %arg5[%c64_282] : memref<216xf32, #tpu.memory_space<smem>>
    %1670 = vector.broadcast %1669 : f32 to vector<12x128xf32>
    %1671 = arith.mulf %1670, %1664 : vector<12x128xf32>
    %1672 = arith.addf %1659, %1671 : vector<12x128xf32>
    %c65_283 = arith.constant 65 : index
    %1673 = memref.load %arg5[%c65_283] : memref<216xf32, #tpu.memory_space<smem>>
    %1674 = vector.broadcast %1673 : f32 to vector<12x128xf32>
    %1675 = arith.mulf %1674, %1664 : vector<12x128xf32>
    %1676 = arith.addf %1663, %1675 : vector<12x128xf32>
    %c135_284 = arith.constant 135 : index
    %1677 = memref.load %arg5[%c135_284] : memref<216xf32, #tpu.memory_space<smem>>
    %1678 = vector.broadcast %1677 : f32 to vector<12x128xf32>
    %1679 = arith.mulf %1678, %1587 : vector<12x128xf32>
    %1680 = arith.addf %1668, %1679 : vector<12x128xf32>
    %c136_285 = arith.constant 136 : index
    %1681 = memref.load %arg5[%c136_285] : memref<216xf32, #tpu.memory_space<smem>>
    %1682 = vector.broadcast %1681 : f32 to vector<12x128xf32>
    %1683 = arith.mulf %1682, %1587 : vector<12x128xf32>
    %1684 = arith.addf %1672, %1683 : vector<12x128xf32>
    %c137_286 = arith.constant 137 : index
    %1685 = memref.load %arg5[%c137_286] : memref<216xf32, #tpu.memory_space<smem>>
    %1686 = vector.broadcast %1685 : f32 to vector<12x128xf32>
    %1687 = arith.mulf %1686, %1587 : vector<12x128xf32>
    %1688 = arith.addf %1676, %1687 : vector<12x128xf32>
    %c11_i32_287 = arith.constant 11 : i32
    %1689 = tpu.dynamic_rotate %1587 by %c11_i32_287 dim 0 : vector<12x128xf32>, i32 -> vector<12x128xf32>
    %c207_288 = arith.constant 207 : index
    %1690 = memref.load %arg5[%c207_288] : memref<216xf32, #tpu.memory_space<smem>>
    %1691 = vector.broadcast %1690 : f32 to vector<12x128xf32>
    %1692 = arith.mulf %1691, %1689 : vector<12x128xf32>
    %1693 = arith.addf %1680, %1692 : vector<12x128xf32>
    %c208_289 = arith.constant 208 : index
    %1694 = memref.load %arg5[%c208_289] : memref<216xf32, #tpu.memory_space<smem>>
    %1695 = vector.broadcast %1694 : f32 to vector<12x128xf32>
    %1696 = arith.mulf %1695, %1689 : vector<12x128xf32>
    %1697 = arith.addf %1684, %1696 : vector<12x128xf32>
    %c209_290 = arith.constant 209 : index
    %1698 = memref.load %arg5[%c209_290] : memref<216xf32, #tpu.memory_space<smem>>
    %1699 = vector.broadcast %1698 : f32 to vector<12x128xf32>
    %1700 = arith.mulf %1699, %1689 : vector<12x128xf32>
    %1701 = arith.addf %1688, %1700 : vector<12x128xf32>
    %c1_i32_291 = arith.constant 1 : i32
    %1702 = tpu.dynamic_rotate %974 by %c1_i32_291 dim 1 : vector<12x128xf32>, i32 -> vector<12x128xf32>
    %cst_292 = arith.constant 0.000000e+00 : f32
    %1703 = vector.broadcast %cst_292 : f32 to vector<12x128xf32>
    %1704 = arith.select %4, %1702, %1703 : vector<12x128xi1>, vector<12x128xf32>
    %c127_i32_293 = arith.constant 127 : i32
    %1705 = tpu.dynamic_rotate %974 by %c127_i32_293 dim 1 : vector<12x128xf32>, i32 -> vector<12x128xf32>
    %cst_294 = arith.constant 0.000000e+00 : f32
    %1706 = vector.broadcast %cst_294 : f32 to vector<12x128xf32>
    %1707 = arith.select %6, %1705, %1706 : vector<12x128xi1>, vector<12x128xf32>
    %c1_i32_295 = arith.constant 1 : i32
    %1708 = tpu.dynamic_rotate %1704 by %c1_i32_295 dim 0 : vector<12x128xf32>, i32 -> vector<12x128xf32>
    %c18_296 = arith.constant 18 : index
    %1709 = memref.load %arg5[%c18_296] : memref<216xf32, #tpu.memory_space<smem>>
    %1710 = vector.broadcast %1709 : f32 to vector<12x128xf32>
    %1711 = arith.mulf %1710, %1708 : vector<12x128xf32>
    %1712 = arith.addf %1693, %1711 : vector<12x128xf32>
    %c19_297 = arith.constant 19 : index
    %1713 = memref.load %arg5[%c19_297] : memref<216xf32, #tpu.memory_space<smem>>
    %1714 = vector.broadcast %1713 : f32 to vector<12x128xf32>
    %1715 = arith.mulf %1714, %1708 : vector<12x128xf32>
    %1716 = arith.addf %1697, %1715 : vector<12x128xf32>
    %c20_298 = arith.constant 20 : index
    %1717 = memref.load %arg5[%c20_298] : memref<216xf32, #tpu.memory_space<smem>>
    %1718 = vector.broadcast %1717 : f32 to vector<12x128xf32>
    %1719 = arith.mulf %1718, %1708 : vector<12x128xf32>
    %1720 = arith.addf %1701, %1719 : vector<12x128xf32>
    %c90_299 = arith.constant 90 : index
    %1721 = memref.load %arg5[%c90_299] : memref<216xf32, #tpu.memory_space<smem>>
    %1722 = vector.broadcast %1721 : f32 to vector<12x128xf32>
    %1723 = arith.mulf %1722, %1704 : vector<12x128xf32>
    %1724 = arith.addf %1712, %1723 : vector<12x128xf32>
    %c91_300 = arith.constant 91 : index
    %1725 = memref.load %arg5[%c91_300] : memref<216xf32, #tpu.memory_space<smem>>
    %1726 = vector.broadcast %1725 : f32 to vector<12x128xf32>
    %1727 = arith.mulf %1726, %1704 : vector<12x128xf32>
    %1728 = arith.addf %1716, %1727 : vector<12x128xf32>
    %c92_301 = arith.constant 92 : index
    %1729 = memref.load %arg5[%c92_301] : memref<216xf32, #tpu.memory_space<smem>>
    %1730 = vector.broadcast %1729 : f32 to vector<12x128xf32>
    %1731 = arith.mulf %1730, %1704 : vector<12x128xf32>
    %1732 = arith.addf %1720, %1731 : vector<12x128xf32>
    %c11_i32_302 = arith.constant 11 : i32
    %1733 = tpu.dynamic_rotate %1704 by %c11_i32_302 dim 0 : vector<12x128xf32>, i32 -> vector<12x128xf32>
    %c162_303 = arith.constant 162 : index
    %1734 = memref.load %arg5[%c162_303] : memref<216xf32, #tpu.memory_space<smem>>
    %1735 = vector.broadcast %1734 : f32 to vector<12x128xf32>
    %1736 = arith.mulf %1735, %1733 : vector<12x128xf32>
    %1737 = arith.addf %1724, %1736 : vector<12x128xf32>
    %c163_304 = arith.constant 163 : index
    %1738 = memref.load %arg5[%c163_304] : memref<216xf32, #tpu.memory_space<smem>>
    %1739 = vector.broadcast %1738 : f32 to vector<12x128xf32>
    %1740 = arith.mulf %1739, %1733 : vector<12x128xf32>
    %1741 = arith.addf %1728, %1740 : vector<12x128xf32>
    %c164_305 = arith.constant 164 : index
    %1742 = memref.load %arg5[%c164_305] : memref<216xf32, #tpu.memory_space<smem>>
    %1743 = vector.broadcast %1742 : f32 to vector<12x128xf32>
    %1744 = arith.mulf %1743, %1733 : vector<12x128xf32>
    %1745 = arith.addf %1732, %1744 : vector<12x128xf32>
    %c1_i32_306 = arith.constant 1 : i32
    %1746 = tpu.dynamic_rotate %974 by %c1_i32_306 dim 0 : vector<12x128xf32>, i32 -> vector<12x128xf32>
    %c42_307 = arith.constant 42 : index
    %1747 = memref.load %arg5[%c42_307] : memref<216xf32, #tpu.memory_space<smem>>
    %1748 = vector.broadcast %1747 : f32 to vector<12x128xf32>
    %1749 = arith.mulf %1748, %1746 : vector<12x128xf32>
    %1750 = arith.addf %1737, %1749 : vector<12x128xf32>
    %c43_308 = arith.constant 43 : index
    %1751 = memref.load %arg5[%c43_308] : memref<216xf32, #tpu.memory_space<smem>>
    %1752 = vector.broadcast %1751 : f32 to vector<12x128xf32>
    %1753 = arith.mulf %1752, %1746 : vector<12x128xf32>
    %1754 = arith.addf %1741, %1753 : vector<12x128xf32>
    %c44_309 = arith.constant 44 : index
    %1755 = memref.load %arg5[%c44_309] : memref<216xf32, #tpu.memory_space<smem>>
    %1756 = vector.broadcast %1755 : f32 to vector<12x128xf32>
    %1757 = arith.mulf %1756, %1746 : vector<12x128xf32>
    %1758 = arith.addf %1745, %1757 : vector<12x128xf32>
    %c114_310 = arith.constant 114 : index
    %1759 = memref.load %arg5[%c114_310] : memref<216xf32, #tpu.memory_space<smem>>
    %1760 = vector.broadcast %1759 : f32 to vector<12x128xf32>
    %1761 = arith.mulf %1760, %974 : vector<12x128xf32>
    %1762 = arith.addf %1750, %1761 : vector<12x128xf32>
    %c115_311 = arith.constant 115 : index
    %1763 = memref.load %arg5[%c115_311] : memref<216xf32, #tpu.memory_space<smem>>
    %1764 = vector.broadcast %1763 : f32 to vector<12x128xf32>
    %1765 = arith.mulf %1764, %974 : vector<12x128xf32>
    %1766 = arith.addf %1754, %1765 : vector<12x128xf32>
    %c116_312 = arith.constant 116 : index
    %1767 = memref.load %arg5[%c116_312] : memref<216xf32, #tpu.memory_space<smem>>
    %1768 = vector.broadcast %1767 : f32 to vector<12x128xf32>
    %1769 = arith.mulf %1768, %974 : vector<12x128xf32>
    %1770 = arith.addf %1758, %1769 : vector<12x128xf32>
    %c11_i32_313 = arith.constant 11 : i32
    %1771 = tpu.dynamic_rotate %974 by %c11_i32_313 dim 0 : vector<12x128xf32>, i32 -> vector<12x128xf32>
    %c186_314 = arith.constant 186 : index
    %1772 = memref.load %arg5[%c186_314] : memref<216xf32, #tpu.memory_space<smem>>
    %1773 = vector.broadcast %1772 : f32 to vector<12x128xf32>
    %1774 = arith.mulf %1773, %1771 : vector<12x128xf32>
    %1775 = arith.addf %1762, %1774 : vector<12x128xf32>
    %c187_315 = arith.constant 187 : index
    %1776 = memref.load %arg5[%c187_315] : memref<216xf32, #tpu.memory_space<smem>>
    %1777 = vector.broadcast %1776 : f32 to vector<12x128xf32>
    %1778 = arith.mulf %1777, %1771 : vector<12x128xf32>
    %1779 = arith.addf %1766, %1778 : vector<12x128xf32>
    %c188_316 = arith.constant 188 : index
    %1780 = memref.load %arg5[%c188_316] : memref<216xf32, #tpu.memory_space<smem>>
    %1781 = vector.broadcast %1780 : f32 to vector<12x128xf32>
    %1782 = arith.mulf %1781, %1771 : vector<12x128xf32>
    %1783 = arith.addf %1770, %1782 : vector<12x128xf32>
    %c1_i32_317 = arith.constant 1 : i32
    %1784 = tpu.dynamic_rotate %1707 by %c1_i32_317 dim 0 : vector<12x128xf32>, i32 -> vector<12x128xf32>
    %c66_318 = arith.constant 66 : index
    %1785 = memref.load %arg5[%c66_318] : memref<216xf32, #tpu.memory_space<smem>>
    %1786 = vector.broadcast %1785 : f32 to vector<12x128xf32>
    %1787 = arith.mulf %1786, %1784 : vector<12x128xf32>
    %1788 = arith.addf %1775, %1787 : vector<12x128xf32>
    %c67_319 = arith.constant 67 : index
    %1789 = memref.load %arg5[%c67_319] : memref<216xf32, #tpu.memory_space<smem>>
    %1790 = vector.broadcast %1789 : f32 to vector<12x128xf32>
    %1791 = arith.mulf %1790, %1784 : vector<12x128xf32>
    %1792 = arith.addf %1779, %1791 : vector<12x128xf32>
    %c68_320 = arith.constant 68 : index
    %1793 = memref.load %arg5[%c68_320] : memref<216xf32, #tpu.memory_space<smem>>
    %1794 = vector.broadcast %1793 : f32 to vector<12x128xf32>
    %1795 = arith.mulf %1794, %1784 : vector<12x128xf32>
    %1796 = arith.addf %1783, %1795 : vector<12x128xf32>
    %c138_321 = arith.constant 138 : index
    %1797 = memref.load %arg5[%c138_321] : memref<216xf32, #tpu.memory_space<smem>>
    %1798 = vector.broadcast %1797 : f32 to vector<12x128xf32>
    %1799 = arith.mulf %1798, %1707 : vector<12x128xf32>
    %1800 = arith.addf %1788, %1799 : vector<12x128xf32>
    %c139_322 = arith.constant 139 : index
    %1801 = memref.load %arg5[%c139_322] : memref<216xf32, #tpu.memory_space<smem>>
    %1802 = vector.broadcast %1801 : f32 to vector<12x128xf32>
    %1803 = arith.mulf %1802, %1707 : vector<12x128xf32>
    %1804 = arith.addf %1792, %1803 : vector<12x128xf32>
    %c140_323 = arith.constant 140 : index
    %1805 = memref.load %arg5[%c140_323] : memref<216xf32, #tpu.memory_space<smem>>
    %1806 = vector.broadcast %1805 : f32 to vector<12x128xf32>
    %1807 = arith.mulf %1806, %1707 : vector<12x128xf32>
    %1808 = arith.addf %1796, %1807 : vector<12x128xf32>
    %c11_i32_324 = arith.constant 11 : i32
    %1809 = tpu.dynamic_rotate %1707 by %c11_i32_324 dim 0 : vector<12x128xf32>, i32 -> vector<12x128xf32>
    %c210_325 = arith.constant 210 : index
    %1810 = memref.load %arg5[%c210_325] : memref<216xf32, #tpu.memory_space<smem>>
    %1811 = vector.broadcast %1810 : f32 to vector<12x128xf32>
    %1812 = arith.mulf %1811, %1809 : vector<12x128xf32>
    %1813 = arith.addf %1800, %1812 : vector<12x128xf32>
    %c211_326 = arith.constant 211 : index
    %1814 = memref.load %arg5[%c211_326] : memref<216xf32, #tpu.memory_space<smem>>
    %1815 = vector.broadcast %1814 : f32 to vector<12x128xf32>
    %1816 = arith.mulf %1815, %1809 : vector<12x128xf32>
    %1817 = arith.addf %1804, %1816 : vector<12x128xf32>
    %c212_327 = arith.constant 212 : index
    %1818 = memref.load %arg5[%c212_327] : memref<216xf32, #tpu.memory_space<smem>>
    %1819 = vector.broadcast %1818 : f32 to vector<12x128xf32>
    %1820 = arith.mulf %1819, %1809 : vector<12x128xf32>
    %1821 = arith.addf %1808, %1820 : vector<12x128xf32>
    %c1_i32_328 = arith.constant 1 : i32
    %1822 = tpu.dynamic_rotate %981 by %c1_i32_328 dim 1 : vector<12x128xf32>, i32 -> vector<12x128xf32>
    %cst_329 = arith.constant 0.000000e+00 : f32
    %1823 = vector.broadcast %cst_329 : f32 to vector<12x128xf32>
    %1824 = arith.select %4, %1822, %1823 : vector<12x128xi1>, vector<12x128xf32>
    %c127_i32_330 = arith.constant 127 : i32
    %1825 = tpu.dynamic_rotate %981 by %c127_i32_330 dim 1 : vector<12x128xf32>, i32 -> vector<12x128xf32>
    %cst_331 = arith.constant 0.000000e+00 : f32
    %1826 = vector.broadcast %cst_331 : f32 to vector<12x128xf32>
    %1827 = arith.select %6, %1825, %1826 : vector<12x128xi1>, vector<12x128xf32>
    %c1_i32_332 = arith.constant 1 : i32
    %1828 = tpu.dynamic_rotate %1824 by %c1_i32_332 dim 0 : vector<12x128xf32>, i32 -> vector<12x128xf32>
    %c21_333 = arith.constant 21 : index
    %1829 = memref.load %arg5[%c21_333] : memref<216xf32, #tpu.memory_space<smem>>
    %1830 = vector.broadcast %1829 : f32 to vector<12x128xf32>
    %1831 = arith.mulf %1830, %1828 : vector<12x128xf32>
    %1832 = arith.addf %1813, %1831 : vector<12x128xf32>
    %c22_334 = arith.constant 22 : index
    %1833 = memref.load %arg5[%c22_334] : memref<216xf32, #tpu.memory_space<smem>>
    %1834 = vector.broadcast %1833 : f32 to vector<12x128xf32>
    %1835 = arith.mulf %1834, %1828 : vector<12x128xf32>
    %1836 = arith.addf %1817, %1835 : vector<12x128xf32>
    %c23_335 = arith.constant 23 : index
    %1837 = memref.load %arg5[%c23_335] : memref<216xf32, #tpu.memory_space<smem>>
    %1838 = vector.broadcast %1837 : f32 to vector<12x128xf32>
    %1839 = arith.mulf %1838, %1828 : vector<12x128xf32>
    %1840 = arith.addf %1821, %1839 : vector<12x128xf32>
    %c93_336 = arith.constant 93 : index
    %1841 = memref.load %arg5[%c93_336] : memref<216xf32, #tpu.memory_space<smem>>
    %1842 = vector.broadcast %1841 : f32 to vector<12x128xf32>
    %1843 = arith.mulf %1842, %1824 : vector<12x128xf32>
    %1844 = arith.addf %1832, %1843 : vector<12x128xf32>
    %c94_337 = arith.constant 94 : index
    %1845 = memref.load %arg5[%c94_337] : memref<216xf32, #tpu.memory_space<smem>>
    %1846 = vector.broadcast %1845 : f32 to vector<12x128xf32>
    %1847 = arith.mulf %1846, %1824 : vector<12x128xf32>
    %1848 = arith.addf %1836, %1847 : vector<12x128xf32>
    %c95_338 = arith.constant 95 : index
    %1849 = memref.load %arg5[%c95_338] : memref<216xf32, #tpu.memory_space<smem>>
    %1850 = vector.broadcast %1849 : f32 to vector<12x128xf32>
    %1851 = arith.mulf %1850, %1824 : vector<12x128xf32>
    %1852 = arith.addf %1840, %1851 : vector<12x128xf32>
    %c11_i32_339 = arith.constant 11 : i32
    %1853 = tpu.dynamic_rotate %1824 by %c11_i32_339 dim 0 : vector<12x128xf32>, i32 -> vector<12x128xf32>
    %c165_340 = arith.constant 165 : index
    %1854 = memref.load %arg5[%c165_340] : memref<216xf32, #tpu.memory_space<smem>>
    %1855 = vector.broadcast %1854 : f32 to vector<12x128xf32>
    %1856 = arith.mulf %1855, %1853 : vector<12x128xf32>
    %1857 = arith.addf %1844, %1856 : vector<12x128xf32>
    %c166_341 = arith.constant 166 : index
    %1858 = memref.load %arg5[%c166_341] : memref<216xf32, #tpu.memory_space<smem>>
    %1859 = vector.broadcast %1858 : f32 to vector<12x128xf32>
    %1860 = arith.mulf %1859, %1853 : vector<12x128xf32>
    %1861 = arith.addf %1848, %1860 : vector<12x128xf32>
    %c167_342 = arith.constant 167 : index
    %1862 = memref.load %arg5[%c167_342] : memref<216xf32, #tpu.memory_space<smem>>
    %1863 = vector.broadcast %1862 : f32 to vector<12x128xf32>
    %1864 = arith.mulf %1863, %1853 : vector<12x128xf32>
    %1865 = arith.addf %1852, %1864 : vector<12x128xf32>
    %c1_i32_343 = arith.constant 1 : i32
    %1866 = tpu.dynamic_rotate %981 by %c1_i32_343 dim 0 : vector<12x128xf32>, i32 -> vector<12x128xf32>
    %c45_344 = arith.constant 45 : index
    %1867 = memref.load %arg5[%c45_344] : memref<216xf32, #tpu.memory_space<smem>>
    %1868 = vector.broadcast %1867 : f32 to vector<12x128xf32>
    %1869 = arith.mulf %1868, %1866 : vector<12x128xf32>
    %1870 = arith.addf %1857, %1869 : vector<12x128xf32>
    %c46_345 = arith.constant 46 : index
    %1871 = memref.load %arg5[%c46_345] : memref<216xf32, #tpu.memory_space<smem>>
    %1872 = vector.broadcast %1871 : f32 to vector<12x128xf32>
    %1873 = arith.mulf %1872, %1866 : vector<12x128xf32>
    %1874 = arith.addf %1861, %1873 : vector<12x128xf32>
    %c47_346 = arith.constant 47 : index
    %1875 = memref.load %arg5[%c47_346] : memref<216xf32, #tpu.memory_space<smem>>
    %1876 = vector.broadcast %1875 : f32 to vector<12x128xf32>
    %1877 = arith.mulf %1876, %1866 : vector<12x128xf32>
    %1878 = arith.addf %1865, %1877 : vector<12x128xf32>
    %c117_347 = arith.constant 117 : index
    %1879 = memref.load %arg5[%c117_347] : memref<216xf32, #tpu.memory_space<smem>>
    %1880 = vector.broadcast %1879 : f32 to vector<12x128xf32>
    %1881 = arith.mulf %1880, %981 : vector<12x128xf32>
    %1882 = arith.addf %1870, %1881 : vector<12x128xf32>
    %c118_348 = arith.constant 118 : index
    %1883 = memref.load %arg5[%c118_348] : memref<216xf32, #tpu.memory_space<smem>>
    %1884 = vector.broadcast %1883 : f32 to vector<12x128xf32>
    %1885 = arith.mulf %1884, %981 : vector<12x128xf32>
    %1886 = arith.addf %1874, %1885 : vector<12x128xf32>
    %c119_349 = arith.constant 119 : index
    %1887 = memref.load %arg5[%c119_349] : memref<216xf32, #tpu.memory_space<smem>>
    %1888 = vector.broadcast %1887 : f32 to vector<12x128xf32>
    %1889 = arith.mulf %1888, %981 : vector<12x128xf32>
    %1890 = arith.addf %1878, %1889 : vector<12x128xf32>
    %c11_i32_350 = arith.constant 11 : i32
    %1891 = tpu.dynamic_rotate %981 by %c11_i32_350 dim 0 : vector<12x128xf32>, i32 -> vector<12x128xf32>
    %c189_351 = arith.constant 189 : index
    %1892 = memref.load %arg5[%c189_351] : memref<216xf32, #tpu.memory_space<smem>>
    %1893 = vector.broadcast %1892 : f32 to vector<12x128xf32>
    %1894 = arith.mulf %1893, %1891 : vector<12x128xf32>
    %1895 = arith.addf %1882, %1894 : vector<12x128xf32>
    %c190_352 = arith.constant 190 : index
    %1896 = memref.load %arg5[%c190_352] : memref<216xf32, #tpu.memory_space<smem>>
    %1897 = vector.broadcast %1896 : f32 to vector<12x128xf32>
    %1898 = arith.mulf %1897, %1891 : vector<12x128xf32>
    %1899 = arith.addf %1886, %1898 : vector<12x128xf32>
    %c191_353 = arith.constant 191 : index
    %1900 = memref.load %arg5[%c191_353] : memref<216xf32, #tpu.memory_space<smem>>
    %1901 = vector.broadcast %1900 : f32 to vector<12x128xf32>
    %1902 = arith.mulf %1901, %1891 : vector<12x128xf32>
    %1903 = arith.addf %1890, %1902 : vector<12x128xf32>
    %c1_i32_354 = arith.constant 1 : i32
    %1904 = tpu.dynamic_rotate %1827 by %c1_i32_354 dim 0 : vector<12x128xf32>, i32 -> vector<12x128xf32>
    %c69_355 = arith.constant 69 : index
    %1905 = memref.load %arg5[%c69_355] : memref<216xf32, #tpu.memory_space<smem>>
    %1906 = vector.broadcast %1905 : f32 to vector<12x128xf32>
    %1907 = arith.mulf %1906, %1904 : vector<12x128xf32>
    %1908 = arith.addf %1895, %1907 : vector<12x128xf32>
    %c70_356 = arith.constant 70 : index
    %1909 = memref.load %arg5[%c70_356] : memref<216xf32, #tpu.memory_space<smem>>
    %1910 = vector.broadcast %1909 : f32 to vector<12x128xf32>
    %1911 = arith.mulf %1910, %1904 : vector<12x128xf32>
    %1912 = arith.addf %1899, %1911 : vector<12x128xf32>
    %c71_357 = arith.constant 71 : index
    %1913 = memref.load %arg5[%c71_357] : memref<216xf32, #tpu.memory_space<smem>>
    %1914 = vector.broadcast %1913 : f32 to vector<12x128xf32>
    %1915 = arith.mulf %1914, %1904 : vector<12x128xf32>
    %1916 = arith.addf %1903, %1915 : vector<12x128xf32>
    %c141_358 = arith.constant 141 : index
    %1917 = memref.load %arg5[%c141_358] : memref<216xf32, #tpu.memory_space<smem>>
    %1918 = vector.broadcast %1917 : f32 to vector<12x128xf32>
    %1919 = arith.mulf %1918, %1827 : vector<12x128xf32>
    %1920 = arith.addf %1908, %1919 : vector<12x128xf32>
    %c142_359 = arith.constant 142 : index
    %1921 = memref.load %arg5[%c142_359] : memref<216xf32, #tpu.memory_space<smem>>
    %1922 = vector.broadcast %1921 : f32 to vector<12x128xf32>
    %1923 = arith.mulf %1922, %1827 : vector<12x128xf32>
    %1924 = arith.addf %1912, %1923 : vector<12x128xf32>
    %c143_360 = arith.constant 143 : index
    %1925 = memref.load %arg5[%c143_360] : memref<216xf32, #tpu.memory_space<smem>>
    %1926 = vector.broadcast %1925 : f32 to vector<12x128xf32>
    %1927 = arith.mulf %1926, %1827 : vector<12x128xf32>
    %1928 = arith.addf %1916, %1927 : vector<12x128xf32>
    %c11_i32_361 = arith.constant 11 : i32
    %1929 = tpu.dynamic_rotate %1827 by %c11_i32_361 dim 0 : vector<12x128xf32>, i32 -> vector<12x128xf32>
    %c213_362 = arith.constant 213 : index
    %1930 = memref.load %arg5[%c213_362] : memref<216xf32, #tpu.memory_space<smem>>
    %1931 = vector.broadcast %1930 : f32 to vector<12x128xf32>
    %1932 = arith.mulf %1931, %1929 : vector<12x128xf32>
    %1933 = arith.addf %1920, %1932 : vector<12x128xf32>
    %c214_363 = arith.constant 214 : index
    %1934 = memref.load %arg5[%c214_363] : memref<216xf32, #tpu.memory_space<smem>>
    %1935 = vector.broadcast %1934 : f32 to vector<12x128xf32>
    %1936 = arith.mulf %1935, %1929 : vector<12x128xf32>
    %1937 = arith.addf %1924, %1936 : vector<12x128xf32>
    %c215_364 = arith.constant 215 : index
    %1938 = memref.load %arg5[%c215_364] : memref<216xf32, #tpu.memory_space<smem>>
    %1939 = vector.broadcast %1938 : f32 to vector<12x128xf32>
    %1940 = arith.mulf %1939, %1929 : vector<12x128xf32>
    %1941 = arith.addf %1928, %1940 : vector<12x128xf32>
    %1942 = vector.extract_strided_slice %1933 {offsets = [2, 0], sizes = [8, 128], strides = [1, 1]} : vector<12x128xf32> to vector<8x128xf32>
    %c0_365 = arith.constant 0 : index
    %1943 = memref.load %arg6[%c0_365] : memref<3xf32, #tpu.memory_space<smem>>
    %1944 = vector.broadcast %1943 : f32 to vector<8x128xf32>
    %1945 = arith.addf %1942, %1944 : vector<8x128xf32>
    %c0_366 = arith.constant 0 : index
    %c0_367 = arith.constant 0 : index
    %c0_368 = arith.constant 0 : index
    %c0_369 = arith.constant 0 : index
    %1946 = vector.load %arg7[%c0_366, %c0_367, %c0_368, %c0_369] : memref<1x3x8x128xf32, #tpu.memory_space<vmem>>, vector<1x1x8x128xf32>
    %1947 = vector.shape_cast %1946 : vector<1x1x8x128xf32> to vector<8x128xf32>
    %1948 = vector.shape_cast %1945 : vector<8x128xf32> to vector<1x1x8x128xf32>
    tpu.vector_store %arg7[%c0_366, %c0_367, %c0_368, %c0_369], %1948 {strides = array<i32>} : memref<1x3x8x128xf32, #tpu.memory_space<vmem>>, vector<1x1x8x128xf32>,
    %1949 = vector.extract_strided_slice %1937 {offsets = [2, 0], sizes = [8, 128], strides = [1, 1]} : vector<12x128xf32> to vector<8x128xf32>
    %c1_370 = arith.constant 1 : index
    %1950 = memref.load %arg6[%c1_370] : memref<3xf32, #tpu.memory_space<smem>>
    %1951 = vector.broadcast %1950 : f32 to vector<8x128xf32>
    %1952 = arith.addf %1949, %1951 : vector<8x128xf32>
    %c0_371 = arith.constant 0 : index
    %c1_372 = arith.constant 1 : index
    %c0_373 = arith.constant 0 : index
    %c0_374 = arith.constant 0 : index
    %1953 = vector.load %arg7[%c0_371, %c1_372, %c0_373, %c0_374] : memref<1x3x8x128xf32, #tpu.memory_space<vmem>>, vector<1x1x8x128xf32>
    %1954 = vector.shape_cast %1953 : vector<1x1x8x128xf32> to vector<8x128xf32>
    %1955 = vector.shape_cast %1952 : vector<8x128xf32> to vector<1x1x8x128xf32>
    tpu.vector_store %arg7[%c0_371, %c1_372, %c0_373, %c0_374], %1955 {strides = array<i32>} : memref<1x3x8x128xf32, #tpu.memory_space<vmem>>, vector<1x1x8x128xf32>,
    %1956 = vector.extract_strided_slice %1941 {offsets = [2, 0], sizes = [8, 128], strides = [1, 1]} : vector<12x128xf32> to vector<8x128xf32>
    %c2_375 = arith.constant 2 : index
    %1957 = memref.load %arg6[%c2_375] : memref<3xf32, #tpu.memory_space<smem>>
    %1958 = vector.broadcast %1957 : f32 to vector<8x128xf32>
    %1959 = arith.addf %1956, %1958 : vector<8x128xf32>
    %c0_376 = arith.constant 0 : index
    %c2_377 = arith.constant 2 : index
    %c0_378 = arith.constant 0 : index
    %c0_379 = arith.constant 0 : index
    %1960 = vector.load %arg7[%c0_376, %c2_377, %c0_378, %c0_379] : memref<1x3x8x128xf32, #tpu.memory_space<vmem>>, vector<1x1x8x128xf32>
    %1961 = vector.shape_cast %1960 : vector<1x1x8x128xf32> to vector<8x128xf32>
    %1962 = vector.shape_cast %1959 : vector<8x128xf32> to vector<1x1x8x128xf32>
    tpu.vector_store %arg7[%c0_376, %c2_377, %c0_378, %c0_379], %1962 {strides = array<i32>} : memref<1x3x8x128xf32, #tpu.memory_space<vmem>>, vector<1x1x8x128xf32>,
    return
  }
  func.func @transform_1(%arg0: i32, %arg1: i32) -> i32 {
    %c0_i32 = arith.constant 0 : i32
    %c0_i32_0 = arith.constant 0 : i32
    return %c0_i32 : i32
  }
  func.func @transform_2(%arg0: i32, %arg1: i32) -> i32 {
    %c0_i32 = arith.constant 0 : i32
    %c0_i32_0 = arith.constant 0 : i32
    return %c0_i32 : i32
  }
  func.func @transform_3(%arg0: i32, %arg1: i32) -> i32 {
    %c0_i32 = arith.constant 0 : i32
    %c0_i32_0 = arith.constant 0 : i32
    return %c0_i32 : i32
  }
  func.func @transform_4(%arg0: i32, %arg1: i32) -> i32 {
    %c0_i32 = arith.constant 0 : i32
    %c0_i32_0 = arith.constant 0 : i32
    return %c0_i32 : i32
  }
  func.func @transform_5(%arg0: i32, %arg1: i32) -> (i32, i32, i32, i32) {
    %c0_i32 = arith.constant 0 : i32
    %c0_i32_0 = arith.constant 0 : i32
    %c0_i32_1 = arith.constant 0 : i32
    return %arg0, %c0_i32, %arg1, %c0_i32_0 : i32, i32, i32, i32
  }
}

</mosaic_0001>

<llo_original>
// kernel: model_forward.1
$region0: #{model_forward.1}
  #allocation0 [shape = 'u32[]', space=smem, size = 0x4, offset = 0x4, fixed_abs, tag = 'smem constant byte address 0x4 - core index']
  #allocation1 [shape = 'u32[144,128]{1,0:T(1,128)}', space=vmem, size = 0x12000, scoped, tag = 'internal scratch']
  #allocation2 [shape = 'f32[1,3,12,128]{3,2,1,0:T(8,128)}', space=vmem, size = 0x6000, scoped, tag = 'scratch operand']
  #allocation3 [shape = 's32[1]{0}', space=sflag, size = 0x4, scoped, tag = 'scratch operand']
  #allocation13 [shape = 's32[]', space=sflag, size = 0x4, offset = 0, fixed_abs, tag = 'sflag constant byte address 0x0 - dummy sync flag']
  %s0 = inlined_call_operand.vmem [shape: f32[2,3,20,128], index: 0, kind: input, shape index: {}]
  %s1 = inlined_call_operand.vmem [shape: f32[216], index: 1, kind: input, shape index: {}]
  %s2 = inlined_call_operand.vmem [shape: f32[8], index: 2, kind: input, shape index: {}]
  %s3 = inlined_call_operand.vmem [shape: f32[216], index: 3, kind: input, shape index: {}]
  %s4 = inlined_call_operand.vmem [shape: f32[3], index: 4, kind: input, shape index: {}]
  %s5 = inlined_call_operand.hbm [shape: f32[2,3,16,128], index: 5, kind: output, shape index: {}]
  %s6 = sld [smem:[#allocation0]]
  $region102: #{model_forward.1} parent=0
    _
  %s8 = ssub.s32 1, %s6
  %s9 = scalar_select 0, %s8, %s6
  $region1: #{model_forward.1} parent=0
    #allocation4 [shape = 'u8[1024]{0}', space=smem, size = 0x400, scoped, tag = 'input window, operand 1, single buffered']
    #allocation5 [shape = 's32[2]{0}', space=sflag, size = 0x8, scoped, tag = 'scoped memory for model_forward.1']
    #allocation6 [shape = 's32[2]{0}', space=sflag, size = 0x8, scoped, tag = 'scoped memory for model_forward.1']
    #allocation7 [shape = 'u8[512]{0}', space=smem, size = 0x200, scoped, tag = 'input window, operand 2, single buffered']
    #allocation8 [shape = 's32[1]{0}', space=sflag, size = 0x4, scoped, tag = 'scoped memory for model_forward.1']
    #allocation9 [shape = 'u8[1024]{0}', space=smem, size = 0x400, scoped, tag = 'input window, operand 3, single buffered']
    #allocation10 [shape = 'u8[512]{0}', space=smem, size = 0x200, scoped, tag = 'input window, operand 4, single buffered']
    #allocation11 [shape = 's32[1]{0}', space=sflag, size = 0x4, scoped, tag = 'scoped memory for model_forward.1']
    #allocation12 [shape = 'u8[24576]{0}', space=vmem, size = 0x6000, scoped, tag = 'output window, operand 0']
    %10 = vsyncpa [#allocation6], 0
    %11 = vsyncpa [#allocation8], 0
    %12 = vsyncpa [#allocation11], 0
    %13 = vsyncpa [#allocation5], 0
    %s14 = scalar_lea.sflag [#allocation5], 1
    %15 = vsyncpa %s14, 0
    loop: start=0, step=1, limit=6
    $region2: #{model_forward.1} parent=1 // loop_pre_header
      _
    $region3: #{model_forward.1} parent=1 // loop_header
      %s17 = sphi 0, %s21
      %p18 = scmp.ge.s32.totalorder %s17, 6
      %s24 = sphi 0, %s36
      %s25 = sphi 0, %s32
      %s26 = sphi 0, %s24
      %s27 = sphi 0, %s25
      %s28 = sphi 0, %s26
      %s29 = sphi 0, %s27
      %s37 = sphi 0, %s37
      %s39 = sphi 0, %s37
      %s40 = sphi 0, %s39
      %s54 = sphi 0, %s40
      %s58 = sphi 0, %s58
      %s60 = sphi 0, %s58
      %s61 = sphi 0, %s60
      %s75 = sphi 0, %s61
      %s79 = sphi 0, %s79
      %s81 = sphi 0, %s79
      %s82 = sphi 0, %s81
      %s96 = sphi 0, %s82
      %s100 = sphi 0, %s100
      %s102 = sphi 0, %s100
      %s103 = sphi 0, %s102
      %s117 = sphi 0, %s103
      %s125 = sphi 0, %s127
      %s128 = sphi 0, %s125
      %s129 = sphi 0, %s128
      %s145 = sphi 0, %s129
    $region4: #{model_forward.1} parent=1 // loop_header_branch
      %20 = sbr.rel (%p18) target = $region8
    $region5: #{model_forward.1} parent=1 // loop_body
      %s22 = ssub.s32 %s17, 1
      %s23 = ssub.s32 %s17, 2
      %s30 = sadd.s32 1, %s25
      %p31 = scmp.ge.s32.totalorder %s30, 2
      %s32 = scalar_select %p31, 0, %s30
      %s33 = sadd.s32 1, %s24
      %s34 = scalar_select %p31, %s33, %s24
      %p35 = scmp.ge.s32.totalorder %s34, 2
      %s36 = scalar_select %p35, 0, %s34
      %s38 = sadd.s32 %s37, 1
      %p41 = scmp.eq.s32.totalorder %s17, 3
      %p42 = scmp.ne.s32.totalorder %s37, %s39
      %p43 = scmp.eq.s32.totalorder %s17, 0
      %p44 = por %p42, %p43
      %p45 = scmp.ne.s32.totalorder %s37, %s39
      %p46 = scmp.eq.s32.totalorder %s22, 3
      %p47 = por %p45, %p46
      %p48 = scmp.ne.s32.totalorder %s39, %s40
      %p49 = scmp.eq.s32.totalorder %s22, 0
      %p50 = por %p48, %p49
      %p51 = scmp.ne.s32.totalorder %s39, %s40
      %p52 = scmp.eq.s32.totalorder %s23, 3
      %p53 = por %p51, %p52
      %p55 = scmp.ne.s32.totalorder %s40, %s54
      %p56 = scmp.eq.s32.totalorder %s23, 0
      %p57 = por %p55, %p56
      %s59 = sadd.s32 %s58, 1
      %p62 = scmp.eq.s32.totalorder %s17, 3
      %p63 = scmp.ne.s32.totalorder %s58, %s60
      %p64 = scmp.eq.s32.totalorder %s17, 0
      %p65 = por %p63, %p64
      %p66 = scmp.ne.s32.totalorder %s58, %s60
      %p67 = scmp.eq.s32.totalorder %s22, 3
      %p68 = por %p66, %p67
      %p69 = scmp.ne.s32.totalorder %s60, %s61
      %p70 = scmp.eq.s32.totalorder %s22, 0
      %p71 = por %p69, %p70
      %p72 = scmp.ne.s32.totalorder %s60, %s61
      %p73 = scmp.eq.s32.totalorder %s23, 3
      %p74 = por %p72, %p73
      %p76 = scmp.ne.s32.totalorder %s61, %s75
      %p77 = scmp.eq.s32.totalorder %s23, 0
      %p78 = por %p76, %p77
      %s80 = sadd.s32 %s79, 1
      %p83 = scmp.eq.s32.totalorder %s17, 3
      %p84 = scmp.ne.s32.totalorder %s79, %s81
      %p85 = scmp.eq.s32.totalorder %s17, 0
      %p86 = por %p84, %p85
      %p87 = scmp.ne.s32.totalorder %s79, %s81
      %p88 = scmp.eq.s32.totalorder %s22, 3
      %p89 = por %p87, %p88
      %p90 = scmp.ne.s32.totalorder %s81, %s82
      %p91 = scmp.eq.s32.totalorder %s22, 0
      %p92 = por %p90, %p91
      %p93 = scmp.ne.s32.totalorder %s81, %s82
      %p94 = scmp.eq.s32.totalorder %s23, 3
      %p95 = por %p93, %p94
      %p97 = scmp.ne.s32.totalorder %s82, %s96
      %p98 = scmp.eq.s32.totalorder %s23, 0
      %p99 = por %p97, %p98
      %s101 = sadd.s32 %s100, 1
      %p104 = scmp.eq.s32.totalorder %s17, 3
      %p105 = scmp.ne.s32.totalorder %s100, %s102
      %p106 = scmp.eq.s32.totalorder %s17, 0
      %p107 = por %p105, %p106
      %p108 = scmp.ne.s32.totalorder %s100, %s102
      %p109 = scmp.eq.s32.totalorder %s22, 3
      %p110 = por %p108, %p109
      %p111 = scmp.ne.s32.totalorder %s102, %s103
      %p112 = scmp.eq.s32.totalorder %s22, 0
      %p113 = por %p111, %p112
      %p114 = scmp.ne.s32.totalorder %s102, %s103
      %p115 = scmp.eq.s32.totalorder %s23, 3
      %p116 = por %p114, %p115
      %p118 = scmp.ne.s32.totalorder %s103, %s117
      %p119 = scmp.eq.s32.totalorder %s23, 0
      %p120 = por %p118, %p119
      %s121 = ssub.s32 %s24, %s36
      %s122 = ssub.s32 %s25, %s32
      %s123 = sor.u32 %s121, %s122
      %p124 = scmp.eq.s32.totalorder %s123, 0
      %s126 = sadd.s32 %s125, 1
      %s127 = scalar_select %p124, %s125, %s126
      %p130 = pneg %p124
      %p131 = scmp.eq.s32.totalorder %s17, 3
      %p132 = por %p130, %p131
      %p133 = scmp.ne.s32.totalorder %s125, %s128
      %p134 = scmp.eq.s32.totalorder %s17, 0
      %p135 = por %p133, %p134
      %p136 = scmp.ne.s32.totalorder %s125, %s128
      %p137 = scmp.eq.s32.totalorder %s22, 3
      %p138 = por %p136, %p137
      %p139 = scmp.ne.s32.totalorder %s128, %s129
      %p140 = scmp.eq.s32.totalorder %s22, 0
      %p141 = por %p139, %p140
      %p142 = scmp.ne.s32.totalorder %s128, %s129
      %p143 = scmp.eq.s32.totalorder %s23, 3
      %p144 = por %p142, %p143
      %p146 = scmp.ne.s32.totalorder %s129, %s145
      %p147 = scmp.eq.s32.totalorder %s23, 0
      %p148 = por %p146, %p147
      %p149 = scmp.le.s32.totalorder 1, %s17
      %p150 = scmp.lt.s32.totalorder %s17, 5
      %p151 = pnand %p149, %p150
      %p152 = pneg %p151
      // Predicated region
      $region9: #{model_forward.1} parent=5 // pred_check
        _
      $region10: #{model_forward.1} parent=5 // pred_check_branch
        %154 = sbr.rel (%p151) target = $region12
      $region11: #{model_forward.1} parent=5 // pred_region
        %s155 = ssub.s32 %s17, 1
        // Predicated region
        $region13: #{model_forward.1} parent=11 // pred_check
          %p156 = pneg %p50
        $region14: #{model_forward.1} parent=11 // pred_check_branch
          %158 = sbr.rel (%p156) target = $region16
        $region15: #{model_forward.1} parent=11 // pred_region
          %s160 = ssub.s32 32, 32
          %161 = vsyncadd [#allocation6], %s160
          %s163 = sshll.u32 %s1, 4
          %s164 = int_to_ptr.vmem [resolvable:$true] %s163
          %166 = dma.vmem_to_smem %s164, 32, [#allocation4], [#allocation6]
        $region16: #{model_forward.1} parent=11 // pred_fallthru
          _
        // Predicated region
        $region17: #{model_forward.1} parent=11 // pred_check
          %p167 = pneg %p71
        $region18: #{model_forward.1} parent=11 // pred_check_branch
          %169 = sbr.rel (%p167) target = $region20
        $region19: #{model_forward.1} parent=11 // pred_region
          %s171 = ssub.s32 16, 16
          %172 = vsyncadd [#allocation8], %s171
          %s174 = sshll.u32 %s2, 4
          %s175 = int_to_ptr.vmem [resolvable:$true] %s174
          %177 = dma.vmem_to_smem %s175, 16, [#allocation7], [#allocation8]
        $region20: #{model_forward.1} parent=11 // pred_fallthru
          _
        // Predicated region
        $region21: #{model_forward.1} parent=11 // pred_check
          %p178 = pneg %p92
        $region22: #{model_forward.1} parent=11 // pred_check_branch
          %180 = sbr.rel (%p178) target = $region24
        $region23: #{model_forward.1} parent=11 // pred_region
          %s182 = ssub.s32 32, 32
          %183 = vsyncadd [#allocation8], %s182
          %s185 = sshll.u32 %s3, 4
          %s186 = int_to_ptr.vmem [resolvable:$true] %s185
          %188 = dma.vmem_to_smem %s186, 32, [#allocation9], [#allocation8]
        $region24: #{model_forward.1} parent=11 // pred_fallthru
          _
        // Predicated region
        $region25: #{model_forward.1} parent=11 // pred_check
          %p189 = pneg %p113
        $region26: #{model_forward.1} parent=11 // pred_check_branch
          %191 = sbr.rel (%p189) target = $region28
        $region27: #{model_forward.1} parent=11 // pred_region
          %s193 = ssub.s32 16, 16
          %194 = vsyncadd [#allocation11], %s193
          %s196 = sshll.u32 %s4, 4
          %s197 = int_to_ptr.vmem [resolvable:$true] %s196
          %199 = dma.vmem_to_smem %s197, 16, [#allocation10], [#allocation11]
        $region28: #{model_forward.1} parent=11 // pred_fallthru
          _
      $region12: #{model_forward.1} parent=5 // pred_fallthru
        _
      %p200 = scmp.lt.s32.totalorder %s17, 4
      // Predicated region
      $region29: #{model_forward.1} parent=5 // pred_check
        %p201 = pneg %p200
      $region30: #{model_forward.1} parent=5 // pred_check_branch
        %203 = sbr.rel (%p201) target = $region32
      $region31: #{model_forward.1} parent=5 // pred_region
        _
      $region32: #{model_forward.1} parent=5 // pred_fallthru
        _
      %p204 = scmp.le.s32.totalorder 1, %s17
      %p205 = scmp.lt.s32.totalorder %s17, 5
      %p206 = pnand %p204, %p205
      %p207 = pneg %p206
      // Predicated region
      $region33: #{model_forward.1} parent=5 // pred_check
        _
      $region34: #{model_forward.1} parent=5 // pred_check_branch
        %209 = sbr.rel (%p206) target = $region36
      $region35: #{model_forward.1} parent=5 // pred_region
        %s210 = ssub.s32 %s17, 1
        // Predicated region
        $region37: #{model_forward.1} parent=35 // pred_check
          %p211 = pneg %p50
        $region38: #{model_forward.1} parent=35 // pred_check_branch
          %213 = sbr.rel (%p211) target = $region40
        $region39: #{model_forward.1} parent=35 // pred_region
          %214 = dma.done [#allocation6], 32
        $region40: #{model_forward.1} parent=35 // pred_fallthru
          _
        // Predicated region
        $region41: #{model_forward.1} parent=35 // pred_check
          %p215 = pneg %p71
        $region42: #{model_forward.1} parent=35 // pred_check_branch
          %217 = sbr.rel (%p215) target = $region44
        $region43: #{model_forward.1} parent=35 // pred_region
          %218 = dma.done [#allocation8], 16
        $region44: #{model_forward.1} parent=35 // pred_fallthru
          _
        // Predicated region
        $region45: #{model_forward.1} parent=35 // pred_check
          %p219 = pneg %p92
        $region46: #{model_forward.1} parent=35 // pred_check_branch
          %221 = sbr.rel (%p219) target = $region48
        $region47: #{model_forward.1} parent=35 // pred_region
          %222 = dma.done [#allocation8], 32
        $region48: #{model_forward.1} parent=35 // pred_fallthru
          _
        // Predicated region
        $region49: #{model_forward.1} parent=35 // pred_check
          %p223 = pneg %p113
        $region50: #{model_forward.1} parent=35 // pred_check_branch
          %225 = sbr.rel (%p223) target = $region52
        $region51: #{model_forward.1} parent=35 // pred_region
          %226 = dma.done [#allocation11], 16
        $region52: #{model_forward.1} parent=35 // pred_fallthru
          _
        %227 = sfence
        %p228 = pneg %p50
        %p229 = pneg %p47
        %p230 = pneg %p71
        %p231 = pneg %p68
        %p232 = pneg %p92
        %p233 = pneg %p89
        %p234 = pneg %p113
        %p235 = pneg %p110
        %p236 = pneg %p141
        %p237 = pneg %p138
        %s238 = sand.u32 %s128, 1
        %s239 = scalar_lea.sflag [#allocation5], %s238
        %s240 = sand.u32 %s128, 1
        %s241 = smul.addr %s240, 24
        %s242 = scalar_lea.vmem [#allocation12], %s241
        %s243 = smul.u32 %s27, 8
        %s244 = smul.u32 %s26, 72
        %s245 = sadd.s32 %s243, %s244
        %s246 = scalar_lea.vmem %s0, %s245
        %p248 = scmp.lt.u32.totalorder 12, 8
        %p249 = pneg %p248
        // Predicated region
        $region53: #{model_forward.1} parent=35 // pred_check
          _
        $region54: #{model_forward.1} parent=35 // pred_check_branch
          %251 = sbr.rel (%p248) target = $region56
        $region55: #{model_forward.1} parent=35 // pred_region
          %s271 = sand.u32 12, 7
          %p272 = scmp.eq.s32.totalorder %s271, 0
          %p273 = pneg %p272
          // Predicated region
          $region68: #{model_forward.1} parent=55 // pred_check
            _
          $region69: #{model_forward.1} parent=55 // pred_check_branch
            %275 = sbr.rel (%p272) target = $region71
          $region70: #{model_forward.1} parent=55 // pred_region
            %s276 = sand.u32 12, 7
            %s277 = ssub.s32 12, %s276
            %s278 = scalar_lea.vmem %s246, %s277
            %s279 = ssub.s32 12, %s276
            %s280 = scalar_lea.vmem [#allocation2], %s279
            loop: start=0, step=1, limit=1
            $region72: #{model_forward.1} parent=70 // loop_pre_header
              _
            $region73: #{model_forward.1} parent=70 // loop_header
              %s282 = sphi 0, %s286
              %p283 = scmp.ge.s32.totalorder %s282, 1
              %s287 = sphi %s246, %s246
              %s288 = sphi [#allocation2], [#allocation2]
            $region74: #{model_forward.1} parent=70 // loop_header_branch
              %285 = sbr.rel (%p283) target = $region78
            $region75: #{model_forward.1} parent=70 // loop_body
              %v289 = vld [vmem:[%s287] sm:$0xff]
              %290 = vst [vmem:[%s288] sm:$0xff] %v289
              %v291 = vld [vmem:[%s287 + $0x18] sm:$0xff]
              %292 = vst [vmem:[%s288 + $0x10] sm:$0xff] %v291
              %v293 = vld [vmem:[%s287 + $0x30] sm:$0xff]
              %294 = vst [vmem:[%s288 + $0x20] sm:$0xff] %v293
            $region76: #{model_forward.1} parent=70 // loop_footer
              %s286 = sadd.s32 1, %s282
            $region77: #{model_forward.1} parent=70 // loop_footer_branch
              %281 = sbr.rel target = $region73
            $region78: #{model_forward.1} parent=70 // loop_exit
              _
            %s295 = sshll.u32 1, %s276
            %s296 = ssub.s32 %s295, 1
            loop: start=0, step=1, limit=1
            $region79: #{model_forward.1} parent=70 // loop_pre_header
              _
            $region80: #{model_forward.1} parent=70 // loop_header
              %s298 = sphi 0, %s302
              %p299 = scmp.ge.s32.totalorder %s298, 1
              %s303 = sphi %s278, %s278
              %s304 = sphi %s280, %s280
            $region81: #{model_forward.1} parent=70 // loop_header_branch
              %301 = sbr.rel (%p299) target = $region85
            $region82: #{model_forward.1} parent=70 // loop_body
              %v305 = vld [vmem:[%s303] sm:%s296]
              %306 = vst [vmem:[%s304] sm:%s296] %v305
              %v307 = vld [vmem:[%s303 + $0x18] sm:%s296]
              %308 = vst [vmem:[%s304 + $0x10] sm:%s296] %v307
              %v309 = vld [vmem:[%s303 + $0x30] sm:%s296]
              %310 = vst [vmem:[%s304 + $0x20] sm:%s296] %v309
            $region83: #{model_forward.1} parent=70 // loop_footer
              %s302 = sadd.s32 1, %s298
            $region84: #{model_forward.1} parent=70 // loop_footer_branch
              %297 = sbr.rel target = $region80
            $region85: #{model_forward.1} parent=70 // loop_exit
              _
          $region71: #{model_forward.1} parent=55 // pred_fallthru
            _
        $region56: #{model_forward.1} parent=35 // pred_fallthru
          _
        // Predicated region
        $region57: #{model_forward.1} parent=35 // pred_check
          %p252 = pneg %p248
        $region58: #{model_forward.1} parent=35 // pred_check_branch
          %254 = sbr.rel (%p252) target = $region60
        $region59: #{model_forward.1} parent=35 // pred_region
          %s255 = sshll.u32 1, 12
          %s256 = ssub.s32 %s255, 1
          loop: start=0, step=1, limit=1
          $region61: #{model_forward.1} parent=59 // loop_pre_header
            _
          $region62: #{model_forward.1} parent=59 // loop_header
            %s258 = sphi 0, %s262
            %p259 = scmp.ge.s32.totalorder %s258, 1
            %s263 = sphi %s246, %s246
            %s264 = sphi [#allocation2], [#allocation2]
          $region63: #{model_forward.1} parent=59 // loop_header_branch
            %261 = sbr.rel (%p259) target = $region67
          $region64: #{model_forward.1} parent=59 // loop_body
            %v265 = vld [vmem:[%s263] sm:%s256]
            %266 = vst [vmem:[%s264] sm:%s256] %v265
            %v267 = vld [vmem:[%s263 + $0x18] sm:%s256]
            %268 = vst [vmem:[%s264 + $0x10] sm:%s256] %v267
            %v269 = vld [vmem:[%s263 + $0x30] sm:%s256]
            %270 = vst [vmem:[%s264 + $0x20] sm:%s256] %v269
          $region65: #{model_forward.1} parent=59 // loop_footer
            %s262 = sadd.s32 1, %s258
          $region66: #{model_forward.1} parent=59 // loop_footer_branch
            %257 = sbr.rel target = $region62
          $region67: #{model_forward.1} parent=59 // loop_exit
            _
        $region60: #{model_forward.1} parent=35 // pred_fallthru
          _
        // Predicated region
        $region86: #{model_forward.1} parent=35 // pred_check
          _
        $region87: #{model_forward.1} parent=35 // pred_check_branch
          %313 = sbr.rel (0) target = $region89
        $region88: #{model_forward.1} parent=35 // pred_region
          %314 = vsyncadd [#allocation3], 576
        $region89: #{model_forward.1} parent=35 // pred_fallthru
          _
        %v315 = vlaneseq
        %v316 = vand.u32 %v315, 127
        %vm317 = vcmp.ge.s32.totalorder %v316, 1
        %vm318 = vcmp.lt.s32.totalorder %v316, 15
        %v319 = vlaneseq
        %v320 = vshrl.u32 %v319, 7
        %v321 = vadd.s32 %v320, 8
        %v322 = vstv %s243
        %v323 = vadd.s32 %v320, %v322
        %v324 = vadd.s32 %v321, %v322
        %v325 = vsub.s32 %v323, 2
        %v326 = vsub.s32 %v324, 2
        %vm327 = vcmp.ge.s32.totalorder %v325, 0
        %vm328 = vcmp.ge.s32.totalorder %v326, 0
        %vm329 = vcmp.lt.s32.totalorder %v325, 16
        %vm330 = vcmp.lt.s32.totalorder %v326, 16
        %vm331 = vmand %vm327, %vm329
        %vm332 = vmand %vm328, %vm330
        %s333 = smul.u32 1, 3
        %s334 = smul.u32 %s333, 12
        %s335 = smul.u32 %s334, 1
        %s336 = sshll.u32 %s335, 4
        %337 = dma.done [#allocation3], %s336
        %v338 = vld [vmem:[#allocation2] sm:$0xff]
        %v339 = vld [vmem:[#allocation2 + $0x8] sm:$0xf]
        %340 = vrot.lane.b32.xlu0 %v338, 1
        %v341 = vpop.permute.xlu0 %340
        %342 = vrot.lane.b32.xlu0 %v339, 1
        %v343 = vpop.permute.xlu0 %342
        %v344 = vsel %vm317, %v341, 0.0
        %v345 = vsel %vm317, %v343, 0.0
        %346 = vrot.lane.b32.xlu0 %v338, 127
        %v347 = vpop.permute.xlu0 %346
        %348 = vrot.lane.b32.xlu0 %v339, 127
        %v349 = vpop.permute.xlu0 %348
        %v350 = vsel %vm318, %v347, 0.0
        %v351 = vsel %vm318, %v349, 0.0
        %vm352 = vcmask 1047556
        %v353 = vrot.slane %v344, 4
        %v354 = vsel %vm352, %v353, %v345
        %v355 = vrot.slane %v354, 4
        %v356 = vsel %vm352, %v355, %v353
        %s357 = sld [smem:[#allocation4]]
        %v358 = vstv %s357
        %v359 = vmul.f32 %v358, %v354
        %v360 = vmul.f32 %v358, %v356
        %v361 = vadd.f32 %v359, 0.0
        %v362 = vadd.f32 %v360, 0.0
        %s363 = sld [smem:[#allocation4 + $0x1]]
        %v364 = vstv %s363
        %v365 = vmul.f32 %v364, %v354
        %v366 = vmul.f32 %v364, %v356
        %v367 = vadd.f32 %v365, 0.0
        %v368 = vadd.f32 %v366, 0.0
        %s369 = sld [smem:[#allocation4 + $0x2]]
        %v370 = vstv %s369
        %v371 = vmul.f32 %v370, %v354
        %v372 = vmul.f32 %v370, %v356
        %v373 = vadd.f32 %v371, 0.0
        %v374 = vadd.f32 %v372, 0.0
        %s375 = sld [smem:[#allocation4 + $0x3]]
        %v376 = vstv %s375
        %v377 = vmul.f32 %v376, %v354
        %v378 = vmul.f32 %v376, %v356
        %v379 = vadd.f32 %v377, 0.0
        %v380 = vadd.f32 %v378, 0.0
        %s381 = sld [smem:[#allocation4 + $0x4]]
        %v382 = vstv %s381
        %v383 = vmul.f32 %v382, %v354
        %v384 = vmul.f32 %v382, %v356
        %v385 = vadd.f32 %v383, 0.0
        %v386 = vadd.f32 %v384, 0.0
        %s387 = sld [smem:[#allocation4 + $0x5]]
        %v388 = vstv %s387
        %v389 = vmul.f32 %v388, %v354
        %v390 = vmul.f32 %v388, %v356
        %v391 = vadd.f32 %v389, 0.0
        %v392 = vadd.f32 %v390, 0.0
        %s393 = sld [smem:[#allocation4 + $0x6]]
        %v394 = vstv %s393
        %v395 = vmul.f32 %v394, %v354
        %v396 = vmul.f32 %v394, %v356
        %v397 = vadd.f32 %v395, 0.0
        %v398 = vadd.f32 %v396, 0.0
        %s399 = sld [smem:[#allocation4 + $0x7]]
        %v400 = vstv %s399
        %v401 = vmul.f32 %v400, %v354
        %v402 = vmul.f32 %v400, %v356
        %v403 = vadd.f32 %v401, 0.0
        %v404 = vadd.f32 %v402, 0.0
        %s405 = sld [smem:[#allocation4 + $0x48]]
        %v406 = vstv %s405
        %v407 = vmul.f32 %v406, %v344
        %v408 = vmul.f32 %v406, %v345
        %vm411 = vcmask 1042432
        %v412 = vrot.slane %v407, 5
        %v413 = vrot.slane %v408, 5
        %v414 = vsel %vm411, %v412, %v413
        %v417 = vadd.f32 %v361, %v412
        %v418 = vadd.f32 %v362, %v414
        %s419 = sld [smem:[#allocation4 + $0x49]]
        %v420 = vstv %s419
        %v421 = vmul.f32 %v420, %v344
        %v422 = vmul.f32 %v420, %v345
        %v425 = vrot.slane %v421, 5
        %v426 = vrot.slane %v422, 5
        %v427 = vsel %vm411, %v425, %v426
        %v430 = vadd.f32 %v367, %v425
        %v431 = vadd.f32 %v368, %v427
        %s432 = sld [smem:[#allocation4 + $0x4a]]
        %v433 = vstv %s432
        %v434 = vmul.f32 %v433, %v344
        %v435 = vmul.f32 %v433, %v345
        %v438 = vrot.slane %v434, 5
        %v439 = vrot.slane %v435, 5
        %v440 = vsel %vm411, %v438, %v439
        %v443 = vadd.f32 %v373, %v438
        %v444 = vadd.f32 %v374, %v440
        %s445 = sld [smem:[#allocation4 + $0x4b]]
        %v446 = vstv %s445
        %v447 = vmul.f32 %v446, %v344
        %v448 = vmul.f32 %v446, %v345
        %v451 = vrot.slane %v447, 5
        %v452 = vrot.slane %v448, 5
        %v453 = vsel %vm411, %v451, %v452
        %v456 = vadd.f32 %v379, %v451
        %v457 = vadd.f32 %v380, %v453
        %s458 = sld [smem:[#allocation4 + $0x4c]]
        %v459 = vstv %s458
        %v460 = vmul.f32 %v459, %v344
        %v461 = vmul.f32 %v459, %v345
        %v464 = vrot.slane %v460, 5
        %v465 = vrot.slane %v461, 5
        %v466 = vsel %vm411, %v464, %v465
        %v469 = vadd.f32 %v385, %v464
        %v470 = vadd.f32 %v386, %v466
        %s471 = sld [smem:[#allocation4 + $0x4d]]
        %v472 = vstv %s471
        %v473 = vmul.f32 %v472, %v344
        %v474 = vmul.f32 %v472, %v345
        %v477 = vrot.slane %v473, 5
        %v478 = vrot.slane %v474, 5
        %v479 = vsel %vm411, %v477, %v478
        %v482 = vadd.f32 %v391, %v477
        %v483 = vadd.f32 %v392, %v479
        %s484 = sld [smem:[#allocation4 + $0x4e]]
        %v485 = vstv %s484
        %v486 = vmul.f32 %v485, %v344
        %v487 = vmul.f32 %v485, %v345
        %v490 = vrot.slane %v486, 5
        %v491 = vrot.slane %v487, 5
        %v492 = vsel %vm411, %v490, %v491
        %v495 = vadd.f32 %v397, %v490
        %v496 = vadd.f32 %v398, %v492
        %s497 = sld [smem:[#allocation4 + $0x4f]]
        %v498 = vstv %s497
        %v499 = vmul.f32 %v498, %v344
        %v500 = vmul.f32 %v498, %v345
        %v503 = vrot.slane %v499, 5
        %v504 = vrot.slane %v500, 5
        %v505 = vsel %vm411, %v503, %v504
        %v508 = vadd.f32 %v403, %v503
        %v509 = vadd.f32 %v404, %v505
        %s510 = sld [smem:[#allocation4 + $0x90]]
        %v511 = vstv %s510
        %v512 = vmul.f32 %v511, %v344
        %v513 = vmul.f32 %v511, %v354
        %vm516 = vcmask 1041408
        %v517 = vrot.slane %v512, 6
        %v518 = vrot.slane %v513, 6
        %v519 = vsel %vm516, %v517, %v518
        %v522 = vadd.f32 %v417, %v517
        %v523 = vadd.f32 %v418, %v519
        %s524 = sld [smem:[#allocation4 + $0x91]]
        %v525 = vstv %s524
        %v526 = vmul.f32 %v525, %v344
        %v527 = vmul.f32 %v525, %v354
        %v530 = vrot.slane %v526, 6
        %v531 = vrot.slane %v527, 6
        %v532 = vsel %vm516, %v530, %v531
        %v535 = vadd.f32 %v430, %v530
        %v536 = vadd.f32 %v431, %v532
        %s537 = sld [smem:[#allocation4 + $0x92]]
        %v538 = vstv %s537
        %v539 = vmul.f32 %v538, %v344
        %v540 = vmul.f32 %v538, %v354
        %v543 = vrot.slane %v539, 6
        %v544 = vrot.slane %v540, 6
        %v545 = vsel %vm516, %v543, %v544
        %v548 = vadd.f32 %v443, %v543
        %v549 = vadd.f32 %v444, %v545
        %s550 = sld [smem:[#allocation4 + $0x93]]
        %v551 = vstv %s550
        %v552 = vmul.f32 %v551, %v344
        %v553 = vmul.f32 %v551, %v354
        %v556 = vrot.slane %v552, 6
        %v557 = vrot.slane %v553, 6
        %v558 = vsel %vm516, %v556, %v557
        %v561 = vadd.f32 %v456, %v556
        %v562 = vadd.f32 %v457, %v558
        %s563 = sld [smem:[#allocation4 + $0x94]]
        %v564 = vstv %s563
        %v565 = vmul.f32 %v564, %v344
        %v566 = vmul.f32 %v564, %v354
        %v569 = vrot.slane %v565, 6
        %v570 = vrot.slane %v566, 6
        %v571 = vsel %vm516, %v569, %v570
        %v574 = vadd.f32 %v469, %v569
        %v575 = vadd.f32 %v470, %v571
        %s576 = sld [smem:[#allocation4 + $0x95]]
        %v577 = vstv %s576
        %v578 = vmul.f32 %v577, %v344
        %v579 = vmul.f32 %v577, %v354
        %v582 = vrot.slane %v578, 6
        %v583 = vrot.slane %v579, 6
        %v584 = vsel %vm516, %v582, %v583
        %v587 = vadd.f32 %v482, %v582
        %v588 = vadd.f32 %v483, %v584
        %s589 = sld [smem:[#allocation4 + $0x96]]
        %v590 = vstv %s589
        %v591 = vmul.f32 %v590, %v344
        %v592 = vmul.f32 %v590, %v354
        %v595 = vrot.slane %v591, 6
        %v596 = vrot.slane %v592, 6
        %v597 = vsel %vm516, %v595, %v596
        %v600 = vadd.f32 %v495, %v595
        %v601 = vadd.f32 %v496, %v597
        %s602 = sld [smem:[#allocation4 + $0x97]]
        %v603 = vstv %s602
        %v604 = vmul.f32 %v603, %v344
        %v605 = vmul.f32 %v603, %v354
        %v608 = vrot.slane %v604, 6
        %v609 = vrot.slane %v605, 6
        %v610 = vsel %vm516, %v608, %v609
        %v613 = vadd.f32 %v508, %v608
        %v614 = vadd.f32 %v509, %v610
        %v615 = vrot.slane %v338, 4
        %v616 = vsel %vm352, %v615, %v339
        %v617 = vrot.slane %v616, 4
        %v618 = vsel %vm352, %v617, %v615
        %s619 = sld [smem:[#allocation4 + $0x18]]
        %v620 = vstv %s619
        %v621 = vmul.f32 %v620, %v616
        %v622 = vmul.f32 %v620, %v618
        %v623 = vadd.f32 %v522, %v621
        %v624 = vadd.f32 %v523, %v622
        %s625 = sld [smem:[#allocation4 + $0x19]]
        %v626 = vstv %s625
        %v627 = vmul.f32 %v626, %v616
        %v628 = vmul.f32 %v626, %v618
        %v629 = vadd.f32 %v535, %v627
        %v630 = vadd.f32 %v536, %v628
        %s631 = sld [smem:[#allocation4 + $0x1a]]
        %v632 = vstv %s631
        %v633 = vmul.f32 %v632, %v616
        %v634 = vmul.f32 %v632, %v618
        %v635 = vadd.f32 %v548, %v633
        %v636 = vadd.f32 %v549, %v634
        %s637 = sld [smem:[#allocation4 + $0x1b]]
        %v638 = vstv %s637
        %v639 = vmul.f32 %v638, %v616
        %v640 = vmul.f32 %v638, %v618
        %v641 = vadd.f32 %v561, %v639
        %v642 = vadd.f32 %v562, %v640
        %s643 = sld [smem:[#allocation4 + $0x1c]]
        %v644 = vstv %s643
        %v645 = vmul.f32 %v644, %v616
        %v646 = vmul.f32 %v644, %v618
        %v647 = vadd.f32 %v574, %v645
        %v648 = vadd.f32 %v575, %v646
        %s649 = sld [smem:[#allocation4 + $0x1d]]
        %v650 = vstv %s649
        %v651 = vmul.f32 %v650, %v616
        %v652 = vmul.f32 %v650, %v618
        %v653 = vadd.f32 %v587, %v651
        %v654 = vadd.f32 %v588, %v652
        %s655 = sld [smem:[#allocation4 + $0x1e]]
        %v656 = vstv %s655
        %v657 = vmul.f32 %v656, %v616
        %v658 = vmul.f32 %v656, %v618
        %v659 = vadd.f32 %v600, %v657
        %v660 = vadd.f32 %v601, %v658
        %s661 = sld [smem:[#allocation4 + $0x1f]]
        %v662 = vstv %s661
        %v663 = vmul.f32 %v662, %v616
        %v664 = vmul.f32 %v662, %v618
        %v665 = vadd.f32 %v613, %v663
        %v666 = vadd.f32 %v614, %v664
        %s667 = sld [smem:[#allocation4 + $0x60]]
        %v668 = vstv %s667
        %v669 = vmul.f32 %v668, %v338
        %v670 = vmul.f32 %v668, %v339
        %v673 = vrot.slane %v669, 5
        %v674 = vrot.slane %v670, 5
        %v675 = vsel %vm411, %v673, %v674
        %v678 = vadd.f32 %v623, %v673
        %v679 = vadd.f32 %v624, %v675
        %s680 = sld [smem:[#allocation4 + $0x61]]
        %v681 = vstv %s680
        %v682 = vmul.f32 %v681, %v338
        %v683 = vmul.f32 %v681, %v339
        %v686 = vrot.slane %v682, 5
        %v687 = vrot.slane %v683, 5
        %v688 = vsel %vm411, %v686, %v687
        %v691 = vadd.f32 %v629, %v686
        %v692 = vadd.f32 %v630, %v688
        %s693 = sld [smem:[#allocation4 + $0x62]]
        %v694 = vstv %s693
        %v695 = vmul.f32 %v694, %v338
        %v696 = vmul.f32 %v694, %v339
        %v699 = vrot.slane %v695, 5
        %v700 = vrot.slane %v696, 5
        %v701 = vsel %vm411, %v699, %v700
        %v704 = vadd.f32 %v635, %v699
        %v705 = vadd.f32 %v636, %v701
        %s706 = sld [smem:[#allocation4 + $0x63]]
        %v707 = vstv %s706
        %v708 = vmul.f32 %v707, %v338
        %v709 = vmul.f32 %v707, %v339
        %v712 = vrot.slane %v708, 5
        %v713 = vrot.slane %v709, 5
        %v714 = vsel %vm411, %v712, %v713
        %v717 = vadd.f32 %v641, %v712
        %v718 = vadd.f32 %v642, %v714
        %s719 = sld [smem:[#allocation4 + $0x64]]
        %v720 = vstv %s719
        %v721 = vmul.f32 %v720, %v338
        %v722 = vmul.f32 %v720, %v339
        %v725 = vrot.slane %v721, 5
        %v726 = vrot.slane %v722, 5
        %v727 = vsel %vm411, %v725, %v726
        %v730 = vadd.f32 %v647, %v725
        %v731 = vadd.f32 %v648, %v727
        %s732 = sld [smem:[#allocation4 + $0x65]]
        %v733 = vstv %s732
        %v734 = vmul.f32 %v733, %v338
        %v735 = vmul.f32 %v733, %v339
        %v738 = vrot.slane %v734, 5
        %v739 = vrot.slane %v735, 5
        %v740 = vsel %vm411, %v738, %v739
        %v743 = vadd.f32 %v653, %v738
        %v744 = vadd.f32 %v654, %v740
        %s745 = sld [smem:[#allocation4 + $0x66]]
        %v746 = vstv %s745
        %v747 = vmul.f32 %v746, %v338
        %v748 = vmul.f32 %v746, %v339
        %v751 = vrot.slane %v747, 5
        %v752 = vrot.slane %v748, 5
        %v753 = vsel %vm411, %v751, %v752
        %v756 = vadd.f32 %v659, %v751
        %v757 = vadd.f32 %v660, %v753
        %s758 = sld [smem:[#allocation4 + $0x67]]
        %v759 = vstv %s758
        %v760 = vmul.f32 %v759, %v338
        %v761 = vmul.f32 %v759, %v339
        %v764 = vrot.slane %v760, 5
        %v765 = vrot.slane %v761, 5
        %v766 = vsel %vm411, %v764, %v765
        %v769 = vadd.f32 %v665, %v764
        %v770 = vadd.f32 %v666, %v766
        %s771 = sld [smem:[#allocation4 + $0xa8]]
        %v772 = vstv %s771
        %v773 = vmul.f32 %v772, %v338
        %v774 = vmul.f32 %v772, %v616
        %v777 = vrot.slane %v773, 6
        %v778 = vrot.slane %v774, 6
        %v779 = vsel %vm516, %v777, %v778
        %v782 = vadd.f32 %v678, %v777
        %v783 = vadd.f32 %v679, %v779
        %s784 = sld [smem:[#allocation4 + $0xa9]]
        %v785 = vstv %s784
        %v786 = vmul.f32 %v785, %v338
        %v787 = vmul.f32 %v785, %v616
        %v790 = vrot.slane %v786, 6
        %v791 = vrot.slane %v787, 6
        %v792 = vsel %vm516, %v790, %v791
        %v795 = vadd.f32 %v691, %v790
        %v796 = vadd.f32 %v692, %v792
        %s797 = sld [smem:[#allocation4 + $0xaa]]
        %v798 = vstv %s797
        %v799 = vmul.f32 %v798, %v338
        %v800 = vmul.f32 %v798, %v616
        %v803 = vrot.slane %v799, 6
        %v804 = vrot.slane %v800, 6
        %v805 = vsel %vm516, %v803, %v804
        %v808 = vadd.f32 %v704, %v803
        %v809 = vadd.f32 %v705, %v805
        %s810 = sld [smem:[#allocation4 + $0xab]]
        %v811 = vstv %s810
        %v812 = vmul.f32 %v811, %v338
        %v813 = vmul.f32 %v811, %v616
        %v816 = vrot.slane %v812, 6
        %v817 = vrot.slane %v813, 6
        %v818 = vsel %vm516, %v816, %v817
        %v821 = vadd.f32 %v717, %v816
        %v822 = vadd.f32 %v718, %v818
        %s823 = sld [smem:[#allocation4 + $0xac]]
        %v824 = vstv %s823
        %v825 = vmul.f32 %v824, %v338
        %v826 = vmul.f32 %v824, %v616
        %v829 = vrot.slane %v825, 6
        %v830 = vrot.slane %v826, 6
        %v831 = vsel %vm516, %v829, %v830
        %v834 = vadd.f32 %v730, %v829
        %v835 = vadd.f32 %v731, %v831
        %s836 = sld [smem:[#allocation4 + $0xad]]
        %v837 = vstv %s836
        %v838 = vmul.f32 %v837, %v338
        %v839 = vmul.f32 %v837, %v616
        %v842 = vrot.slane %v838, 6
        %v843 = vrot.slane %v839, 6
        %v844 = vsel %vm516, %v842, %v843
        %v847 = vadd.f32 %v743, %v842
        %v848 = vadd.f32 %v744, %v844
        %s849 = sld [smem:[#allocation4 + $0xae]]
        %v850 = vstv %s849
        %v851 = vmul.f32 %v850, %v338
        %v852 = vmul.f32 %v850, %v616
        %v855 = vrot.slane %v851, 6
        %v856 = vrot.slane %v852, 6
        %v857 = vsel %vm516, %v855, %v856
        %v860 = vadd.f32 %v756, %v855
        %v861 = vadd.f32 %v757, %v857
        %s862 = sld [smem:[#allocation4 + $0xaf]]
        %v863 = vstv %s862
        %v864 = vmul.f32 %v863, %v338
        %v865 = vmul.f32 %v863, %v616
        %v868 = vrot.slane %v864, 6
        %v869 = vrot.slane %v865, 6
        %v870 = vsel %vm516, %v868, %v869
        %v873 = vadd.f32 %v769, %v868
        %v874 = vadd.f32 %v770, %v870
        %v875 = vrot.slane %v350, 4
        %v876 = vsel %vm352, %v875, %v351
        %v877 = vrot.slane %v876, 4
        %v878 = vsel %vm352, %v877, %v875
        %s879 = sld [smem:[#allocation4 + $0x30]]
        %v880 = vstv %s879
        %v881 = vmul.f32 %v880, %v876
        %v882 = vmul.f32 %v880, %v878
        %v883 = vadd.f32 %v782, %v881
        %v884 = vadd.f32 %v783, %v882
        %s885 = sld [smem:[#allocation4 + $0x31]]
        %v886 = vstv %s885
        %v887 = vmul.f32 %v886, %v876
        %v888 = vmul.f32 %v886, %v878
        %v889 = vadd.f32 %v795, %v887
        %v890 = vadd.f32 %v796, %v888
        %s891 = sld [smem:[#allocation4 + $0x32]]
        %v892 = vstv %s891
        %v893 = vmul.f32 %v892, %v876
        %v894 = vmul.f32 %v892, %v878
        %v895 = vadd.f32 %v808, %v893
        %v896 = vadd.f32 %v809, %v894
        %s897 = sld [smem:[#allocation4 + $0x33]]
        %v898 = vstv %s897
        %v899 = vmul.f32 %v898, %v876
        %v900 = vmul.f32 %v898, %v878
        %v901 = vadd.f32 %v821, %v899
        %v902 = vadd.f32 %v822, %v900
        %s903 = sld [smem:[#allocation4 + $0x34]]
        %v904 = vstv %s903
        %v905 = vmul.f32 %v904, %v876
        %v906 = vmul.f32 %v904, %v878
        %v907 = vadd.f32 %v834, %v905
        %v908 = vadd.f32 %v835, %v906
        %s909 = sld [smem:[#allocation4 + $0x35]]
        %v910 = vstv %s909
        %v911 = vmul.f32 %v910, %v876
        %v912 = vmul.f32 %v910, %v878
        %v913 = vadd.f32 %v847, %v911
        %v914 = vadd.f32 %v848, %v912
        %s915 = sld [smem:[#allocation4 + $0x36]]
        %v916 = vstv %s915
        %v917 = vmul.f32 %v916, %v876
        %v918 = vmul.f32 %v916, %v878
        %v919 = vadd.f32 %v860, %v917
        %v920 = vadd.f32 %v861, %v918
        %s921 = sld [smem:[#allocation4 + $0x37]]
        %v922 = vstv %s921
        %v923 = vmul.f32 %v922, %v876
        %v924 = vmul.f32 %v922, %v878
        %v925 = vadd.f32 %v873, %v923
        %v926 = vadd.f32 %v874, %v924
        %s927 = sld [smem:[#allocation4 + $0x78]]
        %v928 = vstv %s927
        %v929 = vmul.f32 %v928, %v350
        %v930 = vmul.f32 %v928, %v351
        %v933 = vrot.slane %v929, 5
        %v934 = vrot.slane %v930, 5
        %v935 = vsel %vm411, %v933, %v934
        %v938 = vadd.f32 %v883, %v933
        %v939 = vadd.f32 %v884, %v935
        %s940 = sld [smem:[#allocation4 + $0x79]]
        %v941 = vstv %s940
        %v942 = vmul.f32 %v941, %v350
        %v943 = vmul.f32 %v941, %v351
        %v946 = vrot.slane %v942, 5
        %v947 = vrot.slane %v943, 5
        %v948 = vsel %vm411, %v946, %v947
        %v951 = vadd.f32 %v889, %v946
        %v952 = vadd.f32 %v890, %v948
        %s953 = sld [smem:[#allocation4 + $0x7a]]
        %v954 = vstv %s953
        %v955 = vmul.f32 %v954, %v350
        %v956 = vmul.f32 %v954, %v351
        %v959 = vrot.slane %v955, 5
        %v960 = vrot.slane %v956, 5
        %v961 = vsel %vm411, %v959, %v960
        %v964 = vadd.f32 %v895, %v959
        %v965 = vadd.f32 %v896, %v961
        %s966 = sld [smem:[#allocation4 + $0x7b]]
        %v967 = vstv %s966
        %v968 = vmul.f32 %v967, %v350
        %v969 = vmul.f32 %v967, %v351
        %v972 = vrot.slane %v968, 5
        %v973 = vrot.slane %v969, 5
        %v974 = vsel %vm411, %v972, %v973
        %v977 = vadd.f32 %v901, %v972
        %v978 = vadd.f32 %v902, %v974
        %s979 = sld [smem:[#allocation4 + $0x7c]]
        %v980 = vstv %s979
        %v981 = vmul.f32 %v980, %v350
        %v982 = vmul.f32 %v980, %v351
        %v985 = vrot.slane %v981, 5
        %v986 = vrot.slane %v982, 5
        %v987 = vsel %vm411, %v985, %v986
        %v990 = vadd.f32 %v907, %v985
        %v991 = vadd.f32 %v908, %v987
        %s992 = sld [smem:[#allocation4 + $0x7d]]
        %v993 = vstv %s992
        %v994 = vmul.f32 %v993, %v350
        %v995 = vmul.f32 %v993, %v351
        %v998 = vrot.slane %v994, 5
        %v999 = vrot.slane %v995, 5
        %v1000 = vsel %vm411, %v998, %v999
        %v1003 = vadd.f32 %v913, %v998
        %v1004 = vadd.f32 %v914, %v1000
        %s1005 = sld [smem:[#allocation4 + $0x7e]]
        %v1006 = vstv %s1005
        %v1007 = vmul.f32 %v1006, %v350
        %v1008 = vmul.f32 %v1006, %v351
        %v1011 = vrot.slane %v1007, 5
        %v1012 = vrot.slane %v1008, 5
        %v1013 = vsel %vm411, %v1011, %v1012
        %v1016 = vadd.f32 %v919, %v1011
        %v1017 = vadd.f32 %v920, %v1013
        %s1018 = sld [smem:[#allocation4 + $0x7f]]
        %v1019 = vstv %s1018
        %v1020 = vmul.f32 %v1019, %v350
        %v1021 = vmul.f32 %v1019, %v351
        %v1024 = vrot.slane %v1020, 5
        %v1025 = vrot.slane %v1021, 5
        %v1026 = vsel %vm411, %v1024, %v1025
        %v1029 = vadd.f32 %v925, %v1024
        %v1030 = vadd.f32 %v926, %v1026
        %s1031 = sld [smem:[#allocation4 + $0xc0]]
        %v1032 = vstv %s1031
        %v1033 = vmul.f32 %v1032, %v350
        %v1034 = vmul.f32 %v1032, %v876
        %v1037 = vrot.slane %v1033, 6
        %v1038 = vrot.slane %v1034, 6
        %v1039 = vsel %vm516, %v1037, %v1038
        %v1042 = vadd.f32 %v938, %v1037
        %v1043 = vadd.f32 %v939, %v1039
        %s1044 = sld [smem:[#allocation4 + $0xc1]]
        %v1045 = vstv %s1044
        %v1046 = vmul.f32 %v1045, %v350
        %v1047 = vmul.f32 %v1045, %v876
        %v1050 = vrot.slane %v1046, 6
        %v1051 = vrot.slane %v1047, 6
        %v1052 = vsel %vm516, %v1050, %v1051
        %v1055 = vadd.f32 %v951, %v1050
        %v1056 = vadd.f32 %v952, %v1052
        %s1057 = sld [smem:[#allocation4 + $0xc2]]
        %v1058 = vstv %s1057
        %v1059 = vmul.f32 %v1058, %v350
        %v1060 = vmul.f32 %v1058, %v876
        %v1063 = vrot.slane %v1059, 6
        %v1064 = vrot.slane %v1060, 6
        %v1065 = vsel %vm516, %v1063, %v1064
        %v1068 = vadd.f32 %v964, %v1063
        %v1069 = vadd.f32 %v965, %v1065
        %s1070 = sld [smem:[#allocation4 + $0xc3]]
        %v1071 = vstv %s1070
        %v1072 = vmul.f32 %v1071, %v350
        %v1073 = vmul.f32 %v1071, %v876
        %v1076 = vrot.slane %v1072, 6
        %v1077 = vrot.slane %v1073, 6
        %v1078 = vsel %vm516, %v1076, %v1077
        %v1081 = vadd.f32 %v977, %v1076
        %v1082 = vadd.f32 %v978, %v1078
        %s1083 = sld [smem:[#allocation4 + $0xc4]]
        %v1084 = vstv %s1083
        %v1085 = vmul.f32 %v1084, %v350
        %v1086 = vmul.f32 %v1084, %v876
        %v1089 = vrot.slane %v1085, 6
        %v1090 = vrot.slane %v1086, 6
        %v1091 = vsel %vm516, %v1089, %v1090
        %v1094 = vadd.f32 %v990, %v1089
        %v1095 = vadd.f32 %v991, %v1091
        %s1096 = sld [smem:[#allocation4 + $0xc5]]
        %v1097 = vstv %s1096
        %v1098 = vmul.f32 %v1097, %v350
        %v1099 = vmul.f32 %v1097, %v876
        %v1102 = vrot.slane %v1098, 6
        %v1103 = vrot.slane %v1099, 6
        %v1104 = vsel %vm516, %v1102, %v1103
        %v1107 = vadd.f32 %v1003, %v1102
        %v1108 = vadd.f32 %v1004, %v1104
        %s1109 = sld [smem:[#allocation4 + $0xc6]]
        %v1110 = vstv %s1109
        %v1111 = vmul.f32 %v1110, %v350
        %v1112 = vmul.f32 %v1110, %v876
        %v1115 = vrot.slane %v1111, 6
        %v1116 = vrot.slane %v1112, 6
        %v1117 = vsel %vm516, %v1115, %v1116
        %v1120 = vadd.f32 %v1016, %v1115
        %v1121 = vadd.f32 %v1017, %v1117
        %s1122 = sld [smem:[#allocation4 + $0xc7]]
        %v1123 = vstv %s1122
        %v1124 = vmul.f32 %v1123, %v350
        %v1125 = vmul.f32 %v1123, %v876
        %v1128 = vrot.slane %v1124, 6
        %v1129 = vrot.slane %v1125, 6
        %v1130 = vsel %vm516, %v1128, %v1129
        %v1133 = vadd.f32 %v1029, %v1128
        %v1134 = vadd.f32 %v1030, %v1130
        %s1135 = scalar_lea.vmem [#allocation2], 16
        %v1136 = vld [vmem:[%s1135] sm:$0xff]
        %v1137 = vld [vmem:[%s1135 + $0x8] sm:$0xf]
        %1138 = vrot.lane.b32.xlu0 %v1136, 1
        %v1139 = vpop.permute.xlu0 %1138
        %1140 = vrot.lane.b32.xlu0 %v1137, 1
        %v1141 = vpop.permute.xlu0 %1140
        %v1142 = vsel %vm317, %v1139, 0.0
        %v1143 = vsel %vm317, %v1141, 0.0
        %1144 = vrot.lane.b32.xlu0 %v1136, 127
        %v1145 = vpop.permute.xlu0 %1144
        %1146 = vrot.lane.b32.xlu0 %v1137, 127
        %v1147 = vpop.permute.xlu0 %1146
        %v1148 = vsel %vm318, %v1145, 0.0
        %v1149 = vsel %vm318, %v1147, 0.0
        %v1150 = vrot.slane %v1142, 4
        %v1151 = vsel %vm352, %v1150, %v1143
        %v1152 = vrot.slane %v1151, 4
        %v1153 = vsel %vm352, %v1152, %v1150
        %s1154 = sld [smem:[#allocation4 + $0x8]]
        %v1155 = vstv %s1154
        %v1156 = vmul.f32 %v1155, %v1151
        %v1157 = vmul.f32 %v1155, %v1153
        %v1158 = vadd.f32 %v1042, %v1156
        %v1159 = vadd.f32 %v1043, %v1157
        %s1160 = sld [smem:[#allocation4 + $0x9]]
        %v1161 = vstv %s1160
        %v1162 = vmul.f32 %v1161, %v1151
        %v1163 = vmul.f32 %v1161, %v1153
        %v1164 = vadd.f32 %v1055, %v1162
        %v1165 = vadd.f32 %v1056, %v1163
        %s1166 = sld [smem:[#allocation4 + $0xa]]
        %v1167 = vstv %s1166
        %v1168 = vmul.f32 %v1167, %v1151
        %v1169 = vmul.f32 %v1167, %v1153
        %v1170 = vadd.f32 %v1068, %v1168
        %v1171 = vadd.f32 %v1069, %v1169
        %s1172 = sld [smem:[#allocation4 + $0xb]]
        %v1173 = vstv %s1172
        %v1174 = vmul.f32 %v1173, %v1151
        %v1175 = vmul.f32 %v1173, %v1153
        %v1176 = vadd.f32 %v1081, %v1174
        %v1177 = vadd.f32 %v1082, %v1175
        %s1178 = sld [smem:[#allocation4 + $0xc]]
        %v1179 = vstv %s1178
        %v1180 = vmul.f32 %v1179, %v1151
        %v1181 = vmul.f32 %v1179, %v1153
        %v1182 = vadd.f32 %v1094, %v1180
        %v1183 = vadd.f32 %v1095, %v1181
        %s1184 = sld [smem:[#allocation4 + $0xd]]
        %v1185 = vstv %s1184
        %v1186 = vmul.f32 %v1185, %v1151
        %v1187 = vmul.f32 %v1185, %v1153
        %v1188 = vadd.f32 %v1107, %v1186
        %v1189 = vadd.f32 %v1108, %v1187
        %s1190 = sld [smem:[#allocation4 + $0xe]]
        %v1191 = vstv %s1190
        %v1192 = vmul.f32 %v1191, %v1151
        %v1193 = vmul.f32 %v1191, %v1153
        %v1194 = vadd.f32 %v1120, %v1192
        %v1195 = vadd.f32 %v1121, %v1193
        %s1196 = sld [smem:[#allocation4 + $0xf]]
        %v1197 = vstv %s1196
        %v1198 = vmul.f32 %v1197, %v1151
        %v1199 = vmul.f32 %v1197, %v1153
        %v1200 = vadd.f32 %v1133, %v1198
        %v1201 = vadd.f32 %v1134, %v1199
        %s1202 = sld [smem:[#allocation4 + $0x50]]
        %v1203 = vstv %s1202
        %v1204 = vmul.f32 %v1203, %v1142
        %v1205 = vmul.f32 %v1203, %v1143
        %v1208 = vrot.slane %v1204, 5
        %v1209 = vrot.slane %v1205, 5
        %v1210 = vsel %vm411, %v1208, %v1209
        %v1213 = vadd.f32 %v1158, %v1208
        %v1214 = vadd.f32 %v1159, %v1210
        %s1215 = sld [smem:[#allocation4 + $0x51]]
        %v1216 = vstv %s1215
        %v1217 = vmul.f32 %v1216, %v1142
        %v1218 = vmul.f32 %v1216, %v1143
        %v1221 = vrot.slane %v1217, 5
        %v1222 = vrot.slane %v1218, 5
        %v1223 = vsel %vm411, %v1221, %v1222
        %v1226 = vadd.f32 %v1164, %v1221
        %v1227 = vadd.f32 %v1165, %v1223
        %s1228 = sld [smem:[#allocation4 + $0x52]]
        %v1229 = vstv %s1228
        %v1230 = vmul.f32 %v1229, %v1142
        %v1231 = vmul.f32 %v1229, %v1143
        %v1234 = vrot.slane %v1230, 5
        %v1235 = vrot.slane %v1231, 5
        %v1236 = vsel %vm411, %v1234, %v1235
        %v1239 = vadd.f32 %v1170, %v1234
        %v1240 = vadd.f32 %v1171, %v1236
        %s1241 = sld [smem:[#allocation4 + $0x53]]
        %v1242 = vstv %s1241
        %v1243 = vmul.f32 %v1242, %v1142
        %v1244 = vmul.f32 %v1242, %v1143
        %v1247 = vrot.slane %v1243, 5
        %v1248 = vrot.slane %v1244, 5
        %v1249 = vsel %vm411, %v1247, %v1248
        %v1252 = vadd.f32 %v1176, %v1247
        %v1253 = vadd.f32 %v1177, %v1249
        %s1254 = sld [smem:[#allocation4 + $0x54]]
        %v1255 = vstv %s1254
        %v1256 = vmul.f32 %v1255, %v1142
        %v1257 = vmul.f32 %v1255, %v1143
        %v1260 = vrot.slane %v1256, 5
        %v1261 = vrot.slane %v1257, 5
        %v1262 = vsel %vm411, %v1260, %v1261
        %v1265 = vadd.f32 %v1182, %v1260
        %v1266 = vadd.f32 %v1183, %v1262
        %s1267 = sld [smem:[#allocation4 + $0x55]]
        %v1268 = vstv %s1267
        %v1269 = vmul.f32 %v1268, %v1142
        %v1270 = vmul.f32 %v1268, %v1143
        %v1273 = vrot.slane %v1269, 5
        %v1274 = vrot.slane %v1270, 5
        %v1275 = vsel %vm411, %v1273, %v1274
        %v1278 = vadd.f32 %v1188, %v1273
        %v1279 = vadd.f32 %v1189, %v1275
        %s1280 = sld [smem:[#allocation4 + $0x56]]
        %v1281 = vstv %s1280
        %v1282 = vmul.f32 %v1281, %v1142
        %v1283 = vmul.f32 %v1281, %v1143
        %v1286 = vrot.slane %v1282, 5
        %v1287 = vrot.slane %v1283, 5
        %v1288 = vsel %vm411, %v1286, %v1287
        %v1291 = vadd.f32 %v1194, %v1286
        %v1292 = vadd.f32 %v1195, %v1288
        %s1293 = sld [smem:[#allocation4 + $0x57]]
        %v1294 = vstv %s1293
        %v1295 = vmul.f32 %v1294, %v1142
        %v1296 = vmul.f32 %v1294, %v1143
        %v1299 = vrot.slane %v1295, 5
        %v1300 = vrot.slane %v1296, 5
        %v1301 = vsel %vm411, %v1299, %v1300
        %v1304 = vadd.f32 %v1200, %v1299
        %v1305 = vadd.f32 %v1201, %v1301
        %s1306 = sld [smem:[#allocation4 + $0x98]]
        %v1307 = vstv %s1306
        %v1308 = vmul.f32 %v1307, %v1142
        %v1309 = vmul.f32 %v1307, %v1151
        %v1312 = vrot.slane %v1308, 6
        %v1313 = vrot.slane %v1309, 6
        %v1314 = vsel %vm516, %v1312, %v1313
        %v1317 = vadd.f32 %v1213, %v1312
        %v1318 = vadd.f32 %v1214, %v1314
        %s1319 = sld [smem:[#allocation4 + $0x99]]
        %v1320 = vstv %s1319
        %v1321 = vmul.f32 %v1320, %v1142
        %v1322 = vmul.f32 %v1320, %v1151
        %v1325 = vrot.slane %v1321, 6
        %v1326 = vrot.slane %v1322, 6
        %v1327 = vsel %vm516, %v1325, %v1326
        %v1330 = vadd.f32 %v1226, %v1325
        %v1331 = vadd.f32 %v1227, %v1327
        %s1332 = sld [smem:[#allocation4 + $0x9a]]
        %v1333 = vstv %s1332
        %v1334 = vmul.f32 %v1333, %v1142
        %v1335 = vmul.f32 %v1333, %v1151
        %v1338 = vrot.slane %v1334, 6
        %v1339 = vrot.slane %v1335, 6
        %v1340 = vsel %vm516, %v1338, %v1339
        %v1343 = vadd.f32 %v1239, %v1338
        %v1344 = vadd.f32 %v1240, %v1340
        %s1345 = sld [smem:[#allocation4 + $0x9b]]
        %v1346 = vstv %s1345
        %v1347 = vmul.f32 %v1346, %v1142
        %v1348 = vmul.f32 %v1346, %v1151
        %v1351 = vrot.slane %v1347, 6
        %v1352 = vrot.slane %v1348, 6
        %v1353 = vsel %vm516, %v1351, %v1352
        %v1356 = vadd.f32 %v1252, %v1351
        %v1357 = vadd.f32 %v1253, %v1353
        %s1358 = sld [smem:[#allocation4 + $0x9c]]
        %v1359 = vstv %s1358
        %v1360 = vmul.f32 %v1359, %v1142
        %v1361 = vmul.f32 %v1359, %v1151
        %v1364 = vrot.slane %v1360, 6
        %v1365 = vrot.slane %v1361, 6
        %v1366 = vsel %vm516, %v1364, %v1365
        %v1369 = vadd.f32 %v1265, %v1364
        %v1370 = vadd.f32 %v1266, %v1366
        %s1371 = sld [smem:[#allocation4 + $0x9d]]
        %v1372 = vstv %s1371
        %v1373 = vmul.f32 %v1372, %v1142
        %v1374 = vmul.f32 %v1372, %v1151
        %v1377 = vrot.slane %v1373, 6
        %v1378 = vrot.slane %v1374, 6
        %v1379 = vsel %vm516, %v1377, %v1378
        %v1382 = vadd.f32 %v1278, %v1377
        %v1383 = vadd.f32 %v1279, %v1379
        %s1384 = sld [smem:[#allocation4 + $0x9e]]
        %v1385 = vstv %s1384
        %v1386 = vmul.f32 %v1385, %v1142
        %v1387 = vmul.f32 %v1385, %v1151
        %v1390 = vrot.slane %v1386, 6
        %v1391 = vrot.slane %v1387, 6
        %v1392 = vsel %vm516, %v1390, %v1391
        %v1395 = vadd.f32 %v1291, %v1390
        %v1396 = vadd.f32 %v1292, %v1392
        %s1397 = sld [smem:[#allocation4 + $0x9f]]
        %v1398 = vstv %s1397
        %v1399 = vmul.f32 %v1398, %v1142
        %v1400 = vmul.f32 %v1398, %v1151
        %v1403 = vrot.slane %v1399, 6
        %v1404 = vrot.slane %v1400, 6
        %v1405 = vsel %vm516, %v1403, %v1404
        %v1408 = vadd.f32 %v1304, %v1403
        %v1409 = vadd.f32 %v1305, %v1405
        %v1410 = vrot.slane %v1136, 4
        %v1411 = vsel %vm352, %v1410, %v1137
        %v1412 = vrot.slane %v1411, 4
        %v1413 = vsel %vm352, %v1412, %v1410
        %s1414 = sld [smem:[#allocation4 + $0x20]]
        %v1415 = vstv %s1414
        %v1416 = vmul.f32 %v1415, %v1411
        %v1417 = vmul.f32 %v1415, %v1413
        %v1418 = vadd.f32 %v1317, %v1416
        %v1419 = vadd.f32 %v1318, %v1417
        %s1420 = sld [smem:[#allocation4 + $0x21]]
        %v1421 = vstv %s1420
        %v1422 = vmul.f32 %v1421, %v1411
        %v1423 = vmul.f32 %v1421, %v1413
        %v1424 = vadd.f32 %v1330, %v1422
        %v1425 = vadd.f32 %v1331, %v1423
        %s1426 = sld [smem:[#allocation4 + $0x22]]
        %v1427 = vstv %s1426
        %v1428 = vmul.f32 %v1427, %v1411
        %v1429 = vmul.f32 %v1427, %v1413
        %v1430 = vadd.f32 %v1343, %v1428
        %v1431 = vadd.f32 %v1344, %v1429
        %s1432 = sld [smem:[#allocation4 + $0x23]]
        %v1433 = vstv %s1432
        %v1434 = vmul.f32 %v1433, %v1411
        %v1435 = vmul.f32 %v1433, %v1413
        %v1436 = vadd.f32 %v1356, %v1434
        %v1437 = vadd.f32 %v1357, %v1435
        %s1438 = sld [smem:[#allocation4 + $0x24]]
        %v1439 = vstv %s1438
        %v1440 = vmul.f32 %v1439, %v1411
        %v1441 = vmul.f32 %v1439, %v1413
        %v1442 = vadd.f32 %v1369, %v1440
        %v1443 = vadd.f32 %v1370, %v1441
        %s1444 = sld [smem:[#allocation4 + $0x25]]
        %v1445 = vstv %s1444
        %v1446 = vmul.f32 %v1445, %v1411
        %v1447 = vmul.f32 %v1445, %v1413
        %v1448 = vadd.f32 %v1382, %v1446
        %v1449 = vadd.f32 %v1383, %v1447
        %s1450 = sld [smem:[#allocation4 + $0x26]]
        %v1451 = vstv %s1450
        %v1452 = vmul.f32 %v1451, %v1411
        %v1453 = vmul.f32 %v1451, %v1413
        %v1454 = vadd.f32 %v1395, %v1452
        %v1455 = vadd.f32 %v1396, %v1453
        %s1456 = sld [smem:[#allocation4 + $0x27]]
        %v1457 = vstv %s1456
        %v1458 = vmul.f32 %v1457, %v1411
        %v1459 = vmul.f32 %v1457, %v1413
        %v1460 = vadd.f32 %v1408, %v1458
        %v1461 = vadd.f32 %v1409, %v1459
        %s1462 = sld [smem:[#allocation4 + $0x68]]
        %v1463 = vstv %s1462
        %v1464 = vmul.f32 %v1463, %v1136
        %v1465 = vmul.f32 %v1463, %v1137
        %v1468 = vrot.slane %v1464, 5
        %v1469 = vrot.slane %v1465, 5
        %v1470 = vsel %vm411, %v1468, %v1469
        %v1473 = vadd.f32 %v1418, %v1468
        %v1474 = vadd.f32 %v1419, %v1470
        %s1475 = sld [smem:[#allocation4 + $0x69]]
        %v1476 = vstv %s1475
        %v1477 = vmul.f32 %v1476, %v1136
        %v1478 = vmul.f32 %v1476, %v1137
        %v1481 = vrot.slane %v1477, 5
        %v1482 = vrot.slane %v1478, 5
        %v1483 = vsel %vm411, %v1481, %v1482
        %v1486 = vadd.f32 %v1424, %v1481
        %v1487 = vadd.f32 %v1425, %v1483
        %s1488 = sld [smem:[#allocation4 + $0x6a]]
        %v1489 = vstv %s1488
        %v1490 = vmul.f32 %v1489, %v1136
        %v1491 = vmul.f32 %v1489, %v1137
        %v1494 = vrot.slane %v1490, 5
        %v1495 = vrot.slane %v1491, 5
        %v1496 = vsel %vm411, %v1494, %v1495
        %v1499 = vadd.f32 %v1430, %v1494
        %v1500 = vadd.f32 %v1431, %v1496
        %s1501 = sld [smem:[#allocation4 + $0x6b]]
        %v1502 = vstv %s1501
        %v1503 = vmul.f32 %v1502, %v1136
        %v1504 = vmul.f32 %v1502, %v1137
        %v1507 = vrot.slane %v1503, 5
        %v1508 = vrot.slane %v1504, 5
        %v1509 = vsel %vm411, %v1507, %v1508
        %v1512 = vadd.f32 %v1436, %v1507
        %v1513 = vadd.f32 %v1437, %v1509
        %s1514 = sld [smem:[#allocation4 + $0x6c]]
        %v1515 = vstv %s1514
        %v1516 = vmul.f32 %v1515, %v1136
        %v1517 = vmul.f32 %v1515, %v1137
        %v1520 = vrot.slane %v1516, 5
        %v1521 = vrot.slane %v1517, 5
        %v1522 = vsel %vm411, %v1520, %v1521
        %v1525 = vadd.f32 %v1442, %v1520
        %v1526 = vadd.f32 %v1443, %v1522
        %s1527 = sld [smem:[#allocation4 + $0x6d]]
        %v1528 = vstv %s1527
        %v1529 = vmul.f32 %v1528, %v1136
        %v1530 = vmul.f32 %v1528, %v1137
        %v1533 = vrot.slane %v1529, 5
        %v1534 = vrot.slane %v1530, 5
        %v1535 = vsel %vm411, %v1533, %v1534
        %v1538 = vadd.f32 %v1448, %v1533
        %v1539 = vadd.f32 %v1449, %v1535
        %s1540 = sld [smem:[#allocation4 + $0x6e]]
        %v1541 = vstv %s1540
        %v1542 = vmul.f32 %v1541, %v1136
        %v1543 = vmul.f32 %v1541, %v1137
        %v1546 = vrot.slane %v1542, 5
        %v1547 = vrot.slane %v1543, 5
        %v1548 = vsel %vm411, %v1546, %v1547
        %v1551 = vadd.f32 %v1454, %v1546
        %v1552 = vadd.f32 %v1455, %v1548
        %s1553 = sld [smem:[#allocation4 + $0x6f]]
        %v1554 = vstv %s1553
        %v1555 = vmul.f32 %v1554, %v1136
        %v1556 = vmul.f32 %v1554, %v1137
        %v1559 = vrot.slane %v1555, 5
        %v1560 = vrot.slane %v1556, 5
        %v1561 = vsel %vm411, %v1559, %v1560
        %v1564 = vadd.f32 %v1460, %v1559
        %v1565 = vadd.f32 %v1461, %v1561
        %s1566 = sld [smem:[#allocation4 + $0xb0]]
        %v1567 = vstv %s1566
        %v1568 = vmul.f32 %v1567, %v1136
        %v1569 = vmul.f32 %v1567, %v1411
        %v1572 = vrot.slane %v1568, 6
        %v1573 = vrot.slane %v1569, 6
        %v1574 = vsel %vm516, %v1572, %v1573
        %v1577 = vadd.f32 %v1473, %v1572
        %v1578 = vadd.f32 %v1474, %v1574
        %s1579 = sld [smem:[#allocation4 + $0xb1]]
        %v1580 = vstv %s1579
        %v1581 = vmul.f32 %v1580, %v1136
        %v1582 = vmul.f32 %v1580, %v1411
        %v1585 = vrot.slane %v1581, 6
        %v1586 = vrot.slane %v1582, 6
        %v1587 = vsel %vm516, %v1585, %v1586
        %v1590 = vadd.f32 %v1486, %v1585
        %v1591 = vadd.f32 %v1487, %v1587
        %s1592 = sld [smem:[#allocation4 + $0xb2]]
        %v1593 = vstv %s1592
        %v1594 = vmul.f32 %v1593, %v1136
        %v1595 = vmul.f32 %v1593, %v1411
        %v1598 = vrot.slane %v1594, 6
        %v1599 = vrot.slane %v1595, 6
        %v1600 = vsel %vm516, %v1598, %v1599
        %v1603 = vadd.f32 %v1499, %v1598
        %v1604 = vadd.f32 %v1500, %v1600
        %s1605 = sld [smem:[#allocation4 + $0xb3]]
        %v1606 = vstv %s1605
        %v1607 = vmul.f32 %v1606, %v1136
        %v1608 = vmul.f32 %v1606, %v1411
        %v1611 = vrot.slane %v1607, 6
        %v1612 = vrot.slane %v1608, 6
        %v1613 = vsel %vm516, %v1611, %v1612
        %v1616 = vadd.f32 %v1512, %v1611
        %v1617 = vadd.f32 %v1513, %v1613
        %s1618 = sld [smem:[#allocation4 + $0xb4]]
        %v1619 = vstv %s1618
        %v1620 = vmul.f32 %v1619, %v1136
        %v1621 = vmul.f32 %v1619, %v1411
        %v1624 = vrot.slane %v1620, 6
        %v1625 = vrot.slane %v1621, 6
        %v1626 = vsel %vm516, %v1624, %v1625
        %v1629 = vadd.f32 %v1525, %v1624
        %v1630 = vadd.f32 %v1526, %v1626
        %s1631 = sld [smem:[#allocation4 + $0xb5]]
        %v1632 = vstv %s1631
        %v1633 = vmul.f32 %v1632, %v1136
        %v1634 = vmul.f32 %v1632, %v1411
        %v1637 = vrot.slane %v1633, 6
        %v1638 = vrot.slane %v1634, 6
        %v1639 = vsel %vm516, %v1637, %v1638
        %v1642 = vadd.f32 %v1538, %v1637
        %v1643 = vadd.f32 %v1539, %v1639
        %s1644 = sld [smem:[#allocation4 + $0xb6]]
        %v1645 = vstv %s1644
        %v1646 = vmul.f32 %v1645, %v1136
        %v1647 = vmul.f32 %v1645, %v1411
        %v1650 = vrot.slane %v1646, 6
        %v1651 = vrot.slane %v1647, 6
        %v1652 = vsel %vm516, %v1650, %v1651
        %v1655 = vadd.f32 %v1551, %v1650
        %v1656 = vadd.f32 %v1552, %v1652
        %s1657 = sld [smem:[#allocation4 + $0xb7]]
        %v1658 = vstv %s1657
        %v1659 = vmul.f32 %v1658, %v1136
        %v1660 = vmul.f32 %v1658, %v1411
        %v1663 = vrot.slane %v1659, 6
        %v1664 = vrot.slane %v1660, 6
        %v1665 = vsel %vm516, %v1663, %v1664
        %v1668 = vadd.f32 %v1564, %v1663
        %v1669 = vadd.f32 %v1565, %v1665
        %v1670 = vrot.slane %v1148, 4
        %v1671 = vsel %vm352, %v1670, %v1149
        %v1672 = vrot.slane %v1671, 4
        %v1673 = vsel %vm352, %v1672, %v1670
        %s1674 = sld [smem:[#allocation4 + $0x38]]
        %v1675 = vstv %s1674
        %v1676 = vmul.f32 %v1675, %v1671
        %v1677 = vmul.f32 %v1675, %v1673
        %v1678 = vadd.f32 %v1577, %v1676
        %v1679 = vadd.f32 %v1578, %v1677
        %s1680 = sld [smem:[#allocation4 + $0x39]]
        %v1681 = vstv %s1680
        %v1682 = vmul.f32 %v1681, %v1671
        %v1683 = vmul.f32 %v1681, %v1673
        %v1684 = vadd.f32 %v1590, %v1682
        %v1685 = vadd.f32 %v1591, %v1683
        %s1686 = sld [smem:[#allocation4 + $0x3a]]
        %v1687 = vstv %s1686
        %v1688 = vmul.f32 %v1687, %v1671
        %v1689 = vmul.f32 %v1687, %v1673
        %v1690 = vadd.f32 %v1603, %v1688
        %v1691 = vadd.f32 %v1604, %v1689
        %s1692 = sld [smem:[#allocation4 + $0x3b]]
        %v1693 = vstv %s1692
        %v1694 = vmul.f32 %v1693, %v1671
        %v1695 = vmul.f32 %v1693, %v1673
        %v1696 = vadd.f32 %v1616, %v1694
        %v1697 = vadd.f32 %v1617, %v1695
        %s1698 = sld [smem:[#allocation4 + $0x3c]]
        %v1699 = vstv %s1698
        %v1700 = vmul.f32 %v1699, %v1671
        %v1701 = vmul.f32 %v1699, %v1673
        %v1702 = vadd.f32 %v1629, %v1700
        %v1703 = vadd.f32 %v1630, %v1701
        %s1704 = sld [smem:[#allocation4 + $0x3d]]
        %v1705 = vstv %s1704
        %v1706 = vmul.f32 %v1705, %v1671
        %v1707 = vmul.f32 %v1705, %v1673
        %v1708 = vadd.f32 %v1642, %v1706
        %v1709 = vadd.f32 %v1643, %v1707
        %s1710 = sld [smem:[#allocation4 + $0x3e]]
        %v1711 = vstv %s1710
        %v1712 = vmul.f32 %v1711, %v1671
        %v1713 = vmul.f32 %v1711, %v1673
        %v1714 = vadd.f32 %v1655, %v1712
        %v1715 = vadd.f32 %v1656, %v1713
        %s1716 = sld [smem:[#allocation4 + $0x3f]]
        %v1717 = vstv %s1716
        %v1718 = vmul.f32 %v1717, %v1671
        %v1719 = vmul.f32 %v1717, %v1673
        %v1720 = vadd.f32 %v1668, %v1718
        %v1721 = vadd.f32 %v1669, %v1719
        %s1722 = sld [smem:[#allocation4 + $0x80]]
        %v1723 = vstv %s1722
        %v1724 = vmul.f32 %v1723, %v1148
        %v1725 = vmul.f32 %v1723, %v1149
        %v1728 = vrot.slane %v1724, 5
        %v1729 = vrot.slane %v1725, 5
        %v1730 = vsel %vm411, %v1728, %v1729
        %v1733 = vadd.f32 %v1678, %v1728
        %v1734 = vadd.f32 %v1679, %v1730
        %s1735 = sld [smem:[#allocation4 + $0x81]]
        %v1736 = vstv %s1735
        %v1737 = vmul.f32 %v1736, %v1148
        %v1738 = vmul.f32 %v1736, %v1149
        %v1741 = vrot.slane %v1737, 5
        %v1742 = vrot.slane %v1738, 5
        %v1743 = vsel %vm411, %v1741, %v1742
        %v1746 = vadd.f32 %v1684, %v1741
        %v1747 = vadd.f32 %v1685, %v1743
        %s1748 = sld [smem:[#allocation4 + $0x82]]
        %v1749 = vstv %s1748
        %v1750 = vmul.f32 %v1749, %v1148
        %v1751 = vmul.f32 %v1749, %v1149
        %v1754 = vrot.slane %v1750, 5
        %v1755 = vrot.slane %v1751, 5
        %v1756 = vsel %vm411, %v1754, %v1755
        %v1759 = vadd.f32 %v1690, %v1754
        %v1760 = vadd.f32 %v1691, %v1756
        %s1761 = sld [smem:[#allocation4 + $0x83]]
        %v1762 = vstv %s1761
        %v1763 = vmul.f32 %v1762, %v1148
        %v1764 = vmul.f32 %v1762, %v1149
        %v1767 = vrot.slane %v1763, 5
        %v1768 = vrot.slane %v1764, 5
        %v1769 = vsel %vm411, %v1767, %v1768
        %v1772 = vadd.f32 %v1696, %v1767
        %v1773 = vadd.f32 %v1697, %v1769
        %s1774 = sld [smem:[#allocation4 + $0x84]]
        %v1775 = vstv %s1774
        %v1776 = vmul.f32 %v1775, %v1148
        %v1777 = vmul.f32 %v1775, %v1149
        %v1780 = vrot.slane %v1776, 5
        %v1781 = vrot.slane %v1777, 5
        %v1782 = vsel %vm411, %v1780, %v1781
        %v1785 = vadd.f32 %v1702, %v1780
        %v1786 = vadd.f32 %v1703, %v1782
        %s1787 = sld [smem:[#allocation4 + $0x85]]
        %v1788 = vstv %s1787
        %v1789 = vmul.f32 %v1788, %v1148
        %v1790 = vmul.f32 %v1788, %v1149
        %v1793 = vrot.slane %v1789, 5
        %v1794 = vrot.slane %v1790, 5
        %v1795 = vsel %vm411, %v1793, %v1794
        %v1798 = vadd.f32 %v1708, %v1793
        %v1799 = vadd.f32 %v1709, %v1795
        %s1800 = sld [smem:[#allocation4 + $0x86]]
        %v1801 = vstv %s1800
        %v1802 = vmul.f32 %v1801, %v1148
        %v1803 = vmul.f32 %v1801, %v1149
        %v1806 = vrot.slane %v1802, 5
        %v1807 = vrot.slane %v1803, 5
        %v1808 = vsel %vm411, %v1806, %v1807
        %v1811 = vadd.f32 %v1714, %v1806
        %v1812 = vadd.f32 %v1715, %v1808
        %s1813 = sld [smem:[#allocation4 + $0x87]]
        %v1814 = vstv %s1813
        %v1815 = vmul.f32 %v1814, %v1148
        %v1816 = vmul.f32 %v1814, %v1149
        %v1819 = vrot.slane %v1815, 5
        %v1820 = vrot.slane %v1816, 5
        %v1821 = vsel %vm411, %v1819, %v1820
        %v1824 = vadd.f32 %v1720, %v1819
        %v1825 = vadd.f32 %v1721, %v1821
        %s1826 = sld [smem:[#allocation4 + $0xc8]]
        %v1827 = vstv %s1826
        %v1828 = vmul.f32 %v1827, %v1148
        %v1829 = vmul.f32 %v1827, %v1671
        %v1832 = vrot.slane %v1828, 6
        %v1833 = vrot.slane %v1829, 6
        %v1834 = vsel %vm516, %v1832, %v1833
        %v1837 = vadd.f32 %v1733, %v1832
        %v1838 = vadd.f32 %v1734, %v1834
        %s1839 = sld [smem:[#allocation4 + $0xc9]]
        %v1840 = vstv %s1839
        %v1841 = vmul.f32 %v1840, %v1148
        %v1842 = vmul.f32 %v1840, %v1671
        %v1845 = vrot.slane %v1841, 6
        %v1846 = vrot.slane %v1842, 6
        %v1847 = vsel %vm516, %v1845, %v1846
        %v1850 = vadd.f32 %v1746, %v1845
        %v1851 = vadd.f32 %v1747, %v1847
        %s1852 = sld [smem:[#allocation4 + $0xca]]
        %v1853 = vstv %s1852
        %v1854 = vmul.f32 %v1853, %v1148
        %v1855 = vmul.f32 %v1853, %v1671
        %v1858 = vrot.slane %v1854, 6
        %v1859 = vrot.slane %v1855, 6
        %v1860 = vsel %vm516, %v1858, %v1859
        %v1863 = vadd.f32 %v1759, %v1858
        %v1864 = vadd.f32 %v1760, %v1860
        %s1865 = sld [smem:[#allocation4 + $0xcb]]
        %v1866 = vstv %s1865
        %v1867 = vmul.f32 %v1866, %v1148
        %v1868 = vmul.f32 %v1866, %v1671
        %v1871 = vrot.slane %v1867, 6
        %v1872 = vrot.slane %v1868, 6
        %v1873 = vsel %vm516, %v1871, %v1872
        %v1876 = vadd.f32 %v1772, %v1871
        %v1877 = vadd.f32 %v1773, %v1873
        %s1878 = sld [smem:[#allocation4 + $0xcc]]
        %v1879 = vstv %s1878
        %v1880 = vmul.f32 %v1879, %v1148
        %v1881 = vmul.f32 %v1879, %v1671
        %v1884 = vrot.slane %v1880, 6
        %v1885 = vrot.slane %v1881, 6
        %v1886 = vsel %vm516, %v1884, %v1885
        %v1889 = vadd.f32 %v1785, %v1884
        %v1890 = vadd.f32 %v1786, %v1886
        %s1891 = sld [smem:[#allocation4 + $0xcd]]
        %v1892 = vstv %s1891
        %v1893 = vmul.f32 %v1892, %v1148
        %v1894 = vmul.f32 %v1892, %v1671
        %v1897 = vrot.slane %v1893, 6
        %v1898 = vrot.slane %v1894, 6
        %v1899 = vsel %vm516, %v1897, %v1898
        %v1902 = vadd.f32 %v1798, %v1897
        %v1903 = vadd.f32 %v1799, %v1899
        %s1904 = sld [smem:[#allocation4 + $0xce]]
        %v1905 = vstv %s1904
        %v1906 = vmul.f32 %v1905, %v1148
        %v1907 = vmul.f32 %v1905, %v1671
        %v1910 = vrot.slane %v1906, 6
        %v1911 = vrot.slane %v1907, 6
        %v1912 = vsel %vm516, %v1910, %v1911
        %v1915 = vadd.f32 %v1811, %v1910
        %v1916 = vadd.f32 %v1812, %v1912
        %s1917 = sld [smem:[#allocation4 + $0xcf]]
        %v1918 = vstv %s1917
        %v1919 = vmul.f32 %v1918, %v1148
        %v1920 = vmul.f32 %v1918, %v1671
        %v1923 = vrot.slane %v1919, 6
        %v1924 = vrot.slane %v1920, 6
        %v1925 = vsel %vm516, %v1923, %v1924
        %v1928 = vadd.f32 %v1824, %v1923
        %v1929 = vadd.f32 %v1825, %v1925
        %s1930 = scalar_lea.vmem [#allocation2], 32
        %v1931 = vld [vmem:[%s1930] sm:$0xff]
        %v1932 = vld [vmem:[%s1930 + $0x8] sm:$0xf]
        %1933 = vrot.lane.b32.xlu0 %v1931, 1
        %v1934 = vpop.permute.xlu0 %1933
        %1935 = vrot.lane.b32.xlu0 %v1932, 1
        %v1936 = vpop.permute.xlu0 %1935
        %v1937 = vsel %vm317, %v1934, 0.0
        %v1938 = vsel %vm317, %v1936, 0.0
        %1939 = vrot.lane.b32.xlu0 %v1931, 127
        %v1940 = vpop.permute.xlu0 %1939
        %1941 = vrot.lane.b32.xlu0 %v1932, 127
        %v1942 = vpop.permute.xlu0 %1941
        %v1943 = vsel %vm318, %v1940, 0.0
        %v1944 = vsel %vm318, %v1942, 0.0
        %v1945 = vrot.slane %v1937, 4
        %v1946 = vsel %vm352, %v1945, %v1938
        %v1947 = vrot.slane %v1946, 4
        %v1948 = vsel %vm352, %v1947, %v1945
        %s1949 = sld [smem:[#allocation4 + $0x10]]
        %v1950 = vstv %s1949
        %v1951 = vmul.f32 %v1950, %v1946
        %v1952 = vmul.f32 %v1950, %v1948
        %v1953 = vadd.f32 %v1837, %v1951
        %v1954 = vadd.f32 %v1838, %v1952
        %s1955 = sld [smem:[#allocation4 + $0x11]]
        %v1956 = vstv %s1955
        %v1957 = vmul.f32 %v1956, %v1946
        %v1958 = vmul.f32 %v1956, %v1948
        %v1959 = vadd.f32 %v1850, %v1957
        %v1960 = vadd.f32 %v1851, %v1958
        %s1961 = sld [smem:[#allocation4 + $0x12]]
        %v1962 = vstv %s1961
        %v1963 = vmul.f32 %v1962, %v1946
        %v1964 = vmul.f32 %v1962, %v1948
        %v1965 = vadd.f32 %v1863, %v1963
        %v1966 = vadd.f32 %v1864, %v1964
        %s1967 = sld [smem:[#allocation4 + $0x13]]
        %v1968 = vstv %s1967
        %v1969 = vmul.f32 %v1968, %v1946
        %v1970 = vmul.f32 %v1968, %v1948
        %v1971 = vadd.f32 %v1876, %v1969
        %v1972 = vadd.f32 %v1877, %v1970
        %s1973 = sld [smem:[#allocation4 + $0x14]]
        %v1974 = vstv %s1973
        %v1975 = vmul.f32 %v1974, %v1946
        %v1976 = vmul.f32 %v1974, %v1948
        %v1977 = vadd.f32 %v1889, %v1975
        %v1978 = vadd.f32 %v1890, %v1976
        %s1979 = sld [smem:[#allocation4 + $0x15]]
        %v1980 = vstv %s1979
        %v1981 = vmul.f32 %v1980, %v1946
        %v1982 = vmul.f32 %v1980, %v1948
        %v1983 = vadd.f32 %v1902, %v1981
        %v1984 = vadd.f32 %v1903, %v1982
        %s1985 = sld [smem:[#allocation4 + $0x16]]
        %v1986 = vstv %s1985
        %v1987 = vmul.f32 %v1986, %v1946
        %v1988 = vmul.f32 %v1986, %v1948
        %v1989 = vadd.f32 %v1915, %v1987
        %v1990 = vadd.f32 %v1916, %v1988
        %s1991 = sld [smem:[#allocation4 + $0x17]]
        %v1992 = vstv %s1991
        %v1993 = vmul.f32 %v1992, %v1946
        %v1994 = vmul.f32 %v1992, %v1948
        %v1995 = vadd.f32 %v1928, %v1993
        %v1996 = vadd.f32 %v1929, %v1994
        %s1997 = sld [smem:[#allocation4 + $0x58]]
        %v1998 = vstv %s1997
        %v1999 = vmul.f32 %v1998, %v1937
        %v2000 = vmul.f32 %v1998, %v1938
        %v2003 = vrot.slane %v1999, 5
        %v2004 = vrot.slane %v2000, 5
        %v2005 = vsel %vm411, %v2003, %v2004
        %v2008 = vadd.f32 %v1953, %v2003
        %v2009 = vadd.f32 %v1954, %v2005
        %s2010 = sld [smem:[#allocation4 + $0x59]]
        %v2011 = vstv %s2010
        %v2012 = vmul.f32 %v2011, %v1937
        %v2013 = vmul.f32 %v2011, %v1938
        %v2016 = vrot.slane %v2012, 5
        %v2017 = vrot.slane %v2013, 5
        %v2018 = vsel %vm411, %v2016, %v2017
        %v2021 = vadd.f32 %v1959, %v2016
        %v2022 = vadd.f32 %v1960, %v2018
        %s2023 = sld [smem:[#allocation4 + $0x5a]]
        %v2024 = vstv %s2023
        %v2025 = vmul.f32 %v2024, %v1937
        %v2026 = vmul.f32 %v2024, %v1938
        %v2029 = vrot.slane %v2025, 5
        %v2030 = vrot.slane %v2026, 5
        %v2031 = vsel %vm411, %v2029, %v2030
        %v2034 = vadd.f32 %v1965, %v2029
        %v2035 = vadd.f32 %v1966, %v2031
        %s2036 = sld [smem:[#allocation4 + $0x5b]]
        %v2037 = vstv %s2036
        %v2038 = vmul.f32 %v2037, %v1937
        %v2039 = vmul.f32 %v2037, %v1938
        %v2042 = vrot.slane %v2038, 5
        %v2043 = vrot.slane %v2039, 5
        %v2044 = vsel %vm411, %v2042, %v2043
        %v2047 = vadd.f32 %v1971, %v2042
        %v2048 = vadd.f32 %v1972, %v2044
        %s2049 = sld [smem:[#allocation4 + $0x5c]]
        %v2050 = vstv %s2049
        %v2051 = vmul.f32 %v2050, %v1937
        %v2052 = vmul.f32 %v2050, %v1938
        %v2055 = vrot.slane %v2051, 5
        %v2056 = vrot.slane %v2052, 5
        %v2057 = vsel %vm411, %v2055, %v2056
        %v2060 = vadd.f32 %v1977, %v2055
        %v2061 = vadd.f32 %v1978, %v2057
        %s2062 = sld [smem:[#allocation4 + $0x5d]]
        %v2063 = vstv %s2062
        %v2064 = vmul.f32 %v2063, %v1937
        %v2065 = vmul.f32 %v2063, %v1938
        %v2068 = vrot.slane %v2064, 5
        %v2069 = vrot.slane %v2065, 5
        %v2070 = vsel %vm411, %v2068, %v2069
        %v2073 = vadd.f32 %v1983, %v2068
        %v2074 = vadd.f32 %v1984, %v2070
        %s2075 = sld [smem:[#allocation4 + $0x5e]]
        %v2076 = vstv %s2075
        %v2077 = vmul.f32 %v2076, %v1937
        %v2078 = vmul.f32 %v2076, %v1938
        %v2081 = vrot.slane %v2077, 5
        %v2082 = vrot.slane %v2078, 5
        %v2083 = vsel %vm411, %v2081, %v2082
        %v2086 = vadd.f32 %v1989, %v2081
        %v2087 = vadd.f32 %v1990, %v2083
        %s2088 = sld [smem:[#allocation4 + $0x5f]]
        %v2089 = vstv %s2088
        %v2090 = vmul.f32 %v2089, %v1937
        %v2091 = vmul.f32 %v2089, %v1938
        %v2094 = vrot.slane %v2090, 5
        %v2095 = vrot.slane %v2091, 5
        %v2096 = vsel %vm411, %v2094, %v2095
        %v2099 = vadd.f32 %v1995, %v2094
        %v2100 = vadd.f32 %v1996, %v2096
        %s2101 = sld [smem:[#allocation4 + $0xa0]]
        %v2102 = vstv %s2101
        %v2103 = vmul.f32 %v2102, %v1937
        %v2104 = vmul.f32 %v2102, %v1946
        %v2107 = vrot.slane %v2103, 6
        %v2108 = vrot.slane %v2104, 6
        %v2109 = vsel %vm516, %v2107, %v2108
        %v2112 = vadd.f32 %v2008, %v2107
        %v2113 = vadd.f32 %v2009, %v2109
        %s2114 = sld [smem:[#allocation4 + $0xa1]]
        %v2115 = vstv %s2114
        %v2116 = vmul.f32 %v2115, %v1937
        %v2117 = vmul.f32 %v2115, %v1946
        %v2120 = vrot.slane %v2116, 6
        %v2121 = vrot.slane %v2117, 6
        %v2122 = vsel %vm516, %v2120, %v2121
        %v2125 = vadd.f32 %v2021, %v2120
        %v2126 = vadd.f32 %v2022, %v2122
        %s2127 = sld [smem:[#allocation4 + $0xa2]]
        %v2128 = vstv %s2127
        %v2129 = vmul.f32 %v2128, %v1937
        %v2130 = vmul.f32 %v2128, %v1946
        %v2133 = vrot.slane %v2129, 6
        %v2134 = vrot.slane %v2130, 6
        %v2135 = vsel %vm516, %v2133, %v2134
        %v2138 = vadd.f32 %v2034, %v2133
        %v2139 = vadd.f32 %v2035, %v2135
        %s2140 = sld [smem:[#allocation4 + $0xa3]]
        %v2141 = vstv %s2140
        %v2142 = vmul.f32 %v2141, %v1937
        %v2143 = vmul.f32 %v2141, %v1946
        %v2146 = vrot.slane %v2142, 6
        %v2147 = vrot.slane %v2143, 6
        %v2148 = vsel %vm516, %v2146, %v2147
        %v2151 = vadd.f32 %v2047, %v2146
        %v2152 = vadd.f32 %v2048, %v2148
        %s2153 = sld [smem:[#allocation4 + $0xa4]]
        %v2154 = vstv %s2153
        %v2155 = vmul.f32 %v2154, %v1937
        %v2156 = vmul.f32 %v2154, %v1946
        %v2159 = vrot.slane %v2155, 6
        %v2160 = vrot.slane %v2156, 6
        %v2161 = vsel %vm516, %v2159, %v2160
        %v2164 = vadd.f32 %v2060, %v2159
        %v2165 = vadd.f32 %v2061, %v2161
        %s2166 = sld [smem:[#allocation4 + $0xa5]]
        %v2167 = vstv %s2166
        %v2168 = vmul.f32 %v2167, %v1937
        %v2169 = vmul.f32 %v2167, %v1946
        %v2172 = vrot.slane %v2168, 6
        %v2173 = vrot.slane %v2169, 6
        %v2174 = vsel %vm516, %v2172, %v2173
        %v2177 = vadd.f32 %v2073, %v2172
        %v2178 = vadd.f32 %v2074, %v2174
        %s2179 = sld [smem:[#allocation4 + $0xa6]]
        %v2180 = vstv %s2179
        %v2181 = vmul.f32 %v2180, %v1937
        %v2182 = vmul.f32 %v2180, %v1946
        %v2185 = vrot.slane %v2181, 6
        %v2186 = vrot.slane %v2182, 6
        %v2187 = vsel %vm516, %v2185, %v2186
        %v2190 = vadd.f32 %v2086, %v2185
        %v2191 = vadd.f32 %v2087, %v2187
        %s2192 = sld [smem:[#allocation4 + $0xa7]]
        %v2193 = vstv %s2192
        %v2194 = vmul.f32 %v2193, %v1937
        %v2195 = vmul.f32 %v2193, %v1946
        %v2198 = vrot.slane %v2194, 6
        %v2199 = vrot.slane %v2195, 6
        %v2200 = vsel %vm516, %v2198, %v2199
        %v2203 = vadd.f32 %v2099, %v2198
        %v2204 = vadd.f32 %v2100, %v2200
        %v2205 = vrot.slane %v1931, 4
        %v2206 = vsel %vm352, %v2205, %v1932
        %v2207 = vrot.slane %v2206, 4
        %v2208 = vsel %vm352, %v2207, %v2205
        %s2209 = sld [smem:[#allocation4 + $0x28]]
        %v2210 = vstv %s2209
        %v2211 = vmul.f32 %v2210, %v2206
        %v2212 = vmul.f32 %v2210, %v2208
        %v2213 = vadd.f32 %v2112, %v2211
        %v2214 = vadd.f32 %v2113, %v2212
        %s2215 = sld [smem:[#allocation4 + $0x29]]
        %v2216 = vstv %s2215
        %v2217 = vmul.f32 %v2216, %v2206
        %v2218 = vmul.f32 %v2216, %v2208
        %v2219 = vadd.f32 %v2125, %v2217
        %v2220 = vadd.f32 %v2126, %v2218
        %s2221 = sld [smem:[#allocation4 + $0x2a]]
        %v2222 = vstv %s2221
        %v2223 = vmul.f32 %v2222, %v2206
        %v2224 = vmul.f32 %v2222, %v2208
        %v2225 = vadd.f32 %v2138, %v2223
        %v2226 = vadd.f32 %v2139, %v2224
        %s2227 = sld [smem:[#allocation4 + $0x2b]]
        %v2228 = vstv %s2227
        %v2229 = vmul.f32 %v2228, %v2206
        %v2230 = vmul.f32 %v2228, %v2208
        %v2231 = vadd.f32 %v2151, %v2229
        %v2232 = vadd.f32 %v2152, %v2230
        %s2233 = sld [smem:[#allocation4 + $0x2c]]
        %v2234 = vstv %s2233
        %v2235 = vmul.f32 %v2234, %v2206
        %v2236 = vmul.f32 %v2234, %v2208
        %v2237 = vadd.f32 %v2164, %v2235
        %v2238 = vadd.f32 %v2165, %v2236
        %s2239 = sld [smem:[#allocation4 + $0x2d]]
        %v2240 = vstv %s2239
        %v2241 = vmul.f32 %v2240, %v2206
        %v2242 = vmul.f32 %v2240, %v2208
        %v2243 = vadd.f32 %v2177, %v2241
        %v2244 = vadd.f32 %v2178, %v2242
        %s2245 = sld [smem:[#allocation4 + $0x2e]]
        %v2246 = vstv %s2245
        %v2247 = vmul.f32 %v2246, %v2206
        %v2248 = vmul.f32 %v2246, %v2208
        %v2249 = vadd.f32 %v2190, %v2247
        %v2250 = vadd.f32 %v2191, %v2248
        %s2251 = sld [smem:[#allocation4 + $0x2f]]
        %v2252 = vstv %s2251
        %v2253 = vmul.f32 %v2252, %v2206
        %v2254 = vmul.f32 %v2252, %v2208
        %v2255 = vadd.f32 %v2203, %v2253
        %v2256 = vadd.f32 %v2204, %v2254
        %s2257 = sld [smem:[#allocation4 + $0x70]]
        %v2258 = vstv %s2257
        %v2259 = vmul.f32 %v2258, %v1931
        %v2260 = vmul.f32 %v2258, %v1932
        %v2263 = vrot.slane %v2259, 5
        %v2264 = vrot.slane %v2260, 5
        %v2265 = vsel %vm411, %v2263, %v2264
        %v2268 = vadd.f32 %v2213, %v2263
        %v2269 = vadd.f32 %v2214, %v2265
        %s2270 = sld [smem:[#allocation4 + $0x71]]
        %v2271 = vstv %s2270
        %v2272 = vmul.f32 %v2271, %v1931
        %v2273 = vmul.f32 %v2271, %v1932
        %v2276 = vrot.slane %v2272, 5
        %v2277 = vrot.slane %v2273, 5
        %v2278 = vsel %vm411, %v2276, %v2277
        %v2281 = vadd.f32 %v2219, %v2276
        %v2282 = vadd.f32 %v2220, %v2278
        %s2283 = sld [smem:[#allocation4 + $0x72]]
        %v2284 = vstv %s2283
        %v2285 = vmul.f32 %v2284, %v1931
        %v2286 = vmul.f32 %v2284, %v1932
        %v2289 = vrot.slane %v2285, 5
        %v2290 = vrot.slane %v2286, 5
        %v2291 = vsel %vm411, %v2289, %v2290
        %v2294 = vadd.f32 %v2225, %v2289
        %v2295 = vadd.f32 %v2226, %v2291
        %s2296 = sld [smem:[#allocation4 + $0x73]]
        %v2297 = vstv %s2296
        %v2298 = vmul.f32 %v2297, %v1931
        %v2299 = vmul.f32 %v2297, %v1932
        %v2302 = vrot.slane %v2298, 5
        %v2303 = vrot.slane %v2299, 5
        %v2304 = vsel %vm411, %v2302, %v2303
        %v2307 = vadd.f32 %v2231, %v2302
        %v2308 = vadd.f32 %v2232, %v2304
        %s2309 = sld [smem:[#allocation4 + $0x74]]
        %v2310 = vstv %s2309
        %v2311 = vmul.f32 %v2310, %v1931
        %v2312 = vmul.f32 %v2310, %v1932
        %v2315 = vrot.slane %v2311, 5
        %v2316 = vrot.slane %v2312, 5
        %v2317 = vsel %vm411, %v2315, %v2316
        %v2320 = vadd.f32 %v2237, %v2315
        %v2321 = vadd.f32 %v2238, %v2317
        %s2322 = sld [smem:[#allocation4 + $0x75]]
        %v2323 = vstv %s2322
        %v2324 = vmul.f32 %v2323, %v1931
        %v2325 = vmul.f32 %v2323, %v1932
        %v2328 = vrot.slane %v2324, 5
        %v2329 = vrot.slane %v2325, 5
        %v2330 = vsel %vm411, %v2328, %v2329
        %v2333 = vadd.f32 %v2243, %v2328
        %v2334 = vadd.f32 %v2244, %v2330
        %s2335 = sld [smem:[#allocation4 + $0x76]]
        %v2336 = vstv %s2335
        %v2337 = vmul.f32 %v2336, %v1931
        %v2338 = vmul.f32 %v2336, %v1932
        %v2341 = vrot.slane %v2337, 5
        %v2342 = vrot.slane %v2338, 5
        %v2343 = vsel %vm411, %v2341, %v2342
        %v2346 = vadd.f32 %v2249, %v2341
        %v2347 = vadd.f32 %v2250, %v2343
        %s2348 = sld [smem:[#allocation4 + $0x77]]
        %v2349 = vstv %s2348
        %v2350 = vmul.f32 %v2349, %v1931
        %v2351 = vmul.f32 %v2349, %v1932
        %v2354 = vrot.slane %v2350, 5
        %v2355 = vrot.slane %v2351, 5
        %v2356 = vsel %vm411, %v2354, %v2355
        %v2359 = vadd.f32 %v2255, %v2354
        %v2360 = vadd.f32 %v2256, %v2356
        %s2361 = sld [smem:[#allocation4 + $0xb8]]
        %v2362 = vstv %s2361
        %v2363 = vmul.f32 %v2362, %v1931
        %v2364 = vmul.f32 %v2362, %v2206
        %v2367 = vrot.slane %v2363, 6
        %v2368 = vrot.slane %v2364, 6
        %v2369 = vsel %vm516, %v2367, %v2368
        %v2372 = vadd.f32 %v2268, %v2367
        %v2373 = vadd.f32 %v2269, %v2369
        %s2374 = sld [smem:[#allocation4 + $0xb9]]
        %v2375 = vstv %s2374
        %v2376 = vmul.f32 %v2375, %v1931
        %v2377 = vmul.f32 %v2375, %v2206
        %v2380 = vrot.slane %v2376, 6
        %v2381 = vrot.slane %v2377, 6
        %v2382 = vsel %vm516, %v2380, %v2381
        %v2385 = vadd.f32 %v2281, %v2380
        %v2386 = vadd.f32 %v2282, %v2382
        %s2387 = sld [smem:[#allocation4 + $0xba]]
        %v2388 = vstv %s2387
        %v2389 = vmul.f32 %v2388, %v1931
        %v2390 = vmul.f32 %v2388, %v2206
        %v2393 = vrot.slane %v2389, 6
        %v2394 = vrot.slane %v2390, 6
        %v2395 = vsel %vm516, %v2393, %v2394
        %v2398 = vadd.f32 %v2294, %v2393
        %v2399 = vadd.f32 %v2295, %v2395
        %s2400 = sld [smem:[#allocation4 + $0xbb]]
        %v2401 = vstv %s2400
        %v2402 = vmul.f32 %v2401, %v1931
        %v2403 = vmul.f32 %v2401, %v2206
        %v2406 = vrot.slane %v2402, 6
        %v2407 = vrot.slane %v2403, 6
        %v2408 = vsel %vm516, %v2406, %v2407
        %v2411 = vadd.f32 %v2307, %v2406
        %v2412 = vadd.f32 %v2308, %v2408
        %s2413 = sld [smem:[#allocation4 + $0xbc]]
        %v2414 = vstv %s2413
        %v2415 = vmul.f32 %v2414, %v1931
        %v2416 = vmul.f32 %v2414, %v2206
        %v2419 = vrot.slane %v2415, 6
        %v2420 = vrot.slane %v2416, 6
        %v2421 = vsel %vm516, %v2419, %v2420
        %v2424 = vadd.f32 %v2320, %v2419
        %v2425 = vadd.f32 %v2321, %v2421
        %s2426 = sld [smem:[#allocation4 + $0xbd]]
        %v2427 = vstv %s2426
        %v2428 = vmul.f32 %v2427, %v1931
        %v2429 = vmul.f32 %v2427, %v2206
        %v2432 = vrot.slane %v2428, 6
        %v2433 = vrot.slane %v2429, 6
        %v2434 = vsel %vm516, %v2432, %v2433
        %v2437 = vadd.f32 %v2333, %v2432
        %v2438 = vadd.f32 %v2334, %v2434
        %s2439 = sld [smem:[#allocation4 + $0xbe]]
        %v2440 = vstv %s2439
        %v2441 = vmul.f32 %v2440, %v1931
        %v2442 = vmul.f32 %v2440, %v2206
        %v2445 = vrot.slane %v2441, 6
        %v2446 = vrot.slane %v2442, 6
        %v2447 = vsel %vm516, %v2445, %v2446
        %v2450 = vadd.f32 %v2346, %v2445
        %v2451 = vadd.f32 %v2347, %v2447
        %s2452 = sld [smem:[#allocation4 + $0xbf]]
        %v2453 = vstv %s2452
        %v2454 = vmul.f32 %v2453, %v1931
        %v2455 = vmul.f32 %v2453, %v2206
        %v2458 = vrot.slane %v2454, 6
        %v2459 = vrot.slane %v2455, 6
        %v2460 = vsel %vm516, %v2458, %v2459
        %v2463 = vadd.f32 %v2359, %v2458
        %v2464 = vadd.f32 %v2360, %v2460
        %v2465 = vrot.slane %v1943, 4
        %v2466 = vsel %vm352, %v2465, %v1944
        %v2467 = vrot.slane %v2466, 4
        %v2468 = vsel %vm352, %v2467, %v2465
        %s2469 = sld [smem:[#allocation4 + $0x40]]
        %v2470 = vstv %s2469
        %v2471 = vmul.f32 %v2470, %v2466
        %v2472 = vmul.f32 %v2470, %v2468
        %v2473 = vadd.f32 %v2372, %v2471
        %v2474 = vadd.f32 %v2373, %v2472
        %s2475 = sld [smem:[#allocation4 + $0x41]]
        %v2476 = vstv %s2475
        %v2477 = vmul.f32 %v2476, %v2466
        %v2478 = vmul.f32 %v2476, %v2468
        %v2479 = vadd.f32 %v2385, %v2477
        %v2480 = vadd.f32 %v2386, %v2478
        %s2481 = sld [smem:[#allocation4 + $0x42]]
        %v2482 = vstv %s2481
        %v2483 = vmul.f32 %v2482, %v2466
        %v2484 = vmul.f32 %v2482, %v2468
        %v2485 = vadd.f32 %v2398, %v2483
        %v2486 = vadd.f32 %v2399, %v2484
        %s2487 = sld [smem:[#allocation4 + $0x43]]
        %v2488 = vstv %s2487
        %v2489 = vmul.f32 %v2488, %v2466
        %v2490 = vmul.f32 %v2488, %v2468
        %v2491 = vadd.f32 %v2411, %v2489
        %v2492 = vadd.f32 %v2412, %v2490
        %s2493 = sld [smem:[#allocation4 + $0x44]]
        %v2494 = vstv %s2493
        %v2495 = vmul.f32 %v2494, %v2466
        %v2496 = vmul.f32 %v2494, %v2468
        %v2497 = vadd.f32 %v2424, %v2495
        %v2498 = vadd.f32 %v2425, %v2496
        %s2499 = sld [smem:[#allocation4 + $0x45]]
        %v2500 = vstv %s2499
        %v2501 = vmul.f32 %v2500, %v2466
        %v2502 = vmul.f32 %v2500, %v2468
        %v2503 = vadd.f32 %v2437, %v2501
        %v2504 = vadd.f32 %v2438, %v2502
        %s2505 = sld [smem:[#allocation4 + $0x46]]
        %v2506 = vstv %s2505
        %v2507 = vmul.f32 %v2506, %v2466
        %v2508 = vmul.f32 %v2506, %v2468
        %v2509 = vadd.f32 %v2450, %v2507
        %v2510 = vadd.f32 %v2451, %v2508
        %s2511 = sld [smem:[#allocation4 + $0x47]]
        %v2512 = vstv %s2511
        %v2513 = vmul.f32 %v2512, %v2466
        %v2514 = vmul.f32 %v2512, %v2468
        %v2515 = vadd.f32 %v2463, %v2513
        %v2516 = vadd.f32 %v2464, %v2514
        %s2517 = sld [smem:[#allocation4 + $0x88]]
        %v2518 = vstv %s2517
        %v2519 = vmul.f32 %v2518, %v1943
        %v2520 = vmul.f32 %v2518, %v1944
        %v2523 = vrot.slane %v2519, 5
        %v2524 = vrot.slane %v2520, 5
        %v2525 = vsel %vm411, %v2523, %v2524
        %v2528 = vadd.f32 %v2473, %v2523
        %v2529 = vadd.f32 %v2474, %v2525
        %s2530 = sld [smem:[#allocation4 + $0x89]]
        %v2531 = vstv %s2530
        %v2532 = vmul.f32 %v2531, %v1943
        %v2533 = vmul.f32 %v2531, %v1944
        %v2536 = vrot.slane %v2532, 5
        %v2537 = vrot.slane %v2533, 5
        %v2538 = vsel %vm411, %v2536, %v2537
        %v2541 = vadd.f32 %v2479, %v2536
        %v2542 = vadd.f32 %v2480, %v2538
        %s2543 = sld [smem:[#allocation4 + $0x8a]]
        %v2544 = vstv %s2543
        %v2545 = vmul.f32 %v2544, %v1943
        %v2546 = vmul.f32 %v2544, %v1944
        %v2549 = vrot.slane %v2545, 5
        %v2550 = vrot.slane %v2546, 5
        %v2551 = vsel %vm411, %v2549, %v2550
        %v2554 = vadd.f32 %v2485, %v2549
        %v2555 = vadd.f32 %v2486, %v2551
        %s2556 = sld [smem:[#allocation4 + $0x8b]]
        %v2557 = vstv %s2556
        %v2558 = vmul.f32 %v2557, %v1943
        %v2559 = vmul.f32 %v2557, %v1944
        %v2562 = vrot.slane %v2558, 5
        %v2563 = vrot.slane %v2559, 5
        %v2564 = vsel %vm411, %v2562, %v2563
        %v2567 = vadd.f32 %v2491, %v2562
        %v2568 = vadd.f32 %v2492, %v2564
        %s2569 = sld [smem:[#allocation4 + $0x8c]]
        %v2570 = vstv %s2569
        %v2571 = vmul.f32 %v2570, %v1943
        %v2572 = vmul.f32 %v2570, %v1944
        %v2575 = vrot.slane %v2571, 5
        %v2576 = vrot.slane %v2572, 5
        %v2577 = vsel %vm411, %v2575, %v2576
        %v2580 = vadd.f32 %v2497, %v2575
        %v2581 = vadd.f32 %v2498, %v2577
        %s2582 = sld [smem:[#allocation4 + $0x8d]]
        %v2583 = vstv %s2582
        %v2584 = vmul.f32 %v2583, %v1943
        %v2585 = vmul.f32 %v2583, %v1944
        %v2588 = vrot.slane %v2584, 5
        %v2589 = vrot.slane %v2585, 5
        %v2590 = vsel %vm411, %v2588, %v2589
        %v2593 = vadd.f32 %v2503, %v2588
        %v2594 = vadd.f32 %v2504, %v2590
        %s2595 = sld [smem:[#allocation4 + $0x8e]]
        %v2596 = vstv %s2595
        %v2597 = vmul.f32 %v2596, %v1943
        %v2598 = vmul.f32 %v2596, %v1944
        %v2601 = vrot.slane %v2597, 5
        %v2602 = vrot.slane %v2598, 5
        %v2603 = vsel %vm411, %v2601, %v2602
        %v2606 = vadd.f32 %v2509, %v2601
        %v2607 = vadd.f32 %v2510, %v2603
        %s2608 = sld [smem:[#allocation4 + $0x8f]]
        %v2609 = vstv %s2608
        %v2610 = vmul.f32 %v2609, %v1943
        %v2611 = vmul.f32 %v2609, %v1944
        %v2614 = vrot.slane %v2610, 5
        %v2615 = vrot.slane %v2611, 5
        %v2616 = vsel %vm411, %v2614, %v2615
        %v2619 = vadd.f32 %v2515, %v2614
        %v2620 = vadd.f32 %v2516, %v2616
        %s2621 = sld [smem:[#allocation4 + $0xd0]]
        %v2622 = vstv %s2621
        %v2623 = vmul.f32 %v2622, %v1943
        %v2624 = vmul.f32 %v2622, %v2466
        %v2627 = vrot.slane %v2623, 6
        %v2628 = vrot.slane %v2624, 6
        %v2629 = vsel %vm516, %v2627, %v2628
        %v2632 = vadd.f32 %v2528, %v2627
        %v2633 = vadd.f32 %v2529, %v2629
        %s2634 = sld [smem:[#allocation4 + $0xd1]]
        %v2635 = vstv %s2634
        %v2636 = vmul.f32 %v2635, %v1943
        %v2637 = vmul.f32 %v2635, %v2466
        %v2640 = vrot.slane %v2636, 6
        %v2641 = vrot.slane %v2637, 6
        %v2642 = vsel %vm516, %v2640, %v2641
        %v2645 = vadd.f32 %v2541, %v2640
        %v2646 = vadd.f32 %v2542, %v2642
        %s2647 = sld [smem:[#allocation4 + $0xd2]]
        %v2648 = vstv %s2647
        %v2649 = vmul.f32 %v2648, %v1943
        %v2650 = vmul.f32 %v2648, %v2466
        %v2653 = vrot.slane %v2649, 6
        %v2654 = vrot.slane %v2650, 6
        %v2655 = vsel %vm516, %v2653, %v2654
        %v2658 = vadd.f32 %v2554, %v2653
        %v2659 = vadd.f32 %v2555, %v2655
        %s2660 = sld [smem:[#allocation4 + $0xd3]]
        %v2661 = vstv %s2660
        %v2662 = vmul.f32 %v2661, %v1943
        %v2663 = vmul.f32 %v2661, %v2466
        %v2666 = vrot.slane %v2662, 6
        %v2667 = vrot.slane %v2663, 6
        %v2668 = vsel %vm516, %v2666, %v2667
        %v2671 = vadd.f32 %v2567, %v2666
        %v2672 = vadd.f32 %v2568, %v2668
        %s2673 = sld [smem:[#allocation4 + $0xd4]]
        %v2674 = vstv %s2673
        %v2675 = vmul.f32 %v2674, %v1943
        %v2676 = vmul.f32 %v2674, %v2466
        %v2679 = vrot.slane %v2675, 6
        %v2680 = vrot.slane %v2676, 6
        %v2681 = vsel %vm516, %v2679, %v2680
        %v2684 = vadd.f32 %v2580, %v2679
        %v2685 = vadd.f32 %v2581, %v2681
        %s2686 = sld [smem:[#allocation4 + $0xd5]]
        %v2687 = vstv %s2686
        %v2688 = vmul.f32 %v2687, %v1943
        %v2689 = vmul.f32 %v2687, %v2466
        %v2692 = vrot.slane %v2688, 6
        %v2693 = vrot.slane %v2689, 6
        %v2694 = vsel %vm516, %v2692, %v2693
        %v2697 = vadd.f32 %v2593, %v2692
        %v2698 = vadd.f32 %v2594, %v2694
        %s2699 = sld [smem:[#allocation4 + $0xd6]]
        %v2700 = vstv %s2699
        %v2701 = vmul.f32 %v2700, %v1943
        %v2702 = vmul.f32 %v2700, %v2466
        %v2705 = vrot.slane %v2701, 6
        %v2706 = vrot.slane %v2702, 6
        %v2707 = vsel %vm516, %v2705, %v2706
        %v2710 = vadd.f32 %v2606, %v2705
        %v2711 = vadd.f32 %v2607, %v2707
        %s2712 = sld [smem:[#allocation4 + $0xd7]]
        %v2713 = vstv %s2712
        %v2714 = vmul.f32 %v2713, %v1943
        %v2715 = vmul.f32 %v2713, %v2466
        %v2718 = vrot.slane %v2714, 6
        %v2719 = vrot.slane %v2715, 6
        %v2720 = vsel %vm516, %v2718, %v2719
        %v2723 = vadd.f32 %v2619, %v2718
        %v2724 = vadd.f32 %v2620, %v2720
        %s2725 = sld [smem:[#allocation7]]
        %v2726 = vstv %s2725
        %v2727 = vadd.f32 %v2632, %v2726
        %v2728 = vadd.f32 %v2633, %v2726
        %v2729 = vmax.f32 %v2727, 0.0
        %v2730 = vmax.f32 %v2728, 0.0
        %vm2733 = vcmask 1044480
        %v2734 = vrot.slane %v2729, 3
        %v2735 = vrot.slane %v2730, 3
        %v2736 = vsel %vm2733, %v2734, %v2735
        %v2739 = vsel %vm331, %v2736, 0.0
        %v2740 = vsel %vm332, %v2735, 0.0
        %s2741 = sld [smem:[#allocation7 + $0x1]]
        %v2742 = vstv %s2741
        %v2743 = vadd.f32 %v2645, %v2742
        %v2744 = vadd.f32 %v2646, %v2742
        %v2745 = vmax.f32 %v2743, 0.0
        %v2746 = vmax.f32 %v2744, 0.0
        %v2749 = vrot.slane %v2745, 3
        %v2750 = vrot.slane %v2746, 3
        %v2751 = vsel %vm2733, %v2749, %v2750
        %v2754 = vsel %vm331, %v2751, 0.0
        %v2755 = vsel %vm332, %v2750, 0.0
        %s2756 = sld [smem:[#allocation7 + $0x2]]
        %v2757 = vstv %s2756
        %v2758 = vadd.f32 %v2658, %v2757
        %v2759 = vadd.f32 %v2659, %v2757
        %v2760 = vmax.f32 %v2758, 0.0
        %v2761 = vmax.f32 %v2759, 0.0
        %v2764 = vrot.slane %v2760, 3
        %v2765 = vrot.slane %v2761, 3
        %v2766 = vsel %vm2733, %v2764, %v2765
        %v2769 = vsel %vm331, %v2766, 0.0
        %v2770 = vsel %vm332, %v2765, 0.0
        %s2771 = sld [smem:[#allocation7 + $0x3]]
        %v2772 = vstv %s2771
        %v2773 = vadd.f32 %v2671, %v2772
        %v2774 = vadd.f32 %v2672, %v2772
        %v2775 = vmax.f32 %v2773, 0.0
        %v2776 = vmax.f32 %v2774, 0.0
        %v2779 = vrot.slane %v2775, 3
        %v2780 = vrot.slane %v2776, 3
        %v2781 = vsel %vm2733, %v2779, %v2780
        %v2784 = vsel %vm331, %v2781, 0.0
        %v2785 = vsel %vm332, %v2780, 0.0
        %s2786 = sld [smem:[#allocation7 + $0x4]]
        %v2787 = vstv %s2786
        %v2788 = vadd.f32 %v2684, %v2787
        %v2789 = vadd.f32 %v2685, %v2787
        %v2790 = vmax.f32 %v2788, 0.0
        %v2791 = vmax.f32 %v2789, 0.0
        %v2794 = vrot.slane %v2790, 3
        %v2795 = vrot.slane %v2791, 3
        %v2796 = vsel %vm2733, %v2794, %v2795
        %v2799 = vsel %vm331, %v2796, 0.0
        %v2800 = vsel %vm332, %v2795, 0.0
        %s2801 = sld [smem:[#allocation7 + $0x5]]
        %v2802 = vstv %s2801
        %v2803 = vadd.f32 %v2697, %v2802
        %v2804 = vadd.f32 %v2698, %v2802
        %v2805 = vmax.f32 %v2803, 0.0
        %v2806 = vmax.f32 %v2804, 0.0
        %v2809 = vrot.slane %v2805, 3
        %v2810 = vrot.slane %v2806, 3
        %v2811 = vsel %vm2733, %v2809, %v2810
        %v2814 = vsel %vm331, %v2811, 0.0
        %v2815 = vsel %vm332, %v2810, 0.0
        %s2816 = sld [smem:[#allocation7 + $0x6]]
        %v2817 = vstv %s2816
        %v2818 = vadd.f32 %v2710, %v2817
        %v2819 = vadd.f32 %v2711, %v2817
        %v2820 = vmax.f32 %v2818, 0.0
        %v2821 = vmax.f32 %v2819, 0.0
        %v2824 = vrot.slane %v2820, 3
        %v2825 = vrot.slane %v2821, 3
        %v2826 = vsel %vm2733, %v2824, %v2825
        %v2829 = vsel %vm331, %v2826, 0.0
        %v2830 = vsel %vm332, %v2825, 0.0
        %s2831 = sld [smem:[#allocation7 + $0x7]]
        %v2832 = vstv %s2831
        %v2833 = vadd.f32 %v2723, %v2832
        %v2834 = vadd.f32 %v2724, %v2832
        %v2835 = vmax.f32 %v2833, 0.0
        %v2836 = vmax.f32 %v2834, 0.0
        %v2839 = vrot.slane %v2835, 3
        %v2840 = vrot.slane %v2836, 3
        %v2841 = vsel %vm2733, %v2839, %v2840
        %v2844 = vsel %vm331, %v2841, 0.0
        %v2845 = vsel %vm332, %v2840, 0.0
        %2846 = vrot.lane.b32.xlu0 %v2739, 1
        %v2847 = vpop.permute.xlu0 %2846
        %2848 = vrot.lane.b32.xlu0 %v2740, 1
        %v2849 = vpop.permute.xlu0 %2848
        %v2850 = vsel %vm317, %v2847, 0.0
        %v2851 = vsel %vm317, %v2849, 0.0
        %2852 = vrot.lane.b32.xlu0 %v2739, 127
        %v2853 = vpop.permute.xlu0 %2852
        %2854 = vrot.lane.b32.xlu0 %v2740, 127
        %v2855 = vpop.permute.xlu0 %2854
        %v2856 = vsel %vm318, %v2853, 0.0
        %v2857 = vsel %vm318, %v2855, 0.0
        %v2858 = vrot.slane %v2850, 4
        %v2859 = vsel %vm352, %v2858, %v2851
        %v2860 = vrot.slane %v2859, 4
        %v2861 = vsel %vm352, %v2860, %v2858
        %s2862 = sld [smem:[#allocation9]]
        %v2863 = vstv %s2862
        %v2864 = vmul.f32 %v2863, %v2859
        %v2865 = vmul.f32 %v2863, %v2861
        %v2866 = vadd.f32 %v2864, 0.0
        %v2867 = vadd.f32 %v2865, 0.0
        %s2868 = sld [smem:[#allocation9 + $0x1]]
        %v2869 = vstv %s2868
        %v2870 = vmul.f32 %v2869, %v2859
        %v2871 = vmul.f32 %v2869, %v2861
        %v2872 = vadd.f32 %v2870, 0.0
        %v2873 = vadd.f32 %v2871, 0.0
        %s2874 = sld [smem:[#allocation9 + $0x2]]
        %v2875 = vstv %s2874
        %v2876 = vmul.f32 %v2875, %v2859
        %v2877 = vmul.f32 %v2875, %v2861
        %v2878 = vadd.f32 %v2876, 0.0
        %v2879 = vadd.f32 %v2877, 0.0
        %s2880 = sld [smem:[#allocation9 + $0x48]]
        %v2881 = vstv %s2880
        %v2882 = vmul.f32 %v2881, %v2850
        %v2883 = vmul.f32 %v2881, %v2851
        %v2886 = vrot.slane %v2882, 5
        %v2887 = vrot.slane %v2883, 5
        %v2888 = vsel %vm411, %v2886, %v2887
        %v2891 = vadd.f32 %v2866, %v2886
        %v2892 = vadd.f32 %v2867, %v2888
        %s2893 = sld [smem:[#allocation9 + $0x49]]
        %v2894 = vstv %s2893
        %v2895 = vmul.f32 %v2894, %v2850
        %v2896 = vmul.f32 %v2894, %v2851
        %v2899 = vrot.slane %v2895, 5
        %v2900 = vrot.slane %v2896, 5
        %v2901 = vsel %vm411, %v2899, %v2900
        %v2904 = vadd.f32 %v2872, %v2899
        %v2905 = vadd.f32 %v2873, %v2901
        %s2906 = sld [smem:[#allocation9 + $0x4a]]
        %v2907 = vstv %s2906
        %v2908 = vmul.f32 %v2907, %v2850
        %v2909 = vmul.f32 %v2907, %v2851
        %v2912 = vrot.slane %v2908, 5
        %v2913 = vrot.slane %v2909, 5
        %v2914 = vsel %vm411, %v2912, %v2913
        %v2917 = vadd.f32 %v2878, %v2912
        %v2918 = vadd.f32 %v2879, %v2914
        %s2919 = sld [smem:[#allocation9 + $0x90]]
        %v2920 = vstv %s2919
        %v2921 = vmul.f32 %v2920, %v2850
        %v2922 = vmul.f32 %v2920, %v2859
        %v2925 = vrot.slane %v2921, 6
        %v2926 = vrot.slane %v2922, 6
        %v2927 = vsel %vm516, %v2925, %v2926
        %v2930 = vadd.f32 %v2891, %v2925
        %v2931 = vadd.f32 %v2892, %v2927
        %s2932 = sld [smem:[#allocation9 + $0x91]]
        %v2933 = vstv %s2932
        %v2934 = vmul.f32 %v2933, %v2850
        %v2935 = vmul.f32 %v2933, %v2859
        %v2938 = vrot.slane %v2934, 6
        %v2939 = vrot.slane %v2935, 6
        %v2940 = vsel %vm516, %v2938, %v2939
        %v2943 = vadd.f32 %v2904, %v2938
        %v2944 = vadd.f32 %v2905, %v2940
        %s2945 = sld [smem:[#allocation9 + $0x92]]
        %v2946 = vstv %s2945
        %v2947 = vmul.f32 %v2946, %v2850
        %v2948 = vmul.f32 %v2946, %v2859
        %v2951 = vrot.slane %v2947, 6
        %v2952 = vrot.slane %v2948, 6
        %v2953 = vsel %vm516, %v2951, %v2952
        %v2956 = vadd.f32 %v2917, %v2951
        %v2957 = vadd.f32 %v2918, %v2953
        %v2958 = vrot.slane %v2739, 4
        %v2959 = vsel %vm352, %v2958, %v2740
        %v2960 = vrot.slane %v2959, 4
        %v2961 = vsel %vm352, %v2960, %v2958
        %s2962 = sld [smem:[#allocation9 + $0x18]]
        %v2963 = vstv %s2962
        %v2964 = vmul.f32 %v2963, %v2959
        %v2965 = vmul.f32 %v2963, %v2961
        %v2966 = vadd.f32 %v2930, %v2964
        %v2967 = vadd.f32 %v2931, %v2965
        %s2968 = sld [smem:[#allocation9 + $0x19]]
        %v2969 = vstv %s2968
        %v2970 = vmul.f32 %v2969, %v2959
        %v2971 = vmul.f32 %v2969, %v2961
        %v2972 = vadd.f32 %v2943, %v2970
        %v2973 = vadd.f32 %v2944, %v2971
        %s2974 = sld [smem:[#allocation9 + $0x1a]]
        %v2975 = vstv %s2974
        %v2976 = vmul.f32 %v2975, %v2959
        %v2977 = vmul.f32 %v2975, %v2961
        %v2978 = vadd.f32 %v2956, %v2976
        %v2979 = vadd.f32 %v2957, %v2977
        %s2980 = sld [smem:[#allocation9 + $0x60]]
        %v2981 = vstv %s2980
        %v2982 = vmul.f32 %v2981, %v2739
        %v2983 = vmul.f32 %v2981, %v2740
        %v2986 = vrot.slane %v2982, 5
        %v2987 = vrot.slane %v2983, 5
        %v2988 = vsel %vm411, %v2986, %v2987
        %v2991 = vadd.f32 %v2966, %v2986
        %v2992 = vadd.f32 %v2967, %v2988
        %s2993 = sld [smem:[#allocation9 + $0x61]]
        %v2994 = vstv %s2993
        %v2995 = vmul.f32 %v2994, %v2739
        %v2996 = vmul.f32 %v2994, %v2740
        %v2999 = vrot.slane %v2995, 5
        %v3000 = vrot.slane %v2996, 5
        %v3001 = vsel %vm411, %v2999, %v3000
        %v3004 = vadd.f32 %v2972, %v2999
        %v3005 = vadd.f32 %v2973, %v3001
        %s3006 = sld [smem:[#allocation9 + $0x62]]
        %v3007 = vstv %s3006
        %v3008 = vmul.f32 %v3007, %v2739
        %v3009 = vmul.f32 %v3007, %v2740
        %v3012 = vrot.slane %v3008, 5
        %v3013 = vrot.slane %v3009, 5
        %v3014 = vsel %vm411, %v3012, %v3013
        %v3017 = vadd.f32 %v2978, %v3012
        %v3018 = vadd.f32 %v2979, %v3014
        %s3019 = sld [smem:[#allocation9 + $0xa8]]
        %v3020 = vstv %s3019
        %v3021 = vmul.f32 %v3020, %v2739
        %v3022 = vmul.f32 %v3020, %v2959
        %v3025 = vrot.slane %v3021, 6
        %v3026 = vrot.slane %v3022, 6
        %v3027 = vsel %vm516, %v3025, %v3026
        %v3030 = vadd.f32 %v2991, %v3025
        %v3031 = vadd.f32 %v2992, %v3027
        %s3032 = sld [smem:[#allocation9 + $0xa9]]
        %v3033 = vstv %s3032
        %v3034 = vmul.f32 %v3033, %v2739
        %v3035 = vmul.f32 %v3033, %v2959
        %v3038 = vrot.slane %v3034, 6
        %v3039 = vrot.slane %v3035, 6
        %v3040 = vsel %vm516, %v3038, %v3039
        %v3043 = vadd.f32 %v3004, %v3038
        %v3044 = vadd.f32 %v3005, %v3040
        %s3045 = sld [smem:[#allocation9 + $0xaa]]
        %v3046 = vstv %s3045
        %v3047 = vmul.f32 %v3046, %v2739
        %v3048 = vmul.f32 %v3046, %v2959
        %v3051 = vrot.slane %v3047, 6
        %v3052 = vrot.slane %v3048, 6
        %v3053 = vsel %vm516, %v3051, %v3052
        %v3056 = vadd.f32 %v3017, %v3051
        %v3057 = vadd.f32 %v3018, %v3053
        %v3058 = vrot.slane %v2856, 4
        %v3059 = vsel %vm352, %v3058, %v2857
        %v3060 = vrot.slane %v3059, 4
        %v3061 = vsel %vm352, %v3060, %v3058
        %s3062 = sld [smem:[#allocation9 + $0x30]]
        %v3063 = vstv %s3062
        %v3064 = vmul.f32 %v3063, %v3059
        %v3065 = vmul.f32 %v3063, %v3061
        %v3066 = vadd.f32 %v3030, %v3064
        %v3067 = vadd.f32 %v3031, %v3065
        %s3068 = sld [smem:[#allocation9 + $0x31]]
        %v3069 = vstv %s3068
        %v3070 = vmul.f32 %v3069, %v3059
        %v3071 = vmul.f32 %v3069, %v3061
        %v3072 = vadd.f32 %v3043, %v3070
        %v3073 = vadd.f32 %v3044, %v3071
        %s3074 = sld [smem:[#allocation9 + $0x32]]
        %v3075 = vstv %s3074
        %v3076 = vmul.f32 %v3075, %v3059
        %v3077 = vmul.f32 %v3075, %v3061
        %v3078 = vadd.f32 %v3056, %v3076
        %v3079 = vadd.f32 %v3057, %v3077
        %s3080 = sld [smem:[#allocation9 + $0x78]]
        %v3081 = vstv %s3080
        %v3082 = vmul.f32 %v3081, %v2856
        %v3083 = vmul.f32 %v3081, %v2857
        %v3086 = vrot.slane %v3082, 5
        %v3087 = vrot.slane %v3083, 5
        %v3088 = vsel %vm411, %v3086, %v3087
        %v3091 = vadd.f32 %v3066, %v3086
        %v3092 = vadd.f32 %v3067, %v3088
        %s3093 = sld [smem:[#allocation9 + $0x79]]
        %v3094 = vstv %s3093
        %v3095 = vmul.f32 %v3094, %v2856
        %v3096 = vmul.f32 %v3094, %v2857
        %v3099 = vrot.slane %v3095, 5
        %v3100 = vrot.slane %v3096, 5
        %v3101 = vsel %vm411, %v3099, %v3100
        %v3104 = vadd.f32 %v3072, %v3099
        %v3105 = vadd.f32 %v3073, %v3101
        %s3106 = sld [smem:[#allocation9 + $0x7a]]
        %v3107 = vstv %s3106
        %v3108 = vmul.f32 %v3107, %v2856
        %v3109 = vmul.f32 %v3107, %v2857
        %v3112 = vrot.slane %v3108, 5
        %v3113 = vrot.slane %v3109, 5
        %v3114 = vsel %vm411, %v3112, %v3113
        %v3117 = vadd.f32 %v3078, %v3112
        %v3118 = vadd.f32 %v3079, %v3114
        %s3119 = sld [smem:[#allocation9 + $0xc0]]
        %v3120 = vstv %s3119
        %v3121 = vmul.f32 %v3120, %v2856
        %v3122 = vmul.f32 %v3120, %v3059
        %v3125 = vrot.slane %v3121, 6
        %v3126 = vrot.slane %v3122, 6
        %v3127 = vsel %vm516, %v3125, %v3126
        %v3130 = vadd.f32 %v3091, %v3125
        %v3131 = vadd.f32 %v3092, %v3127
        %s3132 = sld [smem:[#allocation9 + $0xc1]]
        %v3133 = vstv %s3132
        %v3134 = vmul.f32 %v3133, %v2856
        %v3135 = vmul.f32 %v3133, %v3059
        %v3138 = vrot.slane %v3134, 6
        %v3139 = vrot.slane %v3135, 6
        %v3140 = vsel %vm516, %v3138, %v3139
        %v3143 = vadd.f32 %v3104, %v3138
        %v3144 = vadd.f32 %v3105, %v3140
        %s3145 = sld [smem:[#allocation9 + $0xc2]]
        %v3146 = vstv %s3145
        %v3147 = vmul.f32 %v3146, %v2856
        %v3148 = vmul.f32 %v3146, %v3059
        %v3151 = vrot.slane %v3147, 6
        %v3152 = vrot.slane %v3148, 6
        %v3153 = vsel %vm516, %v3151, %v3152
        %v3156 = vadd.f32 %v3117, %v3151
        %v3157 = vadd.f32 %v3118, %v3153
        %3158 = vrot.lane.b32.xlu0 %v2754, 1
        %v3159 = vpop.permute.xlu0 %3158
        %3160 = vrot.lane.b32.xlu0 %v2755, 1
        %v3161 = vpop.permute.xlu0 %3160
        %v3162 = vsel %vm317, %v3159, 0.0
        %v3163 = vsel %vm317, %v3161, 0.0
        %3164 = vrot.lane.b32.xlu0 %v2754, 127
        %v3165 = vpop.permute.xlu0 %3164
        %3166 = vrot.lane.b32.xlu0 %v2755, 127
        %v3167 = vpop.permute.xlu0 %3166
        %v3168 = vsel %vm318, %v3165, 0.0
        %v3169 = vsel %vm318, %v3167, 0.0
        %v3170 = vrot.slane %v3162, 4
        %v3171 = vsel %vm352, %v3170, %v3163
        %v3172 = vrot.slane %v3171, 4
        %v3173 = vsel %vm352, %v3172, %v3170
        %s3174 = sld [smem:[#allocation9 + $0x3]]
        %v3175 = vstv %s3174
        %v3176 = vmul.f32 %v3175, %v3171
        %v3177 = vmul.f32 %v3175, %v3173
        %v3178 = vadd.f32 %v3130, %v3176
        %v3179 = vadd.f32 %v3131, %v3177
        %s3180 = sld [smem:[#allocation9 + $0x4]]
        %v3181 = vstv %s3180
        %v3182 = vmul.f32 %v3181, %v3171
        %v3183 = vmul.f32 %v3181, %v3173
        %v3184 = vadd.f32 %v3143, %v3182
        %v3185 = vadd.f32 %v3144, %v3183
        %s3186 = sld [smem:[#allocation9 + $0x5]]
        %v3187 = vstv %s3186
        %v3188 = vmul.f32 %v3187, %v3171
        %v3189 = vmul.f32 %v3187, %v3173
        %v3190 = vadd.f32 %v3156, %v3188
        %v3191 = vadd.f32 %v3157, %v3189
        %s3192 = sld [smem:[#allocation9 + $0x4b]]
        %v3193 = vstv %s3192
        %v3194 = vmul.f32 %v3193, %v3162
        %v3195 = vmul.f32 %v3193, %v3163
        %v3198 = vrot.slane %v3194, 5
        %v3199 = vrot.slane %v3195, 5
        %v3200 = vsel %vm411, %v3198, %v3199
        %v3203 = vadd.f32 %v3178, %v3198
        %v3204 = vadd.f32 %v3179, %v3200
        %s3205 = sld [smem:[#allocation9 + $0x4c]]
        %v3206 = vstv %s3205
        %v3207 = vmul.f32 %v3206, %v3162
        %v3208 = vmul.f32 %v3206, %v3163
        %v3211 = vrot.slane %v3207, 5
        %v3212 = vrot.slane %v3208, 5
        %v3213 = vsel %vm411, %v3211, %v3212
        %v3216 = vadd.f32 %v3184, %v3211
        %v3217 = vadd.f32 %v3185, %v3213
        %s3218 = sld [smem:[#allocation9 + $0x4d]]
        %v3219 = vstv %s3218
        %v3220 = vmul.f32 %v3219, %v3162
        %v3221 = vmul.f32 %v3219, %v3163
        %v3224 = vrot.slane %v3220, 5
        %v3225 = vrot.slane %v3221, 5
        %v3226 = vsel %vm411, %v3224, %v3225
        %v3229 = vadd.f32 %v3190, %v3224
        %v3230 = vadd.f32 %v3191, %v3226
        %s3231 = sld [smem:[#allocation9 + $0x93]]
        %v3232 = vstv %s3231
        %v3233 = vmul.f32 %v3232, %v3162
        %v3234 = vmul.f32 %v3232, %v3171
        %v3237 = vrot.slane %v3233, 6
        %v3238 = vrot.slane %v3234, 6
        %v3239 = vsel %vm516, %v3237, %v3238
        %v3242 = vadd.f32 %v3203, %v3237
        %v3243 = vadd.f32 %v3204, %v3239
        %s3244 = sld [smem:[#allocation9 + $0x94]]
        %v3245 = vstv %s3244
        %v3246 = vmul.f32 %v3245, %v3162
        %v3247 = vmul.f32 %v3245, %v3171
        %v3250 = vrot.slane %v3246, 6
        %v3251 = vrot.slane %v3247, 6
        %v3252 = vsel %vm516, %v3250, %v3251
        %v3255 = vadd.f32 %v3216, %v3250
        %v3256 = vadd.f32 %v3217, %v3252
        %s3257 = sld [smem:[#allocation9 + $0x95]]
        %v3258 = vstv %s3257
        %v3259 = vmul.f32 %v3258, %v3162
        %v3260 = vmul.f32 %v3258, %v3171
        %v3263 = vrot.slane %v3259, 6
        %v3264 = vrot.slane %v3260, 6
        %v3265 = vsel %vm516, %v3263, %v3264
        %v3268 = vadd.f32 %v3229, %v3263
        %v3269 = vadd.f32 %v3230, %v3265
        %v3270 = vrot.slane %v2754, 4
        %v3271 = vsel %vm352, %v3270, %v2755
        %v3272 = vrot.slane %v3271, 4
        %v3273 = vsel %vm352, %v3272, %v3270
        %s3274 = sld [smem:[#allocation9 + $0x1b]]
        %v3275 = vstv %s3274
        %v3276 = vmul.f32 %v3275, %v3271
        %v3277 = vmul.f32 %v3275, %v3273
        %v3278 = vadd.f32 %v3242, %v3276
        %v3279 = vadd.f32 %v3243, %v3277
        %s3280 = sld [smem:[#allocation9 + $0x1c]]
        %v3281 = vstv %s3280
        %v3282 = vmul.f32 %v3281, %v3271
        %v3283 = vmul.f32 %v3281, %v3273
        %v3284 = vadd.f32 %v3255, %v3282
        %v3285 = vadd.f32 %v3256, %v3283
        %s3286 = sld [smem:[#allocation9 + $0x1d]]
        %v3287 = vstv %s3286
        %v3288 = vmul.f32 %v3287, %v3271
        %v3289 = vmul.f32 %v3287, %v3273
        %v3290 = vadd.f32 %v3268, %v3288
        %v3291 = vadd.f32 %v3269, %v3289
        %s3292 = sld [smem:[#allocation9 + $0x63]]
        %v3293 = vstv %s3292
        %v3294 = vmul.f32 %v3293, %v2754
        %v3295 = vmul.f32 %v3293, %v2755
        %v3298 = vrot.slane %v3294, 5
        %v3299 = vrot.slane %v3295, 5
        %v3300 = vsel %vm411, %v3298, %v3299
        %v3303 = vadd.f32 %v3278, %v3298
        %v3304 = vadd.f32 %v3279, %v3300
        %s3305 = sld [smem:[#allocation9 + $0x64]]
        %v3306 = vstv %s3305
        %v3307 = vmul.f32 %v3306, %v2754
        %v3308 = vmul.f32 %v3306, %v2755
        %v3311 = vrot.slane %v3307, 5
        %v3312 = vrot.slane %v3308, 5
        %v3313 = vsel %vm411, %v3311, %v3312
        %v3316 = vadd.f32 %v3284, %v3311
        %v3317 = vadd.f32 %v3285, %v3313
        %s3318 = sld [smem:[#allocation9 + $0x65]]
        %v3319 = vstv %s3318
        %v3320 = vmul.f32 %v3319, %v2754
        %v3321 = vmul.f32 %v3319, %v2755
        %v3324 = vrot.slane %v3320, 5
        %v3325 = vrot.slane %v3321, 5
        %v3326 = vsel %vm411, %v3324, %v3325
        %v3329 = vadd.f32 %v3290, %v3324
        %v3330 = vadd.f32 %v3291, %v3326
        %s3331 = sld [smem:[#allocation9 + $0xab]]
        %v3332 = vstv %s3331
        %v3333 = vmul.f32 %v3332, %v2754
        %v3334 = vmul.f32 %v3332, %v3271
        %v3337 = vrot.slane %v3333, 6
        %v3338 = vrot.slane %v3334, 6
        %v3339 = vsel %vm516, %v3337, %v3338
        %v3342 = vadd.f32 %v3303, %v3337
        %v3343 = vadd.f32 %v3304, %v3339
        %s3344 = sld [smem:[#allocation9 + $0xac]]
        %v3345 = vstv %s3344
        %v3346 = vmul.f32 %v3345, %v2754
        %v3347 = vmul.f32 %v3345, %v3271
        %v3350 = vrot.slane %v3346, 6
        %v3351 = vrot.slane %v3347, 6
        %v3352 = vsel %vm516, %v3350, %v3351
        %v3355 = vadd.f32 %v3316, %v3350
        %v3356 = vadd.f32 %v3317, %v3352
        %s3357 = sld [smem:[#allocation9 + $0xad]]
        %v3358 = vstv %s3357
        %v3359 = vmul.f32 %v3358, %v2754
        %v3360 = vmul.f32 %v3358, %v3271
        %v3363 = vrot.slane %v3359, 6
        %v3364 = vrot.slane %v3360, 6
        %v3365 = vsel %vm516, %v3363, %v3364
        %v3368 = vadd.f32 %v3329, %v3363
        %v3369 = vadd.f32 %v3330, %v3365
        %v3370 = vrot.slane %v3168, 4
        %v3371 = vsel %vm352, %v3370, %v3169
        %v3372 = vrot.slane %v3371, 4
        %v3373 = vsel %vm352, %v3372, %v3370
        %s3374 = sld [smem:[#allocation9 + $0x33]]
        %v3375 = vstv %s3374
        %v3376 = vmul.f32 %v3375, %v3371
        %v3377 = vmul.f32 %v3375, %v3373
        %v3378 = vadd.f32 %v3342, %v3376
        %v3379 = vadd.f32 %v3343, %v3377
        %s3380 = sld [smem:[#allocation9 + $0x34]]
        %v3381 = vstv %s3380
        %v3382 = vmul.f32 %v3381, %v3371
        %v3383 = vmul.f32 %v3381, %v3373
        %v3384 = vadd.f32 %v3355, %v3382
        %v3385 = vadd.f32 %v3356, %v3383
        %s3386 = sld [smem:[#allocation9 + $0x35]]
        %v3387 = vstv %s3386
        %v3388 = vmul.f32 %v3387, %v3371
        %v3389 = vmul.f32 %v3387, %v3373
        %v3390 = vadd.f32 %v3368, %v3388
        %v3391 = vadd.f32 %v3369, %v3389
        %s3392 = sld [smem:[#allocation9 + $0x7b]]
        %v3393 = vstv %s3392
        %v3394 = vmul.f32 %v3393, %v3168
        %v3395 = vmul.f32 %v3393, %v3169
        %v3398 = vrot.slane %v3394, 5
        %v3399 = vrot.slane %v3395, 5
        %v3400 = vsel %vm411, %v3398, %v3399
        %v3403 = vadd.f32 %v3378, %v3398
        %v3404 = vadd.f32 %v3379, %v3400
        %s3405 = sld [smem:[#allocation9 + $0x7c]]
        %v3406 = vstv %s3405
        %v3407 = vmul.f32 %v3406, %v3168
        %v3408 = vmul.f32 %v3406, %v3169
        %v3411 = vrot.slane %v3407, 5
        %v3412 = vrot.slane %v3408, 5
        %v3413 = vsel %vm411, %v3411, %v3412
        %v3416 = vadd.f32 %v3384, %v3411
        %v3417 = vadd.f32 %v3385, %v3413
        %s3418 = sld [smem:[#allocation9 + $0x7d]]
        %v3419 = vstv %s3418
        %v3420 = vmul.f32 %v3419, %v3168
        %v3421 = vmul.f32 %v3419, %v3169
        %v3424 = vrot.slane %v3420, 5
        %v3425 = vrot.slane %v3421, 5
        %v3426 = vsel %vm411, %v3424, %v3425
        %v3429 = vadd.f32 %v3390, %v3424
        %v3430 = vadd.f32 %v3391, %v3426
        %s3431 = sld [smem:[#allocation9 + $0xc3]]
        %v3432 = vstv %s3431
        %v3433 = vmul.f32 %v3432, %v3168
        %v3434 = vmul.f32 %v3432, %v3371
        %v3437 = vrot.slane %v3433, 6
        %v3438 = vrot.slane %v3434, 6
        %v3439 = vsel %vm516, %v3437, %v3438
        %v3442 = vadd.f32 %v3403, %v3437
        %v3443 = vadd.f32 %v3404, %v3439
        %s3444 = sld [smem:[#allocation9 + $0xc4]]
        %v3445 = vstv %s3444
        %v3446 = vmul.f32 %v3445, %v3168
        %v3447 = vmul.f32 %v3445, %v3371
        %v3450 = vrot.slane %v3446, 6
        %v3451 = vrot.slane %v3447, 6
        %v3452 = vsel %vm516, %v3450, %v3451
        %v3455 = vadd.f32 %v3416, %v3450
        %v3456 = vadd.f32 %v3417, %v3452
        %s3457 = sld [smem:[#allocation9 + $0xc5]]
        %v3458 = vstv %s3457
        %v3459 = vmul.f32 %v3458, %v3168
        %v3460 = vmul.f32 %v3458, %v3371
        %v3463 = vrot.slane %v3459, 6
        %v3464 = vrot.slane %v3460, 6
        %v3465 = vsel %vm516, %v3463, %v3464
        %v3468 = vadd.f32 %v3429, %v3463
        %v3469 = vadd.f32 %v3430, %v3465
        %3470 = vrot.lane.b32.xlu0 %v2769, 1
        %v3471 = vpop.permute.xlu0 %3470
        %3472 = vrot.lane.b32.xlu0 %v2770, 1
        %v3473 = vpop.permute.xlu0 %3472
        %v3474 = vsel %vm317, %v3471, 0.0
        %v3475 = vsel %vm317, %v3473, 0.0
        %3476 = vrot.lane.b32.xlu0 %v2769, 127
        %v3477 = vpop.permute.xlu0 %3476
        %3478 = vrot.lane.b32.xlu0 %v2770, 127
        %v3479 = vpop.permute.xlu0 %3478
        %v3480 = vsel %vm318, %v3477, 0.0
        %v3481 = vsel %vm318, %v3479, 0.0
        %v3482 = vrot.slane %v3474, 4
        %v3483 = vsel %vm352, %v3482, %v3475
        %v3484 = vrot.slane %v3483, 4
        %v3485 = vsel %vm352, %v3484, %v3482
        %s3486 = sld [smem:[#allocation9 + $0x6]]
        %v3487 = vstv %s3486
        %v3488 = vmul.f32 %v3487, %v3483
        %v3489 = vmul.f32 %v3487, %v3485
        %v3490 = vadd.f32 %v3442, %v3488
        %v3491 = vadd.f32 %v3443, %v3489
        %s3492 = sld [smem:[#allocation9 + $0x7]]
        %v3493 = vstv %s3492
        %v3494 = vmul.f32 %v3493, %v3483
        %v3495 = vmul.f32 %v3493, %v3485
        %v3496 = vadd.f32 %v3455, %v3494
        %v3497 = vadd.f32 %v3456, %v3495
        %s3498 = sld [smem:[#allocation9 + $0x8]]
        %v3499 = vstv %s3498
        %v3500 = vmul.f32 %v3499, %v3483
        %v3501 = vmul.f32 %v3499, %v3485
        %v3502 = vadd.f32 %v3468, %v3500
        %v3503 = vadd.f32 %v3469, %v3501
        %s3504 = sld [smem:[#allocation9 + $0x4e]]
        %v3505 = vstv %s3504
        %v3506 = vmul.f32 %v3505, %v3474
        %v3507 = vmul.f32 %v3505, %v3475
        %v3510 = vrot.slane %v3506, 5
        %v3511 = vrot.slane %v3507, 5
        %v3512 = vsel %vm411, %v3510, %v3511
        %v3515 = vadd.f32 %v3490, %v3510
        %v3516 = vadd.f32 %v3491, %v3512
        %s3517 = sld [smem:[#allocation9 + $0x4f]]
        %v3518 = vstv %s3517
        %v3519 = vmul.f32 %v3518, %v3474
        %v3520 = vmul.f32 %v3518, %v3475
        %v3523 = vrot.slane %v3519, 5
        %v3524 = vrot.slane %v3520, 5
        %v3525 = vsel %vm411, %v3523, %v3524
        %v3528 = vadd.f32 %v3496, %v3523
        %v3529 = vadd.f32 %v3497, %v3525
        %s3530 = sld [smem:[#allocation9 + $0x50]]
        %v3531 = vstv %s3530
        %v3532 = vmul.f32 %v3531, %v3474
        %v3533 = vmul.f32 %v3531, %v3475
        %v3536 = vrot.slane %v3532, 5
        %v3537 = vrot.slane %v3533, 5
        %v3538 = vsel %vm411, %v3536, %v3537
        %v3541 = vadd.f32 %v3502, %v3536
        %v3542 = vadd.f32 %v3503, %v3538
        %s3543 = sld [smem:[#allocation9 + $0x96]]
        %v3544 = vstv %s3543
        %v3545 = vmul.f32 %v3544, %v3474
        %v3546 = vmul.f32 %v3544, %v3483
        %v3549 = vrot.slane %v3545, 6
        %v3550 = vrot.slane %v3546, 6
        %v3551 = vsel %vm516, %v3549, %v3550
        %v3554 = vadd.f32 %v3515, %v3549
        %v3555 = vadd.f32 %v3516, %v3551
        %s3556 = sld [smem:[#allocation9 + $0x97]]
        %v3557 = vstv %s3556
        %v3558 = vmul.f32 %v3557, %v3474
        %v3559 = vmul.f32 %v3557, %v3483
        %v3562 = vrot.slane %v3558, 6
        %v3563 = vrot.slane %v3559, 6
        %v3564 = vsel %vm516, %v3562, %v3563
        %v3567 = vadd.f32 %v3528, %v3562
        %v3568 = vadd.f32 %v3529, %v3564
        %s3569 = sld [smem:[#allocation9 + $0x98]]
        %v3570 = vstv %s3569
        %v3571 = vmul.f32 %v3570, %v3474
        %v3572 = vmul.f32 %v3570, %v3483
        %v3575 = vrot.slane %v3571, 6
        %v3576 = vrot.slane %v3572, 6
        %v3577 = vsel %vm516, %v3575, %v3576
        %v3580 = vadd.f32 %v3541, %v3575
        %v3581 = vadd.f32 %v3542, %v3577
        %v3582 = vrot.slane %v2769, 4
        %v3583 = vsel %vm352, %v3582, %v2770
        %v3584 = vrot.slane %v3583, 4
        %v3585 = vsel %vm352, %v3584, %v3582
        %s3586 = sld [smem:[#allocation9 + $0x1e]]
        %v3587 = vstv %s3586
        %v3588 = vmul.f32 %v3587, %v3583
        %v3589 = vmul.f32 %v3587, %v3585
        %v3590 = vadd.f32 %v3554, %v3588
        %v3591 = vadd.f32 %v3555, %v3589
        %s3592 = sld [smem:[#allocation9 + $0x1f]]
        %v3593 = vstv %s3592
        %v3594 = vmul.f32 %v3593, %v3583
        %v3595 = vmul.f32 %v3593, %v3585
        %v3596 = vadd.f32 %v3567, %v3594
        %v3597 = vadd.f32 %v3568, %v3595
        %s3598 = sld [smem:[#allocation9 + $0x20]]
        %v3599 = vstv %s3598
        %v3600 = vmul.f32 %v3599, %v3583
        %v3601 = vmul.f32 %v3599, %v3585
        %v3602 = vadd.f32 %v3580, %v3600
        %v3603 = vadd.f32 %v3581, %v3601
        %s3604 = sld [smem:[#allocation9 + $0x66]]
        %v3605 = vstv %s3604
        %v3606 = vmul.f32 %v3605, %v2769
        %v3607 = vmul.f32 %v3605, %v2770
        %v3610 = vrot.slane %v3606, 5
        %v3611 = vrot.slane %v3607, 5
        %v3612 = vsel %vm411, %v3610, %v3611
        %v3615 = vadd.f32 %v3590, %v3610
        %v3616 = vadd.f32 %v3591, %v3612
        %s3617 = sld [smem:[#allocation9 + $0x67]]
        %v3618 = vstv %s3617
        %v3619 = vmul.f32 %v3618, %v2769
        %v3620 = vmul.f32 %v3618, %v2770
        %v3623 = vrot.slane %v3619, 5
        %v3624 = vrot.slane %v3620, 5
        %v3625 = vsel %vm411, %v3623, %v3624
        %v3628 = vadd.f32 %v3596, %v3623
        %v3629 = vadd.f32 %v3597, %v3625
        %s3630 = sld [smem:[#allocation9 + $0x68]]
        %v3631 = vstv %s3630
        %v3632 = vmul.f32 %v3631, %v2769
        %v3633 = vmul.f32 %v3631, %v2770
        %v3636 = vrot.slane %v3632, 5
        %v3637 = vrot.slane %v3633, 5
        %v3638 = vsel %vm411, %v3636, %v3637
        %v3641 = vadd.f32 %v3602, %v3636
        %v3642 = vadd.f32 %v3603, %v3638
        %s3643 = sld [smem:[#allocation9 + $0xae]]
        %v3644 = vstv %s3643
        %v3645 = vmul.f32 %v3644, %v2769
        %v3646 = vmul.f32 %v3644, %v3583
        %v3649 = vrot.slane %v3645, 6
        %v3650 = vrot.slane %v3646, 6
        %v3651 = vsel %vm516, %v3649, %v3650
        %v3654 = vadd.f32 %v3615, %v3649
        %v3655 = vadd.f32 %v3616, %v3651
        %s3656 = sld [smem:[#allocation9 + $0xaf]]
        %v3657 = vstv %s3656
        %v3658 = vmul.f32 %v3657, %v2769
        %v3659 = vmul.f32 %v3657, %v3583
        %v3662 = vrot.slane %v3658, 6
        %v3663 = vrot.slane %v3659, 6
        %v3664 = vsel %vm516, %v3662, %v3663
        %v3667 = vadd.f32 %v3628, %v3662
        %v3668 = vadd.f32 %v3629, %v3664
        %s3669 = sld [smem:[#allocation9 + $0xb0]]
        %v3670 = vstv %s3669
        %v3671 = vmul.f32 %v3670, %v2769
        %v3672 = vmul.f32 %v3670, %v3583
        %v3675 = vrot.slane %v3671, 6
        %v3676 = vrot.slane %v3672, 6
        %v3677 = vsel %vm516, %v3675, %v3676
        %v3680 = vadd.f32 %v3641, %v3675
        %v3681 = vadd.f32 %v3642, %v3677
        %v3682 = vrot.slane %v3480, 4
        %v3683 = vsel %vm352, %v3682, %v3481
        %v3684 = vrot.slane %v3683, 4
        %v3685 = vsel %vm352, %v3684, %v3682
        %s3686 = sld [smem:[#allocation9 + $0x36]]
        %v3687 = vstv %s3686
        %v3688 = vmul.f32 %v3687, %v3683
        %v3689 = vmul.f32 %v3687, %v3685
        %v3690 = vadd.f32 %v3654, %v3688
        %v3691 = vadd.f32 %v3655, %v3689
        %s3692 = sld [smem:[#allocation9 + $0x37]]
        %v3693 = vstv %s3692
        %v3694 = vmul.f32 %v3693, %v3683
        %v3695 = vmul.f32 %v3693, %v3685
        %v3696 = vadd.f32 %v3667, %v3694
        %v3697 = vadd.f32 %v3668, %v3695
        %s3698 = sld [smem:[#allocation9 + $0x38]]
        %v3699 = vstv %s3698
        %v3700 = vmul.f32 %v3699, %v3683
        %v3701 = vmul.f32 %v3699, %v3685
        %v3702 = vadd.f32 %v3680, %v3700
        %v3703 = vadd.f32 %v3681, %v3701
        %s3704 = sld [smem:[#allocation9 + $0x7e]]
        %v3705 = vstv %s3704
        %v3706 = vmul.f32 %v3705, %v3480
        %v3707 = vmul.f32 %v3705, %v3481
        %v3710 = vrot.slane %v3706, 5
        %v3711 = vrot.slane %v3707, 5
        %v3712 = vsel %vm411, %v3710, %v3711
        %v3715 = vadd.f32 %v3690, %v3710
        %v3716 = vadd.f32 %v3691, %v3712
        %s3717 = sld [smem:[#allocation9 + $0x7f]]
        %v3718 = vstv %s3717
        %v3719 = vmul.f32 %v3718, %v3480
        %v3720 = vmul.f32 %v3718, %v3481
        %v3723 = vrot.slane %v3719, 5
        %v3724 = vrot.slane %v3720, 5
        %v3725 = vsel %vm411, %v3723, %v3724
        %v3728 = vadd.f32 %v3696, %v3723
        %v3729 = vadd.f32 %v3697, %v3725
        %s3730 = sld [smem:[#allocation9 + $0x80]]
        %v3731 = vstv %s3730
        %v3732 = vmul.f32 %v3731, %v3480
        %v3733 = vmul.f32 %v3731, %v3481
        %v3736 = vrot.slane %v3732, 5
        %v3737 = vrot.slane %v3733, 5
        %v3738 = vsel %vm411, %v3736, %v3737
        %v3741 = vadd.f32 %v3702, %v3736
        %v3742 = vadd.f32 %v3703, %v3738
        %s3743 = sld [smem:[#allocation9 + $0xc6]]
        %v3744 = vstv %s3743
        %v3745 = vmul.f32 %v3744, %v3480
        %v3746 = vmul.f32 %v3744, %v3683
        %v3749 = vrot.slane %v3745, 6
        %v3750 = vrot.slane %v3746, 6
        %v3751 = vsel %vm516, %v3749, %v3750
        %v3754 = vadd.f32 %v3715, %v3749
        %v3755 = vadd.f32 %v3716, %v3751
        %s3756 = sld [smem:[#allocation9 + $0xc7]]
        %v3757 = vstv %s3756
        %v3758 = vmul.f32 %v3757, %v3480
        %v3759 = vmul.f32 %v3757, %v3683
        %v3762 = vrot.slane %v3758, 6
        %v3763 = vrot.slane %v3759, 6
        %v3764 = vsel %vm516, %v3762, %v3763
        %v3767 = vadd.f32 %v3728, %v3762
        %v3768 = vadd.f32 %v3729, %v3764
        %s3769 = sld [smem:[#allocation9 + $0xc8]]
        %v3770 = vstv %s3769
        %v3771 = vmul.f32 %v3770, %v3480
        %v3772 = vmul.f32 %v3770, %v3683
        %v3775 = vrot.slane %v3771, 6
        %v3776 = vrot.slane %v3772, 6
        %v3777 = vsel %vm516, %v3775, %v3776
        %v3780 = vadd.f32 %v3741, %v3775
        %v3781 = vadd.f32 %v3742, %v3777
        %3782 = vrot.lane.b32.xlu0 %v2784, 1
        %v3783 = vpop.permute.xlu0 %3782
        %3784 = vrot.lane.b32.xlu0 %v2785, 1
        %v3785 = vpop.permute.xlu0 %3784
        %v3786 = vsel %vm317, %v3783, 0.0
        %v3787 = vsel %vm317, %v3785, 0.0
        %3788 = vrot.lane.b32.xlu0 %v2784, 127
        %v3789 = vpop.permute.xlu0 %3788
        %3790 = vrot.lane.b32.xlu0 %v2785, 127
        %v3791 = vpop.permute.xlu0 %3790
        %v3792 = vsel %vm318, %v3789, 0.0
        %v3793 = vsel %vm318, %v3791, 0.0
        %v3794 = vrot.slane %v3786, 4
        %v3795 = vsel %vm352, %v3794, %v3787
        %v3796 = vrot.slane %v3795, 4
        %v3797 = vsel %vm352, %v3796, %v3794
        %s3798 = sld [smem:[#allocation9 + $0x9]]
        %v3799 = vstv %s3798
        %v3800 = vmul.f32 %v3799, %v3795
        %v3801 = vmul.f32 %v3799, %v3797
        %v3802 = vadd.f32 %v3754, %v3800
        %v3803 = vadd.f32 %v3755, %v3801
        %s3804 = sld [smem:[#allocation9 + $0xa]]
        %v3805 = vstv %s3804
        %v3806 = vmul.f32 %v3805, %v3795
        %v3807 = vmul.f32 %v3805, %v3797
        %v3808 = vadd.f32 %v3767, %v3806
        %v3809 = vadd.f32 %v3768, %v3807
        %s3810 = sld [smem:[#allocation9 + $0xb]]
        %v3811 = vstv %s3810
        %v3812 = vmul.f32 %v3811, %v3795
        %v3813 = vmul.f32 %v3811, %v3797
        %v3814 = vadd.f32 %v3780, %v3812
        %v3815 = vadd.f32 %v3781, %v3813
        %s3816 = sld [smem:[#allocation9 + $0x51]]
        %v3817 = vstv %s3816
        %v3818 = vmul.f32 %v3817, %v3786
        %v3819 = vmul.f32 %v3817, %v3787
        %v3822 = vrot.slane %v3818, 5
        %v3823 = vrot.slane %v3819, 5
        %v3824 = vsel %vm411, %v3822, %v3823
        %v3827 = vadd.f32 %v3802, %v3822
        %v3828 = vadd.f32 %v3803, %v3824
        %s3829 = sld [smem:[#allocation9 + $0x52]]
        %v3830 = vstv %s3829
        %v3831 = vmul.f32 %v3830, %v3786
        %v3832 = vmul.f32 %v3830, %v3787
        %v3835 = vrot.slane %v3831, 5
        %v3836 = vrot.slane %v3832, 5
        %v3837 = vsel %vm411, %v3835, %v3836
        %v3840 = vadd.f32 %v3808, %v3835
        %v3841 = vadd.f32 %v3809, %v3837
        %s3842 = sld [smem:[#allocation9 + $0x53]]
        %v3843 = vstv %s3842
        %v3844 = vmul.f32 %v3843, %v3786
        %v3845 = vmul.f32 %v3843, %v3787
        %v3848 = vrot.slane %v3844, 5
        %v3849 = vrot.slane %v3845, 5
        %v3850 = vsel %vm411, %v3848, %v3849
        %v3853 = vadd.f32 %v3814, %v3848
        %v3854 = vadd.f32 %v3815, %v3850
        %s3855 = sld [smem:[#allocation9 + $0x99]]
        %v3856 = vstv %s3855
        %v3857 = vmul.f32 %v3856, %v3786
        %v3858 = vmul.f32 %v3856, %v3795
        %v3861 = vrot.slane %v3857, 6
        %v3862 = vrot.slane %v3858, 6
        %v3863 = vsel %vm516, %v3861, %v3862
        %v3866 = vadd.f32 %v3827, %v3861
        %v3867 = vadd.f32 %v3828, %v3863
        %s3868 = sld [smem:[#allocation9 + $0x9a]]
        %v3869 = vstv %s3868
        %v3870 = vmul.f32 %v3869, %v3786
        %v3871 = vmul.f32 %v3869, %v3795
        %v3874 = vrot.slane %v3870, 6
        %v3875 = vrot.slane %v3871, 6
        %v3876 = vsel %vm516, %v3874, %v3875
        %v3879 = vadd.f32 %v3840, %v3874
        %v3880 = vadd.f32 %v3841, %v3876
        %s3881 = sld [smem:[#allocation9 + $0x9b]]
        %v3882 = vstv %s3881
        %v3883 = vmul.f32 %v3882, %v3786
        %v3884 = vmul.f32 %v3882, %v3795
        %v3887 = vrot.slane %v3883, 6
        %v3888 = vrot.slane %v3884, 6
        %v3889 = vsel %vm516, %v3887, %v3888
        %v3892 = vadd.f32 %v3853, %v3887
        %v3893 = vadd.f32 %v3854, %v3889
        %v3894 = vrot.slane %v2784, 4
        %v3895 = vsel %vm352, %v3894, %v2785
        %v3896 = vrot.slane %v3895, 4
        %v3897 = vsel %vm352, %v3896, %v3894
        %s3898 = sld [smem:[#allocation9 + $0x21]]
        %v3899 = vstv %s3898
        %v3900 = vmul.f32 %v3899, %v3895
        %v3901 = vmul.f32 %v3899, %v3897
        %v3902 = vadd.f32 %v3866, %v3900
        %v3903 = vadd.f32 %v3867, %v3901
        %s3904 = sld [smem:[#allocation9 + $0x22]]
        %v3905 = vstv %s3904
        %v3906 = vmul.f32 %v3905, %v3895
        %v3907 = vmul.f32 %v3905, %v3897
        %v3908 = vadd.f32 %v3879, %v3906
        %v3909 = vadd.f32 %v3880, %v3907
        %s3910 = sld [smem:[#allocation9 + $0x23]]
        %v3911 = vstv %s3910
        %v3912 = vmul.f32 %v3911, %v3895
        %v3913 = vmul.f32 %v3911, %v3897
        %v3914 = vadd.f32 %v3892, %v3912
        %v3915 = vadd.f32 %v3893, %v3913
        %s3916 = sld [smem:[#allocation9 + $0x69]]
        %v3917 = vstv %s3916
        %v3918 = vmul.f32 %v3917, %v2784
        %v3919 = vmul.f32 %v3917, %v2785
        %v3922 = vrot.slane %v3918, 5
        %v3923 = vrot.slane %v3919, 5
        %v3924 = vsel %vm411, %v3922, %v3923
        %v3927 = vadd.f32 %v3902, %v3922
        %v3928 = vadd.f32 %v3903, %v3924
        %s3929 = sld [smem:[#allocation9 + $0x6a]]
        %v3930 = vstv %s3929
        %v3931 = vmul.f32 %v3930, %v2784
        %v3932 = vmul.f32 %v3930, %v2785
        %v3935 = vrot.slane %v3931, 5
        %v3936 = vrot.slane %v3932, 5
        %v3937 = vsel %vm411, %v3935, %v3936
        %v3940 = vadd.f32 %v3908, %v3935
        %v3941 = vadd.f32 %v3909, %v3937
        %s3942 = sld [smem:[#allocation9 + $0x6b]]
        %v3943 = vstv %s3942
        %v3944 = vmul.f32 %v3943, %v2784
        %v3945 = vmul.f32 %v3943, %v2785
        %v3948 = vrot.slane %v3944, 5
        %v3949 = vrot.slane %v3945, 5
        %v3950 = vsel %vm411, %v3948, %v3949
        %v3953 = vadd.f32 %v3914, %v3948
        %v3954 = vadd.f32 %v3915, %v3950
        %s3955 = sld [smem:[#allocation9 + $0xb1]]
        %v3956 = vstv %s3955
        %v3957 = vmul.f32 %v3956, %v2784
        %v3958 = vmul.f32 %v3956, %v3895
        %v3961 = vrot.slane %v3957, 6
        %v3962 = vrot.slane %v3958, 6
        %v3963 = vsel %vm516, %v3961, %v3962
        %v3966 = vadd.f32 %v3927, %v3961
        %v3967 = vadd.f32 %v3928, %v3963
        %s3968 = sld [smem:[#allocation9 + $0xb2]]
        %v3969 = vstv %s3968
        %v3970 = vmul.f32 %v3969, %v2784
        %v3971 = vmul.f32 %v3969, %v3895
        %v3974 = vrot.slane %v3970, 6
        %v3975 = vrot.slane %v3971, 6
        %v3976 = vsel %vm516, %v3974, %v3975
        %v3979 = vadd.f32 %v3940, %v3974
        %v3980 = vadd.f32 %v3941, %v3976
        %s3981 = sld [smem:[#allocation9 + $0xb3]]
        %v3982 = vstv %s3981
        %v3983 = vmul.f32 %v3982, %v2784
        %v3984 = vmul.f32 %v3982, %v3895
        %v3987 = vrot.slane %v3983, 6
        %v3988 = vrot.slane %v3984, 6
        %v3989 = vsel %vm516, %v3987, %v3988
        %v3992 = vadd.f32 %v3953, %v3987
        %v3993 = vadd.f32 %v3954, %v3989
        %v3994 = vrot.slane %v3792, 4
        %v3995 = vsel %vm352, %v3994, %v3793
        %v3996 = vrot.slane %v3995, 4
        %v3997 = vsel %vm352, %v3996, %v3994
        %s3998 = sld [smem:[#allocation9 + $0x39]]
        %v3999 = vstv %s3998
        %v4000 = vmul.f32 %v3999, %v3995
        %v4001 = vmul.f32 %v3999, %v3997
        %v4002 = vadd.f32 %v3966, %v4000
        %v4003 = vadd.f32 %v3967, %v4001
        %s4004 = sld [smem:[#allocation9 + $0x3a]]
        %v4005 = vstv %s4004
        %v4006 = vmul.f32 %v4005, %v3995
        %v4007 = vmul.f32 %v4005, %v3997
        %v4008 = vadd.f32 %v3979, %v4006
        %v4009 = vadd.f32 %v3980, %v4007
        %s4010 = sld [smem:[#allocation9 + $0x3b]]
        %v4011 = vstv %s4010
        %v4012 = vmul.f32 %v4011, %v3995
        %v4013 = vmul.f32 %v4011, %v3997
        %v4014 = vadd.f32 %v3992, %v4012
        %v4015 = vadd.f32 %v3993, %v4013
        %s4016 = sld [smem:[#allocation9 + $0x81]]
        %v4017 = vstv %s4016
        %v4018 = vmul.f32 %v4017, %v3792
        %v4019 = vmul.f32 %v4017, %v3793
        %v4022 = vrot.slane %v4018, 5
        %v4023 = vrot.slane %v4019, 5
        %v4024 = vsel %vm411, %v4022, %v4023
        %v4027 = vadd.f32 %v4002, %v4022
        %v4028 = vadd.f32 %v4003, %v4024
        %s4029 = sld [smem:[#allocation9 + $0x82]]
        %v4030 = vstv %s4029
        %v4031 = vmul.f32 %v4030, %v3792
        %v4032 = vmul.f32 %v4030, %v3793
        %v4035 = vrot.slane %v4031, 5
        %v4036 = vrot.slane %v4032, 5
        %v4037 = vsel %vm411, %v4035, %v4036
        %v4040 = vadd.f32 %v4008, %v4035
        %v4041 = vadd.f32 %v4009, %v4037
        %s4042 = sld [smem:[#allocation9 + $0x83]]
        %v4043 = vstv %s4042
        %v4044 = vmul.f32 %v4043, %v3792
        %v4045 = vmul.f32 %v4043, %v3793
        %v4048 = vrot.slane %v4044, 5
        %v4049 = vrot.slane %v4045, 5
        %v4050 = vsel %vm411, %v4048, %v4049
        %v4053 = vadd.f32 %v4014, %v4048
        %v4054 = vadd.f32 %v4015, %v4050
        %s4055 = sld [smem:[#allocation9 + $0xc9]]
        %v4056 = vstv %s4055
        %v4057 = vmul.f32 %v4056, %v3792
        %v4058 = vmul.f32 %v4056, %v3995
        %v4061 = vrot.slane %v4057, 6
        %v4062 = vrot.slane %v4058, 6
        %v4063 = vsel %vm516, %v4061, %v4062
        %v4066 = vadd.f32 %v4027, %v4061
        %v4067 = vadd.f32 %v4028, %v4063
        %s4068 = sld [smem:[#allocation9 + $0xca]]
        %v4069 = vstv %s4068
        %v4070 = vmul.f32 %v4069, %v3792
        %v4071 = vmul.f32 %v4069, %v3995
        %v4074 = vrot.slane %v4070, 6
        %v4075 = vrot.slane %v4071, 6
        %v4076 = vsel %vm516, %v4074, %v4075
        %v4079 = vadd.f32 %v4040, %v4074
        %v4080 = vadd.f32 %v4041, %v4076
        %s4081 = sld [smem:[#allocation9 + $0xcb]]
        %v4082 = vstv %s4081
        %v4083 = vmul.f32 %v4082, %v3792
        %v4084 = vmul.f32 %v4082, %v3995
        %v4087 = vrot.slane %v4083, 6
        %v4088 = vrot.slane %v4084, 6
        %v4089 = vsel %vm516, %v4087, %v4088
        %v4092 = vadd.f32 %v4053, %v4087
        %v4093 = vadd.f32 %v4054, %v4089
        %4094 = vrot.lane.b32.xlu0 %v2799, 1
        %v4095 = vpop.permute.xlu0 %4094
        %4096 = vrot.lane.b32.xlu0 %v2800, 1
        %v4097 = vpop.permute.xlu0 %4096
        %v4098 = vsel %vm317, %v4095, 0.0
        %v4099 = vsel %vm317, %v4097, 0.0
        %4100 = vrot.lane.b32.xlu0 %v2799, 127
        %v4101 = vpop.permute.xlu0 %4100
        %4102 = vrot.lane.b32.xlu0 %v2800, 127
        %v4103 = vpop.permute.xlu0 %4102
        %v4104 = vsel %vm318, %v4101, 0.0
        %v4105 = vsel %vm318, %v4103, 0.0
        %v4106 = vrot.slane %v4098, 4
        %v4107 = vsel %vm352, %v4106, %v4099
        %v4108 = vrot.slane %v4107, 4
        %v4109 = vsel %vm352, %v4108, %v4106
        %s4110 = sld [smem:[#allocation9 + $0xc]]
        %v4111 = vstv %s4110
        %v4112 = vmul.f32 %v4111, %v4107
        %v4113 = vmul.f32 %v4111, %v4109
        %v4114 = vadd.f32 %v4066, %v4112
        %v4115 = vadd.f32 %v4067, %v4113
        %s4116 = sld [smem:[#allocation9 + $0xd]]
        %v4117 = vstv %s4116
        %v4118 = vmul.f32 %v4117, %v4107
        %v4119 = vmul.f32 %v4117, %v4109
        %v4120 = vadd.f32 %v4079, %v4118
        %v4121 = vadd.f32 %v4080, %v4119
        %s4122 = sld [smem:[#allocation9 + $0xe]]
        %v4123 = vstv %s4122
        %v4124 = vmul.f32 %v4123, %v4107
        %v4125 = vmul.f32 %v4123, %v4109
        %v4126 = vadd.f32 %v4092, %v4124
        %v4127 = vadd.f32 %v4093, %v4125
        %s4128 = sld [smem:[#allocation9 + $0x54]]
        %v4129 = vstv %s4128
        %v4130 = vmul.f32 %v4129, %v4098
        %v4131 = vmul.f32 %v4129, %v4099
        %v4134 = vrot.slane %v4130, 5
        %v4135 = vrot.slane %v4131, 5
        %v4136 = vsel %vm411, %v4134, %v4135
        %v4139 = vadd.f32 %v4114, %v4134
        %v4140 = vadd.f32 %v4115, %v4136
        %s4141 = sld [smem:[#allocation9 + $0x55]]
        %v4142 = vstv %s4141
        %v4143 = vmul.f32 %v4142, %v4098
        %v4144 = vmul.f32 %v4142, %v4099
        %v4147 = vrot.slane %v4143, 5
        %v4148 = vrot.slane %v4144, 5
        %v4149 = vsel %vm411, %v4147, %v4148
        %v4152 = vadd.f32 %v4120, %v4147
        %v4153 = vadd.f32 %v4121, %v4149
        %s4154 = sld [smem:[#allocation9 + $0x56]]
        %v4155 = vstv %s4154
        %v4156 = vmul.f32 %v4155, %v4098
        %v4157 = vmul.f32 %v4155, %v4099
        %v4160 = vrot.slane %v4156, 5
        %v4161 = vrot.slane %v4157, 5
        %v4162 = vsel %vm411, %v4160, %v4161
        %v4165 = vadd.f32 %v4126, %v4160
        %v4166 = vadd.f32 %v4127, %v4162
        %s4167 = sld [smem:[#allocation9 + $0x9c]]
        %v4168 = vstv %s4167
        %v4169 = vmul.f32 %v4168, %v4098
        %v4170 = vmul.f32 %v4168, %v4107
        %v4173 = vrot.slane %v4169, 6
        %v4174 = vrot.slane %v4170, 6
        %v4175 = vsel %vm516, %v4173, %v4174
        %v4178 = vadd.f32 %v4139, %v4173
        %v4179 = vadd.f32 %v4140, %v4175
        %s4180 = sld [smem:[#allocation9 + $0x9d]]
        %v4181 = vstv %s4180
        %v4182 = vmul.f32 %v4181, %v4098
        %v4183 = vmul.f32 %v4181, %v4107
        %v4186 = vrot.slane %v4182, 6
        %v4187 = vrot.slane %v4183, 6
        %v4188 = vsel %vm516, %v4186, %v4187
        %v4191 = vadd.f32 %v4152, %v4186
        %v4192 = vadd.f32 %v4153, %v4188
        %s4193 = sld [smem:[#allocation9 + $0x9e]]
        %v4194 = vstv %s4193
        %v4195 = vmul.f32 %v4194, %v4098
        %v4196 = vmul.f32 %v4194, %v4107
        %v4199 = vrot.slane %v4195, 6
        %v4200 = vrot.slane %v4196, 6
        %v4201 = vsel %vm516, %v4199, %v4200
        %v4204 = vadd.f32 %v4165, %v4199
        %v4205 = vadd.f32 %v4166, %v4201
        %v4206 = vrot.slane %v2799, 4
        %v4207 = vsel %vm352, %v4206, %v2800
        %v4208 = vrot.slane %v4207, 4
        %v4209 = vsel %vm352, %v4208, %v4206
        %s4210 = sld [smem:[#allocation9 + $0x24]]
        %v4211 = vstv %s4210
        %v4212 = vmul.f32 %v4211, %v4207
        %v4213 = vmul.f32 %v4211, %v4209
        %v4214 = vadd.f32 %v4178, %v4212
        %v4215 = vadd.f32 %v4179, %v4213
        %s4216 = sld [smem:[#allocation9 + $0x25]]
        %v4217 = vstv %s4216
        %v4218 = vmul.f32 %v4217, %v4207
        %v4219 = vmul.f32 %v4217, %v4209
        %v4220 = vadd.f32 %v4191, %v4218
        %v4221 = vadd.f32 %v4192, %v4219
        %s4222 = sld [smem:[#allocation9 + $0x26]]
        %v4223 = vstv %s4222
        %v4224 = vmul.f32 %v4223, %v4207
        %v4225 = vmul.f32 %v4223, %v4209
        %v4226 = vadd.f32 %v4204, %v4224
        %v4227 = vadd.f32 %v4205, %v4225
        %s4228 = sld [smem:[#allocation9 + $0x6c]]
        %v4229 = vstv %s4228
        %v4230 = vmul.f32 %v4229, %v2799
        %v4231 = vmul.f32 %v4229, %v2800
        %v4234 = vrot.slane %v4230, 5
        %v4235 = vrot.slane %v4231, 5
        %v4236 = vsel %vm411, %v4234, %v4235
        %v4239 = vadd.f32 %v4214, %v4234
        %v4240 = vadd.f32 %v4215, %v4236
        %s4241 = sld [smem:[#allocation9 + $0x6d]]
        %v4242 = vstv %s4241
        %v4243 = vmul.f32 %v4242, %v2799
        %v4244 = vmul.f32 %v4242, %v2800
        %v4247 = vrot.slane %v4243, 5
        %v4248 = vrot.slane %v4244, 5
        %v4249 = vsel %vm411, %v4247, %v4248
        %v4252 = vadd.f32 %v4220, %v4247
        %v4253 = vadd.f32 %v4221, %v4249
        %s4254 = sld [smem:[#allocation9 + $0x6e]]
        %v4255 = vstv %s4254
        %v4256 = vmul.f32 %v4255, %v2799
        %v4257 = vmul.f32 %v4255, %v2800
        %v4260 = vrot.slane %v4256, 5
        %v4261 = vrot.slane %v4257, 5
        %v4262 = vsel %vm411, %v4260, %v4261
        %v4265 = vadd.f32 %v4226, %v4260
        %v4266 = vadd.f32 %v4227, %v4262
        %s4267 = sld [smem:[#allocation9 + $0xb4]]
        %v4268 = vstv %s4267
        %v4269 = vmul.f32 %v4268, %v2799
        %v4270 = vmul.f32 %v4268, %v4207
        %v4273 = vrot.slane %v4269, 6
        %v4274 = vrot.slane %v4270, 6
        %v4275 = vsel %vm516, %v4273, %v4274
        %v4278 = vadd.f32 %v4239, %v4273
        %v4279 = vadd.f32 %v4240, %v4275
        %s4280 = sld [smem:[#allocation9 + $0xb5]]
        %v4281 = vstv %s4280
        %v4282 = vmul.f32 %v4281, %v2799
        %v4283 = vmul.f32 %v4281, %v4207
        %v4286 = vrot.slane %v4282, 6
        %v4287 = vrot.slane %v4283, 6
        %v4288 = vsel %vm516, %v4286, %v4287
        %v4291 = vadd.f32 %v4252, %v4286
        %v4292 = vadd.f32 %v4253, %v4288
        %s4293 = sld [smem:[#allocation9 + $0xb6]]
        %v4294 = vstv %s4293
        %v4295 = vmul.f32 %v4294, %v2799
        %v4296 = vmul.f32 %v4294, %v4207
        %v4299 = vrot.slane %v4295, 6
        %v4300 = vrot.slane %v4296, 6
        %v4301 = vsel %vm516, %v4299, %v4300
        %v4304 = vadd.f32 %v4265, %v4299
        %v4305 = vadd.f32 %v4266, %v4301
        %v4306 = vrot.slane %v4104, 4
        %v4307 = vsel %vm352, %v4306, %v4105
        %v4308 = vrot.slane %v4307, 4
        %v4309 = vsel %vm352, %v4308, %v4306
        %s4310 = sld [smem:[#allocation9 + $0x3c]]
        %v4311 = vstv %s4310
        %v4312 = vmul.f32 %v4311, %v4307
        %v4313 = vmul.f32 %v4311, %v4309
        %v4314 = vadd.f32 %v4278, %v4312
        %v4315 = vadd.f32 %v4279, %v4313
        %s4316 = sld [smem:[#allocation9 + $0x3d]]
        %v4317 = vstv %s4316
        %v4318 = vmul.f32 %v4317, %v4307
        %v4319 = vmul.f32 %v4317, %v4309
        %v4320 = vadd.f32 %v4291, %v4318
        %v4321 = vadd.f32 %v4292, %v4319
        %s4322 = sld [smem:[#allocation9 + $0x3e]]
        %v4323 = vstv %s4322
        %v4324 = vmul.f32 %v4323, %v4307
        %v4325 = vmul.f32 %v4323, %v4309
        %v4326 = vadd.f32 %v4304, %v4324
        %v4327 = vadd.f32 %v4305, %v4325
        %s4328 = sld [smem:[#allocation9 + $0x84]]
        %v4329 = vstv %s4328
        %v4330 = vmul.f32 %v4329, %v4104
        %v4331 = vmul.f32 %v4329, %v4105
        %v4334 = vrot.slane %v4330, 5
        %v4335 = vrot.slane %v4331, 5
        %v4336 = vsel %vm411, %v4334, %v4335
        %v4339 = vadd.f32 %v4314, %v4334
        %v4340 = vadd.f32 %v4315, %v4336
        %s4341 = sld [smem:[#allocation9 + $0x85]]
        %v4342 = vstv %s4341
        %v4343 = vmul.f32 %v4342, %v4104
        %v4344 = vmul.f32 %v4342, %v4105
        %v4347 = vrot.slane %v4343, 5
        %v4348 = vrot.slane %v4344, 5
        %v4349 = vsel %vm411, %v4347, %v4348
        %v4352 = vadd.f32 %v4320, %v4347
        %v4353 = vadd.f32 %v4321, %v4349
        %s4354 = sld [smem:[#allocation9 + $0x86]]
        %v4355 = vstv %s4354
        %v4356 = vmul.f32 %v4355, %v4104
        %v4357 = vmul.f32 %v4355, %v4105
        %v4360 = vrot.slane %v4356, 5
        %v4361 = vrot.slane %v4357, 5
        %v4362 = vsel %vm411, %v4360, %v4361
        %v4365 = vadd.f32 %v4326, %v4360
        %v4366 = vadd.f32 %v4327, %v4362
        %s4367 = sld [smem:[#allocation9 + $0xcc]]
        %v4368 = vstv %s4367
        %v4369 = vmul.f32 %v4368, %v4104
        %v4370 = vmul.f32 %v4368, %v4307
        %v4373 = vrot.slane %v4369, 6
        %v4374 = vrot.slane %v4370, 6
        %v4375 = vsel %vm516, %v4373, %v4374
        %v4378 = vadd.f32 %v4339, %v4373
        %v4379 = vadd.f32 %v4340, %v4375
        %s4380 = sld [smem:[#allocation9 + $0xcd]]
        %v4381 = vstv %s4380
        %v4382 = vmul.f32 %v4381, %v4104
        %v4383 = vmul.f32 %v4381, %v4307
        %v4386 = vrot.slane %v4382, 6
        %v4387 = vrot.slane %v4383, 6
        %v4388 = vsel %vm516, %v4386, %v4387
        %v4391 = vadd.f32 %v4352, %v4386
        %v4392 = vadd.f32 %v4353, %v4388
        %s4393 = sld [smem:[#allocation9 + $0xce]]
        %v4394 = vstv %s4393
        %v4395 = vmul.f32 %v4394, %v4104
        %v4396 = vmul.f32 %v4394, %v4307
        %v4399 = vrot.slane %v4395, 6
        %v4400 = vrot.slane %v4396, 6
        %v4401 = vsel %vm516, %v4399, %v4400
        %v4404 = vadd.f32 %v4365, %v4399
        %v4405 = vadd.f32 %v4366, %v4401
        %4406 = vrot.lane.b32.xlu0 %v2814, 1
        %v4407 = vpop.permute.xlu0 %4406
        %4408 = vrot.lane.b32.xlu0 %v2815, 1
        %v4409 = vpop.permute.xlu0 %4408
        %v4410 = vsel %vm317, %v4407, 0.0
        %v4411 = vsel %vm317, %v4409, 0.0
        %4412 = vrot.lane.b32.xlu0 %v2814, 127
        %v4413 = vpop.permute.xlu0 %4412
        %4414 = vrot.lane.b32.xlu0 %v2815, 127
        %v4415 = vpop.permute.xlu0 %4414
        %v4416 = vsel %vm318, %v4413, 0.0
        %v4417 = vsel %vm318, %v4415, 0.0
        %v4418 = vrot.slane %v4410, 4
        %v4419 = vsel %vm352, %v4418, %v4411
        %v4420 = vrot.slane %v4419, 4
        %v4421 = vsel %vm352, %v4420, %v4418
        %s4422 = sld [smem:[#allocation9 + $0xf]]
        %v4423 = vstv %s4422
        %v4424 = vmul.f32 %v4423, %v4419
        %v4425 = vmul.f32 %v4423, %v4421
        %v4426 = vadd.f32 %v4378, %v4424
        %v4427 = vadd.f32 %v4379, %v4425
        %s4428 = sld [smem:[#allocation9 + $0x10]]
        %v4429 = vstv %s4428
        %v4430 = vmul.f32 %v4429, %v4419
        %v4431 = vmul.f32 %v4429, %v4421
        %v4432 = vadd.f32 %v4391, %v4430
        %v4433 = vadd.f32 %v4392, %v4431
        %s4434 = sld [smem:[#allocation9 + $0x11]]
        %v4435 = vstv %s4434
        %v4436 = vmul.f32 %v4435, %v4419
        %v4437 = vmul.f32 %v4435, %v4421
        %v4438 = vadd.f32 %v4404, %v4436
        %v4439 = vadd.f32 %v4405, %v4437
        %s4440 = sld [smem:[#allocation9 + $0x57]]
        %v4441 = vstv %s4440
        %v4442 = vmul.f32 %v4441, %v4410
        %v4443 = vmul.f32 %v4441, %v4411
        %v4446 = vrot.slane %v4442, 5
        %v4447 = vrot.slane %v4443, 5
        %v4448 = vsel %vm411, %v4446, %v4447
        %v4451 = vadd.f32 %v4426, %v4446
        %v4452 = vadd.f32 %v4427, %v4448
        %s4453 = sld [smem:[#allocation9 + $0x58]]
        %v4454 = vstv %s4453
        %v4455 = vmul.f32 %v4454, %v4410
        %v4456 = vmul.f32 %v4454, %v4411
        %v4459 = vrot.slane %v4455, 5
        %v4460 = vrot.slane %v4456, 5
        %v4461 = vsel %vm411, %v4459, %v4460
        %v4464 = vadd.f32 %v4432, %v4459
        %v4465 = vadd.f32 %v4433, %v4461
        %s4466 = sld [smem:[#allocation9 + $0x59]]
        %v4467 = vstv %s4466
        %v4468 = vmul.f32 %v4467, %v4410
        %v4469 = vmul.f32 %v4467, %v4411
        %v4472 = vrot.slane %v4468, 5
        %v4473 = vrot.slane %v4469, 5
        %v4474 = vsel %vm411, %v4472, %v4473
        %v4477 = vadd.f32 %v4438, %v4472
        %v4478 = vadd.f32 %v4439, %v4474
        %s4479 = sld [smem:[#allocation9 + $0x9f]]
        %v4480 = vstv %s4479
        %v4481 = vmul.f32 %v4480, %v4410
        %v4482 = vmul.f32 %v4480, %v4419
        %v4485 = vrot.slane %v4481, 6
        %v4486 = vrot.slane %v4482, 6
        %v4487 = vsel %vm516, %v4485, %v4486
        %v4490 = vadd.f32 %v4451, %v4485
        %v4491 = vadd.f32 %v4452, %v4487
        %s4492 = sld [smem:[#allocation9 + $0xa0]]
        %v4493 = vstv %s4492
        %v4494 = vmul.f32 %v4493, %v4410
        %v4495 = vmul.f32 %v4493, %v4419
        %v4498 = vrot.slane %v4494, 6
        %v4499 = vrot.slane %v4495, 6
        %v4500 = vsel %vm516, %v4498, %v4499
        %v4503 = vadd.f32 %v4464, %v4498
        %v4504 = vadd.f32 %v4465, %v4500
        %s4505 = sld [smem:[#allocation9 + $0xa1]]
        %v4506 = vstv %s4505
        %v4507 = vmul.f32 %v4506, %v4410
        %v4508 = vmul.f32 %v4506, %v4419
        %v4511 = vrot.slane %v4507, 6
        %v4512 = vrot.slane %v4508, 6
        %v4513 = vsel %vm516, %v4511, %v4512
        %v4516 = vadd.f32 %v4477, %v4511
        %v4517 = vadd.f32 %v4478, %v4513
        %v4518 = vrot.slane %v2814, 4
        %v4519 = vsel %vm352, %v4518, %v2815
        %v4520 = vrot.slane %v4519, 4
        %v4521 = vsel %vm352, %v4520, %v4518
        %s4522 = sld [smem:[#allocation9 + $0x27]]
        %v4523 = vstv %s4522
        %v4524 = vmul.f32 %v4523, %v4519
        %v4525 = vmul.f32 %v4523, %v4521
        %v4526 = vadd.f32 %v4490, %v4524
        %v4527 = vadd.f32 %v4491, %v4525
        %s4528 = sld [smem:[#allocation9 + $0x28]]
        %v4529 = vstv %s4528
        %v4530 = vmul.f32 %v4529, %v4519
        %v4531 = vmul.f32 %v4529, %v4521
        %v4532 = vadd.f32 %v4503, %v4530
        %v4533 = vadd.f32 %v4504, %v4531
        %s4534 = sld [smem:[#allocation9 + $0x29]]
        %v4535 = vstv %s4534
        %v4536 = vmul.f32 %v4535, %v4519
        %v4537 = vmul.f32 %v4535, %v4521
        %v4538 = vadd.f32 %v4516, %v4536
        %v4539 = vadd.f32 %v4517, %v4537
        %s4540 = sld [smem:[#allocation9 + $0x6f]]
        %v4541 = vstv %s4540
        %v4542 = vmul.f32 %v4541, %v2814
        %v4543 = vmul.f32 %v4541, %v2815
        %v4546 = vrot.slane %v4542, 5
        %v4547 = vrot.slane %v4543, 5
        %v4548 = vsel %vm411, %v4546, %v4547
        %v4551 = vadd.f32 %v4526, %v4546
        %v4552 = vadd.f32 %v4527, %v4548
        %s4553 = sld [smem:[#allocation9 + $0x70]]
        %v4554 = vstv %s4553
        %v4555 = vmul.f32 %v4554, %v2814
        %v4556 = vmul.f32 %v4554, %v2815
        %v4559 = vrot.slane %v4555, 5
        %v4560 = vrot.slane %v4556, 5
        %v4561 = vsel %vm411, %v4559, %v4560
        %v4564 = vadd.f32 %v4532, %v4559
        %v4565 = vadd.f32 %v4533, %v4561
        %s4566 = sld [smem:[#allocation9 + $0x71]]
        %v4567 = vstv %s4566
        %v4568 = vmul.f32 %v4567, %v2814
        %v4569 = vmul.f32 %v4567, %v2815
        %v4572 = vrot.slane %v4568, 5
        %v4573 = vrot.slane %v4569, 5
        %v4574 = vsel %vm411, %v4572, %v4573
        %v4577 = vadd.f32 %v4538, %v4572
        %v4578 = vadd.f32 %v4539, %v4574
        %s4579 = sld [smem:[#allocation9 + $0xb7]]
        %v4580 = vstv %s4579
        %v4581 = vmul.f32 %v4580, %v2814
        %v4582 = vmul.f32 %v4580, %v4519
        %v4585 = vrot.slane %v4581, 6
        %v4586 = vrot.slane %v4582, 6
        %v4587 = vsel %vm516, %v4585, %v4586
        %v4590 = vadd.f32 %v4551, %v4585
        %v4591 = vadd.f32 %v4552, %v4587
        %s4592 = sld [smem:[#allocation9 + $0xb8]]
        %v4593 = vstv %s4592
        %v4594 = vmul.f32 %v4593, %v2814
        %v4595 = vmul.f32 %v4593, %v4519
        %v4598 = vrot.slane %v4594, 6
        %v4599 = vrot.slane %v4595, 6
        %v4600 = vsel %vm516, %v4598, %v4599
        %v4603 = vadd.f32 %v4564, %v4598
        %v4604 = vadd.f32 %v4565, %v4600
        %s4605 = sld [smem:[#allocation9 + $0xb9]]
        %v4606 = vstv %s4605
        %v4607 = vmul.f32 %v4606, %v2814
        %v4608 = vmul.f32 %v4606, %v4519
        %v4611 = vrot.slane %v4607, 6
        %v4612 = vrot.slane %v4608, 6
        %v4613 = vsel %vm516, %v4611, %v4612
        %v4616 = vadd.f32 %v4577, %v4611
        %v4617 = vadd.f32 %v4578, %v4613
        %v4618 = vrot.slane %v4416, 4
        %v4619 = vsel %vm352, %v4618, %v4417
        %v4620 = vrot.slane %v4619, 4
        %v4621 = vsel %vm352, %v4620, %v4618
        %s4622 = sld [smem:[#allocation9 + $0x3f]]
        %v4623 = vstv %s4622
        %v4624 = vmul.f32 %v4623, %v4619
        %v4625 = vmul.f32 %v4623, %v4621
        %v4626 = vadd.f32 %v4590, %v4624
        %v4627 = vadd.f32 %v4591, %v4625
        %s4628 = sld [smem:[#allocation9 + $0x40]]
        %v4629 = vstv %s4628
        %v4630 = vmul.f32 %v4629, %v4619
        %v4631 = vmul.f32 %v4629, %v4621
        %v4632 = vadd.f32 %v4603, %v4630
        %v4633 = vadd.f32 %v4604, %v4631
        %s4634 = sld [smem:[#allocation9 + $0x41]]
        %v4635 = vstv %s4634
        %v4636 = vmul.f32 %v4635, %v4619
        %v4637 = vmul.f32 %v4635, %v4621
        %v4638 = vadd.f32 %v4616, %v4636
        %v4639 = vadd.f32 %v4617, %v4637
        %s4640 = sld [smem:[#allocation9 + $0x87]]
        %v4641 = vstv %s4640
        %v4642 = vmul.f32 %v4641, %v4416
        %v4643 = vmul.f32 %v4641, %v4417
        %v4646 = vrot.slane %v4642, 5
        %v4647 = vrot.slane %v4643, 5
        %v4648 = vsel %vm411, %v4646, %v4647
        %v4651 = vadd.f32 %v4626, %v4646
        %v4652 = vadd.f32 %v4627, %v4648
        %s4653 = sld [smem:[#allocation9 + $0x88]]
        %v4654 = vstv %s4653
        %v4655 = vmul.f32 %v4654, %v4416
        %v4656 = vmul.f32 %v4654, %v4417
        %v4659 = vrot.slane %v4655, 5
        %v4660 = vrot.slane %v4656, 5
        %v4661 = vsel %vm411, %v4659, %v4660
        %v4664 = vadd.f32 %v4632, %v4659
        %v4665 = vadd.f32 %v4633, %v4661
        %s4666 = sld [smem:[#allocation9 + $0x89]]
        %v4667 = vstv %s4666
        %v4668 = vmul.f32 %v4667, %v4416
        %v4669 = vmul.f32 %v4667, %v4417
        %v4672 = vrot.slane %v4668, 5
        %v4673 = vrot.slane %v4669, 5
        %v4674 = vsel %vm411, %v4672, %v4673
        %v4677 = vadd.f32 %v4638, %v4672
        %v4678 = vadd.f32 %v4639, %v4674
        %s4679 = sld [smem:[#allocation9 + $0xcf]]
        %v4680 = vstv %s4679
        %v4681 = vmul.f32 %v4680, %v4416
        %v4682 = vmul.f32 %v4680, %v4619
        %v4685 = vrot.slane %v4681, 6
        %v4686 = vrot.slane %v4682, 6
        %v4687 = vsel %vm516, %v4685, %v4686
        %v4690 = vadd.f32 %v4651, %v4685
        %v4691 = vadd.f32 %v4652, %v4687
        %s4692 = sld [smem:[#allocation9 + $0xd0]]
        %v4693 = vstv %s4692
        %v4694 = vmul.f32 %v4693, %v4416
        %v4695 = vmul.f32 %v4693, %v4619
        %v4698 = vrot.slane %v4694, 6
        %v4699 = vrot.slane %v4695, 6
        %v4700 = vsel %vm516, %v4698, %v4699
        %v4703 = vadd.f32 %v4664, %v4698
        %v4704 = vadd.f32 %v4665, %v4700
        %s4705 = sld [smem:[#allocation9 + $0xd1]]
        %v4706 = vstv %s4705
        %v4707 = vmul.f32 %v4706, %v4416
        %v4708 = vmul.f32 %v4706, %v4619
        %v4711 = vrot.slane %v4707, 6
        %v4712 = vrot.slane %v4708, 6
        %v4713 = vsel %vm516, %v4711, %v4712
        %v4716 = vadd.f32 %v4677, %v4711
        %v4717 = vadd.f32 %v4678, %v4713
        %4718 = vrot.lane.b32.xlu0 %v2829, 1
        %v4719 = vpop.permute.xlu0 %4718
        %4720 = vrot.lane.b32.xlu0 %v2830, 1
        %v4721 = vpop.permute.xlu0 %4720
        %v4722 = vsel %vm317, %v4719, 0.0
        %v4723 = vsel %vm317, %v4721, 0.0
        %4724 = vrot.lane.b32.xlu0 %v2829, 127
        %v4725 = vpop.permute.xlu0 %4724
        %4726 = vrot.lane.b32.xlu0 %v2830, 127
        %v4727 = vpop.permute.xlu0 %4726
        %v4728 = vsel %vm318, %v4725, 0.0
        %v4729 = vsel %vm318, %v4727, 0.0
        %v4730 = vrot.slane %v4722, 4
        %v4731 = vsel %vm352, %v4730, %v4723
        %v4732 = vrot.slane %v4731, 4
        %v4733 = vsel %vm352, %v4732, %v4730
        %s4734 = sld [smem:[#allocation9 + $0x12]]
        %v4735 = vstv %s4734
        %v4736 = vmul.f32 %v4735, %v4731
        %v4737 = vmul.f32 %v4735, %v4733
        %v4738 = vadd.f32 %v4690, %v4736
        %v4739 = vadd.f32 %v4691, %v4737
        %s4740 = sld [smem:[#allocation9 + $0x13]]
        %v4741 = vstv %s4740
        %v4742 = vmul.f32 %v4741, %v4731
        %v4743 = vmul.f32 %v4741, %v4733
        %v4744 = vadd.f32 %v4703, %v4742
        %v4745 = vadd.f32 %v4704, %v4743
        %s4746 = sld [smem:[#allocation9 + $0x14]]
        %v4747 = vstv %s4746
        %v4748 = vmul.f32 %v4747, %v4731
        %v4749 = vmul.f32 %v4747, %v4733
        %v4750 = vadd.f32 %v4716, %v4748
        %v4751 = vadd.f32 %v4717, %v4749
        %s4752 = sld [smem:[#allocation9 + $0x5a]]
        %v4753 = vstv %s4752
        %v4754 = vmul.f32 %v4753, %v4722
        %v4755 = vmul.f32 %v4753, %v4723
        %v4758 = vrot.slane %v4754, 5
        %v4759 = vrot.slane %v4755, 5
        %v4760 = vsel %vm411, %v4758, %v4759
        %v4763 = vadd.f32 %v4738, %v4758
        %v4764 = vadd.f32 %v4739, %v4760
        %s4765 = sld [smem:[#allocation9 + $0x5b]]
        %v4766 = vstv %s4765
        %v4767 = vmul.f32 %v4766, %v4722
        %v4768 = vmul.f32 %v4766, %v4723
        %v4771 = vrot.slane %v4767, 5
        %v4772 = vrot.slane %v4768, 5
        %v4773 = vsel %vm411, %v4771, %v4772
        %v4776 = vadd.f32 %v4744, %v4771
        %v4777 = vadd.f32 %v4745, %v4773
        %s4778 = sld [smem:[#allocation9 + $0x5c]]
        %v4779 = vstv %s4778
        %v4780 = vmul.f32 %v4779, %v4722
        %v4781 = vmul.f32 %v4779, %v4723
        %v4784 = vrot.slane %v4780, 5
        %v4785 = vrot.slane %v4781, 5
        %v4786 = vsel %vm411, %v4784, %v4785
        %v4789 = vadd.f32 %v4750, %v4784
        %v4790 = vadd.f32 %v4751, %v4786
        %s4791 = sld [smem:[#allocation9 + $0xa2]]
        %v4792 = vstv %s4791
        %v4793 = vmul.f32 %v4792, %v4722
        %v4794 = vmul.f32 %v4792, %v4731
        %v4797 = vrot.slane %v4793, 6
        %v4798 = vrot.slane %v4794, 6
        %v4799 = vsel %vm516, %v4797, %v4798
        %v4802 = vadd.f32 %v4763, %v4797
        %v4803 = vadd.f32 %v4764, %v4799
        %s4804 = sld [smem:[#allocation9 + $0xa3]]
        %v4805 = vstv %s4804
        %v4806 = vmul.f32 %v4805, %v4722
        %v4807 = vmul.f32 %v4805, %v4731
        %v4810 = vrot.slane %v4806, 6
        %v4811 = vrot.slane %v4807, 6
        %v4812 = vsel %vm516, %v4810, %v4811
        %v4815 = vadd.f32 %v4776, %v4810
        %v4816 = vadd.f32 %v4777, %v4812
        %s4817 = sld [smem:[#allocation9 + $0xa4]]
        %v4818 = vstv %s4817
        %v4819 = vmul.f32 %v4818, %v4722
        %v4820 = vmul.f32 %v4818, %v4731
        %v4823 = vrot.slane %v4819, 6
        %v4824 = vrot.slane %v4820, 6
        %v4825 = vsel %vm516, %v4823, %v4824
        %v4828 = vadd.f32 %v4789, %v4823
        %v4829 = vadd.f32 %v4790, %v4825
        %v4830 = vrot.slane %v2829, 4
        %v4831 = vsel %vm352, %v4830, %v2830
        %v4832 = vrot.slane %v4831, 4
        %v4833 = vsel %vm352, %v4832, %v4830
        %s4834 = sld [smem:[#allocation9 + $0x2a]]
        %v4835 = vstv %s4834
        %v4836 = vmul.f32 %v4835, %v4831
        %v4837 = vmul.f32 %v4835, %v4833
        %v4838 = vadd.f32 %v4802, %v4836
        %v4839 = vadd.f32 %v4803, %v4837
        %s4840 = sld [smem:[#allocation9 + $0x2b]]
        %v4841 = vstv %s4840
        %v4842 = vmul.f32 %v4841, %v4831
        %v4843 = vmul.f32 %v4841, %v4833
        %v4844 = vadd.f32 %v4815, %v4842
        %v4845 = vadd.f32 %v4816, %v4843
        %s4846 = sld [smem:[#allocation9 + $0x2c]]
        %v4847 = vstv %s4846
        %v4848 = vmul.f32 %v4847, %v4831
        %v4849 = vmul.f32 %v4847, %v4833
        %v4850 = vadd.f32 %v4828, %v4848
        %v4851 = vadd.f32 %v4829, %v4849
        %s4852 = sld [smem:[#allocation9 + $0x72]]
        %v4853 = vstv %s4852
        %v4854 = vmul.f32 %v4853, %v2829
        %v4855 = vmul.f32 %v4853, %v2830
        %v4858 = vrot.slane %v4854, 5
        %v4859 = vrot.slane %v4855, 5
        %v4860 = vsel %vm411, %v4858, %v4859
        %v4863 = vadd.f32 %v4838, %v4858
        %v4864 = vadd.f32 %v4839, %v4860
        %s4865 = sld [smem:[#allocation9 + $0x73]]
        %v4866 = vstv %s4865
        %v4867 = vmul.f32 %v4866, %v2829
        %v4868 = vmul.f32 %v4866, %v2830
        %v4871 = vrot.slane %v4867, 5
        %v4872 = vrot.slane %v4868, 5
        %v4873 = vsel %vm411, %v4871, %v4872
        %v4876 = vadd.f32 %v4844, %v4871
        %v4877 = vadd.f32 %v4845, %v4873
        %s4878 = sld [smem:[#allocation9 + $0x74]]
        %v4879 = vstv %s4878
        %v4880 = vmul.f32 %v4879, %v2829
        %v4881 = vmul.f32 %v4879, %v2830
        %v4884 = vrot.slane %v4880, 5
        %v4885 = vrot.slane %v4881, 5
        %v4886 = vsel %vm411, %v4884, %v4885
        %v4889 = vadd.f32 %v4850, %v4884
        %v4890 = vadd.f32 %v4851, %v4886
        %s4891 = sld [smem:[#allocation9 + $0xba]]
        %v4892 = vstv %s4891
        %v4893 = vmul.f32 %v4892, %v2829
        %v4894 = vmul.f32 %v4892, %v4831
        %v4897 = vrot.slane %v4893, 6
        %v4898 = vrot.slane %v4894, 6
        %v4899 = vsel %vm516, %v4897, %v4898
        %v4902 = vadd.f32 %v4863, %v4897
        %v4903 = vadd.f32 %v4864, %v4899
        %s4904 = sld [smem:[#allocation9 + $0xbb]]
        %v4905 = vstv %s4904
        %v4906 = vmul.f32 %v4905, %v2829
        %v4907 = vmul.f32 %v4905, %v4831
        %v4910 = vrot.slane %v4906, 6
        %v4911 = vrot.slane %v4907, 6
        %v4912 = vsel %vm516, %v4910, %v4911
        %v4915 = vadd.f32 %v4876, %v4910
        %v4916 = vadd.f32 %v4877, %v4912
        %s4917 = sld [smem:[#allocation9 + $0xbc]]
        %v4918 = vstv %s4917
        %v4919 = vmul.f32 %v4918, %v2829
        %v4920 = vmul.f32 %v4918, %v4831
        %v4923 = vrot.slane %v4919, 6
        %v4924 = vrot.slane %v4920, 6
        %v4925 = vsel %vm516, %v4923, %v4924
        %v4928 = vadd.f32 %v4889, %v4923
        %v4929 = vadd.f32 %v4890, %v4925
        %v4930 = vrot.slane %v4728, 4
        %v4931 = vsel %vm352, %v4930, %v4729
        %v4932 = vrot.slane %v4931, 4
        %v4933 = vsel %vm352, %v4932, %v4930
        %s4934 = sld [smem:[#allocation9 + $0x42]]
        %v4935 = vstv %s4934
        %v4936 = vmul.f32 %v4935, %v4931
        %v4937 = vmul.f32 %v4935, %v4933
        %v4938 = vadd.f32 %v4902, %v4936
        %v4939 = vadd.f32 %v4903, %v4937
        %s4940 = sld [smem:[#allocation9 + $0x43]]
        %v4941 = vstv %s4940
        %v4942 = vmul.f32 %v4941, %v4931
        %v4943 = vmul.f32 %v4941, %v4933
        %v4944 = vadd.f32 %v4915, %v4942
        %v4945 = vadd.f32 %v4916, %v4943
        %s4946 = sld [smem:[#allocation9 + $0x44]]
        %v4947 = vstv %s4946
        %v4948 = vmul.f32 %v4947, %v4931
        %v4949 = vmul.f32 %v4947, %v4933
        %v4950 = vadd.f32 %v4928, %v4948
        %v4951 = vadd.f32 %v4929, %v4949
        %s4952 = sld [smem:[#allocation9 + $0x8a]]
        %v4953 = vstv %s4952
        %v4954 = vmul.f32 %v4953, %v4728
        %v4955 = vmul.f32 %v4953, %v4729
        %v4958 = vrot.slane %v4954, 5
        %v4959 = vrot.slane %v4955, 5
        %v4960 = vsel %vm411, %v4958, %v4959
        %v4963 = vadd.f32 %v4938, %v4958
        %v4964 = vadd.f32 %v4939, %v4960
        %s4965 = sld [smem:[#allocation9 + $0x8b]]
        %v4966 = vstv %s4965
        %v4967 = vmul.f32 %v4966, %v4728
        %v4968 = vmul.f32 %v4966, %v4729
        %v4971 = vrot.slane %v4967, 5
        %v4972 = vrot.slane %v4968, 5
        %v4973 = vsel %vm411, %v4971, %v4972
        %v4976 = vadd.f32 %v4944, %v4971
        %v4977 = vadd.f32 %v4945, %v4973
        %s4978 = sld [smem:[#allocation9 + $0x8c]]
        %v4979 = vstv %s4978
        %v4980 = vmul.f32 %v4979, %v4728
        %v4981 = vmul.f32 %v4979, %v4729
        %v4984 = vrot.slane %v4980, 5
        %v4985 = vrot.slane %v4981, 5
        %v4986 = vsel %vm411, %v4984, %v4985
        %v4989 = vadd.f32 %v4950, %v4984
        %v4990 = vadd.f32 %v4951, %v4986
        %s4991 = sld [smem:[#allocation9 + $0xd2]]
        %v4992 = vstv %s4991
        %v4993 = vmul.f32 %v4992, %v4728
        %v4994 = vmul.f32 %v4992, %v4931
        %v4997 = vrot.slane %v4993, 6
        %v4998 = vrot.slane %v4994, 6
        %v4999 = vsel %vm516, %v4997, %v4998
        %v5002 = vadd.f32 %v4963, %v4997
        %v5003 = vadd.f32 %v4964, %v4999
        %s5004 = sld [smem:[#allocation9 + $0xd3]]
        %v5005 = vstv %s5004
        %v5006 = vmul.f32 %v5005, %v4728
        %v5007 = vmul.f32 %v5005, %v4931
        %v5010 = vrot.slane %v5006, 6
        %v5011 = vrot.slane %v5007, 6
        %v5012 = vsel %vm516, %v5010, %v5011
        %v5015 = vadd.f32 %v4976, %v5010
        %v5016 = vadd.f32 %v4977, %v5012
        %s5017 = sld [smem:[#allocation9 + $0xd4]]
        %v5018 = vstv %s5017
        %v5019 = vmul.f32 %v5018, %v4728
        %v5020 = vmul.f32 %v5018, %v4931
        %v5023 = vrot.slane %v5019, 6
        %v5024 = vrot.slane %v5020, 6
        %v5025 = vsel %vm516, %v5023, %v5024
        %v5028 = vadd.f32 %v4989, %v5023
        %v5029 = vadd.f32 %v4990, %v5025
        %5030 = vrot.lane.b32.xlu0 %v2844, 1
        %v5031 = vpop.permute.xlu0 %5030
        %5032 = vrot.lane.b32.xlu0 %v2845, 1
        %v5033 = vpop.permute.xlu0 %5032
        %v5034 = vsel %vm317, %v5031, 0.0
        %v5035 = vsel %vm317, %v5033, 0.0
        %5036 = vrot.lane.b32.xlu0 %v2844, 127
        %v5037 = vpop.permute.xlu0 %5036
        %5038 = vrot.lane.b32.xlu0 %v2845, 127
        %v5039 = vpop.permute.xlu0 %5038
        %v5040 = vsel %vm318, %v5037, 0.0
        %v5041 = vsel %vm318, %v5039, 0.0
        %v5042 = vrot.slane %v5034, 4
        %v5043 = vsel %vm352, %v5042, %v5035
        %v5044 = vrot.slane %v5043, 4
        %v5045 = vsel %vm352, %v5044, %v5042
        %s5046 = sld [smem:[#allocation9 + $0x15]]
        %v5047 = vstv %s5046
        %v5048 = vmul.f32 %v5047, %v5043
        %v5049 = vmul.f32 %v5047, %v5045
        %v5050 = vadd.f32 %v5002, %v5048
        %v5051 = vadd.f32 %v5003, %v5049
        %s5052 = sld [smem:[#allocation9 + $0x16]]
        %v5053 = vstv %s5052
        %v5054 = vmul.f32 %v5053, %v5043
        %v5055 = vmul.f32 %v5053, %v5045
        %v5056 = vadd.f32 %v5015, %v5054
        %v5057 = vadd.f32 %v5016, %v5055
        %s5058 = sld [smem:[#allocation9 + $0x17]]
        %v5059 = vstv %s5058
        %v5060 = vmul.f32 %v5059, %v5043
        %v5061 = vmul.f32 %v5059, %v5045
        %v5062 = vadd.f32 %v5028, %v5060
        %v5063 = vadd.f32 %v5029, %v5061
        %s5064 = sld [smem:[#allocation9 + $0x5d]]
        %v5065 = vstv %s5064
        %v5066 = vmul.f32 %v5065, %v5034
        %v5067 = vmul.f32 %v5065, %v5035
        %v5070 = vrot.slane %v5066, 5
        %v5071 = vrot.slane %v5067, 5
        %v5072 = vsel %vm411, %v5070, %v5071
        %v5075 = vadd.f32 %v5050, %v5070
        %v5076 = vadd.f32 %v5051, %v5072
        %s5077 = sld [smem:[#allocation9 + $0x5e]]
        %v5078 = vstv %s5077
        %v5079 = vmul.f32 %v5078, %v5034
        %v5080 = vmul.f32 %v5078, %v5035
        %v5083 = vrot.slane %v5079, 5
        %v5084 = vrot.slane %v5080, 5
        %v5085 = vsel %vm411, %v5083, %v5084
        %v5088 = vadd.f32 %v5056, %v5083
        %v5089 = vadd.f32 %v5057, %v5085
        %s5090 = sld [smem:[#allocation9 + $0x5f]]
        %v5091 = vstv %s5090
        %v5092 = vmul.f32 %v5091, %v5034
        %v5093 = vmul.f32 %v5091, %v5035
        %v5096 = vrot.slane %v5092, 5
        %v5097 = vrot.slane %v5093, 5
        %v5098 = vsel %vm411, %v5096, %v5097
        %v5101 = vadd.f32 %v5062, %v5096
        %v5102 = vadd.f32 %v5063, %v5098
        %s5103 = sld [smem:[#allocation9 + $0xa5]]
        %v5104 = vstv %s5103
        %v5105 = vmul.f32 %v5104, %v5034
        %v5106 = vmul.f32 %v5104, %v5043
        %v5109 = vrot.slane %v5105, 6
        %v5110 = vrot.slane %v5106, 6
        %v5111 = vsel %vm516, %v5109, %v5110
        %v5114 = vadd.f32 %v5075, %v5109
        %v5115 = vadd.f32 %v5076, %v5111
        %s5116 = sld [smem:[#allocation9 + $0xa6]]
        %v5117 = vstv %s5116
        %v5118 = vmul.f32 %v5117, %v5034
        %v5119 = vmul.f32 %v5117, %v5043
        %v5122 = vrot.slane %v5118, 6
        %v5123 = vrot.slane %v5119, 6
        %v5124 = vsel %vm516, %v5122, %v5123
        %v5127 = vadd.f32 %v5088, %v5122
        %v5128 = vadd.f32 %v5089, %v5124
        %s5129 = sld [smem:[#allocation9 + $0xa7]]
        %v5130 = vstv %s5129
        %v5131 = vmul.f32 %v5130, %v5034
        %v5132 = vmul.f32 %v5130, %v5043
        %v5135 = vrot.slane %v5131, 6
        %v5136 = vrot.slane %v5132, 6
        %v5137 = vsel %vm516, %v5135, %v5136
        %v5140 = vadd.f32 %v5101, %v5135
        %v5141 = vadd.f32 %v5102, %v5137
        %v5142 = vrot.slane %v2844, 4
        %v5143 = vsel %vm352, %v5142, %v2845
        %v5144 = vrot.slane %v5143, 4
        %v5145 = vsel %vm352, %v5144, %v5142
        %s5146 = sld [smem:[#allocation9 + $0x2d]]
        %v5147 = vstv %s5146
        %v5148 = vmul.f32 %v5147, %v5143
        %v5149 = vmul.f32 %v5147, %v5145
        %v5150 = vadd.f32 %v5114, %v5148
        %v5151 = vadd.f32 %v5115, %v5149
        %s5152 = sld [smem:[#allocation9 + $0x2e]]
        %v5153 = vstv %s5152
        %v5154 = vmul.f32 %v5153, %v5143
        %v5155 = vmul.f32 %v5153, %v5145
        %v5156 = vadd.f32 %v5127, %v5154
        %v5157 = vadd.f32 %v5128, %v5155
        %s5158 = sld [smem:[#allocation9 + $0x2f]]
        %v5159 = vstv %s5158
        %v5160 = vmul.f32 %v5159, %v5143
        %v5161 = vmul.f32 %v5159, %v5145
        %v5162 = vadd.f32 %v5140, %v5160
        %v5163 = vadd.f32 %v5141, %v5161
        %s5164 = sld [smem:[#allocation9 + $0x75]]
        %v5165 = vstv %s5164
        %v5166 = vmul.f32 %v5165, %v2844
        %v5167 = vmul.f32 %v5165, %v2845
        %v5170 = vrot.slane %v5166, 5
        %v5171 = vrot.slane %v5167, 5
        %v5172 = vsel %vm411, %v5170, %v5171
        %v5175 = vadd.f32 %v5150, %v5170
        %v5176 = vadd.f32 %v5151, %v5172
        %s5177 = sld [smem:[#allocation9 + $0x76]]
        %v5178 = vstv %s5177
        %v5179 = vmul.f32 %v5178, %v2844
        %v5180 = vmul.f32 %v5178, %v2845
        %v5183 = vrot.slane %v5179, 5
        %v5184 = vrot.slane %v5180, 5
        %v5185 = vsel %vm411, %v5183, %v5184
        %v5188 = vadd.f32 %v5156, %v5183
        %v5189 = vadd.f32 %v5157, %v5185
        %s5190 = sld [smem:[#allocation9 + $0x77]]
        %v5191 = vstv %s5190
        %v5192 = vmul.f32 %v5191, %v2844
        %v5193 = vmul.f32 %v5191, %v2845
        %v5196 = vrot.slane %v5192, 5
        %v5197 = vrot.slane %v5193, 5
        %v5198 = vsel %vm411, %v5196, %v5197
        %v5201 = vadd.f32 %v5162, %v5196
        %v5202 = vadd.f32 %v5163, %v5198
        %s5203 = sld [smem:[#allocation9 + $0xbd]]
        %v5204 = vstv %s5203
        %v5205 = vmul.f32 %v5204, %v2844
        %v5206 = vmul.f32 %v5204, %v5143
        %v5209 = vrot.slane %v5205, 6
        %v5210 = vrot.slane %v5206, 6
        %v5211 = vsel %vm516, %v5209, %v5210
        %v5214 = vadd.f32 %v5175, %v5209
        %v5215 = vadd.f32 %v5176, %v5211
        %s5216 = sld [smem:[#allocation9 + $0xbe]]
        %v5217 = vstv %s5216
        %v5218 = vmul.f32 %v5217, %v2844
        %v5219 = vmul.f32 %v5217, %v5143
        %v5222 = vrot.slane %v5218, 6
        %v5223 = vrot.slane %v5219, 6
        %v5224 = vsel %vm516, %v5222, %v5223
        %v5227 = vadd.f32 %v5188, %v5222
        %v5228 = vadd.f32 %v5189, %v5224
        %s5229 = sld [smem:[#allocation9 + $0xbf]]
        %v5230 = vstv %s5229
        %v5231 = vmul.f32 %v5230, %v2844
        %v5232 = vmul.f32 %v5230, %v5143
        %v5235 = vrot.slane %v5231, 6
        %v5236 = vrot.slane %v5232, 6
        %v5237 = vsel %vm516, %v5235, %v5236
        %v5240 = vadd.f32 %v5201, %v5235
        %v5241 = vadd.f32 %v5202, %v5237
        %v5242 = vrot.slane %v5040, 4
        %v5243 = vsel %vm352, %v5242, %v5041
        %v5244 = vrot.slane %v5243, 4
        %v5245 = vsel %vm352, %v5244, %v5242
        %s5246 = sld [smem:[#allocation9 + $0x45]]
        %v5247 = vstv %s5246
        %v5248 = vmul.f32 %v5247, %v5243
        %v5249 = vmul.f32 %v5247, %v5245
        %v5250 = vadd.f32 %v5214, %v5248
        %v5251 = vadd.f32 %v5215, %v5249
        %s5252 = sld [smem:[#allocation9 + $0x46]]
        %v5253 = vstv %s5252
        %v5254 = vmul.f32 %v5253, %v5243
        %v5255 = vmul.f32 %v5253, %v5245
        %v5256 = vadd.f32 %v5227, %v5254
        %v5257 = vadd.f32 %v5228, %v5255
        %s5258 = sld [smem:[#allocation9 + $0x47]]
        %v5259 = vstv %s5258
        %v5260 = vmul.f32 %v5259, %v5243
        %v5261 = vmul.f32 %v5259, %v5245
        %v5262 = vadd.f32 %v5240, %v5260
        %v5263 = vadd.f32 %v5241, %v5261
        %s5264 = sld [smem:[#allocation9 + $0x8d]]
        %v5265 = vstv %s5264
        %v5266 = vmul.f32 %v5265, %v5040
        %v5267 = vmul.f32 %v5265, %v5041
        %v5270 = vrot.slane %v5266, 5
        %v5271 = vrot.slane %v5267, 5
        %v5272 = vsel %vm411, %v5270, %v5271
        %v5275 = vadd.f32 %v5250, %v5270
        %v5276 = vadd.f32 %v5251, %v5272
        %s5277 = sld [smem:[#allocation9 + $0x8e]]
        %v5278 = vstv %s5277
        %v5279 = vmul.f32 %v5278, %v5040
        %v5280 = vmul.f32 %v5278, %v5041
        %v5283 = vrot.slane %v5279, 5
        %v5284 = vrot.slane %v5280, 5
        %v5285 = vsel %vm411, %v5283, %v5284
        %v5288 = vadd.f32 %v5256, %v5283
        %v5289 = vadd.f32 %v5257, %v5285
        %s5290 = sld [smem:[#allocation9 + $0x8f]]
        %v5291 = vstv %s5290
        %v5292 = vmul.f32 %v5291, %v5040
        %v5293 = vmul.f32 %v5291, %v5041
        %v5296 = vrot.slane %v5292, 5
        %v5297 = vrot.slane %v5293, 5
        %v5298 = vsel %vm411, %v5296, %v5297
        %v5301 = vadd.f32 %v5262, %v5296
        %v5302 = vadd.f32 %v5263, %v5298
        %s5303 = sld [smem:[#allocation9 + $0xd5]]
        %v5304 = vstv %s5303
        %v5305 = vmul.f32 %v5304, %v5040
        %v5306 = vmul.f32 %v5304, %v5243
        %v5309 = vrot.slane %v5305, 6
        %v5310 = vrot.slane %v5306, 6
        %v5311 = vsel %vm516, %v5309, %v5310
        %v5314 = vadd.f32 %v5275, %v5309
        %v5315 = vadd.f32 %v5276, %v5311
        %s5316 = sld [smem:[#allocation9 + $0xd6]]
        %v5317 = vstv %s5316
        %v5318 = vmul.f32 %v5317, %v5040
        %v5319 = vmul.f32 %v5317, %v5243
        %v5322 = vrot.slane %v5318, 6
        %v5323 = vrot.slane %v5319, 6
        %v5324 = vsel %vm516, %v5322, %v5323
        %v5327 = vadd.f32 %v5288, %v5322
        %v5328 = vadd.f32 %v5289, %v5324
        %s5329 = sld [smem:[#allocation9 + $0xd7]]
        %v5330 = vstv %s5329
        %v5331 = vmul.f32 %v5330, %v5040
        %v5332 = vmul.f32 %v5330, %v5243
        %v5335 = vrot.slane %v5331, 6
        %v5336 = vrot.slane %v5332, 6
        %v5337 = vsel %vm516, %v5335, %v5336
        %v5340 = vadd.f32 %v5301, %v5335
        %v5341 = vadd.f32 %v5302, %v5337
        %s5342 = sld [smem:[#allocation10]]
        %v5343 = vstv %s5342
        %v5344 = vadd.f32 %v5314, %v5343
        %v5345 = vadd.f32 %v5315, %v5343
        %5346 = vst [vmem:[%s242 - $0x5] sm:$0xe0] %v5344
        %5347 = vst [vmem:[%s242 + $0x3] sm:$0x1f] %v5345
        %s5348 = sld [smem:[#allocation10 + $0x1]]
        %v5349 = vstv %s5348
        %v5350 = vadd.f32 %v5327, %v5349
        %v5351 = vadd.f32 %v5328, %v5349
        %s5352 = scalar_lea.vmem %s242, 8 [#allocation12]
        %5353 = vst [vmem:[%s5352 - $0x5] sm:$0xe0] %v5350
        %5354 = vst [vmem:[%s5352 + $0x3] sm:$0x1f] %v5351
        %s5355 = sld [smem:[#allocation10 + $0x2]]
        %v5356 = vstv %s5355
        %v5357 = vadd.f32 %v5340, %v5356
        %v5358 = vadd.f32 %v5341, %v5356
        %s5359 = scalar_lea.vmem %s242, 16 [#allocation12]
        %5360 = vst [vmem:[%s5359 - $0x5] sm:$0xe0] %v5357
        %5361 = vst [vmem:[%s5359 + $0x3] sm:$0x1f] %v5358
        %s5362 = sand.u32 %s128, 1
        %s5363 = scalar_lea.sflag [#allocation5], %s5362
        %s5364 = sand.u32 %s128, 1
        %s5365 = smul.addr %s5364, 24
        %s5366 = scalar_lea.vmem [#allocation12], %s5365
        // Predicated region
        $region90: #{model_forward.1} parent=35 // pred_check
          %p5367 = pneg %p138
        $region91: #{model_forward.1} parent=35 // pred_check_branch
          %5369 = sbr.rel (%p5367) target = $region93
        $region92: #{model_forward.1} parent=35 // pred_region
          %s5371 = ssub.s32 384, 384
          %5372 = vsyncadd %s5363, %s5371
          %s5373 = smul.addr %s26, 6
          %s5374 = sadd.s32 %s27, %s5373
          %s5375 = smul.addr %s5374, 128
          %s5376 = scalar_lea.hbm %s5, %s5375
          %s5377 = sshll.u32 %s5366, 4
          %s5378 = int_to_ptr.vmem [resolvable:$true] %s5377
          %5383 = dma.vmem_to_hbm [thread:$0]  %s5378, 384, %s5376, %s5363, 128, 256, 8
        $region93: #{model_forward.1} parent=35 // pred_fallthru
          _
      $region36: #{model_forward.1} parent=5 // pred_fallthru
        _
      %p5384 = scmp.le.s32.totalorder 2, %s17
      // Predicated region
      $region94: #{model_forward.1} parent=5 // pred_check
        %p5385 = pneg %p5384
      $region95: #{model_forward.1} parent=5 // pred_check_branch
        %5387 = sbr.rel (%p5385) target = $region97
      $region96: #{model_forward.1} parent=5 // pred_region
        %s5388 = ssub.s32 %s17, 2
        // Predicated region
        $region98: #{model_forward.1} parent=96 // pred_check
          %p5389 = pneg %p144
        $region99: #{model_forward.1} parent=96 // pred_check_branch
          %5391 = sbr.rel (%p5389) target = $region101
        $region100: #{model_forward.1} parent=96 // pred_region
          %s5392 = sand.u32 %s129, 1
          %s5393 = scalar_lea.sflag [#allocation5], %s5392
          %s5394 = sand.u32 %s129, 1
          %s5395 = smul.addr %s5394, 24
          %s5396 = scalar_lea.vmem [#allocation12], %s5395
          %5397 = dma.done %s5393, 384
        $region101: #{model_forward.1} parent=96 // pred_fallthru
          _
      $region97: #{model_forward.1} parent=5 // pred_fallthru
        _
    $region6: #{model_forward.1} parent=1 // loop_footer
      %s21 = sadd.s32 1, %s17
    $region7: #{model_forward.1} parent=1 // loop_footer_branch
      %16 = sbr.rel target = $region3
    $region8: #{model_forward.1} parent=1 // loop_exit
      _
    %5398 = vsyncpa [#allocation5], 1
    %s5399 = scalar_lea.sflag [#allocation5], 1
    %5400 = vsyncpa %s5399, 1
    %5401 = vsyncpa [#allocation6], 1
    %s5402 = scalar_lea.sflag [#allocation6], 1
    %5403 = vsyncpa %s5402, 1
    %5404 = vsyncpa [#allocation8], 1
    %5405 = vsyncpa [#allocation11], 1
  %5406 = vsyncmov [#allocation3]
  %s5407 = vpop.sfrf %5406
  %p5408 = scmp.eq.s32.totalorder %s5407, 0
  %p5409 = pneg %p5408
  %5411 = shalt.err (%p5409)

</llo_original>
